<compile_context>
chip_gen: v7x
topology: tpu7x:2x2x1
jax: 0.10.0
libtpu: 0.0.40
codegen_flags: <defaults>
</compile_context>

<pallas_src>
import functools
import math

import jax
import jax.numpy as jnp
from jax.experimental import pallas as pl
from jax.experimental.pallas import tpu as pltpu

_LN_EPS = 1e-5


# ------------------------------ kernel helpers ------------------------------

def _layernorm(t, g, b, eps=_LN_EPS):
    """LayerNorm over last dim. t: (S, D); g/b: (1, D)."""
    mu = jnp.mean(t, axis=-1, keepdims=True)
    tc = t - mu
    var = jnp.mean(tc * tc, axis=-1, keepdims=True)
    return tc * jax.lax.rsqrt(var + eps) * g + b


def _attend(q, k, v, scale):
    """q: (Sq, Dh), k/v: (Sk, Dh). Contract head dim directly (no k.T)."""
    s = jax.lax.dot_general(q, k, (((1,), (1,)), ((), ())),
                            preferred_element_type=jnp.float32) * scale
    m = jnp.max(s, axis=-1, keepdims=True)
    p = jnp.exp(s - m)
    p = p / jnp.sum(p, axis=-1, keepdims=True)   # exact divide for f32 parity
    return jnp.dot(p, v, preferred_element_type=jnp.float32)


# --------------------------- fully fused model kernel -------------------------

def _model_kernel(x_ref,
                  l_ln_g_ref, l_ln_b_ref, l_in_w_ref, l_in_b_ref,
                  l_out_w_ref, l_out_b_ref, l_f1_w_ref, l_f1_b_ref,
                  l_f2_w_ref, l_f2_b_ref,
                  t_ln_g_ref, t_ln_b_ref, t_cw_ref, t_cb_ref,
                  t_wf_ref, t_bf_ref, t_cls_w_ref, t_cls_b_ref,
                  o_ref, *, n_layers, n_heads, seq_len):
    x = x_ref[0]                       # (2S, D): rows [0:S] = rgb, [S:2S] = depth
    d = x.shape[-1]
    s = seq_len
    dh = d // n_heads
    mha_scale = 1.0 / math.sqrt(dh)    # PyTorch MHA scales by 1/sqrt(head_dim)
    ca_scale = 1.0 / math.sqrt(d)      # CrossAttention scales by 1/sqrt(d_attn)

    # ---- n_layers x TransformerEncoderLayer (shared weights for rgb & depth) ----
    # TODO(synk): dropout layers are identity here (inference semantics).
    for l in range(n_layers):          # static unroll over layers
        g = l_ln_g_ref[l]              # (2, D): [ln1, ln2]
        b = l_ln_b_ref[l]
        # NOTE: reference encoder layer has NO residual connections (as written).
        xn1 = _layernorm(x, g[0:1], b[0:1])
        qkv = jnp.dot(xn1, l_in_w_ref[l], preferred_element_type=jnp.float32)
        qkv = qkv + l_in_b_ref[l]      # (2S, 3D)
        q = qkv[:, 0:d]
        k = qkv[:, d:2 * d]
        v = qkv[:, 2 * d:3 * d]

        heads = []
        for h in range(n_heads):       # unrolled; everything stays in vregs
            c0, c1 = h * dh, (h + 1) * dh
            o_rgb = _attend(q[0:s, c0:c1], k[0:s, c0:c1], v[0:s, c0:c1], mha_scale)
            o_dep = _attend(q[s:, c0:c1], k[s:, c0:c1], v[s:, c0:c1], mha_scale)
            heads.append(jnp.concatenate([o_rgb, o_dep], axis=0))
        attn = jnp.concatenate(heads, axis=-1)                    # (2S, D)
        attn = jnp.dot(attn, l_out_w_ref[l], preferred_element_type=jnp.float32)
        attn = attn + l_out_b_ref[l]

        xn2 = _layernorm(attn, g[1:2], b[1:2])
        hid = jnp.dot(xn2, l_f1_w_ref[l], preferred_element_type=jnp.float32)
        hid = jnp.maximum(hid + l_f1_b_ref[l], 0.0)               # ReLU
        x = jnp.dot(hid, l_f2_w_ref[l], preferred_element_type=jnp.float32)
        x = x + l_f2_b_ref[l]

    # ---- tail: norms -> bidirectional CrossAttention -> W_final -> pool -> cls ---
    t_g = t_ln_g_ref[...]   # (4, D): [norm_rgb, norm_depth, CA.norm_image, CA.norm_depth]
    t_b = t_ln_b_ref[...]
    cw = t_cw_ref[...]      # (6, D, D): [wq_img, wk_dep, wv_dep, wq_dep, wk_img, wv_img]
    cb = t_cb_ref[...]      # (6, 1, D)

    def ln(t, i):
        return _layernorm(t, t_g[i:i + 1], t_b[i:i + 1])

    def proj(t, i):
        return jnp.dot(t, cw[i], preferred_element_type=jnp.float32) + cb[i]

    rgb = ln(x[0:s], 0)                 # encoder norm_rgb
    dep = ln(x[s:], 1)                  # encoder norm_depth

    # image -> depth
    q_i = ln(proj(rgb, 0), 2)           # W_Q_image + CA.norm_image
    k_d = ln(proj(dep, 1), 3)           # W_K_depth + CA.norm_depth
    v_d = proj(dep, 2)                  # W_V_depth
    o_i2d = _attend(q_i, k_d, v_d, ca_scale)

    # depth -> image
    q_d = ln(proj(dep, 3), 3)           # W_Q_depth + CA.norm_depth
    k_i = ln(proj(rgb, 4), 2)           # W_K_image + CA.norm_image
    v_i = proj(rgb, 5)                  # W_V_image
    o_d2i = _attend(q_d, k_i, v_i, ca_scale)

    cat = jnp.concatenate([o_i2d, o_d2i], axis=-1)                 # (S, 2D)
    fused = jnp.dot(cat, t_wf_ref[...], preferred_element_type=jnp.float32)
    fused = fused + t_bf_ref[...]                                  # (S, D)

    pooled = jnp.mean(fused, axis=0, keepdims=True)                # (1, D)
    logits = jnp.dot(pooled, t_cls_w_ref[...], preferred_element_type=jnp.float32)
    o_ref[0] = logits + t_cls_b_ref[...]                           # (1, C)


# -------------------------------- wrapper -------------------------------------

def _const_spec(shape):
    nd = len(shape)
    return pl.BlockSpec(shape, lambda i, _nd=nd: (0,) * _nd)


def transformer_fake_detector(rgb, depth, params, *, n_layers, n_heads):
    b, s, d = rgb.shape
    lp = params["layers"]
    tp = params["tail"]
    f = lp["ff1_w"].shape[-1]
    c = tp["cls_w"].shape[-1]

    # rgb & depth share layer weights -> pack along sequence: one (2S, D) slab.
    x = jnp.concatenate([rgb, depth], axis=1)                      # (B, 2S, D)

    out = pl.pallas_call(
        functools.partial(_model_kernel, n_layers=n_layers,
                          n_heads=n_heads, seq_len=s),
        out_shape=jax.ShapeDtypeStruct((b, 1, c), jnp.float32),
        grid=(b,),
        in_specs=[
            pl.BlockSpec((1, 2 * s, d), lambda i: (i, 0, 0)),
            _const_spec((n_layers, 2, d)),        # ln gamma [ln1, ln2]
            _const_spec((n_layers, 2, d)),        # ln beta
            _const_spec((n_layers, d, 3 * d)),    # in_proj W
            _const_spec((n_layers, 1, 3 * d)),    # in_proj b
            _const_spec((n_layers, d, d)),        # out_proj W
            _const_spec((n_layers, 1, d)),        # out_proj b
            _const_spec((n_layers, d, f)),        # ffn1 W
            _const_spec((n_layers, 1, f)),        # ffn1 b
            _const_spec((n_layers, f, d)),        # ffn2 W
            _const_spec((n_layers, 1, d)),        # ffn2 b
            _const_spec((4, d)),                  # tail LN gamma
            _const_spec((4, d)),                  # tail LN beta
            _const_spec((6, d, d)),               # cross-attn projections
            _const_spec((6, 1, d)),               # cross-attn biases
            _const_spec((2 * d, d)),              # W_final
            _const_spec((1, d)),                  # b_final
            _const_spec((d, c)),                  # classifier W
            _const_spec((1, c)),                  # classifier b
        ],
        out_specs=pl.BlockSpec((1, 1, c), lambda i: (i, 0, 0)),
        compiler_params=pltpu.CompilerParams(
            dimension_semantics=("parallel",)),
    )(x,
      lp["ln_g"], lp["ln_b"], lp["in_w"], lp["in_b"],
      lp["out_w"], lp["out_b"], lp["ff1_w"], lp["ff1_b"],
      lp["ff2_w"], lp["ff2_b"],
      tp["ln_g"], tp["ln_b"], tp["cross_w"], tp["cross_b"],
      tp["wf"], tp["bf"], tp["cls_w"], tp["cls_b"])
    return out.reshape(b, c)


# ------------------------------ parameter init --------------------------------

def _xavier(key, fan_in, fan_out):
    a = math.sqrt(6.0 / (fan_in + fan_out))
    return jax.random.uniform(key, (fan_in, fan_out), jnp.float32, -a, a)


def init_params(key, d_model, n_layers, d_ff, num_classes):
    def lkeys(li):
        return jax.random.split(jax.random.fold_in(key, li), 4)

    def stack(fn):
        return jnp.stack([fn(li) for li in range(n_layers)], axis=0)

    layers = {
        "ln_g": jnp.ones((n_layers, 2, d_model), jnp.float32),
        "ln_b": jnp.zeros((n_layers, 2, d_model), jnp.float32),
        "in_w": stack(lambda li: _xavier(lkeys(li)[0], d_model, 3 * d_model)),
        "in_b": jnp.zeros((n_layers, 1, 3 * d_model), jnp.float32),
        "out_w": stack(lambda li: _xavier(lkeys(li)[1], d_model, d_model)),
        "out_b": jnp.zeros((n_layers, 1, d_model), jnp.float32),
        "ff1_w": stack(lambda li: _xavier(lkeys(li)[2], d_model, d_ff)),
        "ff1_b": jnp.zeros((n_layers, 1, d_ff), jnp.float32),
        "ff2_w": stack(lambda li: _xavier(lkeys(li)[3], d_ff, d_model)),
        "ff2_b": jnp.zeros((n_layers, 1, d_model), jnp.float32),
    }
    kc = jax.random.fold_in(key, 1000)
    kcs = jax.random.split(kc, 8)
    tail = {
        # LN order: [norm_rgb, norm_depth, CA.norm_image, CA.norm_depth]
        "ln_g": jnp.ones((4, d_model), jnp.float32),
        "ln_b": jnp.zeros((4, d_model), jnp.float32),
        # cross_w order: [wq_img, wk_dep, wv_dep, wq_dep, wk_img, wv_img]
        "cross_w": jnp.stack([_xavier(kcs[i], d_model, d_model)
                              for i in range(6)], axis=0),
        "cross_b": jnp.zeros((6, 1, d_model), jnp.float32),
        "wf": _xavier(kcs[6], 2 * d_model, d_model),
        "bf": jnp.zeros((1, d_model), jnp.float32),
        "cls_w": _xavier(kcs[7], d_model, num_classes),
        "cls_b": jnp.zeros((1, num_classes), jnp.float32),
    }
    return {"layers": layers, "tail": tail}


# ----------------------------------- main --------------------------------------

if __name__ == "__main__":
    d_model, n_heads, n_layers, d_ff, num_classes = 32, 4, 2, 64, 2
    B, S = 2, 8

    key = jax.random.PRNGKey(0)
    k_rgb, k_dep, k_par = jax.random.split(key, 3)
    rgb_batch = jax.random.normal(k_rgb, (B, S, d_model), jnp.float32)
    depth_batch = jax.random.normal(k_dep, (B, S, d_model), jnp.float32)

    params = init_params(k_par, d_model, n_layers, d_ff, num_classes)

    fwd = jax.jit(functools.partial(transformer_fake_detector,
                                    n_layers=n_layers, n_heads=n_heads))
    logits = jax.block_until_ready(fwd(rgb_batch, depth_batch, params))

    assert logits.shape == (B, num_classes)
    assert bool(jnp.all(jnp.isfinite(logits)))
    print("KERNEL_OK")
</pallas_src>

<mosaic_0001>
module attributes {stable_mosaic.version = 11 : i64} {
  func.func @_model_kernel(%arg0: i32, %arg1: memref<1x16x32xf32, #tpu.memory_space<vmem>>, %arg2: memref<2x2x32xf32, #tpu.memory_space<vmem>>, %arg3: memref<2x2x32xf32, #tpu.memory_space<vmem>>, %arg4: memref<2x32x96xf32, #tpu.memory_space<vmem>>, %arg5: memref<2x1x96xf32, #tpu.memory_space<vmem>>, %arg6: memref<2x32x32xf32, #tpu.memory_space<vmem>>, %arg7: memref<2x1x32xf32, #tpu.memory_space<vmem>>, %arg8: memref<2x32x64xf32, #tpu.memory_space<vmem>>, %arg9: memref<2x1x64xf32, #tpu.memory_space<vmem>>, %arg10: memref<2x64x32xf32, #tpu.memory_space<vmem>>, %arg11: memref<2x1x32xf32, #tpu.memory_space<vmem>>, %arg12: memref<4x32xf32, #tpu.memory_space<vmem>>, %arg13: memref<4x32xf32, #tpu.memory_space<vmem>>, %arg14: memref<6x32x32xf32, #tpu.memory_space<vmem>>, %arg15: memref<6x1x32xf32, #tpu.memory_space<vmem>>, %arg16: memref<64x32xf32, #tpu.memory_space<vmem>>, %arg17: memref<1x32xf32, #tpu.memory_space<vmem>>, %arg18: memref<32x2xf32, #tpu.memory_space<vmem>>, %arg19: memref<1x2xf32, #tpu.memory_space<vmem>>, %arg20: memref<1x1x2xf32, #tpu.memory_space<vmem>>) attributes {dimension_semantics = [#tpu.dimension_semantics<parallel>], iteration_bounds = array<i64: 2>, scalar_prefetch = 0 : i64, scratch_operands = 0 : i64, tpu.core_type = #tpu.core_type<tc>, window_params = [{transform_indices = @transform_0, window_bounds = array<i64: 1, 16, 32>}, {pipeline_mode = #tpu.pipeline_mode<synchronous>, transform_indices = @transform_1, window_bounds = array<i64: 2, 2, 32>}, {pipeline_mode = #tpu.pipeline_mode<synchronous>, transform_indices = @transform_2, window_bounds = array<i64: 2, 2, 32>}, {pipeline_mode = #tpu.pipeline_mode<synchronous>, transform_indices = @transform_3, window_bounds = array<i64: 2, 32, 96>}, {pipeline_mode = #tpu.pipeline_mode<synchronous>, transform_indices = @transform_4, window_bounds = array<i64: 2, 1, 96>}, {pipeline_mode = #tpu.pipeline_mode<synchronous>, transform_indices = @transform_5, window_bounds = array<i64: 2, 32, 32>}, {pipeline_mode = #tpu.pipeline_mode<synchronous>, transform_indices = @transform_6, window_bounds = array<i64: 2, 1, 32>}, {pipeline_mode = #tpu.pipeline_mode<synchronous>, transform_indices = @transform_7, window_bounds = array<i64: 2, 32, 64>}, {pipeline_mode = #tpu.pipeline_mode<synchronous>, transform_indices = @transform_8, window_bounds = array<i64: 2, 1, 64>}, {pipeline_mode = #tpu.pipeline_mode<synchronous>, transform_indices = @transform_9, window_bounds = array<i64: 2, 64, 32>}, {pipeline_mode = #tpu.pipeline_mode<synchronous>, transform_indices = @transform_10, window_bounds = array<i64: 2, 1, 32>}, {pipeline_mode = #tpu.pipeline_mode<synchronous>, transform_indices = @transform_11, window_bounds = array<i64: 4, 32>}, {pipeline_mode = #tpu.pipeline_mode<synchronous>, transform_indices = @transform_12, window_bounds = array<i64: 4, 32>}, {pipeline_mode = #tpu.pipeline_mode<synchronous>, transform_indices = @transform_13, window_bounds = array<i64: 6, 32, 32>}, {pipeline_mode = #tpu.pipeline_mode<synchronous>, transform_indices = @transform_14, window_bounds = array<i64: 6, 1, 32>}, {pipeline_mode = #tpu.pipeline_mode<synchronous>, transform_indices = @transform_15, window_bounds = array<i64: 64, 32>}, {pipeline_mode = #tpu.pipeline_mode<synchronous>, transform_indices = @transform_16, window_bounds = array<i64: 1, 32>}, {pipeline_mode = #tpu.pipeline_mode<synchronous>, transform_indices = @transform_17, window_bounds = array<i64: 32, 2>}, {pipeline_mode = #tpu.pipeline_mode<synchronous>, transform_indices = @transform_18, window_bounds = array<i64: 1, 2>}, {transform_indices = @transform_19, window_bounds = array<i64: 1, 1, 2>}]} {
    %c0 = arith.constant 0 : index
    %c0_0 = arith.constant 0 : index
    %c0_1 = arith.constant 0 : index
    %0 = vector.load %arg1[%c0, %c0_0, %c0_1] : memref<1x16x32xf32, #tpu.memory_space<vmem>>, vector<1x16x32xf32>
    %1 = vector.shape_cast %0 : vector<1x16x32xf32> to vector<16x32xf32>
    %c0_2 = arith.constant 0 : index
    %c0_3 = arith.constant 0 : index
    %c0_4 = arith.constant 0 : index
    %2 = vector.load %arg2[%c0_2, %c0_3, %c0_4] : memref<2x2x32xf32, #tpu.memory_space<vmem>>, vector<1x2x32xf32>
    %3 = vector.shape_cast %2 : vector<1x2x32xf32> to vector<2x32xf32>
    %c0_5 = arith.constant 0 : index
    %c0_6 = arith.constant 0 : index
    %c0_7 = arith.constant 0 : index
    %4 = vector.load %arg3[%c0_5, %c0_6, %c0_7] : memref<2x2x32xf32, #tpu.memory_space<vmem>>, vector<1x2x32xf32>
    %5 = vector.shape_cast %4 : vector<1x2x32xf32> to vector<2x32xf32>
    %6 = vector.extract_strided_slice %3 {offsets = [0, 0], sizes = [1, 32], strides = [1, 1]} : vector<2x32xf32> to vector<1x32xf32>
    %7 = vector.extract_strided_slice %5 {offsets = [0, 0], sizes = [1, 32], strides = [1, 1]} : vector<2x32xf32> to vector<1x32xf32>
    %cst = arith.constant dense<0.000000e+00> : vector<16xf32>
    %8 = vector.multi_reduction <add>, %1, %cst [1] : vector<16x32xf32> to vector<16xf32>
    %9 = vector.shape_cast %8 : vector<16xf32> to vector<16x1xf32>
    %cst_8 = arith.constant 3.200000e+01 : f32
    %10 = vector.broadcast %cst_8 : f32 to vector<16x1xf32>
    %11 = arith.divf %9, %10 : vector<16x1xf32>
    %12 = vector.broadcast %11 : vector<16x1xf32> to vector<16x32xf32>
    %13 = arith.subf %1, %12 : vector<16x32xf32>
    %14 = arith.mulf %13, %13 : vector<16x32xf32>
    %cst_9 = arith.constant dense<0.000000e+00> : vector<16xf32>
    %15 = vector.multi_reduction <add>, %14, %cst_9 [1] : vector<16x32xf32> to vector<16xf32>
    %16 = vector.shape_cast %15 : vector<16xf32> to vector<16x1xf32>
    %cst_10 = arith.constant 3.200000e+01 : f32
    %17 = vector.broadcast %cst_10 : f32 to vector<16x1xf32>
    %18 = arith.divf %16, %17 : vector<16x1xf32>
    %cst_11 = arith.constant 9.99999974E-6 : f32
    %19 = vector.broadcast %cst_11 : f32 to vector<16x1xf32>
    %20 = arith.addf %18, %19 : vector<16x1xf32>
    %21 = math.rsqrt %20 : vector<16x1xf32>
    %22 = vector.broadcast %21 : vector<16x1xf32> to vector<16x32xf32>
    %23 = arith.mulf %13, %22 : vector<16x32xf32>
    %24 = vector.broadcast %6 : vector<1x32xf32> to vector<16x32xf32>
    %25 = arith.mulf %23, %24 : vector<16x32xf32>
    %26 = vector.broadcast %7 : vector<1x32xf32> to vector<16x32xf32>
    %27 = arith.addf %25, %26 : vector<16x32xf32>
    %c0_12 = arith.constant 0 : index
    %c0_13 = arith.constant 0 : index
    %c0_14 = arith.constant 0 : index
    %28 = vector.load %arg4[%c0_12, %c0_13, %c0_14] : memref<2x32x96xf32, #tpu.memory_space<vmem>>, vector<1x32x96xf32>
    %29 = vector.shape_cast %28 : vector<1x32x96xf32> to vector<32x96xf32>
    %cst_15 = arith.constant dense<0.000000e+00> : vector<16x96xf32>
    %30 = tpu.matmul %27, %29, %cst_15 {dimension_numbers = #tpu.dot_dimension_numbers<[1], [0], [0], [1], [0, 0, 1, 1], [], []>} : vector<16x32xf32>, vector<32x96xf32>, vector<16x96xf32> -> vector<16x96xf32>
    %c0_16 = arith.constant 0 : index
    %c0_17 = arith.constant 0 : index
    %c0_18 = arith.constant 0 : index
    %31 = vector.load %arg5[%c0_16, %c0_17, %c0_18] : memref<2x1x96xf32, #tpu.memory_space<vmem>>, vector<1x1x96xf32>
    %32 = vector.shape_cast %31 : vector<1x1x96xf32> to vector<1x96xf32>
    %33 = vector.broadcast %32 : vector<1x96xf32> to vector<16x96xf32>
    %34 = arith.addf %30, %33 : vector<16x96xf32>
    %35 = vector.extract_strided_slice %34 {offsets = [0, 0], sizes = [16, 32], strides = [1, 1]} : vector<16x96xf32> to vector<16x32xf32>
    %36 = vector.extract_strided_slice %34 {offsets = [0, 32], sizes = [16, 32], strides = [1, 1]} : vector<16x96xf32> to vector<16x32xf32>
    %37 = vector.extract_strided_slice %34 {offsets = [0, 64], sizes = [16, 32], strides = [1, 1]} : vector<16x96xf32> to vector<16x32xf32>
    %38 = vector.extract_strided_slice %35 {offsets = [0, 0], sizes = [8, 8], strides = [1, 1]} : vector<16x32xf32> to vector<8x8xf32>
    %39 = vector.extract_strided_slice %36 {offsets = [0, 0], sizes = [8, 8], strides = [1, 1]} : vector<16x32xf32> to vector<8x8xf32>
    %40 = vector.extract_strided_slice %37 {offsets = [0, 0], sizes = [8, 8], strides = [1, 1]} : vector<16x32xf32> to vector<8x8xf32>
    %cst_19 = arith.constant dense<0.000000e+00> : vector<8x8xf32>
    %41 = tpu.matmul %38, %39, %cst_19 {dimension_numbers = #tpu.dot_dimension_numbers<[1], [1], [0], [0], [0, 0, 1, 0], [], []>} : vector<8x8xf32>, vector<8x8xf32>, vector<8x8xf32> -> vector<8x8xf32>
    %cst_20 = arith.constant 0.353553385 : f32
    %42 = vector.broadcast %cst_20 : f32 to vector<8x8xf32>
    %43 = arith.mulf %41, %42 : vector<8x8xf32>
    %cst_21 = arith.constant dense<0xFF800000> : vector<8xf32>
    %44 = vector.multi_reduction <maximumf>, %43, %cst_21 [1] : vector<8x8xf32> to vector<8xf32>
    %45 = vector.shape_cast %44 : vector<8xf32> to vector<8x1xf32>
    %46 = vector.broadcast %45 : vector<8x1xf32> to vector<8x8xf32>
    %47 = arith.subf %43, %46 : vector<8x8xf32>
    %48 = math.exp %47 : vector<8x8xf32>
    %cst_22 = arith.constant dense<0.000000e+00> : vector<8xf32>
    %49 = vector.multi_reduction <add>, %48, %cst_22 [1] : vector<8x8xf32> to vector<8xf32>
    %50 = vector.shape_cast %49 : vector<8xf32> to vector<8x1xf32>
    %51 = vector.broadcast %50 : vector<8x1xf32> to vector<8x8xf32>
    %52 = arith.divf %48, %51 : vector<8x8xf32>
    %cst_23 = arith.constant dense<0.000000e+00> : vector<8x8xf32>
    %53 = tpu.matmul %52, %40, %cst_23 {dimension_numbers = #tpu.dot_dimension_numbers<[1], [0], [0], [1], [0, 0, 1, 1], [], []>} : vector<8x8xf32>, vector<8x8xf32>, vector<8x8xf32> -> vector<8x8xf32>
    %54 = vector.extract_strided_slice %35 {offsets = [8, 0], sizes = [8, 8], strides = [1, 1]} : vector<16x32xf32> to vector<8x8xf32>
    %55 = vector.extract_strided_slice %36 {offsets = [8, 0], sizes = [8, 8], strides = [1, 1]} : vector<16x32xf32> to vector<8x8xf32>
    %56 = vector.extract_strided_slice %37 {offsets = [8, 0], sizes = [8, 8], strides = [1, 1]} : vector<16x32xf32> to vector<8x8xf32>
    %cst_24 = arith.constant dense<0.000000e+00> : vector<8x8xf32>
    %57 = tpu.matmul %54, %55, %cst_24 {dimension_numbers = #tpu.dot_dimension_numbers<[1], [1], [0], [0], [0, 0, 1, 0], [], []>} : vector<8x8xf32>, vector<8x8xf32>, vector<8x8xf32> -> vector<8x8xf32>
    %cst_25 = arith.constant 0.353553385 : f32
    %58 = vector.broadcast %cst_25 : f32 to vector<8x8xf32>
    %59 = arith.mulf %57, %58 : vector<8x8xf32>
    %cst_26 = arith.constant dense<0xFF800000> : vector<8xf32>
    %60 = vector.multi_reduction <maximumf>, %59, %cst_26 [1] : vector<8x8xf32> to vector<8xf32>
    %61 = vector.shape_cast %60 : vector<8xf32> to vector<8x1xf32>
    %62 = vector.broadcast %61 : vector<8x1xf32> to vector<8x8xf32>
    %63 = arith.subf %59, %62 : vector<8x8xf32>
    %64 = math.exp %63 : vector<8x8xf32>
    %cst_27 = arith.constant dense<0.000000e+00> : vector<8xf32>
    %65 = vector.multi_reduction <add>, %64, %cst_27 [1] : vector<8x8xf32> to vector<8xf32>
    %66 = vector.shape_cast %65 : vector<8xf32> to vector<8x1xf32>
    %67 = vector.broadcast %66 : vector<8x1xf32> to vector<8x8xf32>
    %68 = arith.divf %64, %67 : vector<8x8xf32>
    %cst_28 = arith.constant dense<0.000000e+00> : vector<8x8xf32>
    %69 = tpu.matmul %68, %56, %cst_28 {dimension_numbers = #tpu.dot_dimension_numbers<[1], [0], [0], [1], [0, 0, 1, 1], [], []>} : vector<8x8xf32>, vector<8x8xf32>, vector<8x8xf32> -> vector<8x8xf32>
    %70 = tpu.concatenate %53, %69 in 0 : vector<8x8xf32>, vector<8x8xf32> -> vector<16x8xf32>
    %71 = vector.extract_strided_slice %35 {offsets = [0, 8], sizes = [8, 8], strides = [1, 1]} : vector<16x32xf32> to vector<8x8xf32>
    %72 = vector.extract_strided_slice %36 {offsets = [0, 8], sizes = [8, 8], strides = [1, 1]} : vector<16x32xf32> to vector<8x8xf32>
    %73 = vector.extract_strided_slice %37 {offsets = [0, 8], sizes = [8, 8], strides = [1, 1]} : vector<16x32xf32> to vector<8x8xf32>
    %cst_29 = arith.constant dense<0.000000e+00> : vector<8x8xf32>
    %74 = tpu.matmul %71, %72, %cst_29 {dimension_numbers = #tpu.dot_dimension_numbers<[1], [1], [0], [0], [0, 0, 1, 0], [], []>} : vector<8x8xf32>, vector<8x8xf32>, vector<8x8xf32> -> vector<8x8xf32>
    %cst_30 = arith.constant 0.353553385 : f32
    %75 = vector.broadcast %cst_30 : f32 to vector<8x8xf32>
    %76 = arith.mulf %74, %75 : vector<8x8xf32>
    %cst_31 = arith.constant dense<0xFF800000> : vector<8xf32>
    %77 = vector.multi_reduction <maximumf>, %76, %cst_31 [1] : vector<8x8xf32> to vector<8xf32>
    %78 = vector.shape_cast %77 : vector<8xf32> to vector<8x1xf32>
    %79 = vector.broadcast %78 : vector<8x1xf32> to vector<8x8xf32>
    %80 = arith.subf %76, %79 : vector<8x8xf32>
    %81 = math.exp %80 : vector<8x8xf32>
    %cst_32 = arith.constant dense<0.000000e+00> : vector<8xf32>
    %82 = vector.multi_reduction <add>, %81, %cst_32 [1] : vector<8x8xf32> to vector<8xf32>
    %83 = vector.shape_cast %82 : vector<8xf32> to vector<8x1xf32>
    %84 = vector.broadcast %83 : vector<8x1xf32> to vector<8x8xf32>
    %85 = arith.divf %81, %84 : vector<8x8xf32>
    %cst_33 = arith.constant dense<0.000000e+00> : vector<8x8xf32>
    %86 = tpu.matmul %85, %73, %cst_33 {dimension_numbers = #tpu.dot_dimension_numbers<[1], [0], [0], [1], [0, 0, 1, 1], [], []>} : vector<8x8xf32>, vector<8x8xf32>, vector<8x8xf32> -> vector<8x8xf32>
    %87 = vector.extract_strided_slice %35 {offsets = [8, 8], sizes = [8, 8], strides = [1, 1]} : vector<16x32xf32> to vector<8x8xf32>
    %88 = vector.extract_strided_slice %36 {offsets = [8, 8], sizes = [8, 8], strides = [1, 1]} : vector<16x32xf32> to vector<8x8xf32>
    %89 = vector.extract_strided_slice %37 {offsets = [8, 8], sizes = [8, 8], strides = [1, 1]} : vector<16x32xf32> to vector<8x8xf32>
    %cst_34 = arith.constant dense<0.000000e+00> : vector<8x8xf32>
    %90 = tpu.matmul %87, %88, %cst_34 {dimension_numbers = #tpu.dot_dimension_numbers<[1], [1], [0], [0], [0, 0, 1, 0], [], []>} : vector<8x8xf32>, vector<8x8xf32>, vector<8x8xf32> -> vector<8x8xf32>
    %cst_35 = arith.constant 0.353553385 : f32
    %91 = vector.broadcast %cst_35 : f32 to vector<8x8xf32>
    %92 = arith.mulf %90, %91 : vector<8x8xf32>
    %cst_36 = arith.constant dense<0xFF800000> : vector<8xf32>
    %93 = vector.multi_reduction <maximumf>, %92, %cst_36 [1] : vector<8x8xf32> to vector<8xf32>
    %94 = vector.shape_cast %93 : vector<8xf32> to vector<8x1xf32>
    %95 = vector.broadcast %94 : vector<8x1xf32> to vector<8x8xf32>
    %96 = arith.subf %92, %95 : vector<8x8xf32>
    %97 = math.exp %96 : vector<8x8xf32>
    %cst_37 = arith.constant dense<0.000000e+00> : vector<8xf32>
    %98 = vector.multi_reduction <add>, %97, %cst_37 [1] : vector<8x8xf32> to vector<8xf32>
    %99 = vector.shape_cast %98 : vector<8xf32> to vector<8x1xf32>
    %100 = vector.broadcast %99 : vector<8x1xf32> to vector<8x8xf32>
    %101 = arith.divf %97, %100 : vector<8x8xf32>
    %cst_38 = arith.constant dense<0.000000e+00> : vector<8x8xf32>
    %102 = tpu.matmul %101, %89, %cst_38 {dimension_numbers = #tpu.dot_dimension_numbers<[1], [0], [0], [1], [0, 0, 1, 1], [], []>} : vector<8x8xf32>, vector<8x8xf32>, vector<8x8xf32> -> vector<8x8xf32>
    %103 = tpu.concatenate %86, %102 in 0 : vector<8x8xf32>, vector<8x8xf32> -> vector<16x8xf32>
    %104 = vector.extract_strided_slice %35 {offsets = [0, 16], sizes = [8, 8], strides = [1, 1]} : vector<16x32xf32> to vector<8x8xf32>
    %105 = vector.extract_strided_slice %36 {offsets = [0, 16], sizes = [8, 8], strides = [1, 1]} : vector<16x32xf32> to vector<8x8xf32>
    %106 = vector.extract_strided_slice %37 {offsets = [0, 16], sizes = [8, 8], strides = [1, 1]} : vector<16x32xf32> to vector<8x8xf32>
    %cst_39 = arith.constant dense<0.000000e+00> : vector<8x8xf32>
    %107 = tpu.matmul %104, %105, %cst_39 {dimension_numbers = #tpu.dot_dimension_numbers<[1], [1], [0], [0], [0, 0, 1, 0], [], []>} : vector<8x8xf32>, vector<8x8xf32>, vector<8x8xf32> -> vector<8x8xf32>
    %cst_40 = arith.constant 0.353553385 : f32
    %108 = vector.broadcast %cst_40 : f32 to vector<8x8xf32>
    %109 = arith.mulf %107, %108 : vector<8x8xf32>
    %cst_41 = arith.constant dense<0xFF800000> : vector<8xf32>
    %110 = vector.multi_reduction <maximumf>, %109, %cst_41 [1] : vector<8x8xf32> to vector<8xf32>
    %111 = vector.shape_cast %110 : vector<8xf32> to vector<8x1xf32>
    %112 = vector.broadcast %111 : vector<8x1xf32> to vector<8x8xf32>
    %113 = arith.subf %109, %112 : vector<8x8xf32>
    %114 = math.exp %113 : vector<8x8xf32>
    %cst_42 = arith.constant dense<0.000000e+00> : vector<8xf32>
    %115 = vector.multi_reduction <add>, %114, %cst_42 [1] : vector<8x8xf32> to vector<8xf32>
    %116 = vector.shape_cast %115 : vector<8xf32> to vector<8x1xf32>
    %117 = vector.broadcast %116 : vector<8x1xf32> to vector<8x8xf32>
    %118 = arith.divf %114, %117 : vector<8x8xf32>
    %cst_43 = arith.constant dense<0.000000e+00> : vector<8x8xf32>
    %119 = tpu.matmul %118, %106, %cst_43 {dimension_numbers = #tpu.dot_dimension_numbers<[1], [0], [0], [1], [0, 0, 1, 1], [], []>} : vector<8x8xf32>, vector<8x8xf32>, vector<8x8xf32> -> vector<8x8xf32>
    %120 = vector.extract_strided_slice %35 {offsets = [8, 16], sizes = [8, 8], strides = [1, 1]} : vector<16x32xf32> to vector<8x8xf32>
    %121 = vector.extract_strided_slice %36 {offsets = [8, 16], sizes = [8, 8], strides = [1, 1]} : vector<16x32xf32> to vector<8x8xf32>
    %122 = vector.extract_strided_slice %37 {offsets = [8, 16], sizes = [8, 8], strides = [1, 1]} : vector<16x32xf32> to vector<8x8xf32>
    %cst_44 = arith.constant dense<0.000000e+00> : vector<8x8xf32>
    %123 = tpu.matmul %120, %121, %cst_44 {dimension_numbers = #tpu.dot_dimension_numbers<[1], [1], [0], [0], [0, 0, 1, 0], [], []>} : vector<8x8xf32>, vector<8x8xf32>, vector<8x8xf32> -> vector<8x8xf32>
    %cst_45 = arith.constant 0.353553385 : f32
    %124 = vector.broadcast %cst_45 : f32 to vector<8x8xf32>
    %125 = arith.mulf %123, %124 : vector<8x8xf32>
    %cst_46 = arith.constant dense<0xFF800000> : vector<8xf32>
    %126 = vector.multi_reduction <maximumf>, %125, %cst_46 [1] : vector<8x8xf32> to vector<8xf32>
    %127 = vector.shape_cast %126 : vector<8xf32> to vector<8x1xf32>
    %128 = vector.broadcast %127 : vector<8x1xf32> to vector<8x8xf32>
    %129 = arith.subf %125, %128 : vector<8x8xf32>
    %130 = math.exp %129 : vector<8x8xf32>
    %cst_47 = arith.constant dense<0.000000e+00> : vector<8xf32>
    %131 = vector.multi_reduction <add>, %130, %cst_47 [1] : vector<8x8xf32> to vector<8xf32>
    %132 = vector.shape_cast %131 : vector<8xf32> to vector<8x1xf32>
    %133 = vector.broadcast %132 : vector<8x1xf32> to vector<8x8xf32>
    %134 = arith.divf %130, %133 : vector<8x8xf32>
    %cst_48 = arith.constant dense<0.000000e+00> : vector<8x8xf32>
    %135 = tpu.matmul %134, %122, %cst_48 {dimension_numbers = #tpu.dot_dimension_numbers<[1], [0], [0], [1], [0, 0, 1, 1], [], []>} : vector<8x8xf32>, vector<8x8xf32>, vector<8x8xf32> -> vector<8x8xf32>
    %136 = tpu.concatenate %119, %135 in 0 : vector<8x8xf32>, vector<8x8xf32> -> vector<16x8xf32>
    %137 = vector.extract_strided_slice %35 {offsets = [0, 24], sizes = [8, 8], strides = [1, 1]} : vector<16x32xf32> to vector<8x8xf32>
    %138 = vector.extract_strided_slice %36 {offsets = [0, 24], sizes = [8, 8], strides = [1, 1]} : vector<16x32xf32> to vector<8x8xf32>
    %139 = vector.extract_strided_slice %37 {offsets = [0, 24], sizes = [8, 8], strides = [1, 1]} : vector<16x32xf32> to vector<8x8xf32>
    %cst_49 = arith.constant dense<0.000000e+00> : vector<8x8xf32>
    %140 = tpu.matmul %137, %138, %cst_49 {dimension_numbers = #tpu.dot_dimension_numbers<[1], [1], [0], [0], [0, 0, 1, 0], [], []>} : vector<8x8xf32>, vector<8x8xf32>, vector<8x8xf32> -> vector<8x8xf32>
    %cst_50 = arith.constant 0.353553385 : f32
    %141 = vector.broadcast %cst_50 : f32 to vector<8x8xf32>
    %142 = arith.mulf %140, %141 : vector<8x8xf32>
    %cst_51 = arith.constant dense<0xFF800000> : vector<8xf32>
    %143 = vector.multi_reduction <maximumf>, %142, %cst_51 [1] : vector<8x8xf32> to vector<8xf32>
    %144 = vector.shape_cast %143 : vector<8xf32> to vector<8x1xf32>
    %145 = vector.broadcast %144 : vector<8x1xf32> to vector<8x8xf32>
    %146 = arith.subf %142, %145 : vector<8x8xf32>
    %147 = math.exp %146 : vector<8x8xf32>
    %cst_52 = arith.constant dense<0.000000e+00> : vector<8xf32>
    %148 = vector.multi_reduction <add>, %147, %cst_52 [1] : vector<8x8xf32> to vector<8xf32>
    %149 = vector.shape_cast %148 : vector<8xf32> to vector<8x1xf32>
    %150 = vector.broadcast %149 : vector<8x1xf32> to vector<8x8xf32>
    %151 = arith.divf %147, %150 : vector<8x8xf32>
    %cst_53 = arith.constant dense<0.000000e+00> : vector<8x8xf32>
    %152 = tpu.matmul %151, %139, %cst_53 {dimension_numbers = #tpu.dot_dimension_numbers<[1], [0], [0], [1], [0, 0, 1, 1], [], []>} : vector<8x8xf32>, vector<8x8xf32>, vector<8x8xf32> -> vector<8x8xf32>
    %153 = vector.extract_strided_slice %35 {offsets = [8, 24], sizes = [8, 8], strides = [1, 1]} : vector<16x32xf32> to vector<8x8xf32>
    %154 = vector.extract_strided_slice %36 {offsets = [8, 24], sizes = [8, 8], strides = [1, 1]} : vector<16x32xf32> to vector<8x8xf32>
    %155 = vector.extract_strided_slice %37 {offsets = [8, 24], sizes = [8, 8], strides = [1, 1]} : vector<16x32xf32> to vector<8x8xf32>
    %cst_54 = arith.constant dense<0.000000e+00> : vector<8x8xf32>
    %156 = tpu.matmul %153, %154, %cst_54 {dimension_numbers = #tpu.dot_dimension_numbers<[1], [1], [0], [0], [0, 0, 1, 0], [], []>} : vector<8x8xf32>, vector<8x8xf32>, vector<8x8xf32> -> vector<8x8xf32>
    %cst_55 = arith.constant 0.353553385 : f32
    %157 = vector.broadcast %cst_55 : f32 to vector<8x8xf32>
    %158 = arith.mulf %156, %157 : vector<8x8xf32>
    %cst_56 = arith.constant dense<0xFF800000> : vector<8xf32>
    %159 = vector.multi_reduction <maximumf>, %158, %cst_56 [1] : vector<8x8xf32> to vector<8xf32>
    %160 = vector.shape_cast %159 : vector<8xf32> to vector<8x1xf32>
    %161 = vector.broadcast %160 : vector<8x1xf32> to vector<8x8xf32>
    %162 = arith.subf %158, %161 : vector<8x8xf32>
    %163 = math.exp %162 : vector<8x8xf32>
    %cst_57 = arith.constant dense<0.000000e+00> : vector<8xf32>
    %164 = vector.multi_reduction <add>, %163, %cst_57 [1] : vector<8x8xf32> to vector<8xf32>
    %165 = vector.shape_cast %164 : vector<8xf32> to vector<8x1xf32>
    %166 = vector.broadcast %165 : vector<8x1xf32> to vector<8x8xf32>
    %167 = arith.divf %163, %166 : vector<8x8xf32>
    %cst_58 = arith.constant dense<0.000000e+00> : vector<8x8xf32>
    %168 = tpu.matmul %167, %155, %cst_58 {dimension_numbers = #tpu.dot_dimension_numbers<[1], [0], [0], [1], [0, 0, 1, 1], [], []>} : vector<8x8xf32>, vector<8x8xf32>, vector<8x8xf32> -> vector<8x8xf32>
    %169 = tpu.concatenate %152, %168 in 0 : vector<8x8xf32>, vector<8x8xf32> -> vector<16x8xf32>
    %170 = tpu.concatenate %70, %103, %136, %169 in 1 : vector<16x8xf32>, vector<16x8xf32>, vector<16x8xf32>, vector<16x8xf32> -> vector<16x32xf32>
    %c0_59 = arith.constant 0 : index
    %c0_60 = arith.constant 0 : index
    %c0_61 = arith.constant 0 : index
    %171 = vector.load %arg6[%c0_59, %c0_60, %c0_61] : memref<2x32x32xf32, #tpu.memory_space<vmem>>, vector<1x32x32xf32>
    %172 = vector.shape_cast %171 : vector<1x32x32xf32> to vector<32x32xf32>
    %cst_62 = arith.constant dense<0.000000e+00> : vector<16x32xf32>
    %173 = tpu.matmul %170, %172, %cst_62 {dimension_numbers = #tpu.dot_dimension_numbers<[1], [0], [0], [1], [0, 0, 1, 1], [], []>} : vector<16x32xf32>, vector<32x32xf32>, vector<16x32xf32> -> vector<16x32xf32>
    %c0_63 = arith.constant 0 : index
    %c0_64 = arith.constant 0 : index
    %c0_65 = arith.constant 0 : index
    %174 = vector.load %arg7[%c0_63, %c0_64, %c0_65] : memref<2x1x32xf32, #tpu.memory_space<vmem>>, vector<1x1x32xf32>
    %175 = vector.shape_cast %174 : vector<1x1x32xf32> to vector<1x32xf32>
    %176 = vector.broadcast %175 : vector<1x32xf32> to vector<16x32xf32>
    %177 = arith.addf %173, %176 : vector<16x32xf32>
    %178 = vector.extract_strided_slice %3 {offsets = [1, 0], sizes = [1, 32], strides = [1, 1]} : vector<2x32xf32> to vector<1x32xf32>
    %179 = vector.extract_strided_slice %5 {offsets = [1, 0], sizes = [1, 32], strides = [1, 1]} : vector<2x32xf32> to vector<1x32xf32>
    %cst_66 = arith.constant dense<0.000000e+00> : vector<16xf32>
    %180 = vector.multi_reduction <add>, %177, %cst_66 [1] : vector<16x32xf32> to vector<16xf32>
    %181 = vector.shape_cast %180 : vector<16xf32> to vector<16x1xf32>
    %cst_67 = arith.constant 3.200000e+01 : f32
    %182 = vector.broadcast %cst_67 : f32 to vector<16x1xf32>
    %183 = arith.divf %181, %182 : vector<16x1xf32>
    %184 = vector.broadcast %183 : vector<16x1xf32> to vector<16x32xf32>
    %185 = arith.subf %177, %184 : vector<16x32xf32>
    %186 = arith.mulf %185, %185 : vector<16x32xf32>
    %cst_68 = arith.constant dense<0.000000e+00> : vector<16xf32>
    %187 = vector.multi_reduction <add>, %186, %cst_68 [1] : vector<16x32xf32> to vector<16xf32>
    %188 = vector.shape_cast %187 : vector<16xf32> to vector<16x1xf32>
    %cst_69 = arith.constant 3.200000e+01 : f32
    %189 = vector.broadcast %cst_69 : f32 to vector<16x1xf32>
    %190 = arith.divf %188, %189 : vector<16x1xf32>
    %cst_70 = arith.constant 9.99999974E-6 : f32
    %191 = vector.broadcast %cst_70 : f32 to vector<16x1xf32>
    %192 = arith.addf %190, %191 : vector<16x1xf32>
    %193 = math.rsqrt %192 : vector<16x1xf32>
    %194 = vector.broadcast %193 : vector<16x1xf32> to vector<16x32xf32>
    %195 = arith.mulf %185, %194 : vector<16x32xf32>
    %196 = vector.broadcast %178 : vector<1x32xf32> to vector<16x32xf32>
    %197 = arith.mulf %195, %196 : vector<16x32xf32>
    %198 = vector.broadcast %179 : vector<1x32xf32> to vector<16x32xf32>
    %199 = arith.addf %197, %198 : vector<16x32xf32>
    %c0_71 = arith.constant 0 : index
    %c0_72 = arith.constant 0 : index
    %c0_73 = arith.constant 0 : index
    %200 = vector.load %arg8[%c0_71, %c0_72, %c0_73] : memref<2x32x64xf32, #tpu.memory_space<vmem>>, vector<1x32x64xf32>
    %201 = vector.shape_cast %200 : vector<1x32x64xf32> to vector<32x64xf32>
    %cst_74 = arith.constant dense<0.000000e+00> : vector<16x64xf32>
    %202 = tpu.matmul %199, %201, %cst_74 {dimension_numbers = #tpu.dot_dimension_numbers<[1], [0], [0], [1], [0, 0, 1, 1], [], []>} : vector<16x32xf32>, vector<32x64xf32>, vector<16x64xf32> -> vector<16x64xf32>
    %c0_75 = arith.constant 0 : index
    %c0_76 = arith.constant 0 : index
    %c0_77 = arith.constant 0 : index
    %203 = vector.load %arg9[%c0_75, %c0_76, %c0_77] : memref<2x1x64xf32, #tpu.memory_space<vmem>>, vector<1x1x64xf32>
    %204 = vector.shape_cast %203 : vector<1x1x64xf32> to vector<1x64xf32>
    %205 = vector.broadcast %204 : vector<1x64xf32> to vector<16x64xf32>
    %206 = arith.addf %202, %205 : vector<16x64xf32>
    %cst_78 = arith.constant 0.000000e+00 : f32
    %207 = vector.broadcast %cst_78 : f32 to vector<16x64xf32>
    %208 = arith.maximumf %206, %207 : vector<16x64xf32>
    %c0_79 = arith.constant 0 : index
    %c0_80 = arith.constant 0 : index
    %c0_81 = arith.constant 0 : index
    %209 = vector.load %arg10[%c0_79, %c0_80, %c0_81] : memref<2x64x32xf32, #tpu.memory_space<vmem>>, vector<1x64x32xf32>
    %210 = vector.shape_cast %209 : vector<1x64x32xf32> to vector<64x32xf32>
    %cst_82 = arith.constant dense<0.000000e+00> : vector<16x32xf32>
    %211 = tpu.matmul %208, %210, %cst_82 {dimension_numbers = #tpu.dot_dimension_numbers<[1], [0], [0], [1], [0, 0, 1, 1], [], []>} : vector<16x64xf32>, vector<64x32xf32>, vector<16x32xf32> -> vector<16x32xf32>
    %c0_83 = arith.constant 0 : index
    %c0_84 = arith.constant 0 : index
    %c0_85 = arith.constant 0 : index
    %212 = vector.load %arg11[%c0_83, %c0_84, %c0_85] : memref<2x1x32xf32, #tpu.memory_space<vmem>>, vector<1x1x32xf32>
    %213 = vector.shape_cast %212 : vector<1x1x32xf32> to vector<1x32xf32>
    %214 = vector.broadcast %213 : vector<1x32xf32> to vector<16x32xf32>
    %215 = arith.addf %211, %214 : vector<16x32xf32>
    %c1 = arith.constant 1 : index
    %c0_86 = arith.constant 0 : index
    %c0_87 = arith.constant 0 : index
    %216 = vector.load %arg2[%c1, %c0_86, %c0_87] : memref<2x2x32xf32, #tpu.memory_space<vmem>>, vector<1x2x32xf32>
    %217 = vector.shape_cast %216 : vector<1x2x32xf32> to vector<2x32xf32>
    %c1_88 = arith.constant 1 : index
    %c0_89 = arith.constant 0 : index
    %c0_90 = arith.constant 0 : index
    %218 = vector.load %arg3[%c1_88, %c0_89, %c0_90] : memref<2x2x32xf32, #tpu.memory_space<vmem>>, vector<1x2x32xf32>
    %219 = vector.shape_cast %218 : vector<1x2x32xf32> to vector<2x32xf32>
    %220 = vector.extract_strided_slice %217 {offsets = [0, 0], sizes = [1, 32], strides = [1, 1]} : vector<2x32xf32> to vector<1x32xf32>
    %221 = vector.extract_strided_slice %219 {offsets = [0, 0], sizes = [1, 32], strides = [1, 1]} : vector<2x32xf32> to vector<1x32xf32>
    %cst_91 = arith.constant dense<0.000000e+00> : vector<16xf32>
    %222 = vector.multi_reduction <add>, %215, %cst_91 [1] : vector<16x32xf32> to vector<16xf32>
    %223 = vector.shape_cast %222 : vector<16xf32> to vector<16x1xf32>
    %cst_92 = arith.constant 3.200000e+01 : f32
    %224 = vector.broadcast %cst_92 : f32 to vector<16x1xf32>
    %225 = arith.divf %223, %224 : vector<16x1xf32>
    %226 = vector.broadcast %225 : vector<16x1xf32> to vector<16x32xf32>
    %227 = arith.subf %215, %226 : vector<16x32xf32>
    %228 = arith.mulf %227, %227 : vector<16x32xf32>
    %cst_93 = arith.constant dense<0.000000e+00> : vector<16xf32>
    %229 = vector.multi_reduction <add>, %228, %cst_93 [1] : vector<16x32xf32> to vector<16xf32>
    %230 = vector.shape_cast %229 : vector<16xf32> to vector<16x1xf32>
    %cst_94 = arith.constant 3.200000e+01 : f32
    %231 = vector.broadcast %cst_94 : f32 to vector<16x1xf32>
    %232 = arith.divf %230, %231 : vector<16x1xf32>
    %cst_95 = arith.constant 9.99999974E-6 : f32
    %233 = vector.broadcast %cst_95 : f32 to vector<16x1xf32>
    %234 = arith.addf %232, %233 : vector<16x1xf32>
    %235 = math.rsqrt %234 : vector<16x1xf32>
    %236 = vector.broadcast %235 : vector<16x1xf32> to vector<16x32xf32>
    %237 = arith.mulf %227, %236 : vector<16x32xf32>
    %238 = vector.broadcast %220 : vector<1x32xf32> to vector<16x32xf32>
    %239 = arith.mulf %237, %238 : vector<16x32xf32>
    %240 = vector.broadcast %221 : vector<1x32xf32> to vector<16x32xf32>
    %241 = arith.addf %239, %240 : vector<16x32xf32>
    %c1_96 = arith.constant 1 : index
    %c0_97 = arith.constant 0 : index
    %c0_98 = arith.constant 0 : index
    %242 = vector.load %arg4[%c1_96, %c0_97, %c0_98] : memref<2x32x96xf32, #tpu.memory_space<vmem>>, vector<1x32x96xf32>
    %243 = vector.shape_cast %242 : vector<1x32x96xf32> to vector<32x96xf32>
    %cst_99 = arith.constant dense<0.000000e+00> : vector<16x96xf32>
    %244 = tpu.matmul %241, %243, %cst_99 {dimension_numbers = #tpu.dot_dimension_numbers<[1], [0], [0], [1], [0, 0, 1, 1], [], []>} : vector<16x32xf32>, vector<32x96xf32>, vector<16x96xf32> -> vector<16x96xf32>
    %c1_100 = arith.constant 1 : index
    %c0_101 = arith.constant 0 : index
    %c0_102 = arith.constant 0 : index
    %245 = vector.load %arg5[%c1_100, %c0_101, %c0_102] : memref<2x1x96xf32, #tpu.memory_space<vmem>>, vector<1x1x96xf32>
    %246 = vector.shape_cast %245 : vector<1x1x96xf32> to vector<1x96xf32>
    %247 = vector.broadcast %246 : vector<1x96xf32> to vector<16x96xf32>
    %248 = arith.addf %244, %247 : vector<16x96xf32>
    %249 = vector.extract_strided_slice %248 {offsets = [0, 0], sizes = [16, 32], strides = [1, 1]} : vector<16x96xf32> to vector<16x32xf32>
    %250 = vector.extract_strided_slice %248 {offsets = [0, 32], sizes = [16, 32], strides = [1, 1]} : vector<16x96xf32> to vector<16x32xf32>
    %251 = vector.extract_strided_slice %248 {offsets = [0, 64], sizes = [16, 32], strides = [1, 1]} : vector<16x96xf32> to vector<16x32xf32>
    %252 = vector.extract_strided_slice %249 {offsets = [0, 0], sizes = [8, 8], strides = [1, 1]} : vector<16x32xf32> to vector<8x8xf32>
    %253 = vector.extract_strided_slice %250 {offsets = [0, 0], sizes = [8, 8], strides = [1, 1]} : vector<16x32xf32> to vector<8x8xf32>
    %254 = vector.extract_strided_slice %251 {offsets = [0, 0], sizes = [8, 8], strides = [1, 1]} : vector<16x32xf32> to vector<8x8xf32>
    %cst_103 = arith.constant dense<0.000000e+00> : vector<8x8xf32>
    %255 = tpu.matmul %252, %253, %cst_103 {dimension_numbers = #tpu.dot_dimension_numbers<[1], [1], [0], [0], [0, 0, 1, 0], [], []>} : vector<8x8xf32>, vector<8x8xf32>, vector<8x8xf32> -> vector<8x8xf32>
    %cst_104 = arith.constant 0.353553385 : f32
    %256 = vector.broadcast %cst_104 : f32 to vector<8x8xf32>
    %257 = arith.mulf %255, %256 : vector<8x8xf32>
    %cst_105 = arith.constant dense<0xFF800000> : vector<8xf32>
    %258 = vector.multi_reduction <maximumf>, %257, %cst_105 [1] : vector<8x8xf32> to vector<8xf32>
    %259 = vector.shape_cast %258 : vector<8xf32> to vector<8x1xf32>
    %260 = vector.broadcast %259 : vector<8x1xf32> to vector<8x8xf32>
    %261 = arith.subf %257, %260 : vector<8x8xf32>
    %262 = math.exp %261 : vector<8x8xf32>
    %cst_106 = arith.constant dense<0.000000e+00> : vector<8xf32>
    %263 = vector.multi_reduction <add>, %262, %cst_106 [1] : vector<8x8xf32> to vector<8xf32>
    %264 = vector.shape_cast %263 : vector<8xf32> to vector<8x1xf32>
    %265 = vector.broadcast %264 : vector<8x1xf32> to vector<8x8xf32>
    %266 = arith.divf %262, %265 : vector<8x8xf32>
    %cst_107 = arith.constant dense<0.000000e+00> : vector<8x8xf32>
    %267 = tpu.matmul %266, %254, %cst_107 {dimension_numbers = #tpu.dot_dimension_numbers<[1], [0], [0], [1], [0, 0, 1, 1], [], []>} : vector<8x8xf32>, vector<8x8xf32>, vector<8x8xf32> -> vector<8x8xf32>
    %268 = vector.extract_strided_slice %249 {offsets = [8, 0], sizes = [8, 8], strides = [1, 1]} : vector<16x32xf32> to vector<8x8xf32>
    %269 = vector.extract_strided_slice %250 {offsets = [8, 0], sizes = [8, 8], strides = [1, 1]} : vector<16x32xf32> to vector<8x8xf32>
    %270 = vector.extract_strided_slice %251 {offsets = [8, 0], sizes = [8, 8], strides = [1, 1]} : vector<16x32xf32> to vector<8x8xf32>
    %cst_108 = arith.constant dense<0.000000e+00> : vector<8x8xf32>
    %271 = tpu.matmul %268, %269, %cst_108 {dimension_numbers = #tpu.dot_dimension_numbers<[1], [1], [0], [0], [0, 0, 1, 0], [], []>} : vector<8x8xf32>, vector<8x8xf32>, vector<8x8xf32> -> vector<8x8xf32>
    %cst_109 = arith.constant 0.353553385 : f32
    %272 = vector.broadcast %cst_109 : f32 to vector<8x8xf32>
    %273 = arith.mulf %271, %272 : vector<8x8xf32>
    %cst_110 = arith.constant dense<0xFF800000> : vector<8xf32>
    %274 = vector.multi_reduction <maximumf>, %273, %cst_110 [1] : vector<8x8xf32> to vector<8xf32>
    %275 = vector.shape_cast %274 : vector<8xf32> to vector<8x1xf32>
    %276 = vector.broadcast %275 : vector<8x1xf32> to vector<8x8xf32>
    %277 = arith.subf %273, %276 : vector<8x8xf32>
    %278 = math.exp %277 : vector<8x8xf32>
    %cst_111 = arith.constant dense<0.000000e+00> : vector<8xf32>
    %279 = vector.multi_reduction <add>, %278, %cst_111 [1] : vector<8x8xf32> to vector<8xf32>
    %280 = vector.shape_cast %279 : vector<8xf32> to vector<8x1xf32>
    %281 = vector.broadcast %280 : vector<8x1xf32> to vector<8x8xf32>
    %282 = arith.divf %278, %281 : vector<8x8xf32>
    %cst_112 = arith.constant dense<0.000000e+00> : vector<8x8xf32>
    %283 = tpu.matmul %282, %270, %cst_112 {dimension_numbers = #tpu.dot_dimension_numbers<[1], [0], [0], [1], [0, 0, 1, 1], [], []>} : vector<8x8xf32>, vector<8x8xf32>, vector<8x8xf32> -> vector<8x8xf32>
    %284 = tpu.concatenate %267, %283 in 0 : vector<8x8xf32>, vector<8x8xf32> -> vector<16x8xf32>
    %285 = vector.extract_strided_slice %249 {offsets = [0, 8], sizes = [8, 8], strides = [1, 1]} : vector<16x32xf32> to vector<8x8xf32>
    %286 = vector.extract_strided_slice %250 {offsets = [0, 8], sizes = [8, 8], strides = [1, 1]} : vector<16x32xf32> to vector<8x8xf32>
    %287 = vector.extract_strided_slice %251 {offsets = [0, 8], sizes = [8, 8], strides = [1, 1]} : vector<16x32xf32> to vector<8x8xf32>
    %cst_113 = arith.constant dense<0.000000e+00> : vector<8x8xf32>
    %288 = tpu.matmul %285, %286, %cst_113 {dimension_numbers = #tpu.dot_dimension_numbers<[1], [1], [0], [0], [0, 0, 1, 0], [], []>} : vector<8x8xf32>, vector<8x8xf32>, vector<8x8xf32> -> vector<8x8xf32>
    %cst_114 = arith.constant 0.353553385 : f32
    %289 = vector.broadcast %cst_114 : f32 to vector<8x8xf32>
    %290 = arith.mulf %288, %289 : vector<8x8xf32>
    %cst_115 = arith.constant dense<0xFF800000> : vector<8xf32>
    %291 = vector.multi_reduction <maximumf>, %290, %cst_115 [1] : vector<8x8xf32> to vector<8xf32>
    %292 = vector.shape_cast %291 : vector<8xf32> to vector<8x1xf32>
    %293 = vector.broadcast %292 : vector<8x1xf32> to vector<8x8xf32>
    %294 = arith.subf %290, %293 : vector<8x8xf32>
    %295 = math.exp %294 : vector<8x8xf32>
    %cst_116 = arith.constant dense<0.000000e+00> : vector<8xf32>
    %296 = vector.multi_reduction <add>, %295, %cst_116 [1] : vector<8x8xf32> to vector<8xf32>
    %297 = vector.shape_cast %296 : vector<8xf32> to vector<8x1xf32>
    %298 = vector.broadcast %297 : vector<8x1xf32> to vector<8x8xf32>
    %299 = arith.divf %295, %298 : vector<8x8xf32>
    %cst_117 = arith.constant dense<0.000000e+00> : vector<8x8xf32>
    %300 = tpu.matmul %299, %287, %cst_117 {dimension_numbers = #tpu.dot_dimension_numbers<[1], [0], [0], [1], [0, 0, 1, 1], [], []>} : vector<8x8xf32>, vector<8x8xf32>, vector<8x8xf32> -> vector<8x8xf32>
    %301 = vector.extract_strided_slice %249 {offsets = [8, 8], sizes = [8, 8], strides = [1, 1]} : vector<16x32xf32> to vector<8x8xf32>
    %302 = vector.extract_strided_slice %250 {offsets = [8, 8], sizes = [8, 8], strides = [1, 1]} : vector<16x32xf32> to vector<8x8xf32>
    %303 = vector.extract_strided_slice %251 {offsets = [8, 8], sizes = [8, 8], strides = [1, 1]} : vector<16x32xf32> to vector<8x8xf32>
    %cst_118 = arith.constant dense<0.000000e+00> : vector<8x8xf32>
    %304 = tpu.matmul %301, %302, %cst_118 {dimension_numbers = #tpu.dot_dimension_numbers<[1], [1], [0], [0], [0, 0, 1, 0], [], []>} : vector<8x8xf32>, vector<8x8xf32>, vector<8x8xf32> -> vector<8x8xf32>
    %cst_119 = arith.constant 0.353553385 : f32
    %305 = vector.broadcast %cst_119 : f32 to vector<8x8xf32>
    %306 = arith.mulf %304, %305 : vector<8x8xf32>
    %cst_120 = arith.constant dense<0xFF800000> : vector<8xf32>
    %307 = vector.multi_reduction <maximumf>, %306, %cst_120 [1] : vector<8x8xf32> to vector<8xf32>
    %308 = vector.shape_cast %307 : vector<8xf32> to vector<8x1xf32>
    %309 = vector.broadcast %308 : vector<8x1xf32> to vector<8x8xf32>
    %310 = arith.subf %306, %309 : vector<8x8xf32>
    %311 = math.exp %310 : vector<8x8xf32>
    %cst_121 = arith.constant dense<0.000000e+00> : vector<8xf32>
    %312 = vector.multi_reduction <add>, %311, %cst_121 [1] : vector<8x8xf32> to vector<8xf32>
    %313 = vector.shape_cast %312 : vector<8xf32> to vector<8x1xf32>
    %314 = vector.broadcast %313 : vector<8x1xf32> to vector<8x8xf32>
    %315 = arith.divf %311, %314 : vector<8x8xf32>
    %cst_122 = arith.constant dense<0.000000e+00> : vector<8x8xf32>
    %316 = tpu.matmul %315, %303, %cst_122 {dimension_numbers = #tpu.dot_dimension_numbers<[1], [0], [0], [1], [0, 0, 1, 1], [], []>} : vector<8x8xf32>, vector<8x8xf32>, vector<8x8xf32> -> vector<8x8xf32>
    %317 = tpu.concatenate %300, %316 in 0 : vector<8x8xf32>, vector<8x8xf32> -> vector<16x8xf32>
    %318 = vector.extract_strided_slice %249 {offsets = [0, 16], sizes = [8, 8], strides = [1, 1]} : vector<16x32xf32> to vector<8x8xf32>
    %319 = vector.extract_strided_slice %250 {offsets = [0, 16], sizes = [8, 8], strides = [1, 1]} : vector<16x32xf32> to vector<8x8xf32>
    %320 = vector.extract_strided_slice %251 {offsets = [0, 16], sizes = [8, 8], strides = [1, 1]} : vector<16x32xf32> to vector<8x8xf32>
    %cst_123 = arith.constant dense<0.000000e+00> : vector<8x8xf32>
    %321 = tpu.matmul %318, %319, %cst_123 {dimension_numbers = #tpu.dot_dimension_numbers<[1], [1], [0], [0], [0, 0, 1, 0], [], []>} : vector<8x8xf32>, vector<8x8xf32>, vector<8x8xf32> -> vector<8x8xf32>
    %cst_124 = arith.constant 0.353553385 : f32
    %322 = vector.broadcast %cst_124 : f32 to vector<8x8xf32>
    %323 = arith.mulf %321, %322 : vector<8x8xf32>
    %cst_125 = arith.constant dense<0xFF800000> : vector<8xf32>
    %324 = vector.multi_reduction <maximumf>, %323, %cst_125 [1] : vector<8x8xf32> to vector<8xf32>
    %325 = vector.shape_cast %324 : vector<8xf32> to vector<8x1xf32>
    %326 = vector.broadcast %325 : vector<8x1xf32> to vector<8x8xf32>
    %327 = arith.subf %323, %326 : vector<8x8xf32>
    %328 = math.exp %327 : vector<8x8xf32>
    %cst_126 = arith.constant dense<0.000000e+00> : vector<8xf32>
    %329 = vector.multi_reduction <add>, %328, %cst_126 [1] : vector<8x8xf32> to vector<8xf32>
    %330 = vector.shape_cast %329 : vector<8xf32> to vector<8x1xf32>
    %331 = vector.broadcast %330 : vector<8x1xf32> to vector<8x8xf32>
    %332 = arith.divf %328, %331 : vector<8x8xf32>
    %cst_127 = arith.constant dense<0.000000e+00> : vector<8x8xf32>
    %333 = tpu.matmul %332, %320, %cst_127 {dimension_numbers = #tpu.dot_dimension_numbers<[1], [0], [0], [1], [0, 0, 1, 1], [], []>} : vector<8x8xf32>, vector<8x8xf32>, vector<8x8xf32> -> vector<8x8xf32>
    %334 = vector.extract_strided_slice %249 {offsets = [8, 16], sizes = [8, 8], strides = [1, 1]} : vector<16x32xf32> to vector<8x8xf32>
    %335 = vector.extract_strided_slice %250 {offsets = [8, 16], sizes = [8, 8], strides = [1, 1]} : vector<16x32xf32> to vector<8x8xf32>
    %336 = vector.extract_strided_slice %251 {offsets = [8, 16], sizes = [8, 8], strides = [1, 1]} : vector<16x32xf32> to vector<8x8xf32>
    %cst_128 = arith.constant dense<0.000000e+00> : vector<8x8xf32>
    %337 = tpu.matmul %334, %335, %cst_128 {dimension_numbers = #tpu.dot_dimension_numbers<[1], [1], [0], [0], [0, 0, 1, 0], [], []>} : vector<8x8xf32>, vector<8x8xf32>, vector<8x8xf32> -> vector<8x8xf32>
    %cst_129 = arith.constant 0.353553385 : f32
    %338 = vector.broadcast %cst_129 : f32 to vector<8x8xf32>
    %339 = arith.mulf %337, %338 : vector<8x8xf32>
    %cst_130 = arith.constant dense<0xFF800000> : vector<8xf32>
    %340 = vector.multi_reduction <maximumf>, %339, %cst_130 [1] : vector<8x8xf32> to vector<8xf32>
    %341 = vector.shape_cast %340 : vector<8xf32> to vector<8x1xf32>
    %342 = vector.broadcast %341 : vector<8x1xf32> to vector<8x8xf32>
    %343 = arith.subf %339, %342 : vector<8x8xf32>
    %344 = math.exp %343 : vector<8x8xf32>
    %cst_131 = arith.constant dense<0.000000e+00> : vector<8xf32>
    %345 = vector.multi_reduction <add>, %344, %cst_131 [1] : vector<8x8xf32> to vector<8xf32>
    %346 = vector.shape_cast %345 : vector<8xf32> to vector<8x1xf32>
    %347 = vector.broadcast %346 : vector<8x1xf32> to vector<8x8xf32>
    %348 = arith.divf %344, %347 : vector<8x8xf32>
    %cst_132 = arith.constant dense<0.000000e+00> : vector<8x8xf32>
    %349 = tpu.matmul %348, %336, %cst_132 {dimension_numbers = #tpu.dot_dimension_numbers<[1], [0], [0], [1], [0, 0, 1, 1], [], []>} : vector<8x8xf32>, vector<8x8xf32>, vector<8x8xf32> -> vector<8x8xf32>
    %350 = tpu.concatenate %333, %349 in 0 : vector<8x8xf32>, vector<8x8xf32> -> vector<16x8xf32>
    %351 = vector.extract_strided_slice %249 {offsets = [0, 24], sizes = [8, 8], strides = [1, 1]} : vector<16x32xf32> to vector<8x8xf32>
    %352 = vector.extract_strided_slice %250 {offsets = [0, 24], sizes = [8, 8], strides = [1, 1]} : vector<16x32xf32> to vector<8x8xf32>
    %353 = vector.extract_strided_slice %251 {offsets = [0, 24], sizes = [8, 8], strides = [1, 1]} : vector<16x32xf32> to vector<8x8xf32>
    %cst_133 = arith.constant dense<0.000000e+00> : vector<8x8xf32>
    %354 = tpu.matmul %351, %352, %cst_133 {dimension_numbers = #tpu.dot_dimension_numbers<[1], [1], [0], [0], [0, 0, 1, 0], [], []>} : vector<8x8xf32>, vector<8x8xf32>, vector<8x8xf32> -> vector<8x8xf32>
    %cst_134 = arith.constant 0.353553385 : f32
    %355 = vector.broadcast %cst_134 : f32 to vector<8x8xf32>
    %356 = arith.mulf %354, %355 : vector<8x8xf32>
    %cst_135 = arith.constant dense<0xFF800000> : vector<8xf32>
    %357 = vector.multi_reduction <maximumf>, %356, %cst_135 [1] : vector<8x8xf32> to vector<8xf32>
    %358 = vector.shape_cast %357 : vector<8xf32> to vector<8x1xf32>
    %359 = vector.broadcast %358 : vector<8x1xf32> to vector<8x8xf32>
    %360 = arith.subf %356, %359 : vector<8x8xf32>
    %361 = math.exp %360 : vector<8x8xf32>
    %cst_136 = arith.constant dense<0.000000e+00> : vector<8xf32>
    %362 = vector.multi_reduction <add>, %361, %cst_136 [1] : vector<8x8xf32> to vector<8xf32>
    %363 = vector.shape_cast %362 : vector<8xf32> to vector<8x1xf32>
    %364 = vector.broadcast %363 : vector<8x1xf32> to vector<8x8xf32>
    %365 = arith.divf %361, %364 : vector<8x8xf32>
    %cst_137 = arith.constant dense<0.000000e+00> : vector<8x8xf32>
    %366 = tpu.matmul %365, %353, %cst_137 {dimension_numbers = #tpu.dot_dimension_numbers<[1], [0], [0], [1], [0, 0, 1, 1], [], []>} : vector<8x8xf32>, vector<8x8xf32>, vector<8x8xf32> -> vector<8x8xf32>
    %367 = vector.extract_strided_slice %249 {offsets = [8, 24], sizes = [8, 8], strides = [1, 1]} : vector<16x32xf32> to vector<8x8xf32>
    %368 = vector.extract_strided_slice %250 {offsets = [8, 24], sizes = [8, 8], strides = [1, 1]} : vector<16x32xf32> to vector<8x8xf32>
    %369 = vector.extract_strided_slice %251 {offsets = [8, 24], sizes = [8, 8], strides = [1, 1]} : vector<16x32xf32> to vector<8x8xf32>
    %cst_138 = arith.constant dense<0.000000e+00> : vector<8x8xf32>
    %370 = tpu.matmul %367, %368, %cst_138 {dimension_numbers = #tpu.dot_dimension_numbers<[1], [1], [0], [0], [0, 0, 1, 0], [], []>} : vector<8x8xf32>, vector<8x8xf32>, vector<8x8xf32> -> vector<8x8xf32>
    %cst_139 = arith.constant 0.353553385 : f32
    %371 = vector.broadcast %cst_139 : f32 to vector<8x8xf32>
    %372 = arith.mulf %370, %371 : vector<8x8xf32>
    %cst_140 = arith.constant dense<0xFF800000> : vector<8xf32>
    %373 = vector.multi_reduction <maximumf>, %372, %cst_140 [1] : vector<8x8xf32> to vector<8xf32>
    %374 = vector.shape_cast %373 : vector<8xf32> to vector<8x1xf32>
    %375 = vector.broadcast %374 : vector<8x1xf32> to vector<8x8xf32>
    %376 = arith.subf %372, %375 : vector<8x8xf32>
    %377 = math.exp %376 : vector<8x8xf32>
    %cst_141 = arith.constant dense<0.000000e+00> : vector<8xf32>
    %378 = vector.multi_reduction <add>, %377, %cst_141 [1] : vector<8x8xf32> to vector<8xf32>
    %379 = vector.shape_cast %378 : vector<8xf32> to vector<8x1xf32>
    %380 = vector.broadcast %379 : vector<8x1xf32> to vector<8x8xf32>
    %381 = arith.divf %377, %380 : vector<8x8xf32>
    %cst_142 = arith.constant dense<0.000000e+00> : vector<8x8xf32>
    %382 = tpu.matmul %381, %369, %cst_142 {dimension_numbers = #tpu.dot_dimension_numbers<[1], [0], [0], [1], [0, 0, 1, 1], [], []>} : vector<8x8xf32>, vector<8x8xf32>, vector<8x8xf32> -> vector<8x8xf32>
    %383 = tpu.concatenate %366, %382 in 0 : vector<8x8xf32>, vector<8x8xf32> -> vector<16x8xf32>
    %384 = tpu.concatenate %284, %317, %350, %383 in 1 : vector<16x8xf32>, vector<16x8xf32>, vector<16x8xf32>, vector<16x8xf32> -> vector<16x32xf32>
    %c1_143 = arith.constant 1 : index
    %c0_144 = arith.constant 0 : index
    %c0_145 = arith.constant 0 : index
    %385 = vector.load %arg6[%c1_143, %c0_144, %c0_145] : memref<2x32x32xf32, #tpu.memory_space<vmem>>, vector<1x32x32xf32>
    %386 = vector.shape_cast %385 : vector<1x32x32xf32> to vector<32x32xf32>
    %cst_146 = arith.constant dense<0.000000e+00> : vector<16x32xf32>
    %387 = tpu.matmul %384, %386, %cst_146 {dimension_numbers = #tpu.dot_dimension_numbers<[1], [0], [0], [1], [0, 0, 1, 1], [], []>} : vector<16x32xf32>, vector<32x32xf32>, vector<16x32xf32> -> vector<16x32xf32>
    %c1_147 = arith.constant 1 : index
    %c0_148 = arith.constant 0 : index
    %c0_149 = arith.constant 0 : index
    %388 = vector.load %arg7[%c1_147, %c0_148, %c0_149] : memref<2x1x32xf32, #tpu.memory_space<vmem>>, vector<1x1x32xf32>
    %389 = vector.shape_cast %388 : vector<1x1x32xf32> to vector<1x32xf32>
    %390 = vector.broadcast %389 : vector<1x32xf32> to vector<16x32xf32>
    %391 = arith.addf %387, %390 : vector<16x32xf32>
    %392 = vector.extract_strided_slice %217 {offsets = [1, 0], sizes = [1, 32], strides = [1, 1]} : vector<2x32xf32> to vector<1x32xf32>
    %393 = vector.extract_strided_slice %219 {offsets = [1, 0], sizes = [1, 32], strides = [1, 1]} : vector<2x32xf32> to vector<1x32xf32>
    %cst_150 = arith.constant dense<0.000000e+00> : vector<16xf32>
    %394 = vector.multi_reduction <add>, %391, %cst_150 [1] : vector<16x32xf32> to vector<16xf32>
    %395 = vector.shape_cast %394 : vector<16xf32> to vector<16x1xf32>
    %cst_151 = arith.constant 3.200000e+01 : f32
    %396 = vector.broadcast %cst_151 : f32 to vector<16x1xf32>
    %397 = arith.divf %395, %396 : vector<16x1xf32>
    %398 = vector.broadcast %397 : vector<16x1xf32> to vector<16x32xf32>
    %399 = arith.subf %391, %398 : vector<16x32xf32>
    %400 = arith.mulf %399, %399 : vector<16x32xf32>
    %cst_152 = arith.constant dense<0.000000e+00> : vector<16xf32>
    %401 = vector.multi_reduction <add>, %400, %cst_152 [1] : vector<16x32xf32> to vector<16xf32>
    %402 = vector.shape_cast %401 : vector<16xf32> to vector<16x1xf32>
    %cst_153 = arith.constant 3.200000e+01 : f32
    %403 = vector.broadcast %cst_153 : f32 to vector<16x1xf32>
    %404 = arith.divf %402, %403 : vector<16x1xf32>
    %cst_154 = arith.constant 9.99999974E-6 : f32
    %405 = vector.broadcast %cst_154 : f32 to vector<16x1xf32>
    %406 = arith.addf %404, %405 : vector<16x1xf32>
    %407 = math.rsqrt %406 : vector<16x1xf32>
    %408 = vector.broadcast %407 : vector<16x1xf32> to vector<16x32xf32>
    %409 = arith.mulf %399, %408 : vector<16x32xf32>
    %410 = vector.broadcast %392 : vector<1x32xf32> to vector<16x32xf32>
    %411 = arith.mulf %409, %410 : vector<16x32xf32>
    %412 = vector.broadcast %393 : vector<1x32xf32> to vector<16x32xf32>
    %413 = arith.addf %411, %412 : vector<16x32xf32>
    %c1_155 = arith.constant 1 : index
    %c0_156 = arith.constant 0 : index
    %c0_157 = arith.constant 0 : index
    %414 = vector.load %arg8[%c1_155, %c0_156, %c0_157] : memref<2x32x64xf32, #tpu.memory_space<vmem>>, vector<1x32x64xf32>
    %415 = vector.shape_cast %414 : vector<1x32x64xf32> to vector<32x64xf32>
    %cst_158 = arith.constant dense<0.000000e+00> : vector<16x64xf32>
    %416 = tpu.matmul %413, %415, %cst_158 {dimension_numbers = #tpu.dot_dimension_numbers<[1], [0], [0], [1], [0, 0, 1, 1], [], []>} : vector<16x32xf32>, vector<32x64xf32>, vector<16x64xf32> -> vector<16x64xf32>
    %c1_159 = arith.constant 1 : index
    %c0_160 = arith.constant 0 : index
    %c0_161 = arith.constant 0 : index
    %417 = vector.load %arg9[%c1_159, %c0_160, %c0_161] : memref<2x1x64xf32, #tpu.memory_space<vmem>>, vector<1x1x64xf32>
    %418 = vector.shape_cast %417 : vector<1x1x64xf32> to vector<1x64xf32>
    %419 = vector.broadcast %418 : vector<1x64xf32> to vector<16x64xf32>
    %420 = arith.addf %416, %419 : vector<16x64xf32>
    %cst_162 = arith.constant 0.000000e+00 : f32
    %421 = vector.broadcast %cst_162 : f32 to vector<16x64xf32>
    %422 = arith.maximumf %420, %421 : vector<16x64xf32>
    %c1_163 = arith.constant 1 : index
    %c0_164 = arith.constant 0 : index
    %c0_165 = arith.constant 0 : index
    %423 = vector.load %arg10[%c1_163, %c0_164, %c0_165] : memref<2x64x32xf32, #tpu.memory_space<vmem>>, vector<1x64x32xf32>
    %424 = vector.shape_cast %423 : vector<1x64x32xf32> to vector<64x32xf32>
    %cst_166 = arith.constant dense<0.000000e+00> : vector<16x32xf32>
    %425 = tpu.matmul %422, %424, %cst_166 {dimension_numbers = #tpu.dot_dimension_numbers<[1], [0], [0], [1], [0, 0, 1, 1], [], []>} : vector<16x64xf32>, vector<64x32xf32>, vector<16x32xf32> -> vector<16x32xf32>
    %c1_167 = arith.constant 1 : index
    %c0_168 = arith.constant 0 : index
    %c0_169 = arith.constant 0 : index
    %426 = vector.load %arg11[%c1_167, %c0_168, %c0_169] : memref<2x1x32xf32, #tpu.memory_space<vmem>>, vector<1x1x32xf32>
    %427 = vector.shape_cast %426 : vector<1x1x32xf32> to vector<1x32xf32>
    %428 = vector.broadcast %427 : vector<1x32xf32> to vector<16x32xf32>
    %429 = arith.addf %425, %428 : vector<16x32xf32>
    %c0_170 = arith.constant 0 : index
    %c0_171 = arith.constant 0 : index
    %430 = vector.load %arg12[%c0_170, %c0_171] : memref<4x32xf32, #tpu.memory_space<vmem>>, vector<4x32xf32>
    %c0_172 = arith.constant 0 : index
    %c0_173 = arith.constant 0 : index
    %431 = vector.load %arg13[%c0_172, %c0_173] : memref<4x32xf32, #tpu.memory_space<vmem>>, vector<4x32xf32>
    %c0_174 = arith.constant 0 : index
    %c0_175 = arith.constant 0 : index
    %c0_176 = arith.constant 0 : index
    %432 = vector.load %arg14[%c0_174, %c0_175, %c0_176] : memref<6x32x32xf32, #tpu.memory_space<vmem>>, vector<6x32x32xf32>
    %c0_177 = arith.constant 0 : index
    %c0_178 = arith.constant 0 : index
    %c0_179 = arith.constant 0 : index
    %433 = vector.load %arg15[%c0_177, %c0_178, %c0_179] : memref<6x1x32xf32, #tpu.memory_space<vmem>>, vector<6x1x32xf32>
    %434 = vector.extract_strided_slice %429 {offsets = [0, 0], sizes = [8, 32], strides = [1, 1]} : vector<16x32xf32> to vector<8x32xf32>
    %435 = vector.extract_strided_slice %430 {offsets = [0, 0], sizes = [1, 32], strides = [1, 1]} : vector<4x32xf32> to vector<1x32xf32>
    %436 = vector.extract_strided_slice %431 {offsets = [0, 0], sizes = [1, 32], strides = [1, 1]} : vector<4x32xf32> to vector<1x32xf32>
    %cst_180 = arith.constant dense<0.000000e+00> : vector<8xf32>
    %437 = vector.multi_reduction <add>, %434, %cst_180 [1] : vector<8x32xf32> to vector<8xf32>
    %438 = vector.shape_cast %437 : vector<8xf32> to vector<8x1xf32>
    %cst_181 = arith.constant 3.200000e+01 : f32
    %439 = vector.broadcast %cst_181 : f32 to vector<8x1xf32>
    %440 = arith.divf %438, %439 : vector<8x1xf32>
    %441 = vector.broadcast %440 : vector<8x1xf32> to vector<8x32xf32>
    %442 = arith.subf %434, %441 : vector<8x32xf32>
    %443 = arith.mulf %442, %442 : vector<8x32xf32>
    %cst_182 = arith.constant dense<0.000000e+00> : vector<8xf32>
    %444 = vector.multi_reduction <add>, %443, %cst_182 [1] : vector<8x32xf32> to vector<8xf32>
    %445 = vector.shape_cast %444 : vector<8xf32> to vector<8x1xf32>
    %cst_183 = arith.constant 3.200000e+01 : f32
    %446 = vector.broadcast %cst_183 : f32 to vector<8x1xf32>
    %447 = arith.divf %445, %446 : vector<8x1xf32>
    %cst_184 = arith.constant 9.99999974E-6 : f32
    %448 = vector.broadcast %cst_184 : f32 to vector<8x1xf32>
    %449 = arith.addf %447, %448 : vector<8x1xf32>
    %450 = math.rsqrt %449 : vector<8x1xf32>
    %451 = vector.broadcast %450 : vector<8x1xf32> to vector<8x32xf32>
    %452 = arith.mulf %442, %451 : vector<8x32xf32>
    %453 = vector.broadcast %435 : vector<1x32xf32> to vector<8x32xf32>
    %454 = arith.mulf %452, %453 : vector<8x32xf32>
    %455 = vector.broadcast %436 : vector<1x32xf32> to vector<8x32xf32>
    %456 = arith.addf %454, %455 : vector<8x32xf32>
    %457 = vector.extract_strided_slice %429 {offsets = [8, 0], sizes = [8, 32], strides = [1, 1]} : vector<16x32xf32> to vector<8x32xf32>
    %458 = vector.extract_strided_slice %430 {offsets = [1, 0], sizes = [1, 32], strides = [1, 1]} : vector<4x32xf32> to vector<1x32xf32>
    %459 = vector.extract_strided_slice %431 {offsets = [1, 0], sizes = [1, 32], strides = [1, 1]} : vector<4x32xf32> to vector<1x32xf32>
    %cst_185 = arith.constant dense<0.000000e+00> : vector<8xf32>
    %460 = vector.multi_reduction <add>, %457, %cst_185 [1] : vector<8x32xf32> to vector<8xf32>
    %461 = vector.shape_cast %460 : vector<8xf32> to vector<8x1xf32>
    %cst_186 = arith.constant 3.200000e+01 : f32
    %462 = vector.broadcast %cst_186 : f32 to vector<8x1xf32>
    %463 = arith.divf %461, %462 : vector<8x1xf32>
    %464 = vector.broadcast %463 : vector<8x1xf32> to vector<8x32xf32>
    %465 = arith.subf %457, %464 : vector<8x32xf32>
    %466 = arith.mulf %465, %465 : vector<8x32xf32>
    %cst_187 = arith.constant dense<0.000000e+00> : vector<8xf32>
    %467 = vector.multi_reduction <add>, %466, %cst_187 [1] : vector<8x32xf32> to vector<8xf32>
    %468 = vector.shape_cast %467 : vector<8xf32> to vector<8x1xf32>
    %cst_188 = arith.constant 3.200000e+01 : f32
    %469 = vector.broadcast %cst_188 : f32 to vector<8x1xf32>
    %470 = arith.divf %468, %469 : vector<8x1xf32>
    %cst_189 = arith.constant 9.99999974E-6 : f32
    %471 = vector.broadcast %cst_189 : f32 to vector<8x1xf32>
    %472 = arith.addf %470, %471 : vector<8x1xf32>
    %473 = math.rsqrt %472 : vector<8x1xf32>
    %474 = vector.broadcast %473 : vector<8x1xf32> to vector<8x32xf32>
    %475 = arith.mulf %465, %474 : vector<8x32xf32>
    %476 = vector.broadcast %458 : vector<1x32xf32> to vector<8x32xf32>
    %477 = arith.mulf %475, %476 : vector<8x32xf32>
    %478 = vector.broadcast %459 : vector<1x32xf32> to vector<8x32xf32>
    %479 = arith.addf %477, %478 : vector<8x32xf32>
    %480 = vector.extract_strided_slice %432 {offsets = [0, 0, 0], sizes = [1, 32, 32], strides = [1, 1, 1]} : vector<6x32x32xf32> to vector<1x32x32xf32>
    %481 = vector.shape_cast %480 : vector<1x32x32xf32> to vector<32x32xf32>
    %cst_190 = arith.constant dense<0.000000e+00> : vector<8x32xf32>
    %482 = tpu.matmul %456, %481, %cst_190 {dimension_numbers = #tpu.dot_dimension_numbers<[1], [0], [0], [1], [0, 0, 1, 1], [], []>} : vector<8x32xf32>, vector<32x32xf32>, vector<8x32xf32> -> vector<8x32xf32>
    %483 = vector.extract_strided_slice %433 {offsets = [0, 0, 0], sizes = [1, 1, 32], strides = [1, 1, 1]} : vector<6x1x32xf32> to vector<1x1x32xf32>
    %484 = vector.shape_cast %483 : vector<1x1x32xf32> to vector<1x32xf32>
    %485 = vector.broadcast %484 : vector<1x32xf32> to vector<8x32xf32>
    %486 = arith.addf %482, %485 : vector<8x32xf32>
    %487 = vector.extract_strided_slice %430 {offsets = [2, 0], sizes = [1, 32], strides = [1, 1]} : vector<4x32xf32> to vector<1x32xf32>
    %488 = vector.extract_strided_slice %431 {offsets = [2, 0], sizes = [1, 32], strides = [1, 1]} : vector<4x32xf32> to vector<1x32xf32>
    %cst_191 = arith.constant dense<0.000000e+00> : vector<8xf32>
    %489 = vector.multi_reduction <add>, %486, %cst_191 [1] : vector<8x32xf32> to vector<8xf32>
    %490 = vector.shape_cast %489 : vector<8xf32> to vector<8x1xf32>
    %cst_192 = arith.constant 3.200000e+01 : f32
    %491 = vector.broadcast %cst_192 : f32 to vector<8x1xf32>
    %492 = arith.divf %490, %491 : vector<8x1xf32>
    %493 = vector.broadcast %492 : vector<8x1xf32> to vector<8x32xf32>
    %494 = arith.subf %486, %493 : vector<8x32xf32>
    %495 = arith.mulf %494, %494 : vector<8x32xf32>
    %cst_193 = arith.constant dense<0.000000e+00> : vector<8xf32>
    %496 = vector.multi_reduction <add>, %495, %cst_193 [1] : vector<8x32xf32> to vector<8xf32>
    %497 = vector.shape_cast %496 : vector<8xf32> to vector<8x1xf32>
    %cst_194 = arith.constant 3.200000e+01 : f32
    %498 = vector.broadcast %cst_194 : f32 to vector<8x1xf32>
    %499 = arith.divf %497, %498 : vector<8x1xf32>
    %cst_195 = arith.constant 9.99999974E-6 : f32
    %500 = vector.broadcast %cst_195 : f32 to vector<8x1xf32>
    %501 = arith.addf %499, %500 : vector<8x1xf32>
    %502 = math.rsqrt %501 : vector<8x1xf32>
    %503 = vector.broadcast %502 : vector<8x1xf32> to vector<8x32xf32>
    %504 = arith.mulf %494, %503 : vector<8x32xf32>
    %505 = vector.broadcast %487 : vector<1x32xf32> to vector<8x32xf32>
    %506 = arith.mulf %504, %505 : vector<8x32xf32>
    %507 = vector.broadcast %488 : vector<1x32xf32> to vector<8x32xf32>
    %508 = arith.addf %506, %507 : vector<8x32xf32>
    %509 = vector.extract_strided_slice %432 {offsets = [1, 0, 0], sizes = [1, 32, 32], strides = [1, 1, 1]} : vector<6x32x32xf32> to vector<1x32x32xf32>
    %510 = vector.shape_cast %509 : vector<1x32x32xf32> to vector<32x32xf32>
    %cst_196 = arith.constant dense<0.000000e+00> : vector<8x32xf32>
    %511 = tpu.matmul %479, %510, %cst_196 {dimension_numbers = #tpu.dot_dimension_numbers<[1], [0], [0], [1], [0, 0, 1, 1], [], []>} : vector<8x32xf32>, vector<32x32xf32>, vector<8x32xf32> -> vector<8x32xf32>
    %512 = vector.extract_strided_slice %433 {offsets = [1, 0, 0], sizes = [1, 1, 32], strides = [1, 1, 1]} : vector<6x1x32xf32> to vector<1x1x32xf32>
    %513 = vector.shape_cast %512 : vector<1x1x32xf32> to vector<1x32xf32>
    %514 = vector.broadcast %513 : vector<1x32xf32> to vector<8x32xf32>
    %515 = arith.addf %511, %514 : vector<8x32xf32>
    %516 = vector.extract_strided_slice %430 {offsets = [3, 0], sizes = [1, 32], strides = [1, 1]} : vector<4x32xf32> to vector<1x32xf32>
    %517 = vector.extract_strided_slice %431 {offsets = [3, 0], sizes = [1, 32], strides = [1, 1]} : vector<4x32xf32> to vector<1x32xf32>
    %cst_197 = arith.constant dense<0.000000e+00> : vector<8xf32>
    %518 = vector.multi_reduction <add>, %515, %cst_197 [1] : vector<8x32xf32> to vector<8xf32>
    %519 = vector.shape_cast %518 : vector<8xf32> to vector<8x1xf32>
    %cst_198 = arith.constant 3.200000e+01 : f32
    %520 = vector.broadcast %cst_198 : f32 to vector<8x1xf32>
    %521 = arith.divf %519, %520 : vector<8x1xf32>
    %522 = vector.broadcast %521 : vector<8x1xf32> to vector<8x32xf32>
    %523 = arith.subf %515, %522 : vector<8x32xf32>
    %524 = arith.mulf %523, %523 : vector<8x32xf32>
    %cst_199 = arith.constant dense<0.000000e+00> : vector<8xf32>
    %525 = vector.multi_reduction <add>, %524, %cst_199 [1] : vector<8x32xf32> to vector<8xf32>
    %526 = vector.shape_cast %525 : vector<8xf32> to vector<8x1xf32>
    %cst_200 = arith.constant 3.200000e+01 : f32
    %527 = vector.broadcast %cst_200 : f32 to vector<8x1xf32>
    %528 = arith.divf %526, %527 : vector<8x1xf32>
    %cst_201 = arith.constant 9.99999974E-6 : f32
    %529 = vector.broadcast %cst_201 : f32 to vector<8x1xf32>
    %530 = arith.addf %528, %529 : vector<8x1xf32>
    %531 = math.rsqrt %530 : vector<8x1xf32>
    %532 = vector.broadcast %531 : vector<8x1xf32> to vector<8x32xf32>
    %533 = arith.mulf %523, %532 : vector<8x32xf32>
    %534 = vector.broadcast %516 : vector<1x32xf32> to vector<8x32xf32>
    %535 = arith.mulf %533, %534 : vector<8x32xf32>
    %536 = vector.broadcast %517 : vector<1x32xf32> to vector<8x32xf32>
    %537 = arith.addf %535, %536 : vector<8x32xf32>
    %538 = vector.extract_strided_slice %432 {offsets = [2, 0, 0], sizes = [1, 32, 32], strides = [1, 1, 1]} : vector<6x32x32xf32> to vector<1x32x32xf32>
    %539 = vector.shape_cast %538 : vector<1x32x32xf32> to vector<32x32xf32>
    %cst_202 = arith.constant dense<0.000000e+00> : vector<8x32xf32>
    %540 = tpu.matmul %479, %539, %cst_202 {dimension_numbers = #tpu.dot_dimension_numbers<[1], [0], [0], [1], [0, 0, 1, 1], [], []>} : vector<8x32xf32>, vector<32x32xf32>, vector<8x32xf32> -> vector<8x32xf32>
    %541 = vector.extract_strided_slice %433 {offsets = [2, 0, 0], sizes = [1, 1, 32], strides = [1, 1, 1]} : vector<6x1x32xf32> to vector<1x1x32xf32>
    %542 = vector.shape_cast %541 : vector<1x1x32xf32> to vector<1x32xf32>
    %543 = vector.broadcast %542 : vector<1x32xf32> to vector<8x32xf32>
    %544 = arith.addf %540, %543 : vector<8x32xf32>
    %cst_203 = arith.constant dense<0.000000e+00> : vector<8x8xf32>
    %545 = tpu.matmul %508, %537, %cst_203 {dimension_numbers = #tpu.dot_dimension_numbers<[1], [1], [0], [0], [0, 0, 1, 0], [], []>} : vector<8x32xf32>, vector<8x32xf32>, vector<8x8xf32> -> vector<8x8xf32>
    %cst_204 = arith.constant 0.176776692 : f32
    %546 = vector.broadcast %cst_204 : f32 to vector<8x8xf32>
    %547 = arith.mulf %545, %546 : vector<8x8xf32>
    %cst_205 = arith.constant dense<0xFF800000> : vector<8xf32>
    %548 = vector.multi_reduction <maximumf>, %547, %cst_205 [1] : vector<8x8xf32> to vector<8xf32>
    %549 = vector.shape_cast %548 : vector<8xf32> to vector<8x1xf32>
    %550 = vector.broadcast %549 : vector<8x1xf32> to vector<8x8xf32>
    %551 = arith.subf %547, %550 : vector<8x8xf32>
    %552 = math.exp %551 : vector<8x8xf32>
    %cst_206 = arith.constant dense<0.000000e+00> : vector<8xf32>
    %553 = vector.multi_reduction <add>, %552, %cst_206 [1] : vector<8x8xf32> to vector<8xf32>
    %554 = vector.shape_cast %553 : vector<8xf32> to vector<8x1xf32>
    %555 = vector.broadcast %554 : vector<8x1xf32> to vector<8x8xf32>
    %556 = arith.divf %552, %555 : vector<8x8xf32>
    %cst_207 = arith.constant dense<0.000000e+00> : vector<8x32xf32>
    %557 = tpu.matmul %556, %544, %cst_207 {dimension_numbers = #tpu.dot_dimension_numbers<[1], [0], [0], [1], [0, 0, 1, 1], [], []>} : vector<8x8xf32>, vector<8x32xf32>, vector<8x32xf32> -> vector<8x32xf32>
    %558 = vector.extract_strided_slice %432 {offsets = [3, 0, 0], sizes = [1, 32, 32], strides = [1, 1, 1]} : vector<6x32x32xf32> to vector<1x32x32xf32>
    %559 = vector.shape_cast %558 : vector<1x32x32xf32> to vector<32x32xf32>
    %cst_208 = arith.constant dense<0.000000e+00> : vector<8x32xf32>
    %560 = tpu.matmul %479, %559, %cst_208 {dimension_numbers = #tpu.dot_dimension_numbers<[1], [0], [0], [1], [0, 0, 1, 1], [], []>} : vector<8x32xf32>, vector<32x32xf32>, vector<8x32xf32> -> vector<8x32xf32>
    %561 = vector.extract_strided_slice %433 {offsets = [3, 0, 0], sizes = [1, 1, 32], strides = [1, 1, 1]} : vector<6x1x32xf32> to vector<1x1x32xf32>
    %562 = vector.shape_cast %561 : vector<1x1x32xf32> to vector<1x32xf32>
    %563 = vector.broadcast %562 : vector<1x32xf32> to vector<8x32xf32>
    %564 = arith.addf %560, %563 : vector<8x32xf32>
    %565 = vector.extract_strided_slice %430 {offsets = [3, 0], sizes = [1, 32], strides = [1, 1]} : vector<4x32xf32> to vector<1x32xf32>
    %566 = vector.extract_strided_slice %431 {offsets = [3, 0], sizes = [1, 32], strides = [1, 1]} : vector<4x32xf32> to vector<1x32xf32>
    %cst_209 = arith.constant dense<0.000000e+00> : vector<8xf32>
    %567 = vector.multi_reduction <add>, %564, %cst_209 [1] : vector<8x32xf32> to vector<8xf32>
    %568 = vector.shape_cast %567 : vector<8xf32> to vector<8x1xf32>
    %cst_210 = arith.constant 3.200000e+01 : f32
    %569 = vector.broadcast %cst_210 : f32 to vector<8x1xf32>
    %570 = arith.divf %568, %569 : vector<8x1xf32>
    %571 = vector.broadcast %570 : vector<8x1xf32> to vector<8x32xf32>
    %572 = arith.subf %564, %571 : vector<8x32xf32>
    %573 = arith.mulf %572, %572 : vector<8x32xf32>
    %cst_211 = arith.constant dense<0.000000e+00> : vector<8xf32>
    %574 = vector.multi_reduction <add>, %573, %cst_211 [1] : vector<8x32xf32> to vector<8xf32>
    %575 = vector.shape_cast %574 : vector<8xf32> to vector<8x1xf32>
    %cst_212 = arith.constant 3.200000e+01 : f32
    %576 = vector.broadcast %cst_212 : f32 to vector<8x1xf32>
    %577 = arith.divf %575, %576 : vector<8x1xf32>
    %cst_213 = arith.constant 9.99999974E-6 : f32
    %578 = vector.broadcast %cst_213 : f32 to vector<8x1xf32>
    %579 = arith.addf %577, %578 : vector<8x1xf32>
    %580 = math.rsqrt %579 : vector<8x1xf32>
    %581 = vector.broadcast %580 : vector<8x1xf32> to vector<8x32xf32>
    %582 = arith.mulf %572, %581 : vector<8x32xf32>
    %583 = vector.broadcast %565 : vector<1x32xf32> to vector<8x32xf32>
    %584 = arith.mulf %582, %583 : vector<8x32xf32>
    %585 = vector.broadcast %566 : vector<1x32xf32> to vector<8x32xf32>
    %586 = arith.addf %584, %585 : vector<8x32xf32>
    %587 = vector.extract_strided_slice %432 {offsets = [4, 0, 0], sizes = [1, 32, 32], strides = [1, 1, 1]} : vector<6x32x32xf32> to vector<1x32x32xf32>
    %588 = vector.shape_cast %587 : vector<1x32x32xf32> to vector<32x32xf32>
    %cst_214 = arith.constant dense<0.000000e+00> : vector<8x32xf32>
    %589 = tpu.matmul %456, %588, %cst_214 {dimension_numbers = #tpu.dot_dimension_numbers<[1], [0], [0], [1], [0, 0, 1, 1], [], []>} : vector<8x32xf32>, vector<32x32xf32>, vector<8x32xf32> -> vector<8x32xf32>
    %590 = vector.extract_strided_slice %433 {offsets = [4, 0, 0], sizes = [1, 1, 32], strides = [1, 1, 1]} : vector<6x1x32xf32> to vector<1x1x32xf32>
    %591 = vector.shape_cast %590 : vector<1x1x32xf32> to vector<1x32xf32>
    %592 = vector.broadcast %591 : vector<1x32xf32> to vector<8x32xf32>
    %593 = arith.addf %589, %592 : vector<8x32xf32>
    %594 = vector.extract_strided_slice %430 {offsets = [2, 0], sizes = [1, 32], strides = [1, 1]} : vector<4x32xf32> to vector<1x32xf32>
    %595 = vector.extract_strided_slice %431 {offsets = [2, 0], sizes = [1, 32], strides = [1, 1]} : vector<4x32xf32> to vector<1x32xf32>
    %cst_215 = arith.constant dense<0.000000e+00> : vector<8xf32>
    %596 = vector.multi_reduction <add>, %593, %cst_215 [1] : vector<8x32xf32> to vector<8xf32>
    %597 = vector.shape_cast %596 : vector<8xf32> to vector<8x1xf32>
    %cst_216 = arith.constant 3.200000e+01 : f32
    %598 = vector.broadcast %cst_216 : f32 to vector<8x1xf32>
    %599 = arith.divf %597, %598 : vector<8x1xf32>
    %600 = vector.broadcast %599 : vector<8x1xf32> to vector<8x32xf32>
    %601 = arith.subf %593, %600 : vector<8x32xf32>
    %602 = arith.mulf %601, %601 : vector<8x32xf32>
    %cst_217 = arith.constant dense<0.000000e+00> : vector<8xf32>
    %603 = vector.multi_reduction <add>, %602, %cst_217 [1] : vector<8x32xf32> to vector<8xf32>
    %604 = vector.shape_cast %603 : vector<8xf32> to vector<8x1xf32>
    %cst_218 = arith.constant 3.200000e+01 : f32
    %605 = vector.broadcast %cst_218 : f32 to vector<8x1xf32>
    %606 = arith.divf %604, %605 : vector<8x1xf32>
    %cst_219 = arith.constant 9.99999974E-6 : f32
    %607 = vector.broadcast %cst_219 : f32 to vector<8x1xf32>
    %608 = arith.addf %606, %607 : vector<8x1xf32>
    %609 = math.rsqrt %608 : vector<8x1xf32>
    %610 = vector.broadcast %609 : vector<8x1xf32> to vector<8x32xf32>
    %611 = arith.mulf %601, %610 : vector<8x32xf32>
    %612 = vector.broadcast %594 : vector<1x32xf32> to vector<8x32xf32>
    %613 = arith.mulf %611, %612 : vector<8x32xf32>
    %614 = vector.broadcast %595 : vector<1x32xf32> to vector<8x32xf32>
    %615 = arith.addf %613, %614 : vector<8x32xf32>
    %616 = vector.extract_strided_slice %432 {offsets = [5, 0, 0], sizes = [1, 32, 32], strides = [1, 1, 1]} : vector<6x32x32xf32> to vector<1x32x32xf32>
    %617 = vector.shape_cast %616 : vector<1x32x32xf32> to vector<32x32xf32>
    %cst_220 = arith.constant dense<0.000000e+00> : vector<8x32xf32>
    %618 = tpu.matmul %456, %617, %cst_220 {dimension_numbers = #tpu.dot_dimension_numbers<[1], [0], [0], [1], [0, 0, 1, 1], [], []>} : vector<8x32xf32>, vector<32x32xf32>, vector<8x32xf32> -> vector<8x32xf32>
    %619 = vector.extract_strided_slice %433 {offsets = [5, 0, 0], sizes = [1, 1, 32], strides = [1, 1, 1]} : vector<6x1x32xf32> to vector<1x1x32xf32>
    %620 = vector.shape_cast %619 : vector<1x1x32xf32> to vector<1x32xf32>
    %621 = vector.broadcast %620 : vector<1x32xf32> to vector<8x32xf32>
    %622 = arith.addf %618, %621 : vector<8x32xf32>
    %cst_221 = arith.constant dense<0.000000e+00> : vector<8x8xf32>
    %623 = tpu.matmul %586, %615, %cst_221 {dimension_numbers = #tpu.dot_dimension_numbers<[1], [1], [0], [0], [0, 0, 1, 0], [], []>} : vector<8x32xf32>, vector<8x32xf32>, vector<8x8xf32> -> vector<8x8xf32>
    %cst_222 = arith.constant 0.176776692 : f32
    %624 = vector.broadcast %cst_222 : f32 to vector<8x8xf32>
    %625 = arith.mulf %623, %624 : vector<8x8xf32>
    %cst_223 = arith.constant dense<0xFF800000> : vector<8xf32>
    %626 = vector.multi_reduction <maximumf>, %625, %cst_223 [1] : vector<8x8xf32> to vector<8xf32>
    %627 = vector.shape_cast %626 : vector<8xf32> to vector<8x1xf32>
    %628 = vector.broadcast %627 : vector<8x1xf32> to vector<8x8xf32>
    %629 = arith.subf %625, %628 : vector<8x8xf32>
    %630 = math.exp %629 : vector<8x8xf32>
    %cst_224 = arith.constant dense<0.000000e+00> : vector<8xf32>
    %631 = vector.multi_reduction <add>, %630, %cst_224 [1] : vector<8x8xf32> to vector<8xf32>
    %632 = vector.shape_cast %631 : vector<8xf32> to vector<8x1xf32>
    %633 = vector.broadcast %632 : vector<8x1xf32> to vector<8x8xf32>
    %634 = arith.divf %630, %633 : vector<8x8xf32>
    %cst_225 = arith.constant dense<0.000000e+00> : vector<8x32xf32>
    %635 = tpu.matmul %634, %622, %cst_225 {dimension_numbers = #tpu.dot_dimension_numbers<[1], [0], [0], [1], [0, 0, 1, 1], [], []>} : vector<8x8xf32>, vector<8x32xf32>, vector<8x32xf32> -> vector<8x32xf32>
    %636 = tpu.concatenate %557, %635 in 1 : vector<8x32xf32>, vector<8x32xf32> -> vector<8x64xf32>
    %c0_226 = arith.constant 0 : index
    %c0_227 = arith.constant 0 : index
    %637 = vector.load %arg16[%c0_226, %c0_227] : memref<64x32xf32, #tpu.memory_space<vmem>>, vector<64x32xf32>
    %cst_228 = arith.constant dense<0.000000e+00> : vector<8x32xf32>
    %638 = tpu.matmul %636, %637, %cst_228 {dimension_numbers = #tpu.dot_dimension_numbers<[1], [0], [0], [1], [0, 0, 1, 1], [], []>} : vector<8x64xf32>, vector<64x32xf32>, vector<8x32xf32> -> vector<8x32xf32>
    %c0_229 = arith.constant 0 : index
    %c0_230 = arith.constant 0 : index
    %639 = vector.load %arg17[%c0_229, %c0_230] : memref<1x32xf32, #tpu.memory_space<vmem>>, vector<1x32xf32>
    %640 = vector.broadcast %639 : vector<1x32xf32> to vector<8x32xf32>
    %641 = arith.addf %638, %640 : vector<8x32xf32>
    %cst_231 = arith.constant dense<0.000000e+00> : vector<32xf32>
    %642 = vector.multi_reduction <add>, %641, %cst_231 [0] : vector<8x32xf32> to vector<32xf32>
    %643 = vector.shape_cast %642 : vector<32xf32> to vector<1x32xf32>
    %cst_232 = arith.constant 8.000000e+00 : f32
    %644 = vector.broadcast %cst_232 : f32 to vector<1x32xf32>
    %645 = arith.divf %643, %644 : vector<1x32xf32>
    %c0_233 = arith.constant 0 : index
    %c0_234 = arith.constant 0 : index
    %646 = vector.load %arg18[%c0_233, %c0_234] : memref<32x2xf32, #tpu.memory_space<vmem>>, vector<32x2xf32>
    %cst_235 = arith.constant dense<0.000000e+00> : vector<1x2xf32>
    %647 = tpu.matmul %645, %646, %cst_235 {dimension_numbers = #tpu.dot_dimension_numbers<[1], [0], [0], [1], [0, 0, 1, 1], [], []>} : vector<1x32xf32>, vector<32x2xf32>, vector<1x2xf32> -> vector<1x2xf32>
    %c0_236 = arith.constant 0 : index
    %c0_237 = arith.constant 0 : index
    %648 = vector.load %arg19[%c0_236, %c0_237] : memref<1x2xf32, #tpu.memory_space<vmem>>, vector<1x2xf32>
    %649 = arith.addf %647, %648 : vector<1x2xf32>
    %c0_238 = arith.constant 0 : index
    %c0_239 = arith.constant 0 : index
    %c0_240 = arith.constant 0 : index
    %650 = vector.load %arg20[%c0_238, %c0_239, %c0_240] : memref<1x1x2xf32, #tpu.memory_space<vmem>>, vector<1x1x2xf32>
    %651 = vector.shape_cast %650 : vector<1x1x2xf32> to vector<1x2xf32>
    %652 = vector.shape_cast %649 : vector<1x2xf32> to vector<1x1x2xf32>
    tpu.vector_store %arg20[%c0_238, %c0_239, %c0_240], %652 {strides = array<i32>} : memref<1x1x2xf32, #tpu.memory_space<vmem>>, vector<1x1x2xf32>,
    return
  }
  func.func @transform_0(%arg0: i32) -> (i32, i32, i32) {
    %c0_i32 = arith.constant 0 : i32
    %c0_i32_0 = arith.constant 0 : i32
    %c0_i32_1 = arith.constant 0 : i32
    return %arg0, %c0_i32, %c0_i32_0 : i32, i32, i32
  }
  func.func @transform_1(%arg0: i32) -> (i32, i32, i32) {
    %c0_i32 = arith.constant 0 : i32
    %c0_i32_0 = arith.constant 0 : i32
    %c0_i32_1 = arith.constant 0 : i32
    %c0_i32_2 = arith.constant 0 : i32
    return %c0_i32, %c0_i32_0, %c0_i32_1 : i32, i32, i32
  }
  func.func @transform_2(%arg0: i32) -> (i32, i32, i32) {
    %c0_i32 = arith.constant 0 : i32
    %c0_i32_0 = arith.constant 0 : i32
    %c0_i32_1 = arith.constant 0 : i32
    %c0_i32_2 = arith.constant 0 : i32
    return %c0_i32, %c0_i32_0, %c0_i32_1 : i32, i32, i32
  }
  func.func @transform_3(%arg0: i32) -> (i32, i32, i32) {
    %c0_i32 = arith.constant 0 : i32
    %c0_i32_0 = arith.constant 0 : i32
    %c0_i32_1 = arith.constant 0 : i32
    %c0_i32_2 = arith.constant 0 : i32
    return %c0_i32, %c0_i32_0, %c0_i32_1 : i32, i32, i32
  }
  func.func @transform_4(%arg0: i32) -> (i32, i32, i32) {
    %c0_i32 = arith.constant 0 : i32
    %c0_i32_0 = arith.constant 0 : i32
    %c0_i32_1 = arith.constant 0 : i32
    %c0_i32_2 = arith.constant 0 : i32
    return %c0_i32, %c0_i32_0, %c0_i32_1 : i32, i32, i32
  }
  func.func @transform_5(%arg0: i32) -> (i32, i32, i32) {
    %c0_i32 = arith.constant 0 : i32
    %c0_i32_0 = arith.constant 0 : i32
    %c0_i32_1 = arith.constant 0 : i32
    %c0_i32_2 = arith.constant 0 : i32
    return %c0_i32, %c0_i32_0, %c0_i32_1 : i32, i32, i32
  }
  func.func @transform_6(%arg0: i32) -> (i32, i32, i32) {
    %c0_i32 = arith.constant 0 : i32
    %c0_i32_0 = arith.constant 0 : i32
    %c0_i32_1 = arith.constant 0 : i32
    %c0_i32_2 = arith.constant 0 : i32
    return %c0_i32, %c0_i32_0, %c0_i32_1 : i32, i32, i32
  }
  func.func @transform_7(%arg0: i32) -> (i32, i32, i32) {
    %c0_i32 = arith.constant 0 : i32
    %c0_i32_0 = arith.constant 0 : i32
    %c0_i32_1 = arith.constant 0 : i32
    %c0_i32_2 = arith.constant 0 : i32
    return %c0_i32, %c0_i32_0, %c0_i32_1 : i32, i32, i32
  }
  func.func @transform_8(%arg0: i32) -> (i32, i32, i32) {
    %c0_i32 = arith.constant 0 : i32
    %c0_i32_0 = arith.constant 0 : i32
    %c0_i32_1 = arith.constant 0 : i32
    %c0_i32_2 = arith.constant 0 : i32
    return %c0_i32, %c0_i32_0, %c0_i32_1 : i32, i32, i32
  }
  func.func @transform_9(%arg0: i32) -> (i32, i32, i32) {
    %c0_i32 = arith.constant 0 : i32
    %c0_i32_0 = arith.constant 0 : i32
    %c0_i32_1 = arith.constant 0 : i32
    %c0_i32_2 = arith.constant 0 : i32
    return %c0_i32, %c0_i32_0, %c0_i32_1 : i32, i32, i32
  }
  func.func @transform_10(%arg0: i32) -> (i32, i32, i32) {
    %c0_i32 = arith.constant 0 : i32
    %c0_i32_0 = arith.constant 0 : i32
    %c0_i32_1 = arith.constant 0 : i32
    %c0_i32_2 = arith.constant 0 : i32
    return %c0_i32, %c0_i32_0, %c0_i32_1 : i32, i32, i32
  }
  func.func @transform_11(%arg0: i32) -> (i32, i32) {
    %c0_i32 = arith.constant 0 : i32
    %c0_i32_0 = arith.constant 0 : i32
    %c0_i32_1 = arith.constant 0 : i32
    return %c0_i32, %c0_i32_0 : i32, i32
  }
  func.func @transform_12(%arg0: i32) -> (i32, i32) {
    %c0_i32 = arith.constant 0 : i32
    %c0_i32_0 = arith.constant 0 : i32
    %c0_i32_1 = arith.constant 0 : i32
    return %c0_i32, %c0_i32_0 : i32, i32
  }
  func.func @transform_13(%arg0: i32) -> (i32, i32, i32) {
    %c0_i32 = arith.constant 0 : i32
    %c0_i32_0 = arith.constant 0 : i32
    %c0_i32_1 = arith.constant 0 : i32
    %c0_i32_2 = arith.constant 0 : i32
    return %c0_i32, %c0_i32_0, %c0_i32_1 : i32, i32, i32
  }
  func.func @transform_14(%arg0: i32) -> (i32, i32, i32) {
    %c0_i32 = arith.constant 0 : i32
    %c0_i32_0 = arith.constant 0 : i32
    %c0_i32_1 = arith.constant 0 : i32
    %c0_i32_2 = arith.constant 0 : i32
    return %c0_i32, %c0_i32_0, %c0_i32_1 : i32, i32, i32
  }
  func.func @transform_15(%arg0: i32) -> (i32, i32) {
    %c0_i32 = arith.constant 0 : i32
    %c0_i32_0 = arith.constant 0 : i32
    %c0_i32_1 = arith.constant 0 : i32
    return %c0_i32, %c0_i32_0 : i32, i32
  }
  func.func @transform_16(%arg0: i32) -> (i32, i32) {
    %c0_i32 = arith.constant 0 : i32
    %c0_i32_0 = arith.constant 0 : i32
    %c0_i32_1 = arith.constant 0 : i32
    return %c0_i32, %c0_i32_0 : i32, i32
  }
  func.func @transform_17(%arg0: i32) -> (i32, i32) {
    %c0_i32 = arith.constant 0 : i32
    %c0_i32_0 = arith.constant 0 : i32
    %c0_i32_1 = arith.constant 0 : i32
    return %c0_i32, %c0_i32_0 : i32, i32
  }
  func.func @transform_18(%arg0: i32) -> (i32, i32) {
    %c0_i32 = arith.constant 0 : i32
    %c0_i32_0 = arith.constant 0 : i32
    %c0_i32_1 = arith.constant 0 : i32
    return %c0_i32, %c0_i32_0 : i32, i32
  }
  func.func @transform_19(%arg0: i32) -> (i32, i32, i32) {
    %c0_i32 = arith.constant 0 : i32
    %c0_i32_0 = arith.constant 0 : i32
    %c0_i32_1 = arith.constant 0 : i32
    return %arg0, %c0_i32, %c0_i32_0 : i32, i32, i32
  }
}

</mosaic_0001>

<llo_original>
// kernel: transformer_fake_detector.1
$region0: #{transformer_fake_detector.1}
  #allocation0 [shape = 'u32[]', space=smem, size = 0x4, offset = 0x4, fixed_abs, tag = 'smem constant byte address 0x4 - core index']
  #allocation1 [shape = 'u32[144,128]{1,0:T(1,128)}', space=vmem, size = 0x12000, scoped, tag = 'internal scratch']
  %s0 = inlined_call_operand.vmem [shape: f32[2,16,32], index: 0, kind: input, shape index: {}]
  %s1 = inlined_call_operand.hbm [shape: f32[2,2,32], index: 1, kind: input, shape index: {}]
  %s2 = inlined_call_operand.hbm [shape: f32[2,2,32], index: 2, kind: input, shape index: {}]
  %s3 = inlined_call_operand.vmem [shape: f32[2,32,96], index: 3, kind: input, shape index: {}]
  %s4 = inlined_call_operand.hbm [shape: f32[2,1,96], index: 4, kind: input, shape index: {}]
  %s5 = inlined_call_operand.vmem [shape: f32[2,32,32], index: 5, kind: input, shape index: {}]
  %s6 = inlined_call_operand.hbm [shape: f32[2,1,32], index: 6, kind: input, shape index: {}]
  %s7 = inlined_call_operand.hbm [shape: f32[2,32,64], index: 7, kind: input, shape index: {}]
  %s8 = inlined_call_operand.hbm [shape: f32[2,1,64], index: 8, kind: input, shape index: {}]
  %s9 = inlined_call_operand.vmem [shape: f32[2,64,32], index: 9, kind: input, shape index: {}]
  %s10 = inlined_call_operand.hbm [shape: f32[2,1,32], index: 10, kind: input, shape index: {}]
  %s11 = inlined_call_operand.vmem [shape: f32[4,32], index: 11, kind: input, shape index: {}]
  %s12 = inlined_call_operand.vmem [shape: f32[4,32], index: 12, kind: input, shape index: {}]
  %s13 = inlined_call_operand.vmem [shape: f32[6,32,32], index: 13, kind: input, shape index: {}]
  %s14 = inlined_call_operand.vmem [shape: f32[6,1,32], index: 14, kind: input, shape index: {}]
  %s15 = inlined_call_operand.vmem [shape: f32[64,32], index: 15, kind: input, shape index: {}]
  %s16 = inlined_call_operand.vmem [shape: f32[1,32], index: 16, kind: input, shape index: {}]
  %s17 = inlined_call_operand.vmem [shape: f32[32,2], index: 17, kind: input, shape index: {}]
  %s18 = inlined_call_operand.hbm [shape: f32[1,2], index: 18, kind: input, shape index: {}]
  %s19 = inlined_call_operand.hbm [shape: f32[2,1,2], index: 19, kind: output, shape index: {}]
  %s20 = sld [smem:[#allocation0]]
  $region141: #{transformer_fake_detector.1} parent=0
    _
  %s22 = ssub.s32 1, %s20
  %s23 = scalar_select 0, %s22, %s20
  $region1: #{transformer_fake_detector.1} parent=0
    #allocation2 [shape = 'u8[2048]{0}', space=vmem, size = 0x800, scoped, tag = 'input window, operand 1, single buffered']
    #allocation3 [shape = 's32[2]{0}', space=sflag, size = 0x8, scoped, tag = 'scoped memory for transformer_fake_detector.1']
    #allocation4 [shape = 's32[2]{0}', space=sflag, size = 0x8, scoped, tag = 'scoped memory for transformer_fake_detector.1']
    #allocation5 [shape = 'u8[2048]{0}', space=vmem, size = 0x800, scoped, tag = 'input window, operand 2, single buffered']
    #allocation6 [shape = 's32[1]{0}', space=sflag, size = 0x4, scoped, tag = 'scoped memory for transformer_fake_detector.1']
    #allocation7 [shape = 'u8[1024]{0}', space=vmem, size = 0x400, scoped, tag = 'input window, operand 4, single buffered']
    #allocation8 [shape = 'u8[1024]{0}', space=vmem, size = 0x400, scoped, tag = 'input window, operand 6, single buffered']
    #allocation9 [shape = 's32[1]{0}', space=sflag, size = 0x4, scoped, tag = 'scoped memory for transformer_fake_detector.1']
    #allocation10 [shape = 'u8[32768]{0}', space=vmem, size = 0x8000, scoped, tag = 'input window, operand 7, single buffered']
    #allocation11 [shape = 'u8[1024]{0}', space=vmem, size = 0x400, scoped, tag = 'input window, operand 8, single buffered']
    #allocation12 [shape = 's32[1]{0}', space=sflag, size = 0x4, scoped, tag = 'scoped memory for transformer_fake_detector.1']
    #allocation13 [shape = 'u8[1024]{0}', space=vmem, size = 0x400, scoped, tag = 'input window, operand 10, single buffered']
    #allocation14 [shape = 'u8[512]{0}', space=vmem, size = 0x400, scoped, tag = 'input window, operand 18, single buffered']
    #allocation15 [shape = 's32[1]{0}', space=sflag, size = 0x4, scoped, tag = 'scoped memory for transformer_fake_detector.1']
    #allocation16 [shape = 'u8[1024]{0}', space=vmem, size = 0x400, scoped, tag = 'output window, operand 0']
    %24 = vsyncpa [#allocation3], 0
    %25 = vsyncpa [#allocation6], 0
    %26 = vsyncpa [#allocation9], 0
    %27 = vsyncpa [#allocation12], 0
    %28 = vsyncpa [#allocation15], 0
    %29 = vsyncpa [#allocation4], 0
    %s30 = scalar_lea.sflag [#allocation4], 1
    %31 = vsyncpa %s30, 0
    loop: start=0, step=1, limit=4
    $region2: #{transformer_fake_detector.1} parent=1 // loop_pre_header
      _
    $region3: #{transformer_fake_detector.1} parent=1 // loop_header
      %s33 = sphi 0, %s37
      %p34 = scmp.ge.s32.totalorder %s33, 4
      %s43 = sphi 0, %s45
      %s46 = sphi 0, %s43
      %s47 = sphi 0, %s46
      %s63 = sphi 0, %s47
      %s67 = sphi 0, %s67
      %s69 = sphi 0, %s67
      %s70 = sphi 0, %s69
      %s84 = sphi 0, %s70
      %s88 = sphi 0, %s88
      %s90 = sphi 0, %s88
      %s91 = sphi 0, %s90
      %s105 = sphi 0, %s91
      %s109 = sphi 0, %s109
      %s111 = sphi 0, %s109
      %s112 = sphi 0, %s111
      %s126 = sphi 0, %s112
      %s130 = sphi 0, %s130
      %s132 = sphi 0, %s130
      %s133 = sphi 0, %s132
      %s147 = sphi 0, %s133
      %s151 = sphi 0, %s151
      %s153 = sphi 0, %s151
      %s154 = sphi 0, %s153
      %s168 = sphi 0, %s154
      %s172 = sphi 0, %s172
      %s174 = sphi 0, %s172
      %s175 = sphi 0, %s174
      %s189 = sphi 0, %s175
      %s193 = sphi 0, %s193
      %s195 = sphi 0, %s193
      %s196 = sphi 0, %s195
      %s210 = sphi 0, %s196
      %s214 = sphi 0, %s214
      %s216 = sphi 0, %s214
      %s217 = sphi 0, %s216
      %s231 = sphi 0, %s217
      %s235 = sphi 0, %s235
      %s237 = sphi 0, %s235
      %s238 = sphi 0, %s237
      %s252 = sphi 0, %s238
      %s256 = sphi 0, %s256
      %s258 = sphi 0, %s256
      %s259 = sphi 0, %s258
      %s273 = sphi 0, %s259
      %s277 = sphi 0, %s277
      %s279 = sphi 0, %s277
      %s280 = sphi 0, %s279
      %s294 = sphi 0, %s280
      %s298 = sphi 0, %s298
      %s300 = sphi 0, %s298
      %s301 = sphi 0, %s300
      %s315 = sphi 0, %s301
      %s319 = sphi 0, %s319
      %s321 = sphi 0, %s319
      %s322 = sphi 0, %s321
      %s336 = sphi 0, %s322
      %s340 = sphi 0, %s340
      %s342 = sphi 0, %s340
      %s343 = sphi 0, %s342
      %s357 = sphi 0, %s343
      %s361 = sphi 0, %s361
      %s363 = sphi 0, %s361
      %s364 = sphi 0, %s363
      %s378 = sphi 0, %s364
      %s382 = sphi 0, %s382
      %s384 = sphi 0, %s382
      %s385 = sphi 0, %s384
      %s399 = sphi 0, %s385
      %s403 = sphi 0, %s403
      %s405 = sphi 0, %s403
      %s406 = sphi 0, %s405
      %s420 = sphi 0, %s406
      %s424 = sphi 0, %s424
      %s426 = sphi 0, %s424
      %s427 = sphi 0, %s426
      %s441 = sphi 0, %s427
      %s447 = sphi 0, %s449
      %s450 = sphi 0, %s447
      %s451 = sphi 0, %s450
      %s467 = sphi 0, %s451
    $region4: #{transformer_fake_detector.1} parent=1 // loop_header_branch
      %36 = sbr.rel (%p34) target = $region8
    $region5: #{transformer_fake_detector.1} parent=1 // loop_body
      %s38 = ssub.s32 %s33, 1
      %s39 = ssub.s32 %s33, 2
      %s40 = sadd.s32 %s33, 1
      %s41 = ssub.s32 %s33, %s40
      %p42 = scmp.eq.s32.totalorder %s41, 0
      %s44 = sadd.s32 %s43, 1
      %s45 = scalar_select %p42, %s43, %s44
      %p48 = pneg %p42
      %p49 = scmp.eq.s32.totalorder %s33, 1
      %p50 = por %p48, %p49
      %p51 = scmp.ne.s32.totalorder %s43, %s46
      %p52 = scmp.eq.s32.totalorder %s33, 0
      %p53 = por %p51, %p52
      %p54 = scmp.ne.s32.totalorder %s43, %s46
      %p55 = scmp.eq.s32.totalorder %s38, 1
      %p56 = por %p54, %p55
      %p57 = scmp.ne.s32.totalorder %s46, %s47
      %p58 = scmp.eq.s32.totalorder %s38, 0
      %p59 = por %p57, %p58
      %p60 = scmp.ne.s32.totalorder %s46, %s47
      %p61 = scmp.eq.s32.totalorder %s39, 1
      %p62 = por %p60, %p61
      %p64 = scmp.ne.s32.totalorder %s47, %s63
      %p65 = scmp.eq.s32.totalorder %s39, 0
      %p66 = por %p64, %p65
      %s68 = sadd.s32 %s67, 1
      %p71 = scmp.eq.s32.totalorder %s33, 1
      %p72 = scmp.ne.s32.totalorder %s67, %s69
      %p73 = scmp.eq.s32.totalorder %s33, 0
      %p74 = por %p72, %p73
      %p75 = scmp.ne.s32.totalorder %s67, %s69
      %p76 = scmp.eq.s32.totalorder %s38, 1
      %p77 = por %p75, %p76
      %p78 = scmp.ne.s32.totalorder %s69, %s70
      %p79 = scmp.eq.s32.totalorder %s38, 0
      %p80 = por %p78, %p79
      %p81 = scmp.ne.s32.totalorder %s69, %s70
      %p82 = scmp.eq.s32.totalorder %s39, 1
      %p83 = por %p81, %p82
      %p85 = scmp.ne.s32.totalorder %s70, %s84
      %p86 = scmp.eq.s32.totalorder %s39, 0
      %p87 = por %p85, %p86
      %s89 = sadd.s32 %s88, 1
      %p92 = scmp.eq.s32.totalorder %s33, 1
      %p93 = scmp.ne.s32.totalorder %s88, %s90
      %p94 = scmp.eq.s32.totalorder %s33, 0
      %p95 = por %p93, %p94
      %p96 = scmp.ne.s32.totalorder %s88, %s90
      %p97 = scmp.eq.s32.totalorder %s38, 1
      %p98 = por %p96, %p97
      %p99 = scmp.ne.s32.totalorder %s90, %s91
      %p100 = scmp.eq.s32.totalorder %s38, 0
      %p101 = por %p99, %p100
      %p102 = scmp.ne.s32.totalorder %s90, %s91
      %p103 = scmp.eq.s32.totalorder %s39, 1
      %p104 = por %p102, %p103
      %p106 = scmp.ne.s32.totalorder %s91, %s105
      %p107 = scmp.eq.s32.totalorder %s39, 0
      %p108 = por %p106, %p107
      %s110 = sadd.s32 %s109, 1
      %p113 = scmp.eq.s32.totalorder %s33, 1
      %p114 = scmp.ne.s32.totalorder %s109, %s111
      %p115 = scmp.eq.s32.totalorder %s33, 0
      %p116 = por %p114, %p115
      %p117 = scmp.ne.s32.totalorder %s109, %s111
      %p118 = scmp.eq.s32.totalorder %s38, 1
      %p119 = por %p117, %p118
      %p120 = scmp.ne.s32.totalorder %s111, %s112
      %p121 = scmp.eq.s32.totalorder %s38, 0
      %p122 = por %p120, %p121
      %p123 = scmp.ne.s32.totalorder %s111, %s112
      %p124 = scmp.eq.s32.totalorder %s39, 1
      %p125 = por %p123, %p124
      %p127 = scmp.ne.s32.totalorder %s112, %s126
      %p128 = scmp.eq.s32.totalorder %s39, 0
      %p129 = por %p127, %p128
      %s131 = sadd.s32 %s130, 1
      %p134 = scmp.eq.s32.totalorder %s33, 1
      %p135 = scmp.ne.s32.totalorder %s130, %s132
      %p136 = scmp.eq.s32.totalorder %s33, 0
      %p137 = por %p135, %p136
      %p138 = scmp.ne.s32.totalorder %s130, %s132
      %p139 = scmp.eq.s32.totalorder %s38, 1
      %p140 = por %p138, %p139
      %p141 = scmp.ne.s32.totalorder %s132, %s133
      %p142 = scmp.eq.s32.totalorder %s38, 0
      %p143 = por %p141, %p142
      %p144 = scmp.ne.s32.totalorder %s132, %s133
      %p145 = scmp.eq.s32.totalorder %s39, 1
      %p146 = por %p144, %p145
      %p148 = scmp.ne.s32.totalorder %s133, %s147
      %p149 = scmp.eq.s32.totalorder %s39, 0
      %p150 = por %p148, %p149
      %s152 = sadd.s32 %s151, 1
      %p155 = scmp.eq.s32.totalorder %s33, 1
      %p156 = scmp.ne.s32.totalorder %s151, %s153
      %p157 = scmp.eq.s32.totalorder %s33, 0
      %p158 = por %p156, %p157
      %p159 = scmp.ne.s32.totalorder %s151, %s153
      %p160 = scmp.eq.s32.totalorder %s38, 1
      %p161 = por %p159, %p160
      %p162 = scmp.ne.s32.totalorder %s153, %s154
      %p163 = scmp.eq.s32.totalorder %s38, 0
      %p164 = por %p162, %p163
      %p165 = scmp.ne.s32.totalorder %s153, %s154
      %p166 = scmp.eq.s32.totalorder %s39, 1
      %p167 = por %p165, %p166
      %p169 = scmp.ne.s32.totalorder %s154, %s168
      %p170 = scmp.eq.s32.totalorder %s39, 0
      %p171 = por %p169, %p170
      %s173 = sadd.s32 %s172, 1
      %p176 = scmp.eq.s32.totalorder %s33, 1
      %p177 = scmp.ne.s32.totalorder %s172, %s174
      %p178 = scmp.eq.s32.totalorder %s33, 0
      %p179 = por %p177, %p178
      %p180 = scmp.ne.s32.totalorder %s172, %s174
      %p181 = scmp.eq.s32.totalorder %s38, 1
      %p182 = por %p180, %p181
      %p183 = scmp.ne.s32.totalorder %s174, %s175
      %p184 = scmp.eq.s32.totalorder %s38, 0
      %p185 = por %p183, %p184
      %p186 = scmp.ne.s32.totalorder %s174, %s175
      %p187 = scmp.eq.s32.totalorder %s39, 1
      %p188 = por %p186, %p187
      %p190 = scmp.ne.s32.totalorder %s175, %s189
      %p191 = scmp.eq.s32.totalorder %s39, 0
      %p192 = por %p190, %p191
      %s194 = sadd.s32 %s193, 1
      %p197 = scmp.eq.s32.totalorder %s33, 1
      %p198 = scmp.ne.s32.totalorder %s193, %s195
      %p199 = scmp.eq.s32.totalorder %s33, 0
      %p200 = por %p198, %p199
      %p201 = scmp.ne.s32.totalorder %s193, %s195
      %p202 = scmp.eq.s32.totalorder %s38, 1
      %p203 = por %p201, %p202
      %p204 = scmp.ne.s32.totalorder %s195, %s196
      %p205 = scmp.eq.s32.totalorder %s38, 0
      %p206 = por %p204, %p205
      %p207 = scmp.ne.s32.totalorder %s195, %s196
      %p208 = scmp.eq.s32.totalorder %s39, 1
      %p209 = por %p207, %p208
      %p211 = scmp.ne.s32.totalorder %s196, %s210
      %p212 = scmp.eq.s32.totalorder %s39, 0
      %p213 = por %p211, %p212
      %s215 = sadd.s32 %s214, 1
      %p218 = scmp.eq.s32.totalorder %s33, 1
      %p219 = scmp.ne.s32.totalorder %s214, %s216
      %p220 = scmp.eq.s32.totalorder %s33, 0
      %p221 = por %p219, %p220
      %p222 = scmp.ne.s32.totalorder %s214, %s216
      %p223 = scmp.eq.s32.totalorder %s38, 1
      %p224 = por %p222, %p223
      %p225 = scmp.ne.s32.totalorder %s216, %s217
      %p226 = scmp.eq.s32.totalorder %s38, 0
      %p227 = por %p225, %p226
      %p228 = scmp.ne.s32.totalorder %s216, %s217
      %p229 = scmp.eq.s32.totalorder %s39, 1
      %p230 = por %p228, %p229
      %p232 = scmp.ne.s32.totalorder %s217, %s231
      %p233 = scmp.eq.s32.totalorder %s39, 0
      %p234 = por %p232, %p233
      %s236 = sadd.s32 %s235, 1
      %p239 = scmp.eq.s32.totalorder %s33, 1
      %p240 = scmp.ne.s32.totalorder %s235, %s237
      %p241 = scmp.eq.s32.totalorder %s33, 0
      %p242 = por %p240, %p241
      %p243 = scmp.ne.s32.totalorder %s235, %s237
      %p244 = scmp.eq.s32.totalorder %s38, 1
      %p245 = por %p243, %p244
      %p246 = scmp.ne.s32.totalorder %s237, %s238
      %p247 = scmp.eq.s32.totalorder %s38, 0
      %p248 = por %p246, %p247
      %p249 = scmp.ne.s32.totalorder %s237, %s238
      %p250 = scmp.eq.s32.totalorder %s39, 1
      %p251 = por %p249, %p250
      %p253 = scmp.ne.s32.totalorder %s238, %s252
      %p254 = scmp.eq.s32.totalorder %s39, 0
      %p255 = por %p253, %p254
      %s257 = sadd.s32 %s256, 1
      %p260 = scmp.eq.s32.totalorder %s33, 1
      %p261 = scmp.ne.s32.totalorder %s256, %s258
      %p262 = scmp.eq.s32.totalorder %s33, 0
      %p263 = por %p261, %p262
      %p264 = scmp.ne.s32.totalorder %s256, %s258
      %p265 = scmp.eq.s32.totalorder %s38, 1
      %p266 = por %p264, %p265
      %p267 = scmp.ne.s32.totalorder %s258, %s259
      %p268 = scmp.eq.s32.totalorder %s38, 0
      %p269 = por %p267, %p268
      %p270 = scmp.ne.s32.totalorder %s258, %s259
      %p271 = scmp.eq.s32.totalorder %s39, 1
      %p272 = por %p270, %p271
      %p274 = scmp.ne.s32.totalorder %s259, %s273
      %p275 = scmp.eq.s32.totalorder %s39, 0
      %p276 = por %p274, %p275
      %s278 = sadd.s32 %s277, 1
      %p281 = scmp.eq.s32.totalorder %s33, 1
      %p282 = scmp.ne.s32.totalorder %s277, %s279
      %p283 = scmp.eq.s32.totalorder %s33, 0
      %p284 = por %p282, %p283
      %p285 = scmp.ne.s32.totalorder %s277, %s279
      %p286 = scmp.eq.s32.totalorder %s38, 1
      %p287 = por %p285, %p286
      %p288 = scmp.ne.s32.totalorder %s279, %s280
      %p289 = scmp.eq.s32.totalorder %s38, 0
      %p290 = por %p288, %p289
      %p291 = scmp.ne.s32.totalorder %s279, %s280
      %p292 = scmp.eq.s32.totalorder %s39, 1
      %p293 = por %p291, %p292
      %p295 = scmp.ne.s32.totalorder %s280, %s294
      %p296 = scmp.eq.s32.totalorder %s39, 0
      %p297 = por %p295, %p296
      %s299 = sadd.s32 %s298, 1
      %p302 = scmp.eq.s32.totalorder %s33, 1
      %p303 = scmp.ne.s32.totalorder %s298, %s300
      %p304 = scmp.eq.s32.totalorder %s33, 0
      %p305 = por %p303, %p304
      %p306 = scmp.ne.s32.totalorder %s298, %s300
      %p307 = scmp.eq.s32.totalorder %s38, 1
      %p308 = por %p306, %p307
      %p309 = scmp.ne.s32.totalorder %s300, %s301
      %p310 = scmp.eq.s32.totalorder %s38, 0
      %p311 = por %p309, %p310
      %p312 = scmp.ne.s32.totalorder %s300, %s301
      %p313 = scmp.eq.s32.totalorder %s39, 1
      %p314 = por %p312, %p313
      %p316 = scmp.ne.s32.totalorder %s301, %s315
      %p317 = scmp.eq.s32.totalorder %s39, 0
      %p318 = por %p316, %p317
      %s320 = sadd.s32 %s319, 1
      %p323 = scmp.eq.s32.totalorder %s33, 1
      %p324 = scmp.ne.s32.totalorder %s319, %s321
      %p325 = scmp.eq.s32.totalorder %s33, 0
      %p326 = por %p324, %p325
      %p327 = scmp.ne.s32.totalorder %s319, %s321
      %p328 = scmp.eq.s32.totalorder %s38, 1
      %p329 = por %p327, %p328
      %p330 = scmp.ne.s32.totalorder %s321, %s322
      %p331 = scmp.eq.s32.totalorder %s38, 0
      %p332 = por %p330, %p331
      %p333 = scmp.ne.s32.totalorder %s321, %s322
      %p334 = scmp.eq.s32.totalorder %s39, 1
      %p335 = por %p333, %p334
      %p337 = scmp.ne.s32.totalorder %s322, %s336
      %p338 = scmp.eq.s32.totalorder %s39, 0
      %p339 = por %p337, %p338
      %s341 = sadd.s32 %s340, 1
      %p344 = scmp.eq.s32.totalorder %s33, 1
      %p345 = scmp.ne.s32.totalorder %s340, %s342
      %p346 = scmp.eq.s32.totalorder %s33, 0
      %p347 = por %p345, %p346
      %p348 = scmp.ne.s32.totalorder %s340, %s342
      %p349 = scmp.eq.s32.totalorder %s38, 1
      %p350 = por %p348, %p349
      %p351 = scmp.ne.s32.totalorder %s342, %s343
      %p352 = scmp.eq.s32.totalorder %s38, 0
      %p353 = por %p351, %p352
      %p354 = scmp.ne.s32.totalorder %s342, %s343
      %p355 = scmp.eq.s32.totalorder %s39, 1
      %p356 = por %p354, %p355
      %p358 = scmp.ne.s32.totalorder %s343, %s357
      %p359 = scmp.eq.s32.totalorder %s39, 0
      %p360 = por %p358, %p359
      %s362 = sadd.s32 %s361, 1
      %p365 = scmp.eq.s32.totalorder %s33, 1
      %p366 = scmp.ne.s32.totalorder %s361, %s363
      %p367 = scmp.eq.s32.totalorder %s33, 0
      %p368 = por %p366, %p367
      %p369 = scmp.ne.s32.totalorder %s361, %s363
      %p370 = scmp.eq.s32.totalorder %s38, 1
      %p371 = por %p369, %p370
      %p372 = scmp.ne.s32.totalorder %s363, %s364
      %p373 = scmp.eq.s32.totalorder %s38, 0
      %p374 = por %p372, %p373
      %p375 = scmp.ne.s32.totalorder %s363, %s364
      %p376 = scmp.eq.s32.totalorder %s39, 1
      %p377 = por %p375, %p376
      %p379 = scmp.ne.s32.totalorder %s364, %s378
      %p380 = scmp.eq.s32.totalorder %s39, 0
      %p381 = por %p379, %p380
      %s383 = sadd.s32 %s382, 1
      %p386 = scmp.eq.s32.totalorder %s33, 1
      %p387 = scmp.ne.s32.totalorder %s382, %s384
      %p388 = scmp.eq.s32.totalorder %s33, 0
      %p389 = por %p387, %p388
      %p390 = scmp.ne.s32.totalorder %s382, %s384
      %p391 = scmp.eq.s32.totalorder %s38, 1
      %p392 = por %p390, %p391
      %p393 = scmp.ne.s32.totalorder %s384, %s385
      %p394 = scmp.eq.s32.totalorder %s38, 0
      %p395 = por %p393, %p394
      %p396 = scmp.ne.s32.totalorder %s384, %s385
      %p397 = scmp.eq.s32.totalorder %s39, 1
      %p398 = por %p396, %p397
      %p400 = scmp.ne.s32.totalorder %s385, %s399
      %p401 = scmp.eq.s32.totalorder %s39, 0
      %p402 = por %p400, %p401
      %s404 = sadd.s32 %s403, 1
      %p407 = scmp.eq.s32.totalorder %s33, 1
      %p408 = scmp.ne.s32.totalorder %s403, %s405
      %p409 = scmp.eq.s32.totalorder %s33, 0
      %p410 = por %p408, %p409
      %p411 = scmp.ne.s32.totalorder %s403, %s405
      %p412 = scmp.eq.s32.totalorder %s38, 1
      %p413 = por %p411, %p412
      %p414 = scmp.ne.s32.totalorder %s405, %s406
      %p415 = scmp.eq.s32.totalorder %s38, 0
      %p416 = por %p414, %p415
      %p417 = scmp.ne.s32.totalorder %s405, %s406
      %p418 = scmp.eq.s32.totalorder %s39, 1
      %p419 = por %p417, %p418
      %p421 = scmp.ne.s32.totalorder %s406, %s420
      %p422 = scmp.eq.s32.totalorder %s39, 0
      %p423 = por %p421, %p422
      %s425 = sadd.s32 %s424, 1
      %p428 = scmp.eq.s32.totalorder %s33, 1
      %p429 = scmp.ne.s32.totalorder %s424, %s426
      %p430 = scmp.eq.s32.totalorder %s33, 0
      %p431 = por %p429, %p430
      %p432 = scmp.ne.s32.totalorder %s424, %s426
      %p433 = scmp.eq.s32.totalorder %s38, 1
      %p434 = por %p432, %p433
      %p435 = scmp.ne.s32.totalorder %s426, %s427
      %p436 = scmp.eq.s32.totalorder %s38, 0
      %p437 = por %p435, %p436
      %p438 = scmp.ne.s32.totalorder %s426, %s427
      %p439 = scmp.eq.s32.totalorder %s39, 1
      %p440 = por %p438, %p439
      %p442 = scmp.ne.s32.totalorder %s427, %s441
      %p443 = scmp.eq.s32.totalorder %s39, 0
      %p444 = por %p442, %p443
      %s445 = ssub.s32 %s33, %s40
      %p446 = scmp.eq.s32.totalorder %s445, 0
      %s448 = sadd.s32 %s447, 1
      %s449 = scalar_select %p446, %s447, %s448
      %p452 = pneg %p446
      %p453 = scmp.eq.s32.totalorder %s33, 1
      %p454 = por %p452, %p453
      %p455 = scmp.ne.s32.totalorder %s447, %s450
      %p456 = scmp.eq.s32.totalorder %s33, 0
      %p457 = por %p455, %p456
      %p458 = scmp.ne.s32.totalorder %s447, %s450
      %p459 = scmp.eq.s32.totalorder %s38, 1
      %p460 = por %p458, %p459
      %p461 = scmp.ne.s32.totalorder %s450, %s451
      %p462 = scmp.eq.s32.totalorder %s38, 0
      %p463 = por %p461, %p462
      %p464 = scmp.ne.s32.totalorder %s450, %s451
      %p465 = scmp.eq.s32.totalorder %s39, 1
      %p466 = por %p464, %p465
      %p468 = scmp.ne.s32.totalorder %s451, %s467
      %p469 = scmp.eq.s32.totalorder %s39, 0
      %p470 = por %p468, %p469
      %p471 = scmp.le.s32.totalorder 1, %s33
      %p472 = scmp.lt.s32.totalorder %s33, 3
      %p473 = pnand %p471, %p472
      %p474 = pneg %p473
      // Predicated region
      $region9: #{transformer_fake_detector.1} parent=5 // pred_check
        _
      $region10: #{transformer_fake_detector.1} parent=5 // pred_check_branch
        %476 = sbr.rel (%p473) target = $region12
      $region11: #{transformer_fake_detector.1} parent=5 // pred_region
        %s477 = ssub.s32 %s33, 1
        // Predicated region
        $region13: #{transformer_fake_detector.1} parent=11 // pred_check
          %p478 = pneg %p80
        $region14: #{transformer_fake_detector.1} parent=11 // pred_check_branch
          %480 = sbr.rel (%p478) target = $region16
        $region15: #{transformer_fake_detector.1} parent=11 // pred_region
          %s482 = ssub.s32 64, 64
          %483 = vsyncadd [#allocation3], %s482
          %s484 = sshll.u32 [#allocation2], 4
          %s485 = int_to_ptr.vmem [resolvable:$true] %s484
          %490 = dma.hbm_to_vmem [thread:$0]  %s1, 64, %s485, [#allocation3], 32, 32, 2
        $region16: #{transformer_fake_detector.1} parent=11 // pred_fallthru
          _
        // Predicated region
        $region17: #{transformer_fake_detector.1} parent=11 // pred_check
          %p491 = pneg %p101
        $region18: #{transformer_fake_detector.1} parent=11 // pred_check_branch
          %493 = sbr.rel (%p491) target = $region20
        $region19: #{transformer_fake_detector.1} parent=11 // pred_region
          %s495 = ssub.s32 64, 64
          %496 = vsyncadd [#allocation6], %s495
          %s497 = sshll.u32 [#allocation5], 4
          %s498 = int_to_ptr.vmem [resolvable:$true] %s497
          %503 = dma.hbm_to_vmem [thread:$0]  %s2, 64, %s498, [#allocation6], 32, 32, 2
        $region20: #{transformer_fake_detector.1} parent=11 // pred_fallthru
          _
        // Predicated region
        $region21: #{transformer_fake_detector.1} parent=11 // pred_check
          %p504 = pneg %p122
        $region22: #{transformer_fake_detector.1} parent=11 // pred_check_branch
          %506 = sbr.rel (%p504) target = $region24
        $region23: #{transformer_fake_detector.1} parent=11 // pred_region
          _
        $region24: #{transformer_fake_detector.1} parent=11 // pred_fallthru
          _
        // Predicated region
        $region25: #{transformer_fake_detector.1} parent=11 // pred_check
          %p507 = pneg %p143
        $region26: #{transformer_fake_detector.1} parent=11 // pred_check_branch
          %509 = sbr.rel (%p507) target = $region28
        $region27: #{transformer_fake_detector.1} parent=11 // pred_region
          %s511 = ssub.s32 32, 32
          %512 = vsyncadd [#allocation6], %s511
          %s513 = sshll.u32 [#allocation7], 4
          %s514 = int_to_ptr.vmem [resolvable:$true] %s513
          %519 = dma.hbm_to_vmem [thread:$0]  %s4, 32, %s514, [#allocation6], 16, 16, 1
        $region28: #{transformer_fake_detector.1} parent=11 // pred_fallthru
          _
        // Predicated region
        $region29: #{transformer_fake_detector.1} parent=11 // pred_check
          %p520 = pneg %p164
        $region30: #{transformer_fake_detector.1} parent=11 // pred_check_branch
          %522 = sbr.rel (%p520) target = $region32
        $region31: #{transformer_fake_detector.1} parent=11 // pred_region
          _
        $region32: #{transformer_fake_detector.1} parent=11 // pred_fallthru
          _
        // Predicated region
        $region33: #{transformer_fake_detector.1} parent=11 // pred_check
          %p523 = pneg %p185
        $region34: #{transformer_fake_detector.1} parent=11 // pred_check_branch
          %525 = sbr.rel (%p523) target = $region36
        $region35: #{transformer_fake_detector.1} parent=11 // pred_region
          %s527 = ssub.s32 32, 32
          %528 = vsyncadd [#allocation9], %s527
          %s529 = sshll.u32 [#allocation8], 4
          %s530 = int_to_ptr.vmem [resolvable:$true] %s529
          %535 = dma.hbm_to_vmem [thread:$0]  %s6, 32, %s530, [#allocation9], 16, 16, 1
        $region36: #{transformer_fake_detector.1} parent=11 // pred_fallthru
          _
        // Predicated region
        $region37: #{transformer_fake_detector.1} parent=11 // pred_check
          %p536 = pneg %p206
        $region38: #{transformer_fake_detector.1} parent=11 // pred_check_branch
          %538 = sbr.rel (%p536) target = $region40
        $region39: #{transformer_fake_detector.1} parent=11 // pred_region
          %s540 = ssub.s32 1024, 1024
          %541 = vsyncadd [#allocation9], %s540
          %s542 = sshll.u32 [#allocation10], 4
          %s543 = int_to_ptr.vmem [resolvable:$true] %s542
          %548 = dma.hbm_to_vmem [thread:$0]  %s7, 1024, %s543, [#allocation9], 128, 128, 8
        $region40: #{transformer_fake_detector.1} parent=11 // pred_fallthru
          _
        // Predicated region
        $region41: #{transformer_fake_detector.1} parent=11 // pred_check
          %p549 = pneg %p227
        $region42: #{transformer_fake_detector.1} parent=11 // pred_check_branch
          %551 = sbr.rel (%p549) target = $region44
        $region43: #{transformer_fake_detector.1} parent=11 // pred_region
          %s553 = ssub.s32 32, 32
          %554 = vsyncadd [#allocation12], %s553
          %s555 = sshll.u32 [#allocation11], 4
          %s556 = int_to_ptr.vmem [resolvable:$true] %s555
          %561 = dma.hbm_to_vmem [thread:$0]  %s8, 32, %s556, [#allocation12], 16, 16, 1
        $region44: #{transformer_fake_detector.1} parent=11 // pred_fallthru
          _
        // Predicated region
        $region45: #{transformer_fake_detector.1} parent=11 // pred_check
          %p562 = pneg %p248
        $region46: #{transformer_fake_detector.1} parent=11 // pred_check_branch
          %564 = sbr.rel (%p562) target = $region48
        $region47: #{transformer_fake_detector.1} parent=11 // pred_region
          _
        $region48: #{transformer_fake_detector.1} parent=11 // pred_fallthru
          _
        // Predicated region
        $region49: #{transformer_fake_detector.1} parent=11 // pred_check
          %p565 = pneg %p269
        $region50: #{transformer_fake_detector.1} parent=11 // pred_check_branch
          %567 = sbr.rel (%p565) target = $region52
        $region51: #{transformer_fake_detector.1} parent=11 // pred_region
          %s569 = ssub.s32 32, 32
          %570 = vsyncadd [#allocation12], %s569
          %s571 = sshll.u32 [#allocation13], 4
          %s572 = int_to_ptr.vmem [resolvable:$true] %s571
          %577 = dma.hbm_to_vmem [thread:$0]  %s10, 32, %s572, [#allocation12], 16, 16, 1
        $region52: #{transformer_fake_detector.1} parent=11 // pred_fallthru
          _
        // Predicated region
        $region53: #{transformer_fake_detector.1} parent=11 // pred_check
          %p578 = pneg %p290
        $region54: #{transformer_fake_detector.1} parent=11 // pred_check_branch
          %580 = sbr.rel (%p578) target = $region56
        $region55: #{transformer_fake_detector.1} parent=11 // pred_region
          _
        $region56: #{transformer_fake_detector.1} parent=11 // pred_fallthru
          _
        // Predicated region
        $region57: #{transformer_fake_detector.1} parent=11 // pred_check
          %p581 = pneg %p311
        $region58: #{transformer_fake_detector.1} parent=11 // pred_check_branch
          %583 = sbr.rel (%p581) target = $region60
        $region59: #{transformer_fake_detector.1} parent=11 // pred_region
          _
        $region60: #{transformer_fake_detector.1} parent=11 // pred_fallthru
          _
        // Predicated region
        $region61: #{transformer_fake_detector.1} parent=11 // pred_check
          %p584 = pneg %p332
        $region62: #{transformer_fake_detector.1} parent=11 // pred_check_branch
          %586 = sbr.rel (%p584) target = $region64
        $region63: #{transformer_fake_detector.1} parent=11 // pred_region
          _
        $region64: #{transformer_fake_detector.1} parent=11 // pred_fallthru
          _
        // Predicated region
        $region65: #{transformer_fake_detector.1} parent=11 // pred_check
          %p587 = pneg %p353
        $region66: #{transformer_fake_detector.1} parent=11 // pred_check_branch
          %589 = sbr.rel (%p587) target = $region68
        $region67: #{transformer_fake_detector.1} parent=11 // pred_region
          _
        $region68: #{transformer_fake_detector.1} parent=11 // pred_fallthru
          _
        // Predicated region
        $region69: #{transformer_fake_detector.1} parent=11 // pred_check
          %p590 = pneg %p374
        $region70: #{transformer_fake_detector.1} parent=11 // pred_check_branch
          %592 = sbr.rel (%p590) target = $region72
        $region71: #{transformer_fake_detector.1} parent=11 // pred_region
          _
        $region72: #{transformer_fake_detector.1} parent=11 // pred_fallthru
          _
        // Predicated region
        $region73: #{transformer_fake_detector.1} parent=11 // pred_check
          %p593 = pneg %p395
        $region74: #{transformer_fake_detector.1} parent=11 // pred_check_branch
          %595 = sbr.rel (%p593) target = $region76
        $region75: #{transformer_fake_detector.1} parent=11 // pred_region
          _
        $region76: #{transformer_fake_detector.1} parent=11 // pred_fallthru
          _
        // Predicated region
        $region77: #{transformer_fake_detector.1} parent=11 // pred_check
          %p596 = pneg %p416
        $region78: #{transformer_fake_detector.1} parent=11 // pred_check_branch
          %598 = sbr.rel (%p596) target = $region80
        $region79: #{transformer_fake_detector.1} parent=11 // pred_region
          _
        $region80: #{transformer_fake_detector.1} parent=11 // pred_fallthru
          _
        // Predicated region
        $region81: #{transformer_fake_detector.1} parent=11 // pred_check
          %p599 = pneg %p437
        $region82: #{transformer_fake_detector.1} parent=11 // pred_check_branch
          %601 = sbr.rel (%p599) target = $region84
        $region83: #{transformer_fake_detector.1} parent=11 // pred_region
          %s603 = ssub.s32 16, 16
          %604 = vsyncadd [#allocation15], %s603
          %s606 = sshll.u32 [#allocation14], 4
          %s607 = int_to_ptr.vmem [resolvable:$true] %s606
          %609 = dma.hbm_to_vmem [thread:$0]  %s18, 16, %s607, [#allocation15]
        $region84: #{transformer_fake_detector.1} parent=11 // pred_fallthru
          _
      $region12: #{transformer_fake_detector.1} parent=5 // pred_fallthru
        _
      %p610 = scmp.lt.s32.totalorder %s33, 2
      // Predicated region
      $region85: #{transformer_fake_detector.1} parent=5 // pred_check
        %p611 = pneg %p610
      $region86: #{transformer_fake_detector.1} parent=5 // pred_check_branch
        %613 = sbr.rel (%p611) target = $region88
      $region87: #{transformer_fake_detector.1} parent=5 // pred_region
        // Predicated region
        $region89: #{transformer_fake_detector.1} parent=87 // pred_check
          %p614 = pneg %p53
        $region90: #{transformer_fake_detector.1} parent=87 // pred_check_branch
          %616 = sbr.rel (%p614) target = $region92
        $region91: #{transformer_fake_detector.1} parent=87 // pred_region
          %p617 = scmp.lt.s32.totalorder %s33, 1
          %s618 = scalar_select %p617, %s33, 1
          %s619 = smul.addr %s618, 2
          %s620 = smul.addr %s619, 8
          %s621 = scalar_lea.vmem %s0, %s620
        $region92: #{transformer_fake_detector.1} parent=87 // pred_fallthru
          _
      $region88: #{transformer_fake_detector.1} parent=5 // pred_fallthru
        _
      %p622 = scmp.le.s32.totalorder 1, %s33
      %p623 = scmp.lt.s32.totalorder %s33, 3
      %p624 = pnand %p622, %p623
      %p625 = pneg %p624
      // Predicated region
      $region93: #{transformer_fake_detector.1} parent=5 // pred_check
        _
      $region94: #{transformer_fake_detector.1} parent=5 // pred_check_branch
        %627 = sbr.rel (%p624) target = $region96
      $region95: #{transformer_fake_detector.1} parent=5 // pred_region
        %s628 = ssub.s32 %s33, 1
        // Predicated region
        $region97: #{transformer_fake_detector.1} parent=95 // pred_check
          %p629 = pneg %p80
        $region98: #{transformer_fake_detector.1} parent=95 // pred_check_branch
          %631 = sbr.rel (%p629) target = $region100
        $region99: #{transformer_fake_detector.1} parent=95 // pred_region
          %632 = dma.done [#allocation3], 64
        $region100: #{transformer_fake_detector.1} parent=95 // pred_fallthru
          _
        // Predicated region
        $region101: #{transformer_fake_detector.1} parent=95 // pred_check
          %p633 = pneg %p101
        $region102: #{transformer_fake_detector.1} parent=95 // pred_check_branch
          %635 = sbr.rel (%p633) target = $region104
        $region103: #{transformer_fake_detector.1} parent=95 // pred_region
          %636 = dma.done [#allocation6], 64
        $region104: #{transformer_fake_detector.1} parent=95 // pred_fallthru
          _
        // Predicated region
        $region105: #{transformer_fake_detector.1} parent=95 // pred_check
          %p637 = pneg %p143
        $region106: #{transformer_fake_detector.1} parent=95 // pred_check_branch
          %639 = sbr.rel (%p637) target = $region108
        $region107: #{transformer_fake_detector.1} parent=95 // pred_region
          %640 = dma.done [#allocation6], 32
        $region108: #{transformer_fake_detector.1} parent=95 // pred_fallthru
          _
        // Predicated region
        $region109: #{transformer_fake_detector.1} parent=95 // pred_check
          %p641 = pneg %p185
        $region110: #{transformer_fake_detector.1} parent=95 // pred_check_branch
          %643 = sbr.rel (%p641) target = $region112
        $region111: #{transformer_fake_detector.1} parent=95 // pred_region
          %644 = dma.done [#allocation9], 32
        $region112: #{transformer_fake_detector.1} parent=95 // pred_fallthru
          _
        // Predicated region
        $region113: #{transformer_fake_detector.1} parent=95 // pred_check
          %p645 = pneg %p206
        $region114: #{transformer_fake_detector.1} parent=95 // pred_check_branch
          %647 = sbr.rel (%p645) target = $region116
        $region115: #{transformer_fake_detector.1} parent=95 // pred_region
          %648 = dma.done [#allocation9], 1024
        $region116: #{transformer_fake_detector.1} parent=95 // pred_fallthru
          _
        // Predicated region
        $region117: #{transformer_fake_detector.1} parent=95 // pred_check
          %p649 = pneg %p227
        $region118: #{transformer_fake_detector.1} parent=95 // pred_check_branch
          %651 = sbr.rel (%p649) target = $region120
        $region119: #{transformer_fake_detector.1} parent=95 // pred_region
          %652 = dma.done [#allocation12], 32
        $region120: #{transformer_fake_detector.1} parent=95 // pred_fallthru
          _
        // Predicated region
        $region121: #{transformer_fake_detector.1} parent=95 // pred_check
          %p653 = pneg %p269
        $region122: #{transformer_fake_detector.1} parent=95 // pred_check_branch
          %655 = sbr.rel (%p653) target = $region124
        $region123: #{transformer_fake_detector.1} parent=95 // pred_region
          %656 = dma.done [#allocation12], 32
        $region124: #{transformer_fake_detector.1} parent=95 // pred_fallthru
          _
        // Predicated region
        $region125: #{transformer_fake_detector.1} parent=95 // pred_check
          %p657 = pneg %p437
        $region126: #{transformer_fake_detector.1} parent=95 // pred_check_branch
          %659 = sbr.rel (%p657) target = $region128
        $region127: #{transformer_fake_detector.1} parent=95 // pred_region
          %660 = dma.done [#allocation15], 16
        $region128: #{transformer_fake_detector.1} parent=95 // pred_fallthru
          _
        %p661 = scmp.lt.s32.totalorder %s38, 1
        %s662 = scalar_select %p661, %s38, 1
        %s663 = smul.addr %s662, 2
        %s664 = smul.addr %s663, 8
        %s665 = scalar_lea.vmem %s0, %s664
        %p666 = pneg %p59
        %p667 = pneg %p56
        %p668 = pneg %p80
        %p669 = pneg %p77
        %p670 = pneg %p101
        %p671 = pneg %p98
        %p672 = pneg %p122
        %p673 = pneg %p119
        %p674 = pneg %p143
        %p675 = pneg %p140
        %p676 = pneg %p164
        %p677 = pneg %p161
        %p678 = pneg %p185
        %p679 = pneg %p182
        %p680 = pneg %p206
        %p681 = pneg %p203
        %p682 = pneg %p227
        %p683 = pneg %p224
        %p684 = pneg %p248
        %p685 = pneg %p245
        %p686 = pneg %p269
        %p687 = pneg %p266
        %p688 = pneg %p290
        %p689 = pneg %p287
        %p690 = pneg %p311
        %p691 = pneg %p308
        %p692 = pneg %p332
        %p693 = pneg %p329
        %p694 = pneg %p353
        %p695 = pneg %p350
        %p696 = pneg %p374
        %p697 = pneg %p371
        %p698 = pneg %p395
        %p699 = pneg %p392
        %p700 = pneg %p416
        %p701 = pneg %p413
        %p702 = pneg %p437
        %p703 = pneg %p434
        %p704 = pneg %p463
        %p705 = pneg %p460
        %s706 = sand.u32 %s450, 1
        %s707 = scalar_lea.sflag [#allocation4], %s706
        %s708 = sand.u32 %s450, 1
        %s709 = scalar_lea.vmem [#allocation16], %s708
        %p710 = scmp.lt.s32.totalorder %s38, 1
        %s711 = scalar_select %p710, %s38, 1
        %s712 = smul.addr %s711, 2
        %s713 = smul.addr %s712, 8
        %s714 = scalar_lea.vmem %s0, %s713
        %v715 = vld [vmem:[%s714] sm:$0xff]
        %v716 = vld [vmem:[%s714 + $0x8] sm:$0xff]
        %v717 = vld [vmem:[#allocation2] sm:$0x3]
        %v718 = vld [vmem:[#allocation5] sm:$0x3]
        %vm719 = vcmask 261120
        %v720 = vsel %vm719, %v715, 0.0
        %721 = vadd.xlane.f32.xlu0 %v720
        %v722 = vpop.xlane.xlu0 %721
        %v723 = vsel %vm719, %v716, 0.0
        %724 = vadd.xlane.f32.xlu0 %v723
        %v725 = vpop.xlane.xlu0 %724
        %v726 = vrcp.pop 32.0
        %v727 = vmul.f32 %v722, %v726
        %v728 = vmul.f32 %v725, %v726
        %v729 = vsub.f32 %v715, %v727
        %v730 = vsub.f32 %v716, %v728
        %v731 = vmul.f32 %v729, %v729
        %v732 = vmul.f32 %v730, %v730
        %v733 = vsel %vm719, %v731, 0.0
        %734 = vadd.xlane.f32.xlu0 %v733
        %v735 = vpop.xlane.xlu0 %734
        %v736 = vsel %vm719, %v732, 0.0
        %737 = vadd.xlane.f32.xlu0 %v736
        %v738 = vpop.xlane.xlu0 %737
        %v739 = vmul.f32 %v735, %v726
        %v740 = vmul.f32 %v738, %v726
        %v741 = vadd.f32 %v739, 1e-05
        %v742 = vadd.f32 %v740, 1e-05
        %v743 = vrsqrt.pop %v741
        %v744 = vrsqrt.pop %v742
        %v745 = vmul.f32 %v729, %v743
        %v746 = vmul.f32 %v730, %v744
        %v747 = vlaneseq
        %v748 = vshrl.u32 %v747, 7
        %v749 = vsub.s32 0, %v748
        %v750 = vrot.slane %v717, %v749
        %v751 = vmul.f32 %v745, %v750
        %v752 = vmul.f32 %v746, %v750
        %v753 = vlaneseq
        %v754 = vshrl.u32 %v753, 7
        %v755 = vsub.s32 0, %v754
        %v756 = vrot.slane %v718, %v755
        %v757 = vadd.f32 %v751, %v756
        %v758 = vadd.f32 %v752, %v756
        %v759 = vld [vmem:[%s3] sm:$0xff]
        %v760 = vld [vmem:[%s3 + $0x8] sm:$0xff]
        %v761 = vld [vmem:[%s3 + $0x10] sm:$0xff]
        %v762 = vld [vmem:[%s3 + $0x18] sm:$0xff]
        %v763 = vld [vmem:[#allocation7] sm:$0x1]
        %v765 = vlaneseq
        %v766 = vshrl.u32 %v765, 7
        %v767 = vsub.s32 0, %v766
        %v768 = vrot.slane %v763, %v767
        %v771 = vsel %vm719, %v757, 0
        %v774 = vsel %vm719, %v758, 0
        %776 = vmatprep.subr.mxu0 0.0
        %777 = vmatpush1.msra.mxu0 %v759
        %778 = vmatprep.subr.mxu0 0.0
        %779 = vmatpush1.msra.mxu0 %v760
        %780 = vmatprep.subr.mxu0 0.0
        %781 = vmatpush1.msra.mxu0 %v761
        %782 = vmatprep.subr.mxu0 0.0
        %783 = vmatpush1.msra.mxu0 %v762
        %784 = vmatprep.subr.mxu0 0.0
        %785 = vmatpush1.msra.mxu0 0.0
        %786 = vmatprep.subr.mxu0 0.0
        %787 = vmatpush1.msra.mxu0 0.0
        %788 = vmatprep.subr.mxu0 0.0
        %789 = vmatpush1.msra.mxu0 0.0
        %790 = vmatprep.subr.mxu0 0.0
        %791 = vmatpush1.msra.mxu0 0.0
        %792 = vmatprep.subr.mxu0 0.0
        %793 = vmatpush1.msra.mxu0 0.0
        %794 = vmatprep.subr.mxu0 0.0
        %795 = vmatpush1.msra.mxu0 0.0
        %796 = vmatprep.subr.mxu0 0.0
        %797 = vmatpush1.msra.mxu0 0.0
        %798 = vmatprep.subr.mxu0 0.0
        %799 = vmatpush1.msra.mxu0 0.0
        %800 = vmatprep.subr.mxu0 0.0
        %801 = vmatpush1.msra.mxu0 0.0
        %802 = vmatprep.subr.mxu0 0.0
        %803 = vmatpush1.msra.mxu0 0.0
        %804 = vmatprep.subr.mxu0 0.0
        %805 = vmatpush1.msra.mxu0 0.0
        %806 = vmatprep.subr.mxu0 0.0
        %807 = vmatpush1.msra.mxu0 0.0
        %808 = vmatprep.subr.mxu0 0.0
        %809 = vmatpush1.msra.mxu0 0.0
        %810 = vmatprep.subr.mxu0 0.0
        %811 = vmatpush1.msra.mxu0 0.0
        %812 = vmatprep.subr.mxu0 0.0
        %813 = vmatpush1.msra.mxu0 0.0
        %814 = vmatprep.subr.mxu0 0.0
        %815 = vmatpush1.msra.mxu0 0.0
        %816 = vmatprep.subr.mxu0 0.0
        %817 = vmatpush1.msra.mxu0 0.0
        %818 = vmatprep.subr.mxu0 0.0
        %819 = vmatpush1.msra.mxu0 0.0
        %820 = vmatprep.subr.mxu0 0.0
        %821 = vmatpush1.msra.mxu0 0.0
        %822 = vmatprep.subr.mxu0 0.0
        %823 = vmatpush1.msra.mxu0 0.0
        %824 = vmatprep.subr.mxu0 0.0
        %825 = vmatpush1.msra.mxu0 0.0
        %826 = vmatprep.subr.mxu0 0.0
        %827 = vmatpush1.msra.mxu0 0.0
        %828 = vmatprep.subr.mxu0 0.0
        %829 = vmatpush1.msra.mxu0 0.0
        %830 = vmatprep.subr.mxu0 0.0
        %831 = vmatpush1.msra.mxu0 0.0
        %832 = vmatprep.subr.mxu0 0.0
        %833 = vmatpush1.msra.mxu0 0.0
        %834 = vmatprep.subr.mxu0 0.0
        %835 = vmatpush1.msra.mxu0 0.0
        %836 = vmatprep.subr.mxu0 0.0
        %837 = vmatpush1.msra.mxu0 0.0
        %838 = vmatprep.subr.mxu0 0.0
        %839 = vmatpush1.msra.mxu0 0.0
        %840 = vmatprep.mubr.f32.mxu0 0.0
        %841 = vmatmul.mubr.f32.gmra.mrb[0].mxu0 %v771
        %v842 = vpop.f32.mrb[0].mxu0
        %v843 = vadd.f32 %v768, %v842
        %v844 = vpop.f32.mrb[0].mxu0
        %845 = vmatprep.mubr.f32.mxu0 0.0
        %846 = vmatmul.mubr.f32.gmra.mrb[0].mxu0 %v774
        %v847 = vpop.f32.mrb[0].mxu0
        %v848 = vadd.f32 %v768, %v847
        %v849 = vpop.f32.mrb[0].mxu0
        %850 = vdwg.mxu0
        %852 = vrot.lane.b32.xlu0 %v843, 96
        %v853 = vpop.permute.xlu0 %852
        %vm854 = vcmask 64512
        %v855 = vsel %vm854, %v843, 0
        %v857 = vsel %vm854, %v853, 0
        %859 = vmatprep.subr.mxu0 0.0
        %860 = vmatpush1.xpose.msra.mxu0 %v857
        %861 = vmatprep.subr.mxu0 0.0
        %862 = vmatpush1.xpose.msra.mxu0 0.0
        %863 = vmatprep.subr.mxu0 0.0
        %864 = vmatpush1.xpose.msra.mxu0 0.0
        %865 = vmatprep.subr.mxu0 0.0
        %866 = vmatpush1.xpose.msra.mxu0 0.0
        %867 = vmatprep.subr.mxu0 0.0
        %868 = vmatpush1.xpose.msra.mxu0 0.0
        %869 = vmatprep.subr.mxu0 0.0
        %870 = vmatpush1.xpose.msra.mxu0 0.0
        %871 = vmatprep.subr.mxu0 0.0
        %872 = vmatpush1.xpose.msra.mxu0 0.0
        %873 = vmatprep.subr.mxu0 0.0
        %874 = vmatpush1.xpose.msra.mxu0 0.0
        %875 = vmatprep.subr.mxu0 0.0
        %876 = vmatpush1.xpose.msra.mxu0 0.0
        %877 = vmatprep.subr.mxu0 0.0
        %878 = vmatpush1.xpose.msra.mxu0 0.0
        %879 = vmatprep.subr.mxu0 0.0
        %880 = vmatpush1.xpose.msra.mxu0 0.0
        %881 = vmatprep.subr.mxu0 0.0
        %882 = vmatpush1.xpose.msra.mxu0 0.0
        %883 = vmatprep.subr.mxu0 0.0
        %884 = vmatpush1.xpose.msra.mxu0 0.0
        %885 = vmatprep.subr.mxu0 0.0
        %886 = vmatpush1.xpose.msra.mxu0 0.0
        %887 = vmatprep.subr.mxu0 0.0
        %888 = vmatpush1.xpose.msra.mxu0 0.0
        %889 = vmatprep.subr.mxu0 0.0
        %890 = vmatpush1.xpose.msra.mxu0 0.0
        %891 = vmatprep.subr.mxu0 0.0
        %892 = vmatpush1.xpose.msra.mxu0 0.0
        %893 = vmatprep.subr.mxu0 0.0
        %894 = vmatpush1.xpose.msra.mxu0 0.0
        %895 = vmatprep.subr.mxu0 0.0
        %896 = vmatpush1.xpose.msra.mxu0 0.0
        %897 = vmatprep.subr.mxu0 0.0
        %898 = vmatpush1.xpose.msra.mxu0 0.0
        %899 = vmatprep.subr.mxu0 0.0
        %900 = vmatpush1.xpose.msra.mxu0 0.0
        %901 = vmatprep.subr.mxu0 0.0
        %902 = vmatpush1.xpose.msra.mxu0 0.0
        %903 = vmatprep.subr.mxu0 0.0
        %904 = vmatpush1.xpose.msra.mxu0 0.0
        %905 = vmatprep.subr.mxu0 0.0
        %906 = vmatpush1.xpose.msra.mxu0 0.0
        %907 = vmatprep.subr.mxu0 0.0
        %908 = vmatpush1.xpose.msra.mxu0 0.0
        %909 = vmatprep.subr.mxu0 0.0
        %910 = vmatpush1.xpose.msra.mxu0 0.0
        %911 = vmatprep.subr.mxu0 0.0
        %912 = vmatpush1.xpose.msra.mxu0 0.0
        %913 = vmatprep.subr.mxu0 0.0
        %914 = vmatpush1.xpose.msra.mxu0 0.0
        %915 = vmatprep.subr.mxu0 0.0
        %916 = vmatpush1.xpose.msra.mxu0 0.0
        %917 = vmatprep.subr.mxu0 0.0
        %918 = vmatpush1.xpose.msra.mxu0 0.0
        %919 = vmatprep.subr.mxu0 0.0
        %920 = vmatpush1.xpose.msra.mxu0 0.0
        %921 = vmatprep.subr.mxu0 0.0
        %922 = vmatpush1.xpose.msra.mxu0 0.0
        %923 = vmatprep.mubr.f32.mxu0 0.0
        %924 = vmatmul.mubr.f32.gmra.mrb[0].mxu0 %v855
        %v925 = vpop.f32.mrb[0].mxu0
        %v926 = vadd.f32 0.0, %v925
        %v927 = vpop.f32.mrb[0].mxu0
        %928 = vdwg.mxu0
        %v929 = vmul.f32 %v926, 0.35355338
        %v930 = vsel %vm854, %v929, -inf
        %931 = vmax.xlane.f32.xlu0 %v930
        %v932 = vpop.xlane.xlu0 %931
        %v933 = vsub.f32 %v929, %v932
        %v934 = vmul.f32 %v933, 1.442695
        %v935 = vpow.pop %v934
        %v936 = vsel %vm854, %v935, 0.0
        %937 = vadd.xlane.f32.xlu0 %v936
        %v938 = vpop.xlane.xlu0 %937
        %v939 = vrcp.pop %v938
        %v940 = vmul.f32 %v935, %v939
        %941 = vrot.lane.b32.xlu0 %v843, 64
        %v942 = vpop.permute.xlu0 %941
        %v945 = vsel %vm854, %v940, 0
        %947 = vmatprep.subr.mxu0 0.0
        %948 = vmatpush1.msra.mxu0 %v942
        %949 = vmatprep.subr.mxu0 0.0
        %950 = vmatpush1.msra.mxu0 0.0
        %951 = vmatprep.subr.mxu0 0.0
        %952 = vmatpush1.msra.mxu0 0.0
        %953 = vmatprep.subr.mxu0 0.0
        %954 = vmatpush1.msra.mxu0 0.0
        %955 = vmatprep.subr.mxu0 0.0
        %956 = vmatpush1.msra.mxu0 0.0
        %957 = vmatprep.subr.mxu0 0.0
        %958 = vmatpush1.msra.mxu0 0.0
        %959 = vmatprep.subr.mxu0 0.0
        %960 = vmatpush1.msra.mxu0 0.0
        %961 = vmatprep.subr.mxu0 0.0
        %962 = vmatpush1.msra.mxu0 0.0
        %963 = vmatprep.subr.mxu0 0.0
        %964 = vmatpush1.msra.mxu0 0.0
        %965 = vmatprep.subr.mxu0 0.0
        %966 = vmatpush1.msra.mxu0 0.0
        %967 = vmatprep.subr.mxu0 0.0
        %968 = vmatpush1.msra.mxu0 0.0
        %969 = vmatprep.subr.mxu0 0.0
        %970 = vmatpush1.msra.mxu0 0.0
        %971 = vmatprep.subr.mxu0 0.0
        %972 = vmatpush1.msra.mxu0 0.0
        %973 = vmatprep.subr.mxu0 0.0
        %974 = vmatpush1.msra.mxu0 0.0
        %975 = vmatprep.subr.mxu0 0.0
        %976 = vmatpush1.msra.mxu0 0.0
        %977 = vmatprep.subr.mxu0 0.0
        %978 = vmatpush1.msra.mxu0 0.0
        %979 = vmatprep.subr.mxu0 0.0
        %980 = vmatpush1.msra.mxu0 0.0
        %981 = vmatprep.subr.mxu0 0.0
        %982 = vmatpush1.msra.mxu0 0.0
        %983 = vmatprep.subr.mxu0 0.0
        %984 = vmatpush1.msra.mxu0 0.0
        %985 = vmatprep.subr.mxu0 0.0
        %986 = vmatpush1.msra.mxu0 0.0
        %987 = vmatprep.subr.mxu0 0.0
        %988 = vmatpush1.msra.mxu0 0.0
        %989 = vmatprep.subr.mxu0 0.0
        %990 = vmatpush1.msra.mxu0 0.0
        %991 = vmatprep.subr.mxu0 0.0
        %992 = vmatpush1.msra.mxu0 0.0
        %993 = vmatprep.subr.mxu0 0.0
        %994 = vmatpush1.msra.mxu0 0.0
        %995 = vmatprep.subr.mxu0 0.0
        %996 = vmatpush1.msra.mxu0 0.0
        %997 = vmatprep.subr.mxu0 0.0
        %998 = vmatpush1.msra.mxu0 0.0
        %999 = vmatprep.subr.mxu0 0.0
        %1000 = vmatpush1.msra.mxu0 0.0
        %1001 = vmatprep.subr.mxu0 0.0
        %1002 = vmatpush1.msra.mxu0 0.0
        %1003 = vmatprep.subr.mxu0 0.0
        %1004 = vmatpush1.msra.mxu0 0.0
        %1005 = vmatprep.subr.mxu0 0.0
        %1006 = vmatpush1.msra.mxu0 0.0
        %1007 = vmatprep.subr.mxu0 0.0
        %1008 = vmatpush1.msra.mxu0 0.0
        %1009 = vmatprep.subr.mxu0 0.0
        %1010 = vmatpush1.msra.mxu0 0.0
        %1011 = vmatprep.mubr.f32.mxu0 0.0
        %1012 = vmatmul.mubr.f32.gmra.mrb[0].mxu0 %v945
        %v1013 = vpop.f32.mrb[0].mxu0
        %v1014 = vadd.f32 0.0, %v1013
        %v1015 = vpop.f32.mrb[0].mxu0
        %1016 = vdwg.mxu0
        %1018 = vrot.lane.b32.xlu0 %v848, 96
        %v1019 = vpop.permute.xlu0 %1018
        %v1020 = vsel %vm854, %v848, 0
        %v1022 = vsel %vm854, %v1019, 0
        %1024 = vmatprep.subr.mxu0 0.0
        %1025 = vmatpush1.xpose.msra.mxu0 %v1022
        %1026 = vmatprep.subr.mxu0 0.0
        %1027 = vmatpush1.xpose.msra.mxu0 0.0
        %1028 = vmatprep.subr.mxu0 0.0
        %1029 = vmatpush1.xpose.msra.mxu0 0.0
        %1030 = vmatprep.subr.mxu0 0.0
        %1031 = vmatpush1.xpose.msra.mxu0 0.0
        %1032 = vmatprep.subr.mxu0 0.0
        %1033 = vmatpush1.xpose.msra.mxu0 0.0
        %1034 = vmatprep.subr.mxu0 0.0
        %1035 = vmatpush1.xpose.msra.mxu0 0.0
        %1036 = vmatprep.subr.mxu0 0.0
        %1037 = vmatpush1.xpose.msra.mxu0 0.0
        %1038 = vmatprep.subr.mxu0 0.0
        %1039 = vmatpush1.xpose.msra.mxu0 0.0
        %1040 = vmatprep.subr.mxu0 0.0
        %1041 = vmatpush1.xpose.msra.mxu0 0.0
        %1042 = vmatprep.subr.mxu0 0.0
        %1043 = vmatpush1.xpose.msra.mxu0 0.0
        %1044 = vmatprep.subr.mxu0 0.0
        %1045 = vmatpush1.xpose.msra.mxu0 0.0
        %1046 = vmatprep.subr.mxu0 0.0
        %1047 = vmatpush1.xpose.msra.mxu0 0.0
        %1048 = vmatprep.subr.mxu0 0.0
        %1049 = vmatpush1.xpose.msra.mxu0 0.0
        %1050 = vmatprep.subr.mxu0 0.0
        %1051 = vmatpush1.xpose.msra.mxu0 0.0
        %1052 = vmatprep.subr.mxu0 0.0
        %1053 = vmatpush1.xpose.msra.mxu0 0.0
        %1054 = vmatprep.subr.mxu0 0.0
        %1055 = vmatpush1.xpose.msra.mxu0 0.0
        %1056 = vmatprep.subr.mxu0 0.0
        %1057 = vmatpush1.xpose.msra.mxu0 0.0
        %1058 = vmatprep.subr.mxu0 0.0
        %1059 = vmatpush1.xpose.msra.mxu0 0.0
        %1060 = vmatprep.subr.mxu0 0.0
        %1061 = vmatpush1.xpose.msra.mxu0 0.0
        %1062 = vmatprep.subr.mxu0 0.0
        %1063 = vmatpush1.xpose.msra.mxu0 0.0
        %1064 = vmatprep.subr.mxu0 0.0
        %1065 = vmatpush1.xpose.msra.mxu0 0.0
        %1066 = vmatprep.subr.mxu0 0.0
        %1067 = vmatpush1.xpose.msra.mxu0 0.0
        %1068 = vmatprep.subr.mxu0 0.0
        %1069 = vmatpush1.xpose.msra.mxu0 0.0
        %1070 = vmatprep.subr.mxu0 0.0
        %1071 = vmatpush1.xpose.msra.mxu0 0.0
        %1072 = vmatprep.subr.mxu0 0.0
        %1073 = vmatpush1.xpose.msra.mxu0 0.0
        %1074 = vmatprep.subr.mxu0 0.0
        %1075 = vmatpush1.xpose.msra.mxu0 0.0
        %1076 = vmatprep.subr.mxu0 0.0
        %1077 = vmatpush1.xpose.msra.mxu0 0.0
        %1078 = vmatprep.subr.mxu0 0.0
        %1079 = vmatpush1.xpose.msra.mxu0 0.0
        %1080 = vmatprep.subr.mxu0 0.0
        %1081 = vmatpush1.xpose.msra.mxu0 0.0
        %1082 = vmatprep.subr.mxu0 0.0
        %1083 = vmatpush1.xpose.msra.mxu0 0.0
        %1084 = vmatprep.subr.mxu0 0.0
        %1085 = vmatpush1.xpose.msra.mxu0 0.0
        %1086 = vmatprep.subr.mxu0 0.0
        %1087 = vmatpush1.xpose.msra.mxu0 0.0
        %1088 = vmatprep.mubr.f32.mxu0 0.0
        %1089 = vmatmul.mubr.f32.gmra.mrb[0].mxu0 %v1020
        %v1090 = vpop.f32.mrb[0].mxu0
        %v1091 = vadd.f32 0.0, %v1090
        %v1092 = vpop.f32.mrb[0].mxu0
        %1093 = vdwg.mxu0
        %v1094 = vmul.f32 %v1091, 0.35355338
        %v1095 = vsel %vm854, %v1094, -inf
        %1096 = vmax.xlane.f32.xlu0 %v1095
        %v1097 = vpop.xlane.xlu0 %1096
        %v1098 = vsub.f32 %v1094, %v1097
        %v1099 = vmul.f32 %v1098, 1.442695
        %v1100 = vpow.pop %v1099
        %v1101 = vsel %vm854, %v1100, 0.0
        %1102 = vadd.xlane.f32.xlu0 %v1101
        %v1103 = vpop.xlane.xlu0 %1102
        %v1104 = vrcp.pop %v1103
        %v1105 = vmul.f32 %v1100, %v1104
        %1106 = vrot.lane.b32.xlu0 %v848, 64
        %v1107 = vpop.permute.xlu0 %1106
        %v1110 = vsel %vm854, %v1105, 0
        %1112 = vmatprep.subr.mxu0 0.0
        %1113 = vmatpush1.msra.mxu0 %v1107
        %1114 = vmatprep.subr.mxu0 0.0
        %1115 = vmatpush1.msra.mxu0 0.0
        %1116 = vmatprep.subr.mxu0 0.0
        %1117 = vmatpush1.msra.mxu0 0.0
        %1118 = vmatprep.subr.mxu0 0.0
        %1119 = vmatpush1.msra.mxu0 0.0
        %1120 = vmatprep.subr.mxu0 0.0
        %1121 = vmatpush1.msra.mxu0 0.0
        %1122 = vmatprep.subr.mxu0 0.0
        %1123 = vmatpush1.msra.mxu0 0.0
        %1124 = vmatprep.subr.mxu0 0.0
        %1125 = vmatpush1.msra.mxu0 0.0
        %1126 = vmatprep.subr.mxu0 0.0
        %1127 = vmatpush1.msra.mxu0 0.0
        %1128 = vmatprep.subr.mxu0 0.0
        %1129 = vmatpush1.msra.mxu0 0.0
        %1130 = vmatprep.subr.mxu0 0.0
        %1131 = vmatpush1.msra.mxu0 0.0
        %1132 = vmatprep.subr.mxu0 0.0
        %1133 = vmatpush1.msra.mxu0 0.0
        %1134 = vmatprep.subr.mxu0 0.0
        %1135 = vmatpush1.msra.mxu0 0.0
        %1136 = vmatprep.subr.mxu0 0.0
        %1137 = vmatpush1.msra.mxu0 0.0
        %1138 = vmatprep.subr.mxu0 0.0
        %1139 = vmatpush1.msra.mxu0 0.0
        %1140 = vmatprep.subr.mxu0 0.0
        %1141 = vmatpush1.msra.mxu0 0.0
        %1142 = vmatprep.subr.mxu0 0.0
        %1143 = vmatpush1.msra.mxu0 0.0
        %1144 = vmatprep.subr.mxu0 0.0
        %1145 = vmatpush1.msra.mxu0 0.0
        %1146 = vmatprep.subr.mxu0 0.0
        %1147 = vmatpush1.msra.mxu0 0.0
        %1148 = vmatprep.subr.mxu0 0.0
        %1149 = vmatpush1.msra.mxu0 0.0
        %1150 = vmatprep.subr.mxu0 0.0
        %1151 = vmatpush1.msra.mxu0 0.0
        %1152 = vmatprep.subr.mxu0 0.0
        %1153 = vmatpush1.msra.mxu0 0.0
        %1154 = vmatprep.subr.mxu0 0.0
        %1155 = vmatpush1.msra.mxu0 0.0
        %1156 = vmatprep.subr.mxu0 0.0
        %1157 = vmatpush1.msra.mxu0 0.0
        %1158 = vmatprep.subr.mxu0 0.0
        %1159 = vmatpush1.msra.mxu0 0.0
        %1160 = vmatprep.subr.mxu0 0.0
        %1161 = vmatpush1.msra.mxu0 0.0
        %1162 = vmatprep.subr.mxu0 0.0
        %1163 = vmatpush1.msra.mxu0 0.0
        %1164 = vmatprep.subr.mxu0 0.0
        %1165 = vmatpush1.msra.mxu0 0.0
        %1166 = vmatprep.subr.mxu0 0.0
        %1167 = vmatpush1.msra.mxu0 0.0
        %1168 = vmatprep.subr.mxu0 0.0
        %1169 = vmatpush1.msra.mxu0 0.0
        %1170 = vmatprep.subr.mxu0 0.0
        %1171 = vmatpush1.msra.mxu0 0.0
        %1172 = vmatprep.subr.mxu0 0.0
        %1173 = vmatpush1.msra.mxu0 0.0
        %1174 = vmatprep.subr.mxu0 0.0
        %1175 = vmatpush1.msra.mxu0 0.0
        %1176 = vmatprep.mubr.f32.mxu0 0.0
        %1177 = vmatmul.mubr.f32.gmra.mrb[0].mxu0 %v1110
        %v1178 = vpop.f32.mrb[0].mxu0
        %v1179 = vadd.f32 0.0, %v1178
        %v1180 = vpop.f32.mrb[0].mxu0
        %1181 = vdwg.mxu0
        %1182 = vrot.lane.b32.xlu0 %v843, 120
        %v1183 = vpop.permute.xlu0 %1182
        %1184 = vrot.lane.b32.xlu0 %v843, 88
        %v1185 = vpop.permute.xlu0 %1184
        %v1186 = vsel %vm854, %v1183, 0
        %v1188 = vsel %vm854, %v1185, 0
        %1190 = vmatprep.subr.mxu0 0.0
        %1191 = vmatpush1.xpose.msra.mxu0 %v1188
        %1192 = vmatprep.subr.mxu0 0.0
        %1193 = vmatpush1.xpose.msra.mxu0 0.0
        %1194 = vmatprep.subr.mxu0 0.0
        %1195 = vmatpush1.xpose.msra.mxu0 0.0
        %1196 = vmatprep.subr.mxu0 0.0
        %1197 = vmatpush1.xpose.msra.mxu0 0.0
        %1198 = vmatprep.subr.mxu0 0.0
        %1199 = vmatpush1.xpose.msra.mxu0 0.0
        %1200 = vmatprep.subr.mxu0 0.0
        %1201 = vmatpush1.xpose.msra.mxu0 0.0
        %1202 = vmatprep.subr.mxu0 0.0
        %1203 = vmatpush1.xpose.msra.mxu0 0.0
        %1204 = vmatprep.subr.mxu0 0.0
        %1205 = vmatpush1.xpose.msra.mxu0 0.0
        %1206 = vmatprep.subr.mxu0 0.0
        %1207 = vmatpush1.xpose.msra.mxu0 0.0
        %1208 = vmatprep.subr.mxu0 0.0
        %1209 = vmatpush1.xpose.msra.mxu0 0.0
        %1210 = vmatprep.subr.mxu0 0.0
        %1211 = vmatpush1.xpose.msra.mxu0 0.0
        %1212 = vmatprep.subr.mxu0 0.0
        %1213 = vmatpush1.xpose.msra.mxu0 0.0
        %1214 = vmatprep.subr.mxu0 0.0
        %1215 = vmatpush1.xpose.msra.mxu0 0.0
        %1216 = vmatprep.subr.mxu0 0.0
        %1217 = vmatpush1.xpose.msra.mxu0 0.0
        %1218 = vmatprep.subr.mxu0 0.0
        %1219 = vmatpush1.xpose.msra.mxu0 0.0
        %1220 = vmatprep.subr.mxu0 0.0
        %1221 = vmatpush1.xpose.msra.mxu0 0.0
        %1222 = vmatprep.subr.mxu0 0.0
        %1223 = vmatpush1.xpose.msra.mxu0 0.0
        %1224 = vmatprep.subr.mxu0 0.0
        %1225 = vmatpush1.xpose.msra.mxu0 0.0
        %1226 = vmatprep.subr.mxu0 0.0
        %1227 = vmatpush1.xpose.msra.mxu0 0.0
        %1228 = vmatprep.subr.mxu0 0.0
        %1229 = vmatpush1.xpose.msra.mxu0 0.0
        %1230 = vmatprep.subr.mxu0 0.0
        %1231 = vmatpush1.xpose.msra.mxu0 0.0
        %1232 = vmatprep.subr.mxu0 0.0
        %1233 = vmatpush1.xpose.msra.mxu0 0.0
        %1234 = vmatprep.subr.mxu0 0.0
        %1235 = vmatpush1.xpose.msra.mxu0 0.0
        %1236 = vmatprep.subr.mxu0 0.0
        %1237 = vmatpush1.xpose.msra.mxu0 0.0
        %1238 = vmatprep.subr.mxu0 0.0
        %1239 = vmatpush1.xpose.msra.mxu0 0.0
        %1240 = vmatprep.subr.mxu0 0.0
        %1241 = vmatpush1.xpose.msra.mxu0 0.0
        %1242 = vmatprep.subr.mxu0 0.0
        %1243 = vmatpush1.xpose.msra.mxu0 0.0
        %1244 = vmatprep.subr.mxu0 0.0
        %1245 = vmatpush1.xpose.msra.mxu0 0.0
        %1246 = vmatprep.subr.mxu0 0.0
        %1247 = vmatpush1.xpose.msra.mxu0 0.0
        %1248 = vmatprep.subr.mxu0 0.0
        %1249 = vmatpush1.xpose.msra.mxu0 0.0
        %1250 = vmatprep.subr.mxu0 0.0
        %1251 = vmatpush1.xpose.msra.mxu0 0.0
        %1252 = vmatprep.subr.mxu0 0.0
        %1253 = vmatpush1.xpose.msra.mxu0 0.0
        %1254 = vmatprep.mubr.f32.mxu0 0.0
        %1255 = vmatmul.mubr.f32.gmra.mrb[0].mxu0 %v1186
        %v1256 = vpop.f32.mrb[0].mxu0
        %v1257 = vadd.f32 0.0, %v1256
        %v1258 = vpop.f32.mrb[0].mxu0
        %1259 = vdwg.mxu0
        %v1260 = vmul.f32 %v1257, 0.35355338
        %v1261 = vsel %vm854, %v1260, -inf
        %1262 = vmax.xlane.f32.xlu0 %v1261
        %v1263 = vpop.xlane.xlu0 %1262
        %v1264 = vsub.f32 %v1260, %v1263
        %v1265 = vmul.f32 %v1264, 1.442695
        %v1266 = vpow.pop %v1265
        %v1267 = vsel %vm854, %v1266, 0.0
        %1268 = vadd.xlane.f32.xlu0 %v1267
        %v1269 = vpop.xlane.xlu0 %1268
        %v1270 = vrcp.pop %v1269
        %v1271 = vmul.f32 %v1266, %v1270
        %1272 = vrot.lane.b32.xlu0 %v843, 56
        %v1273 = vpop.permute.xlu0 %1272
        %v1276 = vsel %vm854, %v1271, 0
        %1278 = vmatprep.subr.mxu0 0.0
        %1279 = vmatpush1.msra.mxu0 %v1273
        %1280 = vmatprep.subr.mxu0 0.0
        %1281 = vmatpush1.msra.mxu0 0.0
        %1282 = vmatprep.subr.mxu0 0.0
        %1283 = vmatpush1.msra.mxu0 0.0
        %1284 = vmatprep.subr.mxu0 0.0
        %1285 = vmatpush1.msra.mxu0 0.0
        %1286 = vmatprep.subr.mxu0 0.0
        %1287 = vmatpush1.msra.mxu0 0.0
        %1288 = vmatprep.subr.mxu0 0.0
        %1289 = vmatpush1.msra.mxu0 0.0
        %1290 = vmatprep.subr.mxu0 0.0
        %1291 = vmatpush1.msra.mxu0 0.0
        %1292 = vmatprep.subr.mxu0 0.0
        %1293 = vmatpush1.msra.mxu0 0.0
        %1294 = vmatprep.subr.mxu0 0.0
        %1295 = vmatpush1.msra.mxu0 0.0
        %1296 = vmatprep.subr.mxu0 0.0
        %1297 = vmatpush1.msra.mxu0 0.0
        %1298 = vmatprep.subr.mxu0 0.0
        %1299 = vmatpush1.msra.mxu0 0.0
        %1300 = vmatprep.subr.mxu0 0.0
        %1301 = vmatpush1.msra.mxu0 0.0
        %1302 = vmatprep.subr.mxu0 0.0
        %1303 = vmatpush1.msra.mxu0 0.0
        %1304 = vmatprep.subr.mxu0 0.0
        %1305 = vmatpush1.msra.mxu0 0.0
        %1306 = vmatprep.subr.mxu0 0.0
        %1307 = vmatpush1.msra.mxu0 0.0
        %1308 = vmatprep.subr.mxu0 0.0
        %1309 = vmatpush1.msra.mxu0 0.0
        %1310 = vmatprep.subr.mxu0 0.0
        %1311 = vmatpush1.msra.mxu0 0.0
        %1312 = vmatprep.subr.mxu0 0.0
        %1313 = vmatpush1.msra.mxu0 0.0
        %1314 = vmatprep.subr.mxu0 0.0
        %1315 = vmatpush1.msra.mxu0 0.0
        %1316 = vmatprep.subr.mxu0 0.0
        %1317 = vmatpush1.msra.mxu0 0.0
        %1318 = vmatprep.subr.mxu0 0.0
        %1319 = vmatpush1.msra.mxu0 0.0
        %1320 = vmatprep.subr.mxu0 0.0
        %1321 = vmatpush1.msra.mxu0 0.0
        %1322 = vmatprep.subr.mxu0 0.0
        %1323 = vmatpush1.msra.mxu0 0.0
        %1324 = vmatprep.subr.mxu0 0.0
        %1325 = vmatpush1.msra.mxu0 0.0
        %1326 = vmatprep.subr.mxu0 0.0
        %1327 = vmatpush1.msra.mxu0 0.0
        %1328 = vmatprep.subr.mxu0 0.0
        %1329 = vmatpush1.msra.mxu0 0.0
        %1330 = vmatprep.subr.mxu0 0.0
        %1331 = vmatpush1.msra.mxu0 0.0
        %1332 = vmatprep.subr.mxu0 0.0
        %1333 = vmatpush1.msra.mxu0 0.0
        %1334 = vmatprep.subr.mxu0 0.0
        %1335 = vmatpush1.msra.mxu0 0.0
        %1336 = vmatprep.subr.mxu0 0.0
        %1337 = vmatpush1.msra.mxu0 0.0
        %1338 = vmatprep.subr.mxu0 0.0
        %1339 = vmatpush1.msra.mxu0 0.0
        %1340 = vmatprep.subr.mxu0 0.0
        %1341 = vmatpush1.msra.mxu0 0.0
        %1342 = vmatprep.mubr.f32.mxu0 0.0
        %1343 = vmatmul.mubr.f32.gmra.mrb[0].mxu0 %v1276
        %v1344 = vpop.f32.mrb[0].mxu0
        %v1345 = vadd.f32 0.0, %v1344
        %v1346 = vpop.f32.mrb[0].mxu0
        %1347 = vdwg.mxu0
        %1348 = vrot.lane.b32.xlu0 %v848, 120
        %v1349 = vpop.permute.xlu0 %1348
        %1350 = vrot.lane.b32.xlu0 %v848, 88
        %v1351 = vpop.permute.xlu0 %1350
        %v1352 = vsel %vm854, %v1349, 0
        %v1354 = vsel %vm854, %v1351, 0
        %1356 = vmatprep.subr.mxu0 0.0
        %1357 = vmatpush1.xpose.msra.mxu0 %v1354
        %1358 = vmatprep.subr.mxu0 0.0
        %1359 = vmatpush1.xpose.msra.mxu0 0.0
        %1360 = vmatprep.subr.mxu0 0.0
        %1361 = vmatpush1.xpose.msra.mxu0 0.0
        %1362 = vmatprep.subr.mxu0 0.0
        %1363 = vmatpush1.xpose.msra.mxu0 0.0
        %1364 = vmatprep.subr.mxu0 0.0
        %1365 = vmatpush1.xpose.msra.mxu0 0.0
        %1366 = vmatprep.subr.mxu0 0.0
        %1367 = vmatpush1.xpose.msra.mxu0 0.0
        %1368 = vmatprep.subr.mxu0 0.0
        %1369 = vmatpush1.xpose.msra.mxu0 0.0
        %1370 = vmatprep.subr.mxu0 0.0
        %1371 = vmatpush1.xpose.msra.mxu0 0.0
        %1372 = vmatprep.subr.mxu0 0.0
        %1373 = vmatpush1.xpose.msra.mxu0 0.0
        %1374 = vmatprep.subr.mxu0 0.0
        %1375 = vmatpush1.xpose.msra.mxu0 0.0
        %1376 = vmatprep.subr.mxu0 0.0
        %1377 = vmatpush1.xpose.msra.mxu0 0.0
        %1378 = vmatprep.subr.mxu0 0.0
        %1379 = vmatpush1.xpose.msra.mxu0 0.0
        %1380 = vmatprep.subr.mxu0 0.0
        %1381 = vmatpush1.xpose.msra.mxu0 0.0
        %1382 = vmatprep.subr.mxu0 0.0
        %1383 = vmatpush1.xpose.msra.mxu0 0.0
        %1384 = vmatprep.subr.mxu0 0.0
        %1385 = vmatpush1.xpose.msra.mxu0 0.0
        %1386 = vmatprep.subr.mxu0 0.0
        %1387 = vmatpush1.xpose.msra.mxu0 0.0
        %1388 = vmatprep.subr.mxu0 0.0
        %1389 = vmatpush1.xpose.msra.mxu0 0.0
        %1390 = vmatprep.subr.mxu0 0.0
        %1391 = vmatpush1.xpose.msra.mxu0 0.0
        %1392 = vmatprep.subr.mxu0 0.0
        %1393 = vmatpush1.xpose.msra.mxu0 0.0
        %1394 = vmatprep.subr.mxu0 0.0
        %1395 = vmatpush1.xpose.msra.mxu0 0.0
        %1396 = vmatprep.subr.mxu0 0.0
        %1397 = vmatpush1.xpose.msra.mxu0 0.0
        %1398 = vmatprep.subr.mxu0 0.0
        %1399 = vmatpush1.xpose.msra.mxu0 0.0
        %1400 = vmatprep.subr.mxu0 0.0
        %1401 = vmatpush1.xpose.msra.mxu0 0.0
        %1402 = vmatprep.subr.mxu0 0.0
        %1403 = vmatpush1.xpose.msra.mxu0 0.0
        %1404 = vmatprep.subr.mxu0 0.0
        %1405 = vmatpush1.xpose.msra.mxu0 0.0
        %1406 = vmatprep.subr.mxu0 0.0
        %1407 = vmatpush1.xpose.msra.mxu0 0.0
        %1408 = vmatprep.subr.mxu0 0.0
        %1409 = vmatpush1.xpose.msra.mxu0 0.0
        %1410 = vmatprep.subr.mxu0 0.0
        %1411 = vmatpush1.xpose.msra.mxu0 0.0
        %1412 = vmatprep.subr.mxu0 0.0
        %1413 = vmatpush1.xpose.msra.mxu0 0.0
        %1414 = vmatprep.subr.mxu0 0.0
        %1415 = vmatpush1.xpose.msra.mxu0 0.0
        %1416 = vmatprep.subr.mxu0 0.0
        %1417 = vmatpush1.xpose.msra.mxu0 0.0
        %1418 = vmatprep.subr.mxu0 0.0
        %1419 = vmatpush1.xpose.msra.mxu0 0.0
        %1420 = vmatprep.mubr.f32.mxu0 0.0
        %1421 = vmatmul.mubr.f32.gmra.mrb[0].mxu0 %v1352
        %v1422 = vpop.f32.mrb[0].mxu0
        %v1423 = vadd.f32 0.0, %v1422
        %v1424 = vpop.f32.mrb[0].mxu0
        %1425 = vdwg.mxu0
        %v1426 = vmul.f32 %v1423, 0.35355338
        %v1427 = vsel %vm854, %v1426, -inf
        %1428 = vmax.xlane.f32.xlu0 %v1427
        %v1429 = vpop.xlane.xlu0 %1428
        %v1430 = vsub.f32 %v1426, %v1429
        %v1431 = vmul.f32 %v1430, 1.442695
        %v1432 = vpow.pop %v1431
        %v1433 = vsel %vm854, %v1432, 0.0
        %1434 = vadd.xlane.f32.xlu0 %v1433
        %v1435 = vpop.xlane.xlu0 %1434
        %v1436 = vrcp.pop %v1435
        %v1437 = vmul.f32 %v1432, %v1436
        %1438 = vrot.lane.b32.xlu0 %v848, 56
        %v1439 = vpop.permute.xlu0 %1438
        %v1442 = vsel %vm854, %v1437, 0
        %1444 = vmatprep.subr.mxu0 0.0
        %1445 = vmatpush1.msra.mxu0 %v1439
        %1446 = vmatprep.subr.mxu0 0.0
        %1447 = vmatpush1.msra.mxu0 0.0
        %1448 = vmatprep.subr.mxu0 0.0
        %1449 = vmatpush1.msra.mxu0 0.0
        %1450 = vmatprep.subr.mxu0 0.0
        %1451 = vmatpush1.msra.mxu0 0.0
        %1452 = vmatprep.subr.mxu0 0.0
        %1453 = vmatpush1.msra.mxu0 0.0
        %1454 = vmatprep.subr.mxu0 0.0
        %1455 = vmatpush1.msra.mxu0 0.0
        %1456 = vmatprep.subr.mxu0 0.0
        %1457 = vmatpush1.msra.mxu0 0.0
        %1458 = vmatprep.subr.mxu0 0.0
        %1459 = vmatpush1.msra.mxu0 0.0
        %1460 = vmatprep.subr.mxu0 0.0
        %1461 = vmatpush1.msra.mxu0 0.0
        %1462 = vmatprep.subr.mxu0 0.0
        %1463 = vmatpush1.msra.mxu0 0.0
        %1464 = vmatprep.subr.mxu0 0.0
        %1465 = vmatpush1.msra.mxu0 0.0
        %1466 = vmatprep.subr.mxu0 0.0
        %1467 = vmatpush1.msra.mxu0 0.0
        %1468 = vmatprep.subr.mxu0 0.0
        %1469 = vmatpush1.msra.mxu0 0.0
        %1470 = vmatprep.subr.mxu0 0.0
        %1471 = vmatpush1.msra.mxu0 0.0
        %1472 = vmatprep.subr.mxu0 0.0
        %1473 = vmatpush1.msra.mxu0 0.0
        %1474 = vmatprep.subr.mxu0 0.0
        %1475 = vmatpush1.msra.mxu0 0.0
        %1476 = vmatprep.subr.mxu0 0.0
        %1477 = vmatpush1.msra.mxu0 0.0
        %1478 = vmatprep.subr.mxu0 0.0
        %1479 = vmatpush1.msra.mxu0 0.0
        %1480 = vmatprep.subr.mxu0 0.0
        %1481 = vmatpush1.msra.mxu0 0.0
        %1482 = vmatprep.subr.mxu0 0.0
        %1483 = vmatpush1.msra.mxu0 0.0
        %1484 = vmatprep.subr.mxu0 0.0
        %1485 = vmatpush1.msra.mxu0 0.0
        %1486 = vmatprep.subr.mxu0 0.0
        %1487 = vmatpush1.msra.mxu0 0.0
        %1488 = vmatprep.subr.mxu0 0.0
        %1489 = vmatpush1.msra.mxu0 0.0
        %1490 = vmatprep.subr.mxu0 0.0
        %1491 = vmatpush1.msra.mxu0 0.0
        %1492 = vmatprep.subr.mxu0 0.0
        %1493 = vmatpush1.msra.mxu0 0.0
        %1494 = vmatprep.subr.mxu0 0.0
        %1495 = vmatpush1.msra.mxu0 0.0
        %1496 = vmatprep.subr.mxu0 0.0
        %1497 = vmatpush1.msra.mxu0 0.0
        %1498 = vmatprep.subr.mxu0 0.0
        %1499 = vmatpush1.msra.mxu0 0.0
        %1500 = vmatprep.subr.mxu0 0.0
        %1501 = vmatpush1.msra.mxu0 0.0
        %1502 = vmatprep.subr.mxu0 0.0
        %1503 = vmatpush1.msra.mxu0 0.0
        %1504 = vmatprep.subr.mxu0 0.0
        %1505 = vmatpush1.msra.mxu0 0.0
        %1506 = vmatprep.subr.mxu0 0.0
        %1507 = vmatpush1.msra.mxu0 0.0
        %1508 = vmatprep.mubr.f32.mxu0 0.0
        %1509 = vmatmul.mubr.f32.gmra.mrb[0].mxu0 %v1442
        %v1510 = vpop.f32.mrb[0].mxu0
        %v1511 = vadd.f32 0.0, %v1510
        %v1512 = vpop.f32.mrb[0].mxu0
        %1513 = vdwg.mxu0
        %1514 = vrot.lane.b32.xlu0 %v843, 112
        %v1515 = vpop.permute.xlu0 %1514
        %1516 = vrot.lane.b32.xlu0 %v843, 80
        %v1517 = vpop.permute.xlu0 %1516
        %v1518 = vsel %vm854, %v1515, 0
        %v1520 = vsel %vm854, %v1517, 0
        %1522 = vmatprep.subr.mxu0 0.0
        %1523 = vmatpush1.xpose.msra.mxu0 %v1520
        %1524 = vmatprep.subr.mxu0 0.0
        %1525 = vmatpush1.xpose.msra.mxu0 0.0
        %1526 = vmatprep.subr.mxu0 0.0
        %1527 = vmatpush1.xpose.msra.mxu0 0.0
        %1528 = vmatprep.subr.mxu0 0.0
        %1529 = vmatpush1.xpose.msra.mxu0 0.0
        %1530 = vmatprep.subr.mxu0 0.0
        %1531 = vmatpush1.xpose.msra.mxu0 0.0
        %1532 = vmatprep.subr.mxu0 0.0
        %1533 = vmatpush1.xpose.msra.mxu0 0.0
        %1534 = vmatprep.subr.mxu0 0.0
        %1535 = vmatpush1.xpose.msra.mxu0 0.0
        %1536 = vmatprep.subr.mxu0 0.0
        %1537 = vmatpush1.xpose.msra.mxu0 0.0
        %1538 = vmatprep.subr.mxu0 0.0
        %1539 = vmatpush1.xpose.msra.mxu0 0.0
        %1540 = vmatprep.subr.mxu0 0.0
        %1541 = vmatpush1.xpose.msra.mxu0 0.0
        %1542 = vmatprep.subr.mxu0 0.0
        %1543 = vmatpush1.xpose.msra.mxu0 0.0
        %1544 = vmatprep.subr.mxu0 0.0
        %1545 = vmatpush1.xpose.msra.mxu0 0.0
        %1546 = vmatprep.subr.mxu0 0.0
        %1547 = vmatpush1.xpose.msra.mxu0 0.0
        %1548 = vmatprep.subr.mxu0 0.0
        %1549 = vmatpush1.xpose.msra.mxu0 0.0
        %1550 = vmatprep.subr.mxu0 0.0
        %1551 = vmatpush1.xpose.msra.mxu0 0.0
        %1552 = vmatprep.subr.mxu0 0.0
        %1553 = vmatpush1.xpose.msra.mxu0 0.0
        %1554 = vmatprep.subr.mxu0 0.0
        %1555 = vmatpush1.xpose.msra.mxu0 0.0
        %1556 = vmatprep.subr.mxu0 0.0
        %1557 = vmatpush1.xpose.msra.mxu0 0.0
        %1558 = vmatprep.subr.mxu0 0.0
        %1559 = vmatpush1.xpose.msra.mxu0 0.0
        %1560 = vmatprep.subr.mxu0 0.0
        %1561 = vmatpush1.xpose.msra.mxu0 0.0
        %1562 = vmatprep.subr.mxu0 0.0
        %1563 = vmatpush1.xpose.msra.mxu0 0.0
        %1564 = vmatprep.subr.mxu0 0.0
        %1565 = vmatpush1.xpose.msra.mxu0 0.0
        %1566 = vmatprep.subr.mxu0 0.0
        %1567 = vmatpush1.xpose.msra.mxu0 0.0
        %1568 = vmatprep.subr.mxu0 0.0
        %1569 = vmatpush1.xpose.msra.mxu0 0.0
        %1570 = vmatprep.subr.mxu0 0.0
        %1571 = vmatpush1.xpose.msra.mxu0 0.0
        %1572 = vmatprep.subr.mxu0 0.0
        %1573 = vmatpush1.xpose.msra.mxu0 0.0
        %1574 = vmatprep.subr.mxu0 0.0
        %1575 = vmatpush1.xpose.msra.mxu0 0.0
        %1576 = vmatprep.subr.mxu0 0.0
        %1577 = vmatpush1.xpose.msra.mxu0 0.0
        %1578 = vmatprep.subr.mxu0 0.0
        %1579 = vmatpush1.xpose.msra.mxu0 0.0
        %1580 = vmatprep.subr.mxu0 0.0
        %1581 = vmatpush1.xpose.msra.mxu0 0.0
        %1582 = vmatprep.subr.mxu0 0.0
        %1583 = vmatpush1.xpose.msra.mxu0 0.0
        %1584 = vmatprep.subr.mxu0 0.0
        %1585 = vmatpush1.xpose.msra.mxu0 0.0
        %1586 = vmatprep.mubr.f32.mxu0 0.0
        %1587 = vmatmul.mubr.f32.gmra.mrb[0].mxu0 %v1518
        %v1588 = vpop.f32.mrb[0].mxu0
        %v1589 = vadd.f32 0.0, %v1588
        %v1590 = vpop.f32.mrb[0].mxu0
        %1591 = vdwg.mxu0
        %v1592 = vmul.f32 %v1589, 0.35355338
        %v1593 = vsel %vm854, %v1592, -inf
        %1594 = vmax.xlane.f32.xlu0 %v1593
        %v1595 = vpop.xlane.xlu0 %1594
        %v1596 = vsub.f32 %v1592, %v1595
        %v1597 = vmul.f32 %v1596, 1.442695
        %v1598 = vpow.pop %v1597
        %v1599 = vsel %vm854, %v1598, 0.0
        %1600 = vadd.xlane.f32.xlu0 %v1599
        %v1601 = vpop.xlane.xlu0 %1600
        %v1602 = vrcp.pop %v1601
        %v1603 = vmul.f32 %v1598, %v1602
        %1604 = vrot.lane.b32.xlu0 %v843, 48
        %v1605 = vpop.permute.xlu0 %1604
        %v1608 = vsel %vm854, %v1603, 0
        %1610 = vmatprep.subr.mxu0 0.0
        %1611 = vmatpush1.msra.mxu0 %v1605
        %1612 = vmatprep.subr.mxu0 0.0
        %1613 = vmatpush1.msra.mxu0 0.0
        %1614 = vmatprep.subr.mxu0 0.0
        %1615 = vmatpush1.msra.mxu0 0.0
        %1616 = vmatprep.subr.mxu0 0.0
        %1617 = vmatpush1.msra.mxu0 0.0
        %1618 = vmatprep.subr.mxu0 0.0
        %1619 = vmatpush1.msra.mxu0 0.0
        %1620 = vmatprep.subr.mxu0 0.0
        %1621 = vmatpush1.msra.mxu0 0.0
        %1622 = vmatprep.subr.mxu0 0.0
        %1623 = vmatpush1.msra.mxu0 0.0
        %1624 = vmatprep.subr.mxu0 0.0
        %1625 = vmatpush1.msra.mxu0 0.0
        %1626 = vmatprep.subr.mxu0 0.0
        %1627 = vmatpush1.msra.mxu0 0.0
        %1628 = vmatprep.subr.mxu0 0.0
        %1629 = vmatpush1.msra.mxu0 0.0
        %1630 = vmatprep.subr.mxu0 0.0
        %1631 = vmatpush1.msra.mxu0 0.0
        %1632 = vmatprep.subr.mxu0 0.0
        %1633 = vmatpush1.msra.mxu0 0.0
        %1634 = vmatprep.subr.mxu0 0.0
        %1635 = vmatpush1.msra.mxu0 0.0
        %1636 = vmatprep.subr.mxu0 0.0
        %1637 = vmatpush1.msra.mxu0 0.0
        %1638 = vmatprep.subr.mxu0 0.0
        %1639 = vmatpush1.msra.mxu0 0.0
        %1640 = vmatprep.subr.mxu0 0.0
        %1641 = vmatpush1.msra.mxu0 0.0
        %1642 = vmatprep.subr.mxu0 0.0
        %1643 = vmatpush1.msra.mxu0 0.0
        %1644 = vmatprep.subr.mxu0 0.0
        %1645 = vmatpush1.msra.mxu0 0.0
        %1646 = vmatprep.subr.mxu0 0.0
        %1647 = vmatpush1.msra.mxu0 0.0
        %1648 = vmatprep.subr.mxu0 0.0
        %1649 = vmatpush1.msra.mxu0 0.0
        %1650 = vmatprep.subr.mxu0 0.0
        %1651 = vmatpush1.msra.mxu0 0.0
        %1652 = vmatprep.subr.mxu0 0.0
        %1653 = vmatpush1.msra.mxu0 0.0
        %1654 = vmatprep.subr.mxu0 0.0
        %1655 = vmatpush1.msra.mxu0 0.0
        %1656 = vmatprep.subr.mxu0 0.0
        %1657 = vmatpush1.msra.mxu0 0.0
        %1658 = vmatprep.subr.mxu0 0.0
        %1659 = vmatpush1.msra.mxu0 0.0
        %1660 = vmatprep.subr.mxu0 0.0
        %1661 = vmatpush1.msra.mxu0 0.0
        %1662 = vmatprep.subr.mxu0 0.0
        %1663 = vmatpush1.msra.mxu0 0.0
        %1664 = vmatprep.subr.mxu0 0.0
        %1665 = vmatpush1.msra.mxu0 0.0
        %1666 = vmatprep.subr.mxu0 0.0
        %1667 = vmatpush1.msra.mxu0 0.0
        %1668 = vmatprep.subr.mxu0 0.0
        %1669 = vmatpush1.msra.mxu0 0.0
        %1670 = vmatprep.subr.mxu0 0.0
        %1671 = vmatpush1.msra.mxu0 0.0
        %1672 = vmatprep.subr.mxu0 0.0
        %1673 = vmatpush1.msra.mxu0 0.0
        %1674 = vmatprep.mubr.f32.mxu0 0.0
        %1675 = vmatmul.mubr.f32.gmra.mrb[0].mxu0 %v1608
        %v1676 = vpop.f32.mrb[0].mxu0
        %v1677 = vadd.f32 0.0, %v1676
        %v1678 = vpop.f32.mrb[0].mxu0
        %1679 = vdwg.mxu0
        %1680 = vrot.lane.b32.xlu0 %v848, 112
        %v1681 = vpop.permute.xlu0 %1680
        %1682 = vrot.lane.b32.xlu0 %v848, 80
        %v1683 = vpop.permute.xlu0 %1682
        %v1684 = vsel %vm854, %v1681, 0
        %v1686 = vsel %vm854, %v1683, 0
        %1688 = vmatprep.subr.mxu0 0.0
        %1689 = vmatpush1.xpose.msra.mxu0 %v1686
        %1690 = vmatprep.subr.mxu0 0.0
        %1691 = vmatpush1.xpose.msra.mxu0 0.0
        %1692 = vmatprep.subr.mxu0 0.0
        %1693 = vmatpush1.xpose.msra.mxu0 0.0
        %1694 = vmatprep.subr.mxu0 0.0
        %1695 = vmatpush1.xpose.msra.mxu0 0.0
        %1696 = vmatprep.subr.mxu0 0.0
        %1697 = vmatpush1.xpose.msra.mxu0 0.0
        %1698 = vmatprep.subr.mxu0 0.0
        %1699 = vmatpush1.xpose.msra.mxu0 0.0
        %1700 = vmatprep.subr.mxu0 0.0
        %1701 = vmatpush1.xpose.msra.mxu0 0.0
        %1702 = vmatprep.subr.mxu0 0.0
        %1703 = vmatpush1.xpose.msra.mxu0 0.0
        %1704 = vmatprep.subr.mxu0 0.0
        %1705 = vmatpush1.xpose.msra.mxu0 0.0
        %1706 = vmatprep.subr.mxu0 0.0
        %1707 = vmatpush1.xpose.msra.mxu0 0.0
        %1708 = vmatprep.subr.mxu0 0.0
        %1709 = vmatpush1.xpose.msra.mxu0 0.0
        %1710 = vmatprep.subr.mxu0 0.0
        %1711 = vmatpush1.xpose.msra.mxu0 0.0
        %1712 = vmatprep.subr.mxu0 0.0
        %1713 = vmatpush1.xpose.msra.mxu0 0.0
        %1714 = vmatprep.subr.mxu0 0.0
        %1715 = vmatpush1.xpose.msra.mxu0 0.0
        %1716 = vmatprep.subr.mxu0 0.0
        %1717 = vmatpush1.xpose.msra.mxu0 0.0
        %1718 = vmatprep.subr.mxu0 0.0
        %1719 = vmatpush1.xpose.msra.mxu0 0.0
        %1720 = vmatprep.subr.mxu0 0.0
        %1721 = vmatpush1.xpose.msra.mxu0 0.0
        %1722 = vmatprep.subr.mxu0 0.0
        %1723 = vmatpush1.xpose.msra.mxu0 0.0
        %1724 = vmatprep.subr.mxu0 0.0
        %1725 = vmatpush1.xpose.msra.mxu0 0.0
        %1726 = vmatprep.subr.mxu0 0.0
        %1727 = vmatpush1.xpose.msra.mxu0 0.0
        %1728 = vmatprep.subr.mxu0 0.0
        %1729 = vmatpush1.xpose.msra.mxu0 0.0
        %1730 = vmatprep.subr.mxu0 0.0
        %1731 = vmatpush1.xpose.msra.mxu0 0.0
        %1732 = vmatprep.subr.mxu0 0.0
        %1733 = vmatpush1.xpose.msra.mxu0 0.0
        %1734 = vmatprep.subr.mxu0 0.0
        %1735 = vmatpush1.xpose.msra.mxu0 0.0
        %1736 = vmatprep.subr.mxu0 0.0
        %1737 = vmatpush1.xpose.msra.mxu0 0.0
        %1738 = vmatprep.subr.mxu0 0.0
        %1739 = vmatpush1.xpose.msra.mxu0 0.0
        %1740 = vmatprep.subr.mxu0 0.0
        %1741 = vmatpush1.xpose.msra.mxu0 0.0
        %1742 = vmatprep.subr.mxu0 0.0
        %1743 = vmatpush1.xpose.msra.mxu0 0.0
        %1744 = vmatprep.subr.mxu0 0.0
        %1745 = vmatpush1.xpose.msra.mxu0 0.0
        %1746 = vmatprep.subr.mxu0 0.0
        %1747 = vmatpush1.xpose.msra.mxu0 0.0
        %1748 = vmatprep.subr.mxu0 0.0
        %1749 = vmatpush1.xpose.msra.mxu0 0.0
        %1750 = vmatprep.subr.mxu0 0.0
        %1751 = vmatpush1.xpose.msra.mxu0 0.0
        %1752 = vmatprep.mubr.f32.mxu0 0.0
        %1753 = vmatmul.mubr.f32.gmra.mrb[0].mxu0 %v1684
        %v1754 = vpop.f32.mrb[0].mxu0
        %v1755 = vadd.f32 0.0, %v1754
        %v1756 = vpop.f32.mrb[0].mxu0
        %1757 = vdwg.mxu0
        %v1758 = vmul.f32 %v1755, 0.35355338
        %v1759 = vsel %vm854, %v1758, -inf
        %1760 = vmax.xlane.f32.xlu0 %v1759
        %v1761 = vpop.xlane.xlu0 %1760
        %v1762 = vsub.f32 %v1758, %v1761
        %v1763 = vmul.f32 %v1762, 1.442695
        %v1764 = vpow.pop %v1763
        %v1765 = vsel %vm854, %v1764, 0.0
        %1766 = vadd.xlane.f32.xlu0 %v1765
        %v1767 = vpop.xlane.xlu0 %1766
        %v1768 = vrcp.pop %v1767
        %v1769 = vmul.f32 %v1764, %v1768
        %1770 = vrot.lane.b32.xlu0 %v848, 48
        %v1771 = vpop.permute.xlu0 %1770
        %v1774 = vsel %vm854, %v1769, 0
        %1776 = vmatprep.subr.mxu0 0.0
        %1777 = vmatpush1.msra.mxu0 %v1771
        %1778 = vmatprep.subr.mxu0 0.0
        %1779 = vmatpush1.msra.mxu0 0.0
        %1780 = vmatprep.subr.mxu0 0.0
        %1781 = vmatpush1.msra.mxu0 0.0
        %1782 = vmatprep.subr.mxu0 0.0
        %1783 = vmatpush1.msra.mxu0 0.0
        %1784 = vmatprep.subr.mxu0 0.0
        %1785 = vmatpush1.msra.mxu0 0.0
        %1786 = vmatprep.subr.mxu0 0.0
        %1787 = vmatpush1.msra.mxu0 0.0
        %1788 = vmatprep.subr.mxu0 0.0
        %1789 = vmatpush1.msra.mxu0 0.0
        %1790 = vmatprep.subr.mxu0 0.0
        %1791 = vmatpush1.msra.mxu0 0.0
        %1792 = vmatprep.subr.mxu0 0.0
        %1793 = vmatpush1.msra.mxu0 0.0
        %1794 = vmatprep.subr.mxu0 0.0
        %1795 = vmatpush1.msra.mxu0 0.0
        %1796 = vmatprep.subr.mxu0 0.0
        %1797 = vmatpush1.msra.mxu0 0.0
        %1798 = vmatprep.subr.mxu0 0.0
        %1799 = vmatpush1.msra.mxu0 0.0
        %1800 = vmatprep.subr.mxu0 0.0
        %1801 = vmatpush1.msra.mxu0 0.0
        %1802 = vmatprep.subr.mxu0 0.0
        %1803 = vmatpush1.msra.mxu0 0.0
        %1804 = vmatprep.subr.mxu0 0.0
        %1805 = vmatpush1.msra.mxu0 0.0
        %1806 = vmatprep.subr.mxu0 0.0
        %1807 = vmatpush1.msra.mxu0 0.0
        %1808 = vmatprep.subr.mxu0 0.0
        %1809 = vmatpush1.msra.mxu0 0.0
        %1810 = vmatprep.subr.mxu0 0.0
        %1811 = vmatpush1.msra.mxu0 0.0
        %1812 = vmatprep.subr.mxu0 0.0
        %1813 = vmatpush1.msra.mxu0 0.0
        %1814 = vmatprep.subr.mxu0 0.0
        %1815 = vmatpush1.msra.mxu0 0.0
        %1816 = vmatprep.subr.mxu0 0.0
        %1817 = vmatpush1.msra.mxu0 0.0
        %1818 = vmatprep.subr.mxu0 0.0
        %1819 = vmatpush1.msra.mxu0 0.0
        %1820 = vmatprep.subr.mxu0 0.0
        %1821 = vmatpush1.msra.mxu0 0.0
        %1822 = vmatprep.subr.mxu0 0.0
        %1823 = vmatpush1.msra.mxu0 0.0
        %1824 = vmatprep.subr.mxu0 0.0
        %1825 = vmatpush1.msra.mxu0 0.0
        %1826 = vmatprep.subr.mxu0 0.0
        %1827 = vmatpush1.msra.mxu0 0.0
        %1828 = vmatprep.subr.mxu0 0.0
        %1829 = vmatpush1.msra.mxu0 0.0
        %1830 = vmatprep.subr.mxu0 0.0
        %1831 = vmatpush1.msra.mxu0 0.0
        %1832 = vmatprep.subr.mxu0 0.0
        %1833 = vmatpush1.msra.mxu0 0.0
        %1834 = vmatprep.subr.mxu0 0.0
        %1835 = vmatpush1.msra.mxu0 0.0
        %1836 = vmatprep.subr.mxu0 0.0
        %1837 = vmatpush1.msra.mxu0 0.0
        %1838 = vmatprep.subr.mxu0 0.0
        %1839 = vmatpush1.msra.mxu0 0.0
        %1840 = vmatprep.mubr.f32.mxu0 0.0
        %1841 = vmatmul.mubr.f32.gmra.mrb[0].mxu0 %v1774
        %v1842 = vpop.f32.mrb[0].mxu0
        %v1843 = vadd.f32 0.0, %v1842
        %v1844 = vpop.f32.mrb[0].mxu0
        %1845 = vdwg.mxu0
        %1846 = vrot.lane.b32.xlu0 %v843, 104
        %v1847 = vpop.permute.xlu0 %1846
        %1848 = vrot.lane.b32.xlu0 %v843, 72
        %v1849 = vpop.permute.xlu0 %1848
        %v1850 = vsel %vm854, %v1847, 0
        %v1852 = vsel %vm854, %v1849, 0
        %1854 = vmatprep.subr.mxu0 0.0
        %1855 = vmatpush1.xpose.msra.mxu0 %v1852
        %1856 = vmatprep.subr.mxu0 0.0
        %1857 = vmatpush1.xpose.msra.mxu0 0.0
        %1858 = vmatprep.subr.mxu0 0.0
        %1859 = vmatpush1.xpose.msra.mxu0 0.0
        %1860 = vmatprep.subr.mxu0 0.0
        %1861 = vmatpush1.xpose.msra.mxu0 0.0
        %1862 = vmatprep.subr.mxu0 0.0
        %1863 = vmatpush1.xpose.msra.mxu0 0.0
        %1864 = vmatprep.subr.mxu0 0.0
        %1865 = vmatpush1.xpose.msra.mxu0 0.0
        %1866 = vmatprep.subr.mxu0 0.0
        %1867 = vmatpush1.xpose.msra.mxu0 0.0
        %1868 = vmatprep.subr.mxu0 0.0
        %1869 = vmatpush1.xpose.msra.mxu0 0.0
        %1870 = vmatprep.subr.mxu0 0.0
        %1871 = vmatpush1.xpose.msra.mxu0 0.0
        %1872 = vmatprep.subr.mxu0 0.0
        %1873 = vmatpush1.xpose.msra.mxu0 0.0
        %1874 = vmatprep.subr.mxu0 0.0
        %1875 = vmatpush1.xpose.msra.mxu0 0.0
        %1876 = vmatprep.subr.mxu0 0.0
        %1877 = vmatpush1.xpose.msra.mxu0 0.0
        %1878 = vmatprep.subr.mxu0 0.0
        %1879 = vmatpush1.xpose.msra.mxu0 0.0
        %1880 = vmatprep.subr.mxu0 0.0
        %1881 = vmatpush1.xpose.msra.mxu0 0.0
        %1882 = vmatprep.subr.mxu0 0.0
        %1883 = vmatpush1.xpose.msra.mxu0 0.0
        %1884 = vmatprep.subr.mxu0 0.0
        %1885 = vmatpush1.xpose.msra.mxu0 0.0
        %1886 = vmatprep.subr.mxu0 0.0
        %1887 = vmatpush1.xpose.msra.mxu0 0.0
        %1888 = vmatprep.subr.mxu0 0.0
        %1889 = vmatpush1.xpose.msra.mxu0 0.0
        %1890 = vmatprep.subr.mxu0 0.0
        %1891 = vmatpush1.xpose.msra.mxu0 0.0
        %1892 = vmatprep.subr.mxu0 0.0
        %1893 = vmatpush1.xpose.msra.mxu0 0.0
        %1894 = vmatprep.subr.mxu0 0.0
        %1895 = vmatpush1.xpose.msra.mxu0 0.0
        %1896 = vmatprep.subr.mxu0 0.0
        %1897 = vmatpush1.xpose.msra.mxu0 0.0
        %1898 = vmatprep.subr.mxu0 0.0
        %1899 = vmatpush1.xpose.msra.mxu0 0.0
        %1900 = vmatprep.subr.mxu0 0.0
        %1901 = vmatpush1.xpose.msra.mxu0 0.0
        %1902 = vmatprep.subr.mxu0 0.0
        %1903 = vmatpush1.xpose.msra.mxu0 0.0
        %1904 = vmatprep.subr.mxu0 0.0
        %1905 = vmatpush1.xpose.msra.mxu0 0.0
        %1906 = vmatprep.subr.mxu0 0.0
        %1907 = vmatpush1.xpose.msra.mxu0 0.0
        %1908 = vmatprep.subr.mxu0 0.0
        %1909 = vmatpush1.xpose.msra.mxu0 0.0
        %1910 = vmatprep.subr.mxu0 0.0
        %1911 = vmatpush1.xpose.msra.mxu0 0.0
        %1912 = vmatprep.subr.mxu0 0.0
        %1913 = vmatpush1.xpose.msra.mxu0 0.0
        %1914 = vmatprep.subr.mxu0 0.0
        %1915 = vmatpush1.xpose.msra.mxu0 0.0
        %1916 = vmatprep.subr.mxu0 0.0
        %1917 = vmatpush1.xpose.msra.mxu0 0.0
        %1918 = vmatprep.mubr.f32.mxu0 0.0
        %1919 = vmatmul.mubr.f32.gmra.mrb[0].mxu0 %v1850
        %v1920 = vpop.f32.mrb[0].mxu0
        %v1921 = vadd.f32 0.0, %v1920
        %v1922 = vpop.f32.mrb[0].mxu0
        %1923 = vdwg.mxu0
        %v1924 = vmul.f32 %v1921, 0.35355338
        %v1925 = vsel %vm854, %v1924, -inf
        %1926 = vmax.xlane.f32.xlu0 %v1925
        %v1927 = vpop.xlane.xlu0 %1926
        %v1928 = vsub.f32 %v1924, %v1927
        %v1929 = vmul.f32 %v1928, 1.442695
        %v1930 = vpow.pop %v1929
        %v1931 = vsel %vm854, %v1930, 0.0
        %1932 = vadd.xlane.f32.xlu0 %v1931
        %v1933 = vpop.xlane.xlu0 %1932
        %v1934 = vrcp.pop %v1933
        %v1935 = vmul.f32 %v1930, %v1934
        %1936 = vrot.lane.b32.xlu0 %v843, 40
        %v1937 = vpop.permute.xlu0 %1936
        %v1940 = vsel %vm854, %v1935, 0
        %1942 = vmatprep.subr.mxu0 0.0
        %1943 = vmatpush1.msra.mxu0 %v1937
        %1944 = vmatprep.subr.mxu0 0.0
        %1945 = vmatpush1.msra.mxu0 0.0
        %1946 = vmatprep.subr.mxu0 0.0
        %1947 = vmatpush1.msra.mxu0 0.0
        %1948 = vmatprep.subr.mxu0 0.0
        %1949 = vmatpush1.msra.mxu0 0.0
        %1950 = vmatprep.subr.mxu0 0.0
        %1951 = vmatpush1.msra.mxu0 0.0
        %1952 = vmatprep.subr.mxu0 0.0
        %1953 = vmatpush1.msra.mxu0 0.0
        %1954 = vmatprep.subr.mxu0 0.0
        %1955 = vmatpush1.msra.mxu0 0.0
        %1956 = vmatprep.subr.mxu0 0.0
        %1957 = vmatpush1.msra.mxu0 0.0
        %1958 = vmatprep.subr.mxu0 0.0
        %1959 = vmatpush1.msra.mxu0 0.0
        %1960 = vmatprep.subr.mxu0 0.0
        %1961 = vmatpush1.msra.mxu0 0.0
        %1962 = vmatprep.subr.mxu0 0.0
        %1963 = vmatpush1.msra.mxu0 0.0
        %1964 = vmatprep.subr.mxu0 0.0
        %1965 = vmatpush1.msra.mxu0 0.0
        %1966 = vmatprep.subr.mxu0 0.0
        %1967 = vmatpush1.msra.mxu0 0.0
        %1968 = vmatprep.subr.mxu0 0.0
        %1969 = vmatpush1.msra.mxu0 0.0
        %1970 = vmatprep.subr.mxu0 0.0
        %1971 = vmatpush1.msra.mxu0 0.0
        %1972 = vmatprep.subr.mxu0 0.0
        %1973 = vmatpush1.msra.mxu0 0.0
        %1974 = vmatprep.subr.mxu0 0.0
        %1975 = vmatpush1.msra.mxu0 0.0
        %1976 = vmatprep.subr.mxu0 0.0
        %1977 = vmatpush1.msra.mxu0 0.0
        %1978 = vmatprep.subr.mxu0 0.0
        %1979 = vmatpush1.msra.mxu0 0.0
        %1980 = vmatprep.subr.mxu0 0.0
        %1981 = vmatpush1.msra.mxu0 0.0
        %1982 = vmatprep.subr.mxu0 0.0
        %1983 = vmatpush1.msra.mxu0 0.0
        %1984 = vmatprep.subr.mxu0 0.0
        %1985 = vmatpush1.msra.mxu0 0.0
        %1986 = vmatprep.subr.mxu0 0.0
        %1987 = vmatpush1.msra.mxu0 0.0
        %1988 = vmatprep.subr.mxu0 0.0
        %1989 = vmatpush1.msra.mxu0 0.0
        %1990 = vmatprep.subr.mxu0 0.0
        %1991 = vmatpush1.msra.mxu0 0.0
        %1992 = vmatprep.subr.mxu0 0.0
        %1993 = vmatpush1.msra.mxu0 0.0
        %1994 = vmatprep.subr.mxu0 0.0
        %1995 = vmatpush1.msra.mxu0 0.0
        %1996 = vmatprep.subr.mxu0 0.0
        %1997 = vmatpush1.msra.mxu0 0.0
        %1998 = vmatprep.subr.mxu0 0.0
        %1999 = vmatpush1.msra.mxu0 0.0
        %2000 = vmatprep.subr.mxu0 0.0
        %2001 = vmatpush1.msra.mxu0 0.0
        %2002 = vmatprep.subr.mxu0 0.0
        %2003 = vmatpush1.msra.mxu0 0.0
        %2004 = vmatprep.subr.mxu0 0.0
        %2005 = vmatpush1.msra.mxu0 0.0
        %2006 = vmatprep.mubr.f32.mxu0 0.0
        %2007 = vmatmul.mubr.f32.gmra.mrb[0].mxu0 %v1940
        %v2008 = vpop.f32.mrb[0].mxu0
        %v2009 = vadd.f32 0.0, %v2008
        %v2010 = vpop.f32.mrb[0].mxu0
        %2011 = vdwg.mxu0
        %2012 = vrot.lane.b32.xlu0 %v848, 104
        %v2013 = vpop.permute.xlu0 %2012
        %2014 = vrot.lane.b32.xlu0 %v848, 72
        %v2015 = vpop.permute.xlu0 %2014
        %v2016 = vsel %vm854, %v2013, 0
        %v2018 = vsel %vm854, %v2015, 0
        %2020 = vmatprep.subr.mxu0 0.0
        %2021 = vmatpush1.xpose.msra.mxu0 %v2018
        %2022 = vmatprep.subr.mxu0 0.0
        %2023 = vmatpush1.xpose.msra.mxu0 0.0
        %2024 = vmatprep.subr.mxu0 0.0
        %2025 = vmatpush1.xpose.msra.mxu0 0.0
        %2026 = vmatprep.subr.mxu0 0.0
        %2027 = vmatpush1.xpose.msra.mxu0 0.0
        %2028 = vmatprep.subr.mxu0 0.0
        %2029 = vmatpush1.xpose.msra.mxu0 0.0
        %2030 = vmatprep.subr.mxu0 0.0
        %2031 = vmatpush1.xpose.msra.mxu0 0.0
        %2032 = vmatprep.subr.mxu0 0.0
        %2033 = vmatpush1.xpose.msra.mxu0 0.0
        %2034 = vmatprep.subr.mxu0 0.0
        %2035 = vmatpush1.xpose.msra.mxu0 0.0
        %2036 = vmatprep.subr.mxu0 0.0
        %2037 = vmatpush1.xpose.msra.mxu0 0.0
        %2038 = vmatprep.subr.mxu0 0.0
        %2039 = vmatpush1.xpose.msra.mxu0 0.0
        %2040 = vmatprep.subr.mxu0 0.0
        %2041 = vmatpush1.xpose.msra.mxu0 0.0
        %2042 = vmatprep.subr.mxu0 0.0
        %2043 = vmatpush1.xpose.msra.mxu0 0.0
        %2044 = vmatprep.subr.mxu0 0.0
        %2045 = vmatpush1.xpose.msra.mxu0 0.0
        %2046 = vmatprep.subr.mxu0 0.0
        %2047 = vmatpush1.xpose.msra.mxu0 0.0
        %2048 = vmatprep.subr.mxu0 0.0
        %2049 = vmatpush1.xpose.msra.mxu0 0.0
        %2050 = vmatprep.subr.mxu0 0.0
        %2051 = vmatpush1.xpose.msra.mxu0 0.0
        %2052 = vmatprep.subr.mxu0 0.0
        %2053 = vmatpush1.xpose.msra.mxu0 0.0
        %2054 = vmatprep.subr.mxu0 0.0
        %2055 = vmatpush1.xpose.msra.mxu0 0.0
        %2056 = vmatprep.subr.mxu0 0.0
        %2057 = vmatpush1.xpose.msra.mxu0 0.0
        %2058 = vmatprep.subr.mxu0 0.0
        %2059 = vmatpush1.xpose.msra.mxu0 0.0
        %2060 = vmatprep.subr.mxu0 0.0
        %2061 = vmatpush1.xpose.msra.mxu0 0.0
        %2062 = vmatprep.subr.mxu0 0.0
        %2063 = vmatpush1.xpose.msra.mxu0 0.0
        %2064 = vmatprep.subr.mxu0 0.0
        %2065 = vmatpush1.xpose.msra.mxu0 0.0
        %2066 = vmatprep.subr.mxu0 0.0
        %2067 = vmatpush1.xpose.msra.mxu0 0.0
        %2068 = vmatprep.subr.mxu0 0.0
        %2069 = vmatpush1.xpose.msra.mxu0 0.0
        %2070 = vmatprep.subr.mxu0 0.0
        %2071 = vmatpush1.xpose.msra.mxu0 0.0
        %2072 = vmatprep.subr.mxu0 0.0
        %2073 = vmatpush1.xpose.msra.mxu0 0.0
        %2074 = vmatprep.subr.mxu0 0.0
        %2075 = vmatpush1.xpose.msra.mxu0 0.0
        %2076 = vmatprep.subr.mxu0 0.0
        %2077 = vmatpush1.xpose.msra.mxu0 0.0
        %2078 = vmatprep.subr.mxu0 0.0
        %2079 = vmatpush1.xpose.msra.mxu0 0.0
        %2080 = vmatprep.subr.mxu0 0.0
        %2081 = vmatpush1.xpose.msra.mxu0 0.0
        %2082 = vmatprep.subr.mxu0 0.0
        %2083 = vmatpush1.xpose.msra.mxu0 0.0
        %2084 = vmatprep.mubr.f32.mxu0 0.0
        %2085 = vmatmul.mubr.f32.gmra.mrb[0].mxu0 %v2016
        %v2086 = vpop.f32.mrb[0].mxu0
        %v2087 = vadd.f32 0.0, %v2086
        %v2088 = vpop.f32.mrb[0].mxu0
        %2089 = vdwg.mxu0
        %v2090 = vmul.f32 %v2087, 0.35355338
        %v2091 = vsel %vm854, %v2090, -inf
        %2092 = vmax.xlane.f32.xlu0 %v2091
        %v2093 = vpop.xlane.xlu0 %2092
        %v2094 = vsub.f32 %v2090, %v2093
        %v2095 = vmul.f32 %v2094, 1.442695
        %v2096 = vpow.pop %v2095
        %v2097 = vsel %vm854, %v2096, 0.0
        %2098 = vadd.xlane.f32.xlu0 %v2097
        %v2099 = vpop.xlane.xlu0 %2098
        %v2100 = vrcp.pop %v2099
        %v2101 = vmul.f32 %v2096, %v2100
        %2102 = vrot.lane.b32.xlu0 %v848, 40
        %v2103 = vpop.permute.xlu0 %2102
        %v2106 = vsel %vm854, %v2101, 0
        %2108 = vmatprep.subr.mxu0 0.0
        %2109 = vmatpush1.msra.mxu0 %v2103
        %2110 = vmatprep.subr.mxu0 0.0
        %2111 = vmatpush1.msra.mxu0 0.0
        %2112 = vmatprep.subr.mxu0 0.0
        %2113 = vmatpush1.msra.mxu0 0.0
        %2114 = vmatprep.subr.mxu0 0.0
        %2115 = vmatpush1.msra.mxu0 0.0
        %2116 = vmatprep.subr.mxu0 0.0
        %2117 = vmatpush1.msra.mxu0 0.0
        %2118 = vmatprep.subr.mxu0 0.0
        %2119 = vmatpush1.msra.mxu0 0.0
        %2120 = vmatprep.subr.mxu0 0.0
        %2121 = vmatpush1.msra.mxu0 0.0
        %2122 = vmatprep.subr.mxu0 0.0
        %2123 = vmatpush1.msra.mxu0 0.0
        %2124 = vmatprep.subr.mxu0 0.0
        %2125 = vmatpush1.msra.mxu0 0.0
        %2126 = vmatprep.subr.mxu0 0.0
        %2127 = vmatpush1.msra.mxu0 0.0
        %2128 = vmatprep.subr.mxu0 0.0
        %2129 = vmatpush1.msra.mxu0 0.0
        %2130 = vmatprep.subr.mxu0 0.0
        %2131 = vmatpush1.msra.mxu0 0.0
        %2132 = vmatprep.subr.mxu0 0.0
        %2133 = vmatpush1.msra.mxu0 0.0
        %2134 = vmatprep.subr.mxu0 0.0
        %2135 = vmatpush1.msra.mxu0 0.0
        %2136 = vmatprep.subr.mxu0 0.0
        %2137 = vmatpush1.msra.mxu0 0.0
        %2138 = vmatprep.subr.mxu0 0.0
        %2139 = vmatpush1.msra.mxu0 0.0
        %2140 = vmatprep.subr.mxu0 0.0
        %2141 = vmatpush1.msra.mxu0 0.0
        %2142 = vmatprep.subr.mxu0 0.0
        %2143 = vmatpush1.msra.mxu0 0.0
        %2144 = vmatprep.subr.mxu0 0.0
        %2145 = vmatpush1.msra.mxu0 0.0
        %2146 = vmatprep.subr.mxu0 0.0
        %2147 = vmatpush1.msra.mxu0 0.0
        %2148 = vmatprep.subr.mxu0 0.0
        %2149 = vmatpush1.msra.mxu0 0.0
        %2150 = vmatprep.subr.mxu0 0.0
        %2151 = vmatpush1.msra.mxu0 0.0
        %2152 = vmatprep.subr.mxu0 0.0
        %2153 = vmatpush1.msra.mxu0 0.0
        %2154 = vmatprep.subr.mxu0 0.0
        %2155 = vmatpush1.msra.mxu0 0.0
        %2156 = vmatprep.subr.mxu0 0.0
        %2157 = vmatpush1.msra.mxu0 0.0
        %2158 = vmatprep.subr.mxu0 0.0
        %2159 = vmatpush1.msra.mxu0 0.0
        %2160 = vmatprep.subr.mxu0 0.0
        %2161 = vmatpush1.msra.mxu0 0.0
        %2162 = vmatprep.subr.mxu0 0.0
        %2163 = vmatpush1.msra.mxu0 0.0
        %2164 = vmatprep.subr.mxu0 0.0
        %2165 = vmatpush1.msra.mxu0 0.0
        %2166 = vmatprep.subr.mxu0 0.0
        %2167 = vmatpush1.msra.mxu0 0.0
        %2168 = vmatprep.subr.mxu0 0.0
        %2169 = vmatpush1.msra.mxu0 0.0
        %2170 = vmatprep.subr.mxu0 0.0
        %2171 = vmatpush1.msra.mxu0 0.0
        %2172 = vmatprep.mubr.f32.mxu0 0.0
        %2173 = vmatmul.mubr.f32.gmra.mrb[0].mxu0 %v2106
        %v2174 = vpop.f32.mrb[0].mxu0
        %v2175 = vadd.f32 0.0, %v2174
        %v2176 = vpop.f32.mrb[0].mxu0
        %2177 = vdwg.mxu0
        %2180 = vrot.lane.b32.xlu0 %v1345, 8
        %v2181 = vpop.permute.xlu0 %2180
        %2182 = vrot.lane.b32.xlu0 %v1511, 8
        %v2183 = vpop.permute.xlu0 %2182
        %2188 = vrot.lane.b32.xlu0 %v1677, 16
        %v2189 = vpop.permute.xlu0 %2188
        %2190 = vrot.lane.b32.xlu0 %v1843, 16
        %v2191 = vpop.permute.xlu0 %2190
        %2196 = vrot.lane.b32.xlu0 %v2009, 24
        %v2197 = vpop.permute.xlu0 %2196
        %2198 = vrot.lane.b32.xlu0 %v2175, 24
        %v2199 = vpop.permute.xlu0 %2198
        %v2202 = vsel %vm854, %v1014, %v2181
        %v2203 = vsel %vm854, %v1179, %v2183
        %vm2204 = vcmask 130048
        %v2205 = vsel %vm2204, %v2202, %v2189
        %v2206 = vsel %vm2204, %v2203, %v2191
        %vm2207 = vcmask 195584
        %v2208 = vsel %vm2207, %v2205, %v2197
        %v2209 = vsel %vm2207, %v2206, %v2199
        %v2210 = vld [vmem:[%s5] sm:$0xff]
        %v2211 = vld [vmem:[%s5 + $0x8] sm:$0xff]
        %v2212 = vld [vmem:[%s5 + $0x10] sm:$0xff]
        %v2213 = vld [vmem:[%s5 + $0x18] sm:$0xff]
        %v2214 = vld [vmem:[#allocation8] sm:$0x1]
        %v2216 = vlaneseq
        %v2217 = vshrl.u32 %v2216, 7
        %v2218 = vsub.s32 0, %v2217
        %v2219 = vrot.slane %v2214, %v2218
        %v2222 = vsel %vm719, %v2208, 0
        %v2225 = vsel %vm719, %v2209, 0
        %2227 = vmatprep.subr.mxu0 0.0
        %2228 = vmatpush1.msra.mxu0 %v2210
        %2229 = vmatprep.subr.mxu0 0.0
        %2230 = vmatpush1.msra.mxu0 %v2211
        %2231 = vmatprep.subr.mxu0 0.0
        %2232 = vmatpush1.msra.mxu0 %v2212
        %2233 = vmatprep.subr.mxu0 0.0
        %2234 = vmatpush1.msra.mxu0 %v2213
        %2235 = vmatprep.subr.mxu0 0.0
        %2236 = vmatpush1.msra.mxu0 0.0
        %2237 = vmatprep.subr.mxu0 0.0
        %2238 = vmatpush1.msra.mxu0 0.0
        %2239 = vmatprep.subr.mxu0 0.0
        %2240 = vmatpush1.msra.mxu0 0.0
        %2241 = vmatprep.subr.mxu0 0.0
        %2242 = vmatpush1.msra.mxu0 0.0
        %2243 = vmatprep.subr.mxu0 0.0
        %2244 = vmatpush1.msra.mxu0 0.0
        %2245 = vmatprep.subr.mxu0 0.0
        %2246 = vmatpush1.msra.mxu0 0.0
        %2247 = vmatprep.subr.mxu0 0.0
        %2248 = vmatpush1.msra.mxu0 0.0
        %2249 = vmatprep.subr.mxu0 0.0
        %2250 = vmatpush1.msra.mxu0 0.0
        %2251 = vmatprep.subr.mxu0 0.0
        %2252 = vmatpush1.msra.mxu0 0.0
        %2253 = vmatprep.subr.mxu0 0.0
        %2254 = vmatpush1.msra.mxu0 0.0
        %2255 = vmatprep.subr.mxu0 0.0
        %2256 = vmatpush1.msra.mxu0 0.0
        %2257 = vmatprep.subr.mxu0 0.0
        %2258 = vmatpush1.msra.mxu0 0.0
        %2259 = vmatprep.subr.mxu0 0.0
        %2260 = vmatpush1.msra.mxu0 0.0
        %2261 = vmatprep.subr.mxu0 0.0
        %2262 = vmatpush1.msra.mxu0 0.0
        %2263 = vmatprep.subr.mxu0 0.0
        %2264 = vmatpush1.msra.mxu0 0.0
        %2265 = vmatprep.subr.mxu0 0.0
        %2266 = vmatpush1.msra.mxu0 0.0
        %2267 = vmatprep.subr.mxu0 0.0
        %2268 = vmatpush1.msra.mxu0 0.0
        %2269 = vmatprep.subr.mxu0 0.0
        %2270 = vmatpush1.msra.mxu0 0.0
        %2271 = vmatprep.subr.mxu0 0.0
        %2272 = vmatpush1.msra.mxu0 0.0
        %2273 = vmatprep.subr.mxu0 0.0
        %2274 = vmatpush1.msra.mxu0 0.0
        %2275 = vmatprep.subr.mxu0 0.0
        %2276 = vmatpush1.msra.mxu0 0.0
        %2277 = vmatprep.subr.mxu0 0.0
        %2278 = vmatpush1.msra.mxu0 0.0
        %2279 = vmatprep.subr.mxu0 0.0
        %2280 = vmatpush1.msra.mxu0 0.0
        %2281 = vmatprep.subr.mxu0 0.0
        %2282 = vmatpush1.msra.mxu0 0.0
        %2283 = vmatprep.subr.mxu0 0.0
        %2284 = vmatpush1.msra.mxu0 0.0
        %2285 = vmatprep.subr.mxu0 0.0
        %2286 = vmatpush1.msra.mxu0 0.0
        %2287 = vmatprep.subr.mxu0 0.0
        %2288 = vmatpush1.msra.mxu0 0.0
        %2289 = vmatprep.subr.mxu0 0.0
        %2290 = vmatpush1.msra.mxu0 0.0
        %2291 = vmatprep.mubr.f32.mxu0 0.0
        %2292 = vmatmul.mubr.f32.gmra.mrb[0].mxu0 %v2222
        %v2293 = vpop.f32.mrb[0].mxu0
        %v2294 = vadd.f32 %v2219, %v2293
        %v2295 = vpop.f32.mrb[0].mxu0
        %2296 = vmatprep.mubr.f32.mxu0 0.0
        %2297 = vmatmul.mubr.f32.gmra.mrb[0].mxu0 %v2225
        %v2298 = vpop.f32.mrb[0].mxu0
        %v2299 = vadd.f32 %v2219, %v2298
        %v2300 = vpop.f32.mrb[0].mxu0
        %2301 = vdwg.mxu0
        %v2302 = vsel %vm719, %v2294, 0.0
        %2303 = vadd.xlane.f32.xlu0 %v2302
        %v2304 = vpop.xlane.xlu0 %2303
        %v2305 = vsel %vm719, %v2299, 0.0
        %2306 = vadd.xlane.f32.xlu0 %v2305
        %v2307 = vpop.xlane.xlu0 %2306
        %v2308 = vmul.f32 %v2304, %v726
        %v2309 = vmul.f32 %v2307, %v726
        %v2310 = vsub.f32 %v2294, %v2308
        %v2311 = vsub.f32 %v2299, %v2309
        %v2312 = vmul.f32 %v2310, %v2310
        %v2313 = vmul.f32 %v2311, %v2311
        %v2314 = vsel %vm719, %v2312, 0.0
        %2315 = vadd.xlane.f32.xlu0 %v2314
        %v2316 = vpop.xlane.xlu0 %2315
        %v2317 = vsel %vm719, %v2313, 0.0
        %2318 = vadd.xlane.f32.xlu0 %v2317
        %v2319 = vpop.xlane.xlu0 %2318
        %v2320 = vmul.f32 %v2316, %v726
        %v2321 = vmul.f32 %v2319, %v726
        %v2322 = vadd.f32 %v2320, 1e-05
        %v2323 = vadd.f32 %v2321, 1e-05
        %v2324 = vrsqrt.pop %v2322
        %v2325 = vrsqrt.pop %v2323
        %v2326 = vmul.f32 %v2310, %v2324
        %v2327 = vmul.f32 %v2311, %v2325
        %v2328 = vlaneseq
        %v2329 = vshrl.u32 %v2328, 7
        %v2330 = vsub.s32 1, %v2329
        %v2331 = vrot.slane %v717, %v2330
        %v2332 = vmul.f32 %v2326, %v2331
        %v2333 = vmul.f32 %v2327, %v2331
        %v2334 = vlaneseq
        %v2335 = vshrl.u32 %v2334, 7
        %v2336 = vsub.s32 1, %v2335
        %v2337 = vrot.slane %v718, %v2336
        %v2338 = vadd.f32 %v2332, %v2337
        %v2339 = vadd.f32 %v2333, %v2337
        %v2340 = vld [vmem:[#allocation10] sm:$0xff]
        %v2341 = vld [vmem:[#allocation10 + $0x8] sm:$0xff]
        %v2342 = vld [vmem:[#allocation10 + $0x10] sm:$0xff]
        %v2343 = vld [vmem:[#allocation10 + $0x18] sm:$0xff]
        %v2344 = vld [vmem:[#allocation11] sm:$0x1]
        %v2346 = vlaneseq
        %v2347 = vshrl.u32 %v2346, 7
        %v2348 = vsub.s32 0, %v2347
        %v2349 = vrot.slane %v2344, %v2348
        %v2352 = vsel %vm719, %v2338, 0
        %v2355 = vsel %vm719, %v2339, 0
        %2357 = vmatprep.subr.mxu0 0.0
        %2358 = vmatpush1.msra.mxu0 %v2340
        %2359 = vmatprep.subr.mxu0 0.0
        %2360 = vmatpush1.msra.mxu0 %v2341
        %2361 = vmatprep.subr.mxu0 0.0
        %2362 = vmatpush1.msra.mxu0 %v2342
        %2363 = vmatprep.subr.mxu0 0.0
        %2364 = vmatpush1.msra.mxu0 %v2343
        %2365 = vmatprep.subr.mxu0 0.0
        %2366 = vmatpush1.msra.mxu0 0.0
        %2367 = vmatprep.subr.mxu0 0.0
        %2368 = vmatpush1.msra.mxu0 0.0
        %2369 = vmatprep.subr.mxu0 0.0
        %2370 = vmatpush1.msra.mxu0 0.0
        %2371 = vmatprep.subr.mxu0 0.0
        %2372 = vmatpush1.msra.mxu0 0.0
        %2373 = vmatprep.subr.mxu0 0.0
        %2374 = vmatpush1.msra.mxu0 0.0
        %2375 = vmatprep.subr.mxu0 0.0
        %2376 = vmatpush1.msra.mxu0 0.0
        %2377 = vmatprep.subr.mxu0 0.0
        %2378 = vmatpush1.msra.mxu0 0.0
        %2379 = vmatprep.subr.mxu0 0.0
        %2380 = vmatpush1.msra.mxu0 0.0
        %2381 = vmatprep.subr.mxu0 0.0
        %2382 = vmatpush1.msra.mxu0 0.0
        %2383 = vmatprep.subr.mxu0 0.0
        %2384 = vmatpush1.msra.mxu0 0.0
        %2385 = vmatprep.subr.mxu0 0.0
        %2386 = vmatpush1.msra.mxu0 0.0
        %2387 = vmatprep.subr.mxu0 0.0
        %2388 = vmatpush1.msra.mxu0 0.0
        %2389 = vmatprep.subr.mxu0 0.0
        %2390 = vmatpush1.msra.mxu0 0.0
        %2391 = vmatprep.subr.mxu0 0.0
        %2392 = vmatpush1.msra.mxu0 0.0
        %2393 = vmatprep.subr.mxu0 0.0
        %2394 = vmatpush1.msra.mxu0 0.0
        %2395 = vmatprep.subr.mxu0 0.0
        %2396 = vmatpush1.msra.mxu0 0.0
        %2397 = vmatprep.subr.mxu0 0.0
        %2398 = vmatpush1.msra.mxu0 0.0
        %2399 = vmatprep.subr.mxu0 0.0
        %2400 = vmatpush1.msra.mxu0 0.0
        %2401 = vmatprep.subr.mxu0 0.0
        %2402 = vmatpush1.msra.mxu0 0.0
        %2403 = vmatprep.subr.mxu0 0.0
        %2404 = vmatpush1.msra.mxu0 0.0
        %2405 = vmatprep.subr.mxu0 0.0
        %2406 = vmatpush1.msra.mxu0 0.0
        %2407 = vmatprep.subr.mxu0 0.0
        %2408 = vmatpush1.msra.mxu0 0.0
        %2409 = vmatprep.subr.mxu0 0.0
        %2410 = vmatpush1.msra.mxu0 0.0
        %2411 = vmatprep.subr.mxu0 0.0
        %2412 = vmatpush1.msra.mxu0 0.0
        %2413 = vmatprep.subr.mxu0 0.0
        %2414 = vmatpush1.msra.mxu0 0.0
        %2415 = vmatprep.subr.mxu0 0.0
        %2416 = vmatpush1.msra.mxu0 0.0
        %2417 = vmatprep.subr.mxu0 0.0
        %2418 = vmatpush1.msra.mxu0 0.0
        %2419 = vmatprep.subr.mxu0 0.0
        %2420 = vmatpush1.msra.mxu0 0.0
        %2421 = vmatprep.mubr.f32.mxu0 0.0
        %2422 = vmatmul.mubr.f32.gmra.mrb[0].mxu0 %v2352
        %v2423 = vpop.f32.mrb[0].mxu0
        %v2424 = vadd.f32 %v2349, %v2423
        %v2425 = vpop.f32.mrb[0].mxu0
        %2426 = vmatprep.mubr.f32.mxu0 0.0
        %2427 = vmatmul.mubr.f32.gmra.mrb[0].mxu0 %v2355
        %v2428 = vpop.f32.mrb[0].mxu0
        %v2429 = vadd.f32 %v2349, %v2428
        %v2430 = vpop.f32.mrb[0].mxu0
        %2431 = vdwg.mxu0
        %v2432 = vmax.f32 %v2424, 0.0
        %v2433 = vmax.f32 %v2429, 0.0
        %v2434 = vld [vmem:[%s9] sm:$0xff]
        %v2435 = vld [vmem:[%s9 + $0x8] sm:$0xff]
        %v2436 = vld [vmem:[%s9 + $0x10] sm:$0xff]
        %v2437 = vld [vmem:[%s9 + $0x18] sm:$0xff]
        %v2438 = vld [vmem:[%s9 + $0x20] sm:$0xff]
        %v2439 = vld [vmem:[%s9 + $0x28] sm:$0xff]
        %v2440 = vld [vmem:[%s9 + $0x30] sm:$0xff]
        %v2441 = vld [vmem:[%s9 + $0x38] sm:$0xff]
        %v2442 = vld [vmem:[#allocation13] sm:$0x1]
        %v2444 = vlaneseq
        %v2445 = vshrl.u32 %v2444, 7
        %v2446 = vsub.s32 0, %v2445
        %v2447 = vrot.slane %v2442, %v2446
        %vm2449 = vcmask 523264
        %v2451 = vsel %vm2449, %v2432, 0
        %v2454 = vsel %vm2449, %v2433, 0
        %2456 = vmatprep.subr.mxu0 0.0
        %2457 = vmatpush1.msra.mxu0 %v2434
        %2458 = vmatprep.subr.mxu0 0.0
        %2459 = vmatpush1.msra.mxu0 %v2435
        %2460 = vmatprep.subr.mxu0 0.0
        %2461 = vmatpush1.msra.mxu0 %v2436
        %2462 = vmatprep.subr.mxu0 0.0
        %2463 = vmatpush1.msra.mxu0 %v2437
        %2464 = vmatprep.subr.mxu0 0.0
        %2465 = vmatpush1.msra.mxu0 %v2438
        %2466 = vmatprep.subr.mxu0 0.0
        %2467 = vmatpush1.msra.mxu0 %v2439
        %2468 = vmatprep.subr.mxu0 0.0
        %2469 = vmatpush1.msra.mxu0 %v2440
        %2470 = vmatprep.subr.mxu0 0.0
        %2471 = vmatpush1.msra.mxu0 %v2441
        %2472 = vmatprep.subr.mxu0 0.0
        %2473 = vmatpush1.msra.mxu0 0.0
        %2474 = vmatprep.subr.mxu0 0.0
        %2475 = vmatpush1.msra.mxu0 0.0
        %2476 = vmatprep.subr.mxu0 0.0
        %2477 = vmatpush1.msra.mxu0 0.0
        %2478 = vmatprep.subr.mxu0 0.0
        %2479 = vmatpush1.msra.mxu0 0.0
        %2480 = vmatprep.subr.mxu0 0.0
        %2481 = vmatpush1.msra.mxu0 0.0
        %2482 = vmatprep.subr.mxu0 0.0
        %2483 = vmatpush1.msra.mxu0 0.0
        %2484 = vmatprep.subr.mxu0 0.0
        %2485 = vmatpush1.msra.mxu0 0.0
        %2486 = vmatprep.subr.mxu0 0.0
        %2487 = vmatpush1.msra.mxu0 0.0
        %2488 = vmatprep.subr.mxu0 0.0
        %2489 = vmatpush1.msra.mxu0 0.0
        %2490 = vmatprep.subr.mxu0 0.0
        %2491 = vmatpush1.msra.mxu0 0.0
        %2492 = vmatprep.subr.mxu0 0.0
        %2493 = vmatpush1.msra.mxu0 0.0
        %2494 = vmatprep.subr.mxu0 0.0
        %2495 = vmatpush1.msra.mxu0 0.0
        %2496 = vmatprep.subr.mxu0 0.0
        %2497 = vmatpush1.msra.mxu0 0.0
        %2498 = vmatprep.subr.mxu0 0.0
        %2499 = vmatpush1.msra.mxu0 0.0
        %2500 = vmatprep.subr.mxu0 0.0
        %2501 = vmatpush1.msra.mxu0 0.0
        %2502 = vmatprep.subr.mxu0 0.0
        %2503 = vmatpush1.msra.mxu0 0.0
        %2504 = vmatprep.subr.mxu0 0.0
        %2505 = vmatpush1.msra.mxu0 0.0
        %2506 = vmatprep.subr.mxu0 0.0
        %2507 = vmatpush1.msra.mxu0 0.0
        %2508 = vmatprep.subr.mxu0 0.0
        %2509 = vmatpush1.msra.mxu0 0.0
        %2510 = vmatprep.subr.mxu0 0.0
        %2511 = vmatpush1.msra.mxu0 0.0
        %2512 = vmatprep.subr.mxu0 0.0
        %2513 = vmatpush1.msra.mxu0 0.0
        %2514 = vmatprep.subr.mxu0 0.0
        %2515 = vmatpush1.msra.mxu0 0.0
        %2516 = vmatprep.subr.mxu0 0.0
        %2517 = vmatpush1.msra.mxu0 0.0
        %2518 = vmatprep.subr.mxu0 0.0
        %2519 = vmatpush1.msra.mxu0 0.0
        %2520 = vmatprep.mubr.f32.mxu0 0.0
        %2521 = vmatmul.mubr.f32.gmra.mrb[0].mxu0 %v2451
        %v2522 = vpop.f32.mrb[0].mxu0
        %v2523 = vadd.f32 %v2447, %v2522
        %v2524 = vpop.f32.mrb[0].mxu0
        %2525 = vmatprep.mubr.f32.mxu0 0.0
        %2526 = vmatmul.mubr.f32.gmra.mrb[0].mxu0 %v2454
        %v2527 = vpop.f32.mrb[0].mxu0
        %v2528 = vadd.f32 %v2447, %v2527
        %v2529 = vpop.f32.mrb[0].mxu0
        %2530 = vdwg.mxu0
        %s2531 = scalar_lea.vmem [#allocation2], 2
        %v2532 = vld [vmem:[%s2531] sm:$0x3]
        %s2533 = scalar_lea.vmem [#allocation5], 2
        %v2534 = vld [vmem:[%s2533] sm:$0x3]
        %v2535 = vsel %vm719, %v2523, 0.0
        %2536 = vadd.xlane.f32.xlu0 %v2535
        %v2537 = vpop.xlane.xlu0 %2536
        %v2538 = vsel %vm719, %v2528, 0.0
        %2539 = vadd.xlane.f32.xlu0 %v2538
        %v2540 = vpop.xlane.xlu0 %2539
        %v2541 = vmul.f32 %v2537, %v726
        %v2542 = vmul.f32 %v2540, %v726
        %v2543 = vsub.f32 %v2523, %v2541
        %v2544 = vsub.f32 %v2528, %v2542
        %v2545 = vmul.f32 %v2543, %v2543
        %v2546 = vmul.f32 %v2544, %v2544
        %v2547 = vsel %vm719, %v2545, 0.0
        %2548 = vadd.xlane.f32.xlu0 %v2547
        %v2549 = vpop.xlane.xlu0 %2548
        %v2550 = vsel %vm719, %v2546, 0.0
        %2551 = vadd.xlane.f32.xlu0 %v2550
        %v2552 = vpop.xlane.xlu0 %2551
        %v2553 = vmul.f32 %v2549, %v726
        %v2554 = vmul.f32 %v2552, %v726
        %v2555 = vadd.f32 %v2553, 1e-05
        %v2556 = vadd.f32 %v2554, 1e-05
        %v2557 = vrsqrt.pop %v2555
        %v2558 = vrsqrt.pop %v2556
        %v2559 = vmul.f32 %v2543, %v2557
        %v2560 = vmul.f32 %v2544, %v2558
        %v2561 = vlaneseq
        %v2562 = vshrl.u32 %v2561, 7
        %v2563 = vsub.s32 0, %v2562
        %v2564 = vrot.slane %v2532, %v2563
        %v2565 = vmul.f32 %v2559, %v2564
        %v2566 = vmul.f32 %v2560, %v2564
        %v2567 = vlaneseq
        %v2568 = vshrl.u32 %v2567, 7
        %v2569 = vsub.s32 0, %v2568
        %v2570 = vrot.slane %v2534, %v2569
        %v2571 = vadd.f32 %v2565, %v2570
        %v2572 = vadd.f32 %v2566, %v2570
        %s2573 = scalar_lea.vmem %s3, 32
        %v2574 = vld [vmem:[%s2573] sm:$0xff]
        %v2575 = vld [vmem:[%s2573 + $0x8] sm:$0xff]
        %v2576 = vld [vmem:[%s2573 + $0x10] sm:$0xff]
        %v2577 = vld [vmem:[%s2573 + $0x18] sm:$0xff]
        %s2578 = scalar_lea.vmem [#allocation7], 1
        %v2579 = vld [vmem:[%s2578] sm:$0x1]
        %v2581 = vlaneseq
        %v2582 = vshrl.u32 %v2581, 7
        %v2583 = vsub.s32 0, %v2582
        %v2584 = vrot.slane %v2579, %v2583
        %v2587 = vsel %vm719, %v2571, 0
        %v2590 = vsel %vm719, %v2572, 0
        %2592 = vmatprep.subr.mxu0 0.0
        %2593 = vmatpush1.msra.mxu0 %v2574
        %2594 = vmatprep.subr.mxu0 0.0
        %2595 = vmatpush1.msra.mxu0 %v2575
        %2596 = vmatprep.subr.mxu0 0.0
        %2597 = vmatpush1.msra.mxu0 %v2576
        %2598 = vmatprep.subr.mxu0 0.0
        %2599 = vmatpush1.msra.mxu0 %v2577
        %2600 = vmatprep.subr.mxu0 0.0
        %2601 = vmatpush1.msra.mxu0 0.0
        %2602 = vmatprep.subr.mxu0 0.0
        %2603 = vmatpush1.msra.mxu0 0.0
        %2604 = vmatprep.subr.mxu0 0.0
        %2605 = vmatpush1.msra.mxu0 0.0
        %2606 = vmatprep.subr.mxu0 0.0
        %2607 = vmatpush1.msra.mxu0 0.0
        %2608 = vmatprep.subr.mxu0 0.0
        %2609 = vmatpush1.msra.mxu0 0.0
        %2610 = vmatprep.subr.mxu0 0.0
        %2611 = vmatpush1.msra.mxu0 0.0
        %2612 = vmatprep.subr.mxu0 0.0
        %2613 = vmatpush1.msra.mxu0 0.0
        %2614 = vmatprep.subr.mxu0 0.0
        %2615 = vmatpush1.msra.mxu0 0.0
        %2616 = vmatprep.subr.mxu0 0.0
        %2617 = vmatpush1.msra.mxu0 0.0
        %2618 = vmatprep.subr.mxu0 0.0
        %2619 = vmatpush1.msra.mxu0 0.0
        %2620 = vmatprep.subr.mxu0 0.0
        %2621 = vmatpush1.msra.mxu0 0.0
        %2622 = vmatprep.subr.mxu0 0.0
        %2623 = vmatpush1.msra.mxu0 0.0
        %2624 = vmatprep.subr.mxu0 0.0
        %2625 = vmatpush1.msra.mxu0 0.0
        %2626 = vmatprep.subr.mxu0 0.0
        %2627 = vmatpush1.msra.mxu0 0.0
        %2628 = vmatprep.subr.mxu0 0.0
        %2629 = vmatpush1.msra.mxu0 0.0
        %2630 = vmatprep.subr.mxu0 0.0
        %2631 = vmatpush1.msra.mxu0 0.0
        %2632 = vmatprep.subr.mxu0 0.0
        %2633 = vmatpush1.msra.mxu0 0.0
        %2634 = vmatprep.subr.mxu0 0.0
        %2635 = vmatpush1.msra.mxu0 0.0
        %2636 = vmatprep.subr.mxu0 0.0
        %2637 = vmatpush1.msra.mxu0 0.0
        %2638 = vmatprep.subr.mxu0 0.0
        %2639 = vmatpush1.msra.mxu0 0.0
        %2640 = vmatprep.subr.mxu0 0.0
        %2641 = vmatpush1.msra.mxu0 0.0
        %2642 = vmatprep.subr.mxu0 0.0
        %2643 = vmatpush1.msra.mxu0 0.0
        %2644 = vmatprep.subr.mxu0 0.0
        %2645 = vmatpush1.msra.mxu0 0.0
        %2646 = vmatprep.subr.mxu0 0.0
        %2647 = vmatpush1.msra.mxu0 0.0
        %2648 = vmatprep.subr.mxu0 0.0
        %2649 = vmatpush1.msra.mxu0 0.0
        %2650 = vmatprep.subr.mxu0 0.0
        %2651 = vmatpush1.msra.mxu0 0.0
        %2652 = vmatprep.subr.mxu0 0.0
        %2653 = vmatpush1.msra.mxu0 0.0
        %2654 = vmatprep.subr.mxu0 0.0
        %2655 = vmatpush1.msra.mxu0 0.0
        %2656 = vmatprep.mubr.f32.mxu0 0.0
        %2657 = vmatmul.mubr.f32.gmra.mrb[0].mxu0 %v2587
        %v2658 = vpop.f32.mrb[0].mxu0
        %v2659 = vadd.f32 %v2584, %v2658
        %v2660 = vpop.f32.mrb[0].mxu0
        %2661 = vmatprep.mubr.f32.mxu0 0.0
        %2662 = vmatmul.mubr.f32.gmra.mrb[0].mxu0 %v2590
        %v2663 = vpop.f32.mrb[0].mxu0
        %v2664 = vadd.f32 %v2584, %v2663
        %v2665 = vpop.f32.mrb[0].mxu0
        %2666 = vdwg.mxu0
        %2668 = vrot.lane.b32.xlu0 %v2659, 96
        %v2669 = vpop.permute.xlu0 %2668
        %v2670 = vsel %vm854, %v2659, 0
        %v2672 = vsel %vm854, %v2669, 0
        %2674 = vmatprep.subr.mxu0 0.0
        %2675 = vmatpush1.xpose.msra.mxu0 %v2672
        %2676 = vmatprep.subr.mxu0 0.0
        %2677 = vmatpush1.xpose.msra.mxu0 0.0
        %2678 = vmatprep.subr.mxu0 0.0
        %2679 = vmatpush1.xpose.msra.mxu0 0.0
        %2680 = vmatprep.subr.mxu0 0.0
        %2681 = vmatpush1.xpose.msra.mxu0 0.0
        %2682 = vmatprep.subr.mxu0 0.0
        %2683 = vmatpush1.xpose.msra.mxu0 0.0
        %2684 = vmatprep.subr.mxu0 0.0
        %2685 = vmatpush1.xpose.msra.mxu0 0.0
        %2686 = vmatprep.subr.mxu0 0.0
        %2687 = vmatpush1.xpose.msra.mxu0 0.0
        %2688 = vmatprep.subr.mxu0 0.0
        %2689 = vmatpush1.xpose.msra.mxu0 0.0
        %2690 = vmatprep.subr.mxu0 0.0
        %2691 = vmatpush1.xpose.msra.mxu0 0.0
        %2692 = vmatprep.subr.mxu0 0.0
        %2693 = vmatpush1.xpose.msra.mxu0 0.0
        %2694 = vmatprep.subr.mxu0 0.0
        %2695 = vmatpush1.xpose.msra.mxu0 0.0
        %2696 = vmatprep.subr.mxu0 0.0
        %2697 = vmatpush1.xpose.msra.mxu0 0.0
        %2698 = vmatprep.subr.mxu0 0.0
        %2699 = vmatpush1.xpose.msra.mxu0 0.0
        %2700 = vmatprep.subr.mxu0 0.0
        %2701 = vmatpush1.xpose.msra.mxu0 0.0
        %2702 = vmatprep.subr.mxu0 0.0
        %2703 = vmatpush1.xpose.msra.mxu0 0.0
        %2704 = vmatprep.subr.mxu0 0.0
        %2705 = vmatpush1.xpose.msra.mxu0 0.0
        %2706 = vmatprep.subr.mxu0 0.0
        %2707 = vmatpush1.xpose.msra.mxu0 0.0
        %2708 = vmatprep.subr.mxu0 0.0
        %2709 = vmatpush1.xpose.msra.mxu0 0.0
        %2710 = vmatprep.subr.mxu0 0.0
        %2711 = vmatpush1.xpose.msra.mxu0 0.0
        %2712 = vmatprep.subr.mxu0 0.0
        %2713 = vmatpush1.xpose.msra.mxu0 0.0
        %2714 = vmatprep.subr.mxu0 0.0
        %2715 = vmatpush1.xpose.msra.mxu0 0.0
        %2716 = vmatprep.subr.mxu0 0.0
        %2717 = vmatpush1.xpose.msra.mxu0 0.0
        %2718 = vmatprep.subr.mxu0 0.0
        %2719 = vmatpush1.xpose.msra.mxu0 0.0
        %2720 = vmatprep.subr.mxu0 0.0
        %2721 = vmatpush1.xpose.msra.mxu0 0.0
        %2722 = vmatprep.subr.mxu0 0.0
        %2723 = vmatpush1.xpose.msra.mxu0 0.0
        %2724 = vmatprep.subr.mxu0 0.0
        %2725 = vmatpush1.xpose.msra.mxu0 0.0
        %2726 = vmatprep.subr.mxu0 0.0
        %2727 = vmatpush1.xpose.msra.mxu0 0.0
        %2728 = vmatprep.subr.mxu0 0.0
        %2729 = vmatpush1.xpose.msra.mxu0 0.0
        %2730 = vmatprep.subr.mxu0 0.0
        %2731 = vmatpush1.xpose.msra.mxu0 0.0
        %2732 = vmatprep.subr.mxu0 0.0
        %2733 = vmatpush1.xpose.msra.mxu0 0.0
        %2734 = vmatprep.subr.mxu0 0.0
        %2735 = vmatpush1.xpose.msra.mxu0 0.0
        %2736 = vmatprep.subr.mxu0 0.0
        %2737 = vmatpush1.xpose.msra.mxu0 0.0
        %2738 = vmatprep.mubr.f32.mxu0 0.0
        %2739 = vmatmul.mubr.f32.gmra.mrb[0].mxu0 %v2670
        %v2740 = vpop.f32.mrb[0].mxu0
        %v2741 = vadd.f32 0.0, %v2740
        %v2742 = vpop.f32.mrb[0].mxu0
        %2743 = vdwg.mxu0
        %v2744 = vmul.f32 %v2741, 0.35355338
        %v2745 = vsel %vm854, %v2744, -inf
        %2746 = vmax.xlane.f32.xlu0 %v2745
        %v2747 = vpop.xlane.xlu0 %2746
        %v2748 = vsub.f32 %v2744, %v2747
        %v2749 = vmul.f32 %v2748, 1.442695
        %v2750 = vpow.pop %v2749
        %v2751 = vsel %vm854, %v2750, 0.0
        %2752 = vadd.xlane.f32.xlu0 %v2751
        %v2753 = vpop.xlane.xlu0 %2752
        %v2754 = vrcp.pop %v2753
        %v2755 = vmul.f32 %v2750, %v2754
        %2756 = vrot.lane.b32.xlu0 %v2659, 64
        %v2757 = vpop.permute.xlu0 %2756
        %v2760 = vsel %vm854, %v2755, 0
        %2762 = vmatprep.subr.mxu0 0.0
        %2763 = vmatpush1.msra.mxu0 %v2757
        %2764 = vmatprep.subr.mxu0 0.0
        %2765 = vmatpush1.msra.mxu0 0.0
        %2766 = vmatprep.subr.mxu0 0.0
        %2767 = vmatpush1.msra.mxu0 0.0
        %2768 = vmatprep.subr.mxu0 0.0
        %2769 = vmatpush1.msra.mxu0 0.0
        %2770 = vmatprep.subr.mxu0 0.0
        %2771 = vmatpush1.msra.mxu0 0.0
        %2772 = vmatprep.subr.mxu0 0.0
        %2773 = vmatpush1.msra.mxu0 0.0
        %2774 = vmatprep.subr.mxu0 0.0
        %2775 = vmatpush1.msra.mxu0 0.0
        %2776 = vmatprep.subr.mxu0 0.0
        %2777 = vmatpush1.msra.mxu0 0.0
        %2778 = vmatprep.subr.mxu0 0.0
        %2779 = vmatpush1.msra.mxu0 0.0
        %2780 = vmatprep.subr.mxu0 0.0
        %2781 = vmatpush1.msra.mxu0 0.0
        %2782 = vmatprep.subr.mxu0 0.0
        %2783 = vmatpush1.msra.mxu0 0.0
        %2784 = vmatprep.subr.mxu0 0.0
        %2785 = vmatpush1.msra.mxu0 0.0
        %2786 = vmatprep.subr.mxu0 0.0
        %2787 = vmatpush1.msra.mxu0 0.0
        %2788 = vmatprep.subr.mxu0 0.0
        %2789 = vmatpush1.msra.mxu0 0.0
        %2790 = vmatprep.subr.mxu0 0.0
        %2791 = vmatpush1.msra.mxu0 0.0
        %2792 = vmatprep.subr.mxu0 0.0
        %2793 = vmatpush1.msra.mxu0 0.0
        %2794 = vmatprep.subr.mxu0 0.0
        %2795 = vmatpush1.msra.mxu0 0.0
        %2796 = vmatprep.subr.mxu0 0.0
        %2797 = vmatpush1.msra.mxu0 0.0
        %2798 = vmatprep.subr.mxu0 0.0
        %2799 = vmatpush1.msra.mxu0 0.0
        %2800 = vmatprep.subr.mxu0 0.0
        %2801 = vmatpush1.msra.mxu0 0.0
        %2802 = vmatprep.subr.mxu0 0.0
        %2803 = vmatpush1.msra.mxu0 0.0
        %2804 = vmatprep.subr.mxu0 0.0
        %2805 = vmatpush1.msra.mxu0 0.0
        %2806 = vmatprep.subr.mxu0 0.0
        %2807 = vmatpush1.msra.mxu0 0.0
        %2808 = vmatprep.subr.mxu0 0.0
        %2809 = vmatpush1.msra.mxu0 0.0
        %2810 = vmatprep.subr.mxu0 0.0
        %2811 = vmatpush1.msra.mxu0 0.0
        %2812 = vmatprep.subr.mxu0 0.0
        %2813 = vmatpush1.msra.mxu0 0.0
        %2814 = vmatprep.subr.mxu0 0.0
        %2815 = vmatpush1.msra.mxu0 0.0
        %2816 = vmatprep.subr.mxu0 0.0
        %2817 = vmatpush1.msra.mxu0 0.0
        %2818 = vmatprep.subr.mxu0 0.0
        %2819 = vmatpush1.msra.mxu0 0.0
        %2820 = vmatprep.subr.mxu0 0.0
        %2821 = vmatpush1.msra.mxu0 0.0
        %2822 = vmatprep.subr.mxu0 0.0
        %2823 = vmatpush1.msra.mxu0 0.0
        %2824 = vmatprep.subr.mxu0 0.0
        %2825 = vmatpush1.msra.mxu0 0.0
        %2826 = vmatprep.mubr.f32.mxu0 0.0
        %2827 = vmatmul.mubr.f32.gmra.mrb[0].mxu0 %v2760
        %v2828 = vpop.f32.mrb[0].mxu0
        %v2829 = vadd.f32 0.0, %v2828
        %v2830 = vpop.f32.mrb[0].mxu0
        %2831 = vdwg.mxu0
        %2833 = vrot.lane.b32.xlu0 %v2664, 96
        %v2834 = vpop.permute.xlu0 %2833
        %v2835 = vsel %vm854, %v2664, 0
        %v2837 = vsel %vm854, %v2834, 0
        %2839 = vmatprep.subr.mxu0 0.0
        %2840 = vmatpush1.xpose.msra.mxu0 %v2837
        %2841 = vmatprep.subr.mxu0 0.0
        %2842 = vmatpush1.xpose.msra.mxu0 0.0
        %2843 = vmatprep.subr.mxu0 0.0
        %2844 = vmatpush1.xpose.msra.mxu0 0.0
        %2845 = vmatprep.subr.mxu0 0.0
        %2846 = vmatpush1.xpose.msra.mxu0 0.0
        %2847 = vmatprep.subr.mxu0 0.0
        %2848 = vmatpush1.xpose.msra.mxu0 0.0
        %2849 = vmatprep.subr.mxu0 0.0
        %2850 = vmatpush1.xpose.msra.mxu0 0.0
        %2851 = vmatprep.subr.mxu0 0.0
        %2852 = vmatpush1.xpose.msra.mxu0 0.0
        %2853 = vmatprep.subr.mxu0 0.0
        %2854 = vmatpush1.xpose.msra.mxu0 0.0
        %2855 = vmatprep.subr.mxu0 0.0
        %2856 = vmatpush1.xpose.msra.mxu0 0.0
        %2857 = vmatprep.subr.mxu0 0.0
        %2858 = vmatpush1.xpose.msra.mxu0 0.0
        %2859 = vmatprep.subr.mxu0 0.0
        %2860 = vmatpush1.xpose.msra.mxu0 0.0
        %2861 = vmatprep.subr.mxu0 0.0
        %2862 = vmatpush1.xpose.msra.mxu0 0.0
        %2863 = vmatprep.subr.mxu0 0.0
        %2864 = vmatpush1.xpose.msra.mxu0 0.0
        %2865 = vmatprep.subr.mxu0 0.0
        %2866 = vmatpush1.xpose.msra.mxu0 0.0
        %2867 = vmatprep.subr.mxu0 0.0
        %2868 = vmatpush1.xpose.msra.mxu0 0.0
        %2869 = vmatprep.subr.mxu0 0.0
        %2870 = vmatpush1.xpose.msra.mxu0 0.0
        %2871 = vmatprep.subr.mxu0 0.0
        %2872 = vmatpush1.xpose.msra.mxu0 0.0
        %2873 = vmatprep.subr.mxu0 0.0
        %2874 = vmatpush1.xpose.msra.mxu0 0.0
        %2875 = vmatprep.subr.mxu0 0.0
        %2876 = vmatpush1.xpose.msra.mxu0 0.0
        %2877 = vmatprep.subr.mxu0 0.0
        %2878 = vmatpush1.xpose.msra.mxu0 0.0
        %2879 = vmatprep.subr.mxu0 0.0
        %2880 = vmatpush1.xpose.msra.mxu0 0.0
        %2881 = vmatprep.subr.mxu0 0.0
        %2882 = vmatpush1.xpose.msra.mxu0 0.0
        %2883 = vmatprep.subr.mxu0 0.0
        %2884 = vmatpush1.xpose.msra.mxu0 0.0
        %2885 = vmatprep.subr.mxu0 0.0
        %2886 = vmatpush1.xpose.msra.mxu0 0.0
        %2887 = vmatprep.subr.mxu0 0.0
        %2888 = vmatpush1.xpose.msra.mxu0 0.0
        %2889 = vmatprep.subr.mxu0 0.0
        %2890 = vmatpush1.xpose.msra.mxu0 0.0
        %2891 = vmatprep.subr.mxu0 0.0
        %2892 = vmatpush1.xpose.msra.mxu0 0.0
        %2893 = vmatprep.subr.mxu0 0.0
        %2894 = vmatpush1.xpose.msra.mxu0 0.0
        %2895 = vmatprep.subr.mxu0 0.0
        %2896 = vmatpush1.xpose.msra.mxu0 0.0
        %2897 = vmatprep.subr.mxu0 0.0
        %2898 = vmatpush1.xpose.msra.mxu0 0.0
        %2899 = vmatprep.subr.mxu0 0.0
        %2900 = vmatpush1.xpose.msra.mxu0 0.0
        %2901 = vmatprep.subr.mxu0 0.0
        %2902 = vmatpush1.xpose.msra.mxu0 0.0
        %2903 = vmatprep.mubr.f32.mxu0 0.0
        %2904 = vmatmul.mubr.f32.gmra.mrb[0].mxu0 %v2835
        %v2905 = vpop.f32.mrb[0].mxu0
        %v2906 = vadd.f32 0.0, %v2905
        %v2907 = vpop.f32.mrb[0].mxu0
        %2908 = vdwg.mxu0
        %v2909 = vmul.f32 %v2906, 0.35355338
        %v2910 = vsel %vm854, %v2909, -inf
        %2911 = vmax.xlane.f32.xlu0 %v2910
        %v2912 = vpop.xlane.xlu0 %2911
        %v2913 = vsub.f32 %v2909, %v2912
        %v2914 = vmul.f32 %v2913, 1.442695
        %v2915 = vpow.pop %v2914
        %v2916 = vsel %vm854, %v2915, 0.0
        %2917 = vadd.xlane.f32.xlu0 %v2916
        %v2918 = vpop.xlane.xlu0 %2917
        %v2919 = vrcp.pop %v2918
        %v2920 = vmul.f32 %v2915, %v2919
        %2921 = vrot.lane.b32.xlu0 %v2664, 64
        %v2922 = vpop.permute.xlu0 %2921
        %v2925 = vsel %vm854, %v2920, 0
        %2927 = vmatprep.subr.mxu0 0.0
        %2928 = vmatpush1.msra.mxu0 %v2922
        %2929 = vmatprep.subr.mxu0 0.0
        %2930 = vmatpush1.msra.mxu0 0.0
        %2931 = vmatprep.subr.mxu0 0.0
        %2932 = vmatpush1.msra.mxu0 0.0
        %2933 = vmatprep.subr.mxu0 0.0
        %2934 = vmatpush1.msra.mxu0 0.0
        %2935 = vmatprep.subr.mxu0 0.0
        %2936 = vmatpush1.msra.mxu0 0.0
        %2937 = vmatprep.subr.mxu0 0.0
        %2938 = vmatpush1.msra.mxu0 0.0
        %2939 = vmatprep.subr.mxu0 0.0
        %2940 = vmatpush1.msra.mxu0 0.0
        %2941 = vmatprep.subr.mxu0 0.0
        %2942 = vmatpush1.msra.mxu0 0.0
        %2943 = vmatprep.subr.mxu0 0.0
        %2944 = vmatpush1.msra.mxu0 0.0
        %2945 = vmatprep.subr.mxu0 0.0
        %2946 = vmatpush1.msra.mxu0 0.0
        %2947 = vmatprep.subr.mxu0 0.0
        %2948 = vmatpush1.msra.mxu0 0.0
        %2949 = vmatprep.subr.mxu0 0.0
        %2950 = vmatpush1.msra.mxu0 0.0
        %2951 = vmatprep.subr.mxu0 0.0
        %2952 = vmatpush1.msra.mxu0 0.0
        %2953 = vmatprep.subr.mxu0 0.0
        %2954 = vmatpush1.msra.mxu0 0.0
        %2955 = vmatprep.subr.mxu0 0.0
        %2956 = vmatpush1.msra.mxu0 0.0
        %2957 = vmatprep.subr.mxu0 0.0
        %2958 = vmatpush1.msra.mxu0 0.0
        %2959 = vmatprep.subr.mxu0 0.0
        %2960 = vmatpush1.msra.mxu0 0.0
        %2961 = vmatprep.subr.mxu0 0.0
        %2962 = vmatpush1.msra.mxu0 0.0
        %2963 = vmatprep.subr.mxu0 0.0
        %2964 = vmatpush1.msra.mxu0 0.0
        %2965 = vmatprep.subr.mxu0 0.0
        %2966 = vmatpush1.msra.mxu0 0.0
        %2967 = vmatprep.subr.mxu0 0.0
        %2968 = vmatpush1.msra.mxu0 0.0
        %2969 = vmatprep.subr.mxu0 0.0
        %2970 = vmatpush1.msra.mxu0 0.0
        %2971 = vmatprep.subr.mxu0 0.0
        %2972 = vmatpush1.msra.mxu0 0.0
        %2973 = vmatprep.subr.mxu0 0.0
        %2974 = vmatpush1.msra.mxu0 0.0
        %2975 = vmatprep.subr.mxu0 0.0
        %2976 = vmatpush1.msra.mxu0 0.0
        %2977 = vmatprep.subr.mxu0 0.0
        %2978 = vmatpush1.msra.mxu0 0.0
        %2979 = vmatprep.subr.mxu0 0.0
        %2980 = vmatpush1.msra.mxu0 0.0
        %2981 = vmatprep.subr.mxu0 0.0
        %2982 = vmatpush1.msra.mxu0 0.0
        %2983 = vmatprep.subr.mxu0 0.0
        %2984 = vmatpush1.msra.mxu0 0.0
        %2985 = vmatprep.subr.mxu0 0.0
        %2986 = vmatpush1.msra.mxu0 0.0
        %2987 = vmatprep.subr.mxu0 0.0
        %2988 = vmatpush1.msra.mxu0 0.0
        %2989 = vmatprep.subr.mxu0 0.0
        %2990 = vmatpush1.msra.mxu0 0.0
        %2991 = vmatprep.mubr.f32.mxu0 0.0
        %2992 = vmatmul.mubr.f32.gmra.mrb[0].mxu0 %v2925
        %v2993 = vpop.f32.mrb[0].mxu0
        %v2994 = vadd.f32 0.0, %v2993
        %v2995 = vpop.f32.mrb[0].mxu0
        %2996 = vdwg.mxu0
        %2997 = vrot.lane.b32.xlu0 %v2659, 120
        %v2998 = vpop.permute.xlu0 %2997
        %2999 = vrot.lane.b32.xlu0 %v2659, 88
        %v3000 = vpop.permute.xlu0 %2999
        %v3001 = vsel %vm854, %v2998, 0
        %v3003 = vsel %vm854, %v3000, 0
        %3005 = vmatprep.subr.mxu0 0.0
        %3006 = vmatpush1.xpose.msra.mxu0 %v3003
        %3007 = vmatprep.subr.mxu0 0.0
        %3008 = vmatpush1.xpose.msra.mxu0 0.0
        %3009 = vmatprep.subr.mxu0 0.0
        %3010 = vmatpush1.xpose.msra.mxu0 0.0
        %3011 = vmatprep.subr.mxu0 0.0
        %3012 = vmatpush1.xpose.msra.mxu0 0.0
        %3013 = vmatprep.subr.mxu0 0.0
        %3014 = vmatpush1.xpose.msra.mxu0 0.0
        %3015 = vmatprep.subr.mxu0 0.0
        %3016 = vmatpush1.xpose.msra.mxu0 0.0
        %3017 = vmatprep.subr.mxu0 0.0
        %3018 = vmatpush1.xpose.msra.mxu0 0.0
        %3019 = vmatprep.subr.mxu0 0.0
        %3020 = vmatpush1.xpose.msra.mxu0 0.0
        %3021 = vmatprep.subr.mxu0 0.0
        %3022 = vmatpush1.xpose.msra.mxu0 0.0
        %3023 = vmatprep.subr.mxu0 0.0
        %3024 = vmatpush1.xpose.msra.mxu0 0.0
        %3025 = vmatprep.subr.mxu0 0.0
        %3026 = vmatpush1.xpose.msra.mxu0 0.0
        %3027 = vmatprep.subr.mxu0 0.0
        %3028 = vmatpush1.xpose.msra.mxu0 0.0
        %3029 = vmatprep.subr.mxu0 0.0
        %3030 = vmatpush1.xpose.msra.mxu0 0.0
        %3031 = vmatprep.subr.mxu0 0.0
        %3032 = vmatpush1.xpose.msra.mxu0 0.0
        %3033 = vmatprep.subr.mxu0 0.0
        %3034 = vmatpush1.xpose.msra.mxu0 0.0
        %3035 = vmatprep.subr.mxu0 0.0
        %3036 = vmatpush1.xpose.msra.mxu0 0.0
        %3037 = vmatprep.subr.mxu0 0.0
        %3038 = vmatpush1.xpose.msra.mxu0 0.0
        %3039 = vmatprep.subr.mxu0 0.0
        %3040 = vmatpush1.xpose.msra.mxu0 0.0
        %3041 = vmatprep.subr.mxu0 0.0
        %3042 = vmatpush1.xpose.msra.mxu0 0.0
        %3043 = vmatprep.subr.mxu0 0.0
        %3044 = vmatpush1.xpose.msra.mxu0 0.0
        %3045 = vmatprep.subr.mxu0 0.0
        %3046 = vmatpush1.xpose.msra.mxu0 0.0
        %3047 = vmatprep.subr.mxu0 0.0
        %3048 = vmatpush1.xpose.msra.mxu0 0.0
        %3049 = vmatprep.subr.mxu0 0.0
        %3050 = vmatpush1.xpose.msra.mxu0 0.0
        %3051 = vmatprep.subr.mxu0 0.0
        %3052 = vmatpush1.xpose.msra.mxu0 0.0
        %3053 = vmatprep.subr.mxu0 0.0
        %3054 = vmatpush1.xpose.msra.mxu0 0.0
        %3055 = vmatprep.subr.mxu0 0.0
        %3056 = vmatpush1.xpose.msra.mxu0 0.0
        %3057 = vmatprep.subr.mxu0 0.0
        %3058 = vmatpush1.xpose.msra.mxu0 0.0
        %3059 = vmatprep.subr.mxu0 0.0
        %3060 = vmatpush1.xpose.msra.mxu0 0.0
        %3061 = vmatprep.subr.mxu0 0.0
        %3062 = vmatpush1.xpose.msra.mxu0 0.0
        %3063 = vmatprep.subr.mxu0 0.0
        %3064 = vmatpush1.xpose.msra.mxu0 0.0
        %3065 = vmatprep.subr.mxu0 0.0
        %3066 = vmatpush1.xpose.msra.mxu0 0.0
        %3067 = vmatprep.subr.mxu0 0.0
        %3068 = vmatpush1.xpose.msra.mxu0 0.0
        %3069 = vmatprep.mubr.f32.mxu0 0.0
        %3070 = vmatmul.mubr.f32.gmra.mrb[0].mxu0 %v3001
        %v3071 = vpop.f32.mrb[0].mxu0
        %v3072 = vadd.f32 0.0, %v3071
        %v3073 = vpop.f32.mrb[0].mxu0
        %3074 = vdwg.mxu0
        %v3075 = vmul.f32 %v3072, 0.35355338
        %v3076 = vsel %vm854, %v3075, -inf
        %3077 = vmax.xlane.f32.xlu0 %v3076
        %v3078 = vpop.xlane.xlu0 %3077
        %v3079 = vsub.f32 %v3075, %v3078
        %v3080 = vmul.f32 %v3079, 1.442695
        %v3081 = vpow.pop %v3080
        %v3082 = vsel %vm854, %v3081, 0.0
        %3083 = vadd.xlane.f32.xlu0 %v3082
        %v3084 = vpop.xlane.xlu0 %3083
        %v3085 = vrcp.pop %v3084
        %v3086 = vmul.f32 %v3081, %v3085
        %3087 = vrot.lane.b32.xlu0 %v2659, 56
        %v3088 = vpop.permute.xlu0 %3087
        %v3091 = vsel %vm854, %v3086, 0
        %3093 = vmatprep.subr.mxu0 0.0
        %3094 = vmatpush1.msra.mxu0 %v3088
        %3095 = vmatprep.subr.mxu0 0.0
        %3096 = vmatpush1.msra.mxu0 0.0
        %3097 = vmatprep.subr.mxu0 0.0
        %3098 = vmatpush1.msra.mxu0 0.0
        %3099 = vmatprep.subr.mxu0 0.0
        %3100 = vmatpush1.msra.mxu0 0.0
        %3101 = vmatprep.subr.mxu0 0.0
        %3102 = vmatpush1.msra.mxu0 0.0
        %3103 = vmatprep.subr.mxu0 0.0
        %3104 = vmatpush1.msra.mxu0 0.0
        %3105 = vmatprep.subr.mxu0 0.0
        %3106 = vmatpush1.msra.mxu0 0.0
        %3107 = vmatprep.subr.mxu0 0.0
        %3108 = vmatpush1.msra.mxu0 0.0
        %3109 = vmatprep.subr.mxu0 0.0
        %3110 = vmatpush1.msra.mxu0 0.0
        %3111 = vmatprep.subr.mxu0 0.0
        %3112 = vmatpush1.msra.mxu0 0.0
        %3113 = vmatprep.subr.mxu0 0.0
        %3114 = vmatpush1.msra.mxu0 0.0
        %3115 = vmatprep.subr.mxu0 0.0
        %3116 = vmatpush1.msra.mxu0 0.0
        %3117 = vmatprep.subr.mxu0 0.0
        %3118 = vmatpush1.msra.mxu0 0.0
        %3119 = vmatprep.subr.mxu0 0.0
        %3120 = vmatpush1.msra.mxu0 0.0
        %3121 = vmatprep.subr.mxu0 0.0
        %3122 = vmatpush1.msra.mxu0 0.0
        %3123 = vmatprep.subr.mxu0 0.0
        %3124 = vmatpush1.msra.mxu0 0.0
        %3125 = vmatprep.subr.mxu0 0.0
        %3126 = vmatpush1.msra.mxu0 0.0
        %3127 = vmatprep.subr.mxu0 0.0
        %3128 = vmatpush1.msra.mxu0 0.0
        %3129 = vmatprep.subr.mxu0 0.0
        %3130 = vmatpush1.msra.mxu0 0.0
        %3131 = vmatprep.subr.mxu0 0.0
        %3132 = vmatpush1.msra.mxu0 0.0
        %3133 = vmatprep.subr.mxu0 0.0
        %3134 = vmatpush1.msra.mxu0 0.0
        %3135 = vmatprep.subr.mxu0 0.0
        %3136 = vmatpush1.msra.mxu0 0.0
        %3137 = vmatprep.subr.mxu0 0.0
        %3138 = vmatpush1.msra.mxu0 0.0
        %3139 = vmatprep.subr.mxu0 0.0
        %3140 = vmatpush1.msra.mxu0 0.0
        %3141 = vmatprep.subr.mxu0 0.0
        %3142 = vmatpush1.msra.mxu0 0.0
        %3143 = vmatprep.subr.mxu0 0.0
        %3144 = vmatpush1.msra.mxu0 0.0
        %3145 = vmatprep.subr.mxu0 0.0
        %3146 = vmatpush1.msra.mxu0 0.0
        %3147 = vmatprep.subr.mxu0 0.0
        %3148 = vmatpush1.msra.mxu0 0.0
        %3149 = vmatprep.subr.mxu0 0.0
        %3150 = vmatpush1.msra.mxu0 0.0
        %3151 = vmatprep.subr.mxu0 0.0
        %3152 = vmatpush1.msra.mxu0 0.0
        %3153 = vmatprep.subr.mxu0 0.0
        %3154 = vmatpush1.msra.mxu0 0.0
        %3155 = vmatprep.subr.mxu0 0.0
        %3156 = vmatpush1.msra.mxu0 0.0
        %3157 = vmatprep.mubr.f32.mxu0 0.0
        %3158 = vmatmul.mubr.f32.gmra.mrb[0].mxu0 %v3091
        %v3159 = vpop.f32.mrb[0].mxu0
        %v3160 = vadd.f32 0.0, %v3159
        %v3161 = vpop.f32.mrb[0].mxu0
        %3162 = vdwg.mxu0
        %3163 = vrot.lane.b32.xlu0 %v2664, 120
        %v3164 = vpop.permute.xlu0 %3163
        %3165 = vrot.lane.b32.xlu0 %v2664, 88
        %v3166 = vpop.permute.xlu0 %3165
        %v3167 = vsel %vm854, %v3164, 0
        %v3169 = vsel %vm854, %v3166, 0
        %3171 = vmatprep.subr.mxu0 0.0
        %3172 = vmatpush1.xpose.msra.mxu0 %v3169
        %3173 = vmatprep.subr.mxu0 0.0
        %3174 = vmatpush1.xpose.msra.mxu0 0.0
        %3175 = vmatprep.subr.mxu0 0.0
        %3176 = vmatpush1.xpose.msra.mxu0 0.0
        %3177 = vmatprep.subr.mxu0 0.0
        %3178 = vmatpush1.xpose.msra.mxu0 0.0
        %3179 = vmatprep.subr.mxu0 0.0
        %3180 = vmatpush1.xpose.msra.mxu0 0.0
        %3181 = vmatprep.subr.mxu0 0.0
        %3182 = vmatpush1.xpose.msra.mxu0 0.0
        %3183 = vmatprep.subr.mxu0 0.0
        %3184 = vmatpush1.xpose.msra.mxu0 0.0
        %3185 = vmatprep.subr.mxu0 0.0
        %3186 = vmatpush1.xpose.msra.mxu0 0.0
        %3187 = vmatprep.subr.mxu0 0.0
        %3188 = vmatpush1.xpose.msra.mxu0 0.0
        %3189 = vmatprep.subr.mxu0 0.0
        %3190 = vmatpush1.xpose.msra.mxu0 0.0
        %3191 = vmatprep.subr.mxu0 0.0
        %3192 = vmatpush1.xpose.msra.mxu0 0.0
        %3193 = vmatprep.subr.mxu0 0.0
        %3194 = vmatpush1.xpose.msra.mxu0 0.0
        %3195 = vmatprep.subr.mxu0 0.0
        %3196 = vmatpush1.xpose.msra.mxu0 0.0
        %3197 = vmatprep.subr.mxu0 0.0
        %3198 = vmatpush1.xpose.msra.mxu0 0.0
        %3199 = vmatprep.subr.mxu0 0.0
        %3200 = vmatpush1.xpose.msra.mxu0 0.0
        %3201 = vmatprep.subr.mxu0 0.0
        %3202 = vmatpush1.xpose.msra.mxu0 0.0
        %3203 = vmatprep.subr.mxu0 0.0
        %3204 = vmatpush1.xpose.msra.mxu0 0.0
        %3205 = vmatprep.subr.mxu0 0.0
        %3206 = vmatpush1.xpose.msra.mxu0 0.0
        %3207 = vmatprep.subr.mxu0 0.0
        %3208 = vmatpush1.xpose.msra.mxu0 0.0
        %3209 = vmatprep.subr.mxu0 0.0
        %3210 = vmatpush1.xpose.msra.mxu0 0.0
        %3211 = vmatprep.subr.mxu0 0.0
        %3212 = vmatpush1.xpose.msra.mxu0 0.0
        %3213 = vmatprep.subr.mxu0 0.0
        %3214 = vmatpush1.xpose.msra.mxu0 0.0
        %3215 = vmatprep.subr.mxu0 0.0
        %3216 = vmatpush1.xpose.msra.mxu0 0.0
        %3217 = vmatprep.subr.mxu0 0.0
        %3218 = vmatpush1.xpose.msra.mxu0 0.0
        %3219 = vmatprep.subr.mxu0 0.0
        %3220 = vmatpush1.xpose.msra.mxu0 0.0
        %3221 = vmatprep.subr.mxu0 0.0
        %3222 = vmatpush1.xpose.msra.mxu0 0.0
        %3223 = vmatprep.subr.mxu0 0.0
        %3224 = vmatpush1.xpose.msra.mxu0 0.0
        %3225 = vmatprep.subr.mxu0 0.0
        %3226 = vmatpush1.xpose.msra.mxu0 0.0
        %3227 = vmatprep.subr.mxu0 0.0
        %3228 = vmatpush1.xpose.msra.mxu0 0.0
        %3229 = vmatprep.subr.mxu0 0.0
        %3230 = vmatpush1.xpose.msra.mxu0 0.0
        %3231 = vmatprep.subr.mxu0 0.0
        %3232 = vmatpush1.xpose.msra.mxu0 0.0
        %3233 = vmatprep.subr.mxu0 0.0
        %3234 = vmatpush1.xpose.msra.mxu0 0.0
        %3235 = vmatprep.mubr.f32.mxu0 0.0
        %3236 = vmatmul.mubr.f32.gmra.mrb[0].mxu0 %v3167
        %v3237 = vpop.f32.mrb[0].mxu0
        %v3238 = vadd.f32 0.0, %v3237
        %v3239 = vpop.f32.mrb[0].mxu0
        %3240 = vdwg.mxu0
        %v3241 = vmul.f32 %v3238, 0.35355338
        %v3242 = vsel %vm854, %v3241, -inf
        %3243 = vmax.xlane.f32.xlu0 %v3242
        %v3244 = vpop.xlane.xlu0 %3243
        %v3245 = vsub.f32 %v3241, %v3244
        %v3246 = vmul.f32 %v3245, 1.442695
        %v3247 = vpow.pop %v3246
        %v3248 = vsel %vm854, %v3247, 0.0
        %3249 = vadd.xlane.f32.xlu0 %v3248
        %v3250 = vpop.xlane.xlu0 %3249
        %v3251 = vrcp.pop %v3250
        %v3252 = vmul.f32 %v3247, %v3251
        %3253 = vrot.lane.b32.xlu0 %v2664, 56
        %v3254 = vpop.permute.xlu0 %3253
        %v3257 = vsel %vm854, %v3252, 0
        %3259 = vmatprep.subr.mxu0 0.0
        %3260 = vmatpush1.msra.mxu0 %v3254
        %3261 = vmatprep.subr.mxu0 0.0
        %3262 = vmatpush1.msra.mxu0 0.0
        %3263 = vmatprep.subr.mxu0 0.0
        %3264 = vmatpush1.msra.mxu0 0.0
        %3265 = vmatprep.subr.mxu0 0.0
        %3266 = vmatpush1.msra.mxu0 0.0
        %3267 = vmatprep.subr.mxu0 0.0
        %3268 = vmatpush1.msra.mxu0 0.0
        %3269 = vmatprep.subr.mxu0 0.0
        %3270 = vmatpush1.msra.mxu0 0.0
        %3271 = vmatprep.subr.mxu0 0.0
        %3272 = vmatpush1.msra.mxu0 0.0
        %3273 = vmatprep.subr.mxu0 0.0
        %3274 = vmatpush1.msra.mxu0 0.0
        %3275 = vmatprep.subr.mxu0 0.0
        %3276 = vmatpush1.msra.mxu0 0.0
        %3277 = vmatprep.subr.mxu0 0.0
        %3278 = vmatpush1.msra.mxu0 0.0
        %3279 = vmatprep.subr.mxu0 0.0
        %3280 = vmatpush1.msra.mxu0 0.0
        %3281 = vmatprep.subr.mxu0 0.0
        %3282 = vmatpush1.msra.mxu0 0.0
        %3283 = vmatprep.subr.mxu0 0.0
        %3284 = vmatpush1.msra.mxu0 0.0
        %3285 = vmatprep.subr.mxu0 0.0
        %3286 = vmatpush1.msra.mxu0 0.0
        %3287 = vmatprep.subr.mxu0 0.0
        %3288 = vmatpush1.msra.mxu0 0.0
        %3289 = vmatprep.subr.mxu0 0.0
        %3290 = vmatpush1.msra.mxu0 0.0
        %3291 = vmatprep.subr.mxu0 0.0
        %3292 = vmatpush1.msra.mxu0 0.0
        %3293 = vmatprep.subr.mxu0 0.0
        %3294 = vmatpush1.msra.mxu0 0.0
        %3295 = vmatprep.subr.mxu0 0.0
        %3296 = vmatpush1.msra.mxu0 0.0
        %3297 = vmatprep.subr.mxu0 0.0
        %3298 = vmatpush1.msra.mxu0 0.0
        %3299 = vmatprep.subr.mxu0 0.0
        %3300 = vmatpush1.msra.mxu0 0.0
        %3301 = vmatprep.subr.mxu0 0.0
        %3302 = vmatpush1.msra.mxu0 0.0
        %3303 = vmatprep.subr.mxu0 0.0
        %3304 = vmatpush1.msra.mxu0 0.0
        %3305 = vmatprep.subr.mxu0 0.0
        %3306 = vmatpush1.msra.mxu0 0.0
        %3307 = vmatprep.subr.mxu0 0.0
        %3308 = vmatpush1.msra.mxu0 0.0
        %3309 = vmatprep.subr.mxu0 0.0
        %3310 = vmatpush1.msra.mxu0 0.0
        %3311 = vmatprep.subr.mxu0 0.0
        %3312 = vmatpush1.msra.mxu0 0.0
        %3313 = vmatprep.subr.mxu0 0.0
        %3314 = vmatpush1.msra.mxu0 0.0
        %3315 = vmatprep.subr.mxu0 0.0
        %3316 = vmatpush1.msra.mxu0 0.0
        %3317 = vmatprep.subr.mxu0 0.0
        %3318 = vmatpush1.msra.mxu0 0.0
        %3319 = vmatprep.subr.mxu0 0.0
        %3320 = vmatpush1.msra.mxu0 0.0
        %3321 = vmatprep.subr.mxu0 0.0
        %3322 = vmatpush1.msra.mxu0 0.0
        %3323 = vmatprep.mubr.f32.mxu0 0.0
        %3324 = vmatmul.mubr.f32.gmra.mrb[0].mxu0 %v3257
        %v3325 = vpop.f32.mrb[0].mxu0
        %v3326 = vadd.f32 0.0, %v3325
        %v3327 = vpop.f32.mrb[0].mxu0
        %3328 = vdwg.mxu0
        %3329 = vrot.lane.b32.xlu0 %v2659, 112
        %v3330 = vpop.permute.xlu0 %3329
        %3331 = vrot.lane.b32.xlu0 %v2659, 80
        %v3332 = vpop.permute.xlu0 %3331
        %v3333 = vsel %vm854, %v3330, 0
        %v3335 = vsel %vm854, %v3332, 0
        %3337 = vmatprep.subr.mxu0 0.0
        %3338 = vmatpush1.xpose.msra.mxu0 %v3335
        %3339 = vmatprep.subr.mxu0 0.0
        %3340 = vmatpush1.xpose.msra.mxu0 0.0
        %3341 = vmatprep.subr.mxu0 0.0
        %3342 = vmatpush1.xpose.msra.mxu0 0.0
        %3343 = vmatprep.subr.mxu0 0.0
        %3344 = vmatpush1.xpose.msra.mxu0 0.0
        %3345 = vmatprep.subr.mxu0 0.0
        %3346 = vmatpush1.xpose.msra.mxu0 0.0
        %3347 = vmatprep.subr.mxu0 0.0
        %3348 = vmatpush1.xpose.msra.mxu0 0.0
        %3349 = vmatprep.subr.mxu0 0.0
        %3350 = vmatpush1.xpose.msra.mxu0 0.0
        %3351 = vmatprep.subr.mxu0 0.0
        %3352 = vmatpush1.xpose.msra.mxu0 0.0
        %3353 = vmatprep.subr.mxu0 0.0
        %3354 = vmatpush1.xpose.msra.mxu0 0.0
        %3355 = vmatprep.subr.mxu0 0.0
        %3356 = vmatpush1.xpose.msra.mxu0 0.0
        %3357 = vmatprep.subr.mxu0 0.0
        %3358 = vmatpush1.xpose.msra.mxu0 0.0
        %3359 = vmatprep.subr.mxu0 0.0
        %3360 = vmatpush1.xpose.msra.mxu0 0.0
        %3361 = vmatprep.subr.mxu0 0.0
        %3362 = vmatpush1.xpose.msra.mxu0 0.0
        %3363 = vmatprep.subr.mxu0 0.0
        %3364 = vmatpush1.xpose.msra.mxu0 0.0
        %3365 = vmatprep.subr.mxu0 0.0
        %3366 = vmatpush1.xpose.msra.mxu0 0.0
        %3367 = vmatprep.subr.mxu0 0.0
        %3368 = vmatpush1.xpose.msra.mxu0 0.0
        %3369 = vmatprep.subr.mxu0 0.0
        %3370 = vmatpush1.xpose.msra.mxu0 0.0
        %3371 = vmatprep.subr.mxu0 0.0
        %3372 = vmatpush1.xpose.msra.mxu0 0.0
        %3373 = vmatprep.subr.mxu0 0.0
        %3374 = vmatpush1.xpose.msra.mxu0 0.0
        %3375 = vmatprep.subr.mxu0 0.0
        %3376 = vmatpush1.xpose.msra.mxu0 0.0
        %3377 = vmatprep.subr.mxu0 0.0
        %3378 = vmatpush1.xpose.msra.mxu0 0.0
        %3379 = vmatprep.subr.mxu0 0.0
        %3380 = vmatpush1.xpose.msra.mxu0 0.0
        %3381 = vmatprep.subr.mxu0 0.0
        %3382 = vmatpush1.xpose.msra.mxu0 0.0
        %3383 = vmatprep.subr.mxu0 0.0
        %3384 = vmatpush1.xpose.msra.mxu0 0.0
        %3385 = vmatprep.subr.mxu0 0.0
        %3386 = vmatpush1.xpose.msra.mxu0 0.0
        %3387 = vmatprep.subr.mxu0 0.0
        %3388 = vmatpush1.xpose.msra.mxu0 0.0
        %3389 = vmatprep.subr.mxu0 0.0
        %3390 = vmatpush1.xpose.msra.mxu0 0.0
        %3391 = vmatprep.subr.mxu0 0.0
        %3392 = vmatpush1.xpose.msra.mxu0 0.0
        %3393 = vmatprep.subr.mxu0 0.0
        %3394 = vmatpush1.xpose.msra.mxu0 0.0
        %3395 = vmatprep.subr.mxu0 0.0
        %3396 = vmatpush1.xpose.msra.mxu0 0.0
        %3397 = vmatprep.subr.mxu0 0.0
        %3398 = vmatpush1.xpose.msra.mxu0 0.0
        %3399 = vmatprep.subr.mxu0 0.0
        %3400 = vmatpush1.xpose.msra.mxu0 0.0
        %3401 = vmatprep.mubr.f32.mxu0 0.0
        %3402 = vmatmul.mubr.f32.gmra.mrb[0].mxu0 %v3333
        %v3403 = vpop.f32.mrb[0].mxu0
        %v3404 = vadd.f32 0.0, %v3403
        %v3405 = vpop.f32.mrb[0].mxu0
        %3406 = vdwg.mxu0
        %v3407 = vmul.f32 %v3404, 0.35355338
        %v3408 = vsel %vm854, %v3407, -inf
        %3409 = vmax.xlane.f32.xlu0 %v3408
        %v3410 = vpop.xlane.xlu0 %3409
        %v3411 = vsub.f32 %v3407, %v3410
        %v3412 = vmul.f32 %v3411, 1.442695
        %v3413 = vpow.pop %v3412
        %v3414 = vsel %vm854, %v3413, 0.0
        %3415 = vadd.xlane.f32.xlu0 %v3414
        %v3416 = vpop.xlane.xlu0 %3415
        %v3417 = vrcp.pop %v3416
        %v3418 = vmul.f32 %v3413, %v3417
        %3419 = vrot.lane.b32.xlu0 %v2659, 48
        %v3420 = vpop.permute.xlu0 %3419
        %v3423 = vsel %vm854, %v3418, 0
        %3425 = vmatprep.subr.mxu0 0.0
        %3426 = vmatpush1.msra.mxu0 %v3420
        %3427 = vmatprep.subr.mxu0 0.0
        %3428 = vmatpush1.msra.mxu0 0.0
        %3429 = vmatprep.subr.mxu0 0.0
        %3430 = vmatpush1.msra.mxu0 0.0
        %3431 = vmatprep.subr.mxu0 0.0
        %3432 = vmatpush1.msra.mxu0 0.0
        %3433 = vmatprep.subr.mxu0 0.0
        %3434 = vmatpush1.msra.mxu0 0.0
        %3435 = vmatprep.subr.mxu0 0.0
        %3436 = vmatpush1.msra.mxu0 0.0
        %3437 = vmatprep.subr.mxu0 0.0
        %3438 = vmatpush1.msra.mxu0 0.0
        %3439 = vmatprep.subr.mxu0 0.0
        %3440 = vmatpush1.msra.mxu0 0.0
        %3441 = vmatprep.subr.mxu0 0.0
        %3442 = vmatpush1.msra.mxu0 0.0
        %3443 = vmatprep.subr.mxu0 0.0
        %3444 = vmatpush1.msra.mxu0 0.0
        %3445 = vmatprep.subr.mxu0 0.0
        %3446 = vmatpush1.msra.mxu0 0.0
        %3447 = vmatprep.subr.mxu0 0.0
        %3448 = vmatpush1.msra.mxu0 0.0
        %3449 = vmatprep.subr.mxu0 0.0
        %3450 = vmatpush1.msra.mxu0 0.0
        %3451 = vmatprep.subr.mxu0 0.0
        %3452 = vmatpush1.msra.mxu0 0.0
        %3453 = vmatprep.subr.mxu0 0.0
        %3454 = vmatpush1.msra.mxu0 0.0
        %3455 = vmatprep.subr.mxu0 0.0
        %3456 = vmatpush1.msra.mxu0 0.0
        %3457 = vmatprep.subr.mxu0 0.0
        %3458 = vmatpush1.msra.mxu0 0.0
        %3459 = vmatprep.subr.mxu0 0.0
        %3460 = vmatpush1.msra.mxu0 0.0
        %3461 = vmatprep.subr.mxu0 0.0
        %3462 = vmatpush1.msra.mxu0 0.0
        %3463 = vmatprep.subr.mxu0 0.0
        %3464 = vmatpush1.msra.mxu0 0.0
        %3465 = vmatprep.subr.mxu0 0.0
        %3466 = vmatpush1.msra.mxu0 0.0
        %3467 = vmatprep.subr.mxu0 0.0
        %3468 = vmatpush1.msra.mxu0 0.0
        %3469 = vmatprep.subr.mxu0 0.0
        %3470 = vmatpush1.msra.mxu0 0.0
        %3471 = vmatprep.subr.mxu0 0.0
        %3472 = vmatpush1.msra.mxu0 0.0
        %3473 = vmatprep.subr.mxu0 0.0
        %3474 = vmatpush1.msra.mxu0 0.0
        %3475 = vmatprep.subr.mxu0 0.0
        %3476 = vmatpush1.msra.mxu0 0.0
        %3477 = vmatprep.subr.mxu0 0.0
        %3478 = vmatpush1.msra.mxu0 0.0
        %3479 = vmatprep.subr.mxu0 0.0
        %3480 = vmatpush1.msra.mxu0 0.0
        %3481 = vmatprep.subr.mxu0 0.0
        %3482 = vmatpush1.msra.mxu0 0.0
        %3483 = vmatprep.subr.mxu0 0.0
        %3484 = vmatpush1.msra.mxu0 0.0
        %3485 = vmatprep.subr.mxu0 0.0
        %3486 = vmatpush1.msra.mxu0 0.0
        %3487 = vmatprep.subr.mxu0 0.0
        %3488 = vmatpush1.msra.mxu0 0.0
        %3489 = vmatprep.mubr.f32.mxu0 0.0
        %3490 = vmatmul.mubr.f32.gmra.mrb[0].mxu0 %v3423
        %v3491 = vpop.f32.mrb[0].mxu0
        %v3492 = vadd.f32 0.0, %v3491
        %v3493 = vpop.f32.mrb[0].mxu0
        %3494 = vdwg.mxu0
        %3495 = vrot.lane.b32.xlu0 %v2664, 112
        %v3496 = vpop.permute.xlu0 %3495
        %3497 = vrot.lane.b32.xlu0 %v2664, 80
        %v3498 = vpop.permute.xlu0 %3497
        %v3499 = vsel %vm854, %v3496, 0
        %v3501 = vsel %vm854, %v3498, 0
        %3503 = vmatprep.subr.mxu0 0.0
        %3504 = vmatpush1.xpose.msra.mxu0 %v3501
        %3505 = vmatprep.subr.mxu0 0.0
        %3506 = vmatpush1.xpose.msra.mxu0 0.0
        %3507 = vmatprep.subr.mxu0 0.0
        %3508 = vmatpush1.xpose.msra.mxu0 0.0
        %3509 = vmatprep.subr.mxu0 0.0
        %3510 = vmatpush1.xpose.msra.mxu0 0.0
        %3511 = vmatprep.subr.mxu0 0.0
        %3512 = vmatpush1.xpose.msra.mxu0 0.0
        %3513 = vmatprep.subr.mxu0 0.0
        %3514 = vmatpush1.xpose.msra.mxu0 0.0
        %3515 = vmatprep.subr.mxu0 0.0
        %3516 = vmatpush1.xpose.msra.mxu0 0.0
        %3517 = vmatprep.subr.mxu0 0.0
        %3518 = vmatpush1.xpose.msra.mxu0 0.0
        %3519 = vmatprep.subr.mxu0 0.0
        %3520 = vmatpush1.xpose.msra.mxu0 0.0
        %3521 = vmatprep.subr.mxu0 0.0
        %3522 = vmatpush1.xpose.msra.mxu0 0.0
        %3523 = vmatprep.subr.mxu0 0.0
        %3524 = vmatpush1.xpose.msra.mxu0 0.0
        %3525 = vmatprep.subr.mxu0 0.0
        %3526 = vmatpush1.xpose.msra.mxu0 0.0
        %3527 = vmatprep.subr.mxu0 0.0
        %3528 = vmatpush1.xpose.msra.mxu0 0.0
        %3529 = vmatprep.subr.mxu0 0.0
        %3530 = vmatpush1.xpose.msra.mxu0 0.0
        %3531 = vmatprep.subr.mxu0 0.0
        %3532 = vmatpush1.xpose.msra.mxu0 0.0
        %3533 = vmatprep.subr.mxu0 0.0
        %3534 = vmatpush1.xpose.msra.mxu0 0.0
        %3535 = vmatprep.subr.mxu0 0.0
        %3536 = vmatpush1.xpose.msra.mxu0 0.0
        %3537 = vmatprep.subr.mxu0 0.0
        %3538 = vmatpush1.xpose.msra.mxu0 0.0
        %3539 = vmatprep.subr.mxu0 0.0
        %3540 = vmatpush1.xpose.msra.mxu0 0.0
        %3541 = vmatprep.subr.mxu0 0.0
        %3542 = vmatpush1.xpose.msra.mxu0 0.0
        %3543 = vmatprep.subr.mxu0 0.0
        %3544 = vmatpush1.xpose.msra.mxu0 0.0
        %3545 = vmatprep.subr.mxu0 0.0
        %3546 = vmatpush1.xpose.msra.mxu0 0.0
        %3547 = vmatprep.subr.mxu0 0.0
        %3548 = vmatpush1.xpose.msra.mxu0 0.0
        %3549 = vmatprep.subr.mxu0 0.0
        %3550 = vmatpush1.xpose.msra.mxu0 0.0
        %3551 = vmatprep.subr.mxu0 0.0
        %3552 = vmatpush1.xpose.msra.mxu0 0.0
        %3553 = vmatprep.subr.mxu0 0.0
        %3554 = vmatpush1.xpose.msra.mxu0 0.0
        %3555 = vmatprep.subr.mxu0 0.0
        %3556 = vmatpush1.xpose.msra.mxu0 0.0
        %3557 = vmatprep.subr.mxu0 0.0
        %3558 = vmatpush1.xpose.msra.mxu0 0.0
        %3559 = vmatprep.subr.mxu0 0.0
        %3560 = vmatpush1.xpose.msra.mxu0 0.0
        %3561 = vmatprep.subr.mxu0 0.0
        %3562 = vmatpush1.xpose.msra.mxu0 0.0
        %3563 = vmatprep.subr.mxu0 0.0
        %3564 = vmatpush1.xpose.msra.mxu0 0.0
        %3565 = vmatprep.subr.mxu0 0.0
        %3566 = vmatpush1.xpose.msra.mxu0 0.0
        %3567 = vmatprep.mubr.f32.mxu0 0.0
        %3568 = vmatmul.mubr.f32.gmra.mrb[0].mxu0 %v3499
        %v3569 = vpop.f32.mrb[0].mxu0
        %v3570 = vadd.f32 0.0, %v3569
        %v3571 = vpop.f32.mrb[0].mxu0
        %3572 = vdwg.mxu0
        %v3573 = vmul.f32 %v3570, 0.35355338
        %v3574 = vsel %vm854, %v3573, -inf
        %3575 = vmax.xlane.f32.xlu0 %v3574
        %v3576 = vpop.xlane.xlu0 %3575
        %v3577 = vsub.f32 %v3573, %v3576
        %v3578 = vmul.f32 %v3577, 1.442695
        %v3579 = vpow.pop %v3578
        %v3580 = vsel %vm854, %v3579, 0.0
        %3581 = vadd.xlane.f32.xlu0 %v3580
        %v3582 = vpop.xlane.xlu0 %3581
        %v3583 = vrcp.pop %v3582
        %v3584 = vmul.f32 %v3579, %v3583
        %3585 = vrot.lane.b32.xlu0 %v2664, 48
        %v3586 = vpop.permute.xlu0 %3585
        %v3589 = vsel %vm854, %v3584, 0
        %3591 = vmatprep.subr.mxu0 0.0
        %3592 = vmatpush1.msra.mxu0 %v3586
        %3593 = vmatprep.subr.mxu0 0.0
        %3594 = vmatpush1.msra.mxu0 0.0
        %3595 = vmatprep.subr.mxu0 0.0
        %3596 = vmatpush1.msra.mxu0 0.0
        %3597 = vmatprep.subr.mxu0 0.0
        %3598 = vmatpush1.msra.mxu0 0.0
        %3599 = vmatprep.subr.mxu0 0.0
        %3600 = vmatpush1.msra.mxu0 0.0
        %3601 = vmatprep.subr.mxu0 0.0
        %3602 = vmatpush1.msra.mxu0 0.0
        %3603 = vmatprep.subr.mxu0 0.0
        %3604 = vmatpush1.msra.mxu0 0.0
        %3605 = vmatprep.subr.mxu0 0.0
        %3606 = vmatpush1.msra.mxu0 0.0
        %3607 = vmatprep.subr.mxu0 0.0
        %3608 = vmatpush1.msra.mxu0 0.0
        %3609 = vmatprep.subr.mxu0 0.0
        %3610 = vmatpush1.msra.mxu0 0.0
        %3611 = vmatprep.subr.mxu0 0.0
        %3612 = vmatpush1.msra.mxu0 0.0
        %3613 = vmatprep.subr.mxu0 0.0
        %3614 = vmatpush1.msra.mxu0 0.0
        %3615 = vmatprep.subr.mxu0 0.0
        %3616 = vmatpush1.msra.mxu0 0.0
        %3617 = vmatprep.subr.mxu0 0.0
        %3618 = vmatpush1.msra.mxu0 0.0
        %3619 = vmatprep.subr.mxu0 0.0
        %3620 = vmatpush1.msra.mxu0 0.0
        %3621 = vmatprep.subr.mxu0 0.0
        %3622 = vmatpush1.msra.mxu0 0.0
        %3623 = vmatprep.subr.mxu0 0.0
        %3624 = vmatpush1.msra.mxu0 0.0
        %3625 = vmatprep.subr.mxu0 0.0
        %3626 = vmatpush1.msra.mxu0 0.0
        %3627 = vmatprep.subr.mxu0 0.0
        %3628 = vmatpush1.msra.mxu0 0.0
        %3629 = vmatprep.subr.mxu0 0.0
        %3630 = vmatpush1.msra.mxu0 0.0
        %3631 = vmatprep.subr.mxu0 0.0
        %3632 = vmatpush1.msra.mxu0 0.0
        %3633 = vmatprep.subr.mxu0 0.0
        %3634 = vmatpush1.msra.mxu0 0.0
        %3635 = vmatprep.subr.mxu0 0.0
        %3636 = vmatpush1.msra.mxu0 0.0
        %3637 = vmatprep.subr.mxu0 0.0
        %3638 = vmatpush1.msra.mxu0 0.0
        %3639 = vmatprep.subr.mxu0 0.0
        %3640 = vmatpush1.msra.mxu0 0.0
        %3641 = vmatprep.subr.mxu0 0.0
        %3642 = vmatpush1.msra.mxu0 0.0
        %3643 = vmatprep.subr.mxu0 0.0
        %3644 = vmatpush1.msra.mxu0 0.0
        %3645 = vmatprep.subr.mxu0 0.0
        %3646 = vmatpush1.msra.mxu0 0.0
        %3647 = vmatprep.subr.mxu0 0.0
        %3648 = vmatpush1.msra.mxu0 0.0
        %3649 = vmatprep.subr.mxu0 0.0
        %3650 = vmatpush1.msra.mxu0 0.0
        %3651 = vmatprep.subr.mxu0 0.0
        %3652 = vmatpush1.msra.mxu0 0.0
        %3653 = vmatprep.subr.mxu0 0.0
        %3654 = vmatpush1.msra.mxu0 0.0
        %3655 = vmatprep.mubr.f32.mxu0 0.0
        %3656 = vmatmul.mubr.f32.gmra.mrb[0].mxu0 %v3589
        %v3657 = vpop.f32.mrb[0].mxu0
        %v3658 = vadd.f32 0.0, %v3657
        %v3659 = vpop.f32.mrb[0].mxu0
        %3660 = vdwg.mxu0
        %3661 = vrot.lane.b32.xlu0 %v2659, 104
        %v3662 = vpop.permute.xlu0 %3661
        %3663 = vrot.lane.b32.xlu0 %v2659, 72
        %v3664 = vpop.permute.xlu0 %3663
        %v3665 = vsel %vm854, %v3662, 0
        %v3667 = vsel %vm854, %v3664, 0
        %3669 = vmatprep.subr.mxu0 0.0
        %3670 = vmatpush1.xpose.msra.mxu0 %v3667
        %3671 = vmatprep.subr.mxu0 0.0
        %3672 = vmatpush1.xpose.msra.mxu0 0.0
        %3673 = vmatprep.subr.mxu0 0.0
        %3674 = vmatpush1.xpose.msra.mxu0 0.0
        %3675 = vmatprep.subr.mxu0 0.0
        %3676 = vmatpush1.xpose.msra.mxu0 0.0
        %3677 = vmatprep.subr.mxu0 0.0
        %3678 = vmatpush1.xpose.msra.mxu0 0.0
        %3679 = vmatprep.subr.mxu0 0.0
        %3680 = vmatpush1.xpose.msra.mxu0 0.0
        %3681 = vmatprep.subr.mxu0 0.0
        %3682 = vmatpush1.xpose.msra.mxu0 0.0
        %3683 = vmatprep.subr.mxu0 0.0
        %3684 = vmatpush1.xpose.msra.mxu0 0.0
        %3685 = vmatprep.subr.mxu0 0.0
        %3686 = vmatpush1.xpose.msra.mxu0 0.0
        %3687 = vmatprep.subr.mxu0 0.0
        %3688 = vmatpush1.xpose.msra.mxu0 0.0
        %3689 = vmatprep.subr.mxu0 0.0
        %3690 = vmatpush1.xpose.msra.mxu0 0.0
        %3691 = vmatprep.subr.mxu0 0.0
        %3692 = vmatpush1.xpose.msra.mxu0 0.0
        %3693 = vmatprep.subr.mxu0 0.0
        %3694 = vmatpush1.xpose.msra.mxu0 0.0
        %3695 = vmatprep.subr.mxu0 0.0
        %3696 = vmatpush1.xpose.msra.mxu0 0.0
        %3697 = vmatprep.subr.mxu0 0.0
        %3698 = vmatpush1.xpose.msra.mxu0 0.0
        %3699 = vmatprep.subr.mxu0 0.0
        %3700 = vmatpush1.xpose.msra.mxu0 0.0
        %3701 = vmatprep.subr.mxu0 0.0
        %3702 = vmatpush1.xpose.msra.mxu0 0.0
        %3703 = vmatprep.subr.mxu0 0.0
        %3704 = vmatpush1.xpose.msra.mxu0 0.0
        %3705 = vmatprep.subr.mxu0 0.0
        %3706 = vmatpush1.xpose.msra.mxu0 0.0
        %3707 = vmatprep.subr.mxu0 0.0
        %3708 = vmatpush1.xpose.msra.mxu0 0.0
        %3709 = vmatprep.subr.mxu0 0.0
        %3710 = vmatpush1.xpose.msra.mxu0 0.0
        %3711 = vmatprep.subr.mxu0 0.0
        %3712 = vmatpush1.xpose.msra.mxu0 0.0
        %3713 = vmatprep.subr.mxu0 0.0
        %3714 = vmatpush1.xpose.msra.mxu0 0.0
        %3715 = vmatprep.subr.mxu0 0.0
        %3716 = vmatpush1.xpose.msra.mxu0 0.0
        %3717 = vmatprep.subr.mxu0 0.0
        %3718 = vmatpush1.xpose.msra.mxu0 0.0
        %3719 = vmatprep.subr.mxu0 0.0
        %3720 = vmatpush1.xpose.msra.mxu0 0.0
        %3721 = vmatprep.subr.mxu0 0.0
        %3722 = vmatpush1.xpose.msra.mxu0 0.0
        %3723 = vmatprep.subr.mxu0 0.0
        %3724 = vmatpush1.xpose.msra.mxu0 0.0
        %3725 = vmatprep.subr.mxu0 0.0
        %3726 = vmatpush1.xpose.msra.mxu0 0.0
        %3727 = vmatprep.subr.mxu0 0.0
        %3728 = vmatpush1.xpose.msra.mxu0 0.0
        %3729 = vmatprep.subr.mxu0 0.0
        %3730 = vmatpush1.xpose.msra.mxu0 0.0
        %3731 = vmatprep.subr.mxu0 0.0
        %3732 = vmatpush1.xpose.msra.mxu0 0.0
        %3733 = vmatprep.mubr.f32.mxu0 0.0
        %3734 = vmatmul.mubr.f32.gmra.mrb[0].mxu0 %v3665
        %v3735 = vpop.f32.mrb[0].mxu0
        %v3736 = vadd.f32 0.0, %v3735
        %v3737 = vpop.f32.mrb[0].mxu0
        %3738 = vdwg.mxu0
        %v3739 = vmul.f32 %v3736, 0.35355338
        %v3740 = vsel %vm854, %v3739, -inf
        %3741 = vmax.xlane.f32.xlu0 %v3740
        %v3742 = vpop.xlane.xlu0 %3741
        %v3743 = vsub.f32 %v3739, %v3742
        %v3744 = vmul.f32 %v3743, 1.442695
        %v3745 = vpow.pop %v3744
        %v3746 = vsel %vm854, %v3745, 0.0
        %3747 = vadd.xlane.f32.xlu0 %v3746
        %v3748 = vpop.xlane.xlu0 %3747
        %v3749 = vrcp.pop %v3748
        %v3750 = vmul.f32 %v3745, %v3749
        %3751 = vrot.lane.b32.xlu0 %v2659, 40
        %v3752 = vpop.permute.xlu0 %3751
        %v3755 = vsel %vm854, %v3750, 0
        %3757 = vmatprep.subr.mxu0 0.0
        %3758 = vmatpush1.msra.mxu0 %v3752
        %3759 = vmatprep.subr.mxu0 0.0
        %3760 = vmatpush1.msra.mxu0 0.0
        %3761 = vmatprep.subr.mxu0 0.0
        %3762 = vmatpush1.msra.mxu0 0.0
        %3763 = vmatprep.subr.mxu0 0.0
        %3764 = vmatpush1.msra.mxu0 0.0
        %3765 = vmatprep.subr.mxu0 0.0
        %3766 = vmatpush1.msra.mxu0 0.0
        %3767 = vmatprep.subr.mxu0 0.0
        %3768 = vmatpush1.msra.mxu0 0.0
        %3769 = vmatprep.subr.mxu0 0.0
        %3770 = vmatpush1.msra.mxu0 0.0
        %3771 = vmatprep.subr.mxu0 0.0
        %3772 = vmatpush1.msra.mxu0 0.0
        %3773 = vmatprep.subr.mxu0 0.0
        %3774 = vmatpush1.msra.mxu0 0.0
        %3775 = vmatprep.subr.mxu0 0.0
        %3776 = vmatpush1.msra.mxu0 0.0
        %3777 = vmatprep.subr.mxu0 0.0
        %3778 = vmatpush1.msra.mxu0 0.0
        %3779 = vmatprep.subr.mxu0 0.0
        %3780 = vmatpush1.msra.mxu0 0.0
        %3781 = vmatprep.subr.mxu0 0.0
        %3782 = vmatpush1.msra.mxu0 0.0
        %3783 = vmatprep.subr.mxu0 0.0
        %3784 = vmatpush1.msra.mxu0 0.0
        %3785 = vmatprep.subr.mxu0 0.0
        %3786 = vmatpush1.msra.mxu0 0.0
        %3787 = vmatprep.subr.mxu0 0.0
        %3788 = vmatpush1.msra.mxu0 0.0
        %3789 = vmatprep.subr.mxu0 0.0
        %3790 = vmatpush1.msra.mxu0 0.0
        %3791 = vmatprep.subr.mxu0 0.0
        %3792 = vmatpush1.msra.mxu0 0.0
        %3793 = vmatprep.subr.mxu0 0.0
        %3794 = vmatpush1.msra.mxu0 0.0
        %3795 = vmatprep.subr.mxu0 0.0
        %3796 = vmatpush1.msra.mxu0 0.0
        %3797 = vmatprep.subr.mxu0 0.0
        %3798 = vmatpush1.msra.mxu0 0.0
        %3799 = vmatprep.subr.mxu0 0.0
        %3800 = vmatpush1.msra.mxu0 0.0
        %3801 = vmatprep.subr.mxu0 0.0
        %3802 = vmatpush1.msra.mxu0 0.0
        %3803 = vmatprep.subr.mxu0 0.0
        %3804 = vmatpush1.msra.mxu0 0.0
        %3805 = vmatprep.subr.mxu0 0.0
        %3806 = vmatpush1.msra.mxu0 0.0
        %3807 = vmatprep.subr.mxu0 0.0
        %3808 = vmatpush1.msra.mxu0 0.0
        %3809 = vmatprep.subr.mxu0 0.0
        %3810 = vmatpush1.msra.mxu0 0.0
        %3811 = vmatprep.subr.mxu0 0.0
        %3812 = vmatpush1.msra.mxu0 0.0
        %3813 = vmatprep.subr.mxu0 0.0
        %3814 = vmatpush1.msra.mxu0 0.0
        %3815 = vmatprep.subr.mxu0 0.0
        %3816 = vmatpush1.msra.mxu0 0.0
        %3817 = vmatprep.subr.mxu0 0.0
        %3818 = vmatpush1.msra.mxu0 0.0
        %3819 = vmatprep.subr.mxu0 0.0
        %3820 = vmatpush1.msra.mxu0 0.0
        %3821 = vmatprep.mubr.f32.mxu0 0.0
        %3822 = vmatmul.mubr.f32.gmra.mrb[0].mxu0 %v3755
        %v3823 = vpop.f32.mrb[0].mxu0
        %v3824 = vadd.f32 0.0, %v3823
        %v3825 = vpop.f32.mrb[0].mxu0
        %3826 = vdwg.mxu0
        %3827 = vrot.lane.b32.xlu0 %v2664, 104
        %v3828 = vpop.permute.xlu0 %3827
        %3829 = vrot.lane.b32.xlu0 %v2664, 72
        %v3830 = vpop.permute.xlu0 %3829
        %v3831 = vsel %vm854, %v3828, 0
        %v3833 = vsel %vm854, %v3830, 0
        %3835 = vmatprep.subr.mxu0 0.0
        %3836 = vmatpush1.xpose.msra.mxu0 %v3833
        %3837 = vmatprep.subr.mxu0 0.0
        %3838 = vmatpush1.xpose.msra.mxu0 0.0
        %3839 = vmatprep.subr.mxu0 0.0
        %3840 = vmatpush1.xpose.msra.mxu0 0.0
        %3841 = vmatprep.subr.mxu0 0.0
        %3842 = vmatpush1.xpose.msra.mxu0 0.0
        %3843 = vmatprep.subr.mxu0 0.0
        %3844 = vmatpush1.xpose.msra.mxu0 0.0
        %3845 = vmatprep.subr.mxu0 0.0
        %3846 = vmatpush1.xpose.msra.mxu0 0.0
        %3847 = vmatprep.subr.mxu0 0.0
        %3848 = vmatpush1.xpose.msra.mxu0 0.0
        %3849 = vmatprep.subr.mxu0 0.0
        %3850 = vmatpush1.xpose.msra.mxu0 0.0
        %3851 = vmatprep.subr.mxu0 0.0
        %3852 = vmatpush1.xpose.msra.mxu0 0.0
        %3853 = vmatprep.subr.mxu0 0.0
        %3854 = vmatpush1.xpose.msra.mxu0 0.0
        %3855 = vmatprep.subr.mxu0 0.0
        %3856 = vmatpush1.xpose.msra.mxu0 0.0
        %3857 = vmatprep.subr.mxu0 0.0
        %3858 = vmatpush1.xpose.msra.mxu0 0.0
        %3859 = vmatprep.subr.mxu0 0.0
        %3860 = vmatpush1.xpose.msra.mxu0 0.0
        %3861 = vmatprep.subr.mxu0 0.0
        %3862 = vmatpush1.xpose.msra.mxu0 0.0
        %3863 = vmatprep.subr.mxu0 0.0
        %3864 = vmatpush1.xpose.msra.mxu0 0.0
        %3865 = vmatprep.subr.mxu0 0.0
        %3866 = vmatpush1.xpose.msra.mxu0 0.0
        %3867 = vmatprep.subr.mxu0 0.0
        %3868 = vmatpush1.xpose.msra.mxu0 0.0
        %3869 = vmatprep.subr.mxu0 0.0
        %3870 = vmatpush1.xpose.msra.mxu0 0.0
        %3871 = vmatprep.subr.mxu0 0.0
        %3872 = vmatpush1.xpose.msra.mxu0 0.0
        %3873 = vmatprep.subr.mxu0 0.0
        %3874 = vmatpush1.xpose.msra.mxu0 0.0
        %3875 = vmatprep.subr.mxu0 0.0
        %3876 = vmatpush1.xpose.msra.mxu0 0.0
        %3877 = vmatprep.subr.mxu0 0.0
        %3878 = vmatpush1.xpose.msra.mxu0 0.0
        %3879 = vmatprep.subr.mxu0 0.0
        %3880 = vmatpush1.xpose.msra.mxu0 0.0
        %3881 = vmatprep.subr.mxu0 0.0
        %3882 = vmatpush1.xpose.msra.mxu0 0.0
        %3883 = vmatprep.subr.mxu0 0.0
        %3884 = vmatpush1.xpose.msra.mxu0 0.0
        %3885 = vmatprep.subr.mxu0 0.0
        %3886 = vmatpush1.xpose.msra.mxu0 0.0
        %3887 = vmatprep.subr.mxu0 0.0
        %3888 = vmatpush1.xpose.msra.mxu0 0.0
        %3889 = vmatprep.subr.mxu0 0.0
        %3890 = vmatpush1.xpose.msra.mxu0 0.0
        %3891 = vmatprep.subr.mxu0 0.0
        %3892 = vmatpush1.xpose.msra.mxu0 0.0
        %3893 = vmatprep.subr.mxu0 0.0
        %3894 = vmatpush1.xpose.msra.mxu0 0.0
        %3895 = vmatprep.subr.mxu0 0.0
        %3896 = vmatpush1.xpose.msra.mxu0 0.0
        %3897 = vmatprep.subr.mxu0 0.0
        %3898 = vmatpush1.xpose.msra.mxu0 0.0
        %3899 = vmatprep.mubr.f32.mxu0 0.0
        %3900 = vmatmul.mubr.f32.gmra.mrb[0].mxu0 %v3831
        %v3901 = vpop.f32.mrb[0].mxu0
        %v3902 = vadd.f32 0.0, %v3901
        %v3903 = vpop.f32.mrb[0].mxu0
        %3904 = vdwg.mxu0
        %v3905 = vmul.f32 %v3902, 0.35355338
        %v3906 = vsel %vm854, %v3905, -inf
        %3907 = vmax.xlane.f32.xlu0 %v3906
        %v3908 = vpop.xlane.xlu0 %3907
        %v3909 = vsub.f32 %v3905, %v3908
        %v3910 = vmul.f32 %v3909, 1.442695
        %v3911 = vpow.pop %v3910
        %v3912 = vsel %vm854, %v3911, 0.0
        %3913 = vadd.xlane.f32.xlu0 %v3912
        %v3914 = vpop.xlane.xlu0 %3913
        %v3915 = vrcp.pop %v3914
        %v3916 = vmul.f32 %v3911, %v3915
        %3917 = vrot.lane.b32.xlu0 %v2664, 40
        %v3918 = vpop.permute.xlu0 %3917
        %v3921 = vsel %vm854, %v3916, 0
        %3923 = vmatprep.subr.mxu0 0.0
        %3924 = vmatpush1.msra.mxu0 %v3918
        %3925 = vmatprep.subr.mxu0 0.0
        %3926 = vmatpush1.msra.mxu0 0.0
        %3927 = vmatprep.subr.mxu0 0.0
        %3928 = vmatpush1.msra.mxu0 0.0
        %3929 = vmatprep.subr.mxu0 0.0
        %3930 = vmatpush1.msra.mxu0 0.0
        %3931 = vmatprep.subr.mxu0 0.0
        %3932 = vmatpush1.msra.mxu0 0.0
        %3933 = vmatprep.subr.mxu0 0.0
        %3934 = vmatpush1.msra.mxu0 0.0
        %3935 = vmatprep.subr.mxu0 0.0
        %3936 = vmatpush1.msra.mxu0 0.0
        %3937 = vmatprep.subr.mxu0 0.0
        %3938 = vmatpush1.msra.mxu0 0.0
        %3939 = vmatprep.subr.mxu0 0.0
        %3940 = vmatpush1.msra.mxu0 0.0
        %3941 = vmatprep.subr.mxu0 0.0
        %3942 = vmatpush1.msra.mxu0 0.0
        %3943 = vmatprep.subr.mxu0 0.0
        %3944 = vmatpush1.msra.mxu0 0.0
        %3945 = vmatprep.subr.mxu0 0.0
        %3946 = vmatpush1.msra.mxu0 0.0
        %3947 = vmatprep.subr.mxu0 0.0
        %3948 = vmatpush1.msra.mxu0 0.0
        %3949 = vmatprep.subr.mxu0 0.0
        %3950 = vmatpush1.msra.mxu0 0.0
        %3951 = vmatprep.subr.mxu0 0.0
        %3952 = vmatpush1.msra.mxu0 0.0
        %3953 = vmatprep.subr.mxu0 0.0
        %3954 = vmatpush1.msra.mxu0 0.0
        %3955 = vmatprep.subr.mxu0 0.0
        %3956 = vmatpush1.msra.mxu0 0.0
        %3957 = vmatprep.subr.mxu0 0.0
        %3958 = vmatpush1.msra.mxu0 0.0
        %3959 = vmatprep.subr.mxu0 0.0
        %3960 = vmatpush1.msra.mxu0 0.0
        %3961 = vmatprep.subr.mxu0 0.0
        %3962 = vmatpush1.msra.mxu0 0.0
        %3963 = vmatprep.subr.mxu0 0.0
        %3964 = vmatpush1.msra.mxu0 0.0
        %3965 = vmatprep.subr.mxu0 0.0
        %3966 = vmatpush1.msra.mxu0 0.0
        %3967 = vmatprep.subr.mxu0 0.0
        %3968 = vmatpush1.msra.mxu0 0.0
        %3969 = vmatprep.subr.mxu0 0.0
        %3970 = vmatpush1.msra.mxu0 0.0
        %3971 = vmatprep.subr.mxu0 0.0
        %3972 = vmatpush1.msra.mxu0 0.0
        %3973 = vmatprep.subr.mxu0 0.0
        %3974 = vmatpush1.msra.mxu0 0.0
        %3975 = vmatprep.subr.mxu0 0.0
        %3976 = vmatpush1.msra.mxu0 0.0
        %3977 = vmatprep.subr.mxu0 0.0
        %3978 = vmatpush1.msra.mxu0 0.0
        %3979 = vmatprep.subr.mxu0 0.0
        %3980 = vmatpush1.msra.mxu0 0.0
        %3981 = vmatprep.subr.mxu0 0.0
        %3982 = vmatpush1.msra.mxu0 0.0
        %3983 = vmatprep.subr.mxu0 0.0
        %3984 = vmatpush1.msra.mxu0 0.0
        %3985 = vmatprep.subr.mxu0 0.0
        %3986 = vmatpush1.msra.mxu0 0.0
        %3987 = vmatprep.mubr.f32.mxu0 0.0
        %3988 = vmatmul.mubr.f32.gmra.mrb[0].mxu0 %v3921
        %v3989 = vpop.f32.mrb[0].mxu0
        %v3990 = vadd.f32 0.0, %v3989
        %v3991 = vpop.f32.mrb[0].mxu0
        %3992 = vdwg.mxu0
        %3995 = vrot.lane.b32.xlu0 %v3160, 8
        %v3996 = vpop.permute.xlu0 %3995
        %3997 = vrot.lane.b32.xlu0 %v3326, 8
        %v3998 = vpop.permute.xlu0 %3997
        %4003 = vrot.lane.b32.xlu0 %v3492, 16
        %v4004 = vpop.permute.xlu0 %4003
        %4005 = vrot.lane.b32.xlu0 %v3658, 16
        %v4006 = vpop.permute.xlu0 %4005
        %4011 = vrot.lane.b32.xlu0 %v3824, 24
        %v4012 = vpop.permute.xlu0 %4011
        %4013 = vrot.lane.b32.xlu0 %v3990, 24
        %v4014 = vpop.permute.xlu0 %4013
        %v4017 = vsel %vm854, %v2829, %v3996
        %v4018 = vsel %vm854, %v2994, %v3998
        %v4019 = vsel %vm2204, %v4017, %v4004
        %v4020 = vsel %vm2204, %v4018, %v4006
        %v4021 = vsel %vm2207, %v4019, %v4012
        %v4022 = vsel %vm2207, %v4020, %v4014
        %s4023 = scalar_lea.vmem %s5, 32
        %v4024 = vld [vmem:[%s4023] sm:$0xff]
        %v4025 = vld [vmem:[%s4023 + $0x8] sm:$0xff]
        %v4026 = vld [vmem:[%s4023 + $0x10] sm:$0xff]
        %v4027 = vld [vmem:[%s4023 + $0x18] sm:$0xff]
        %s4028 = scalar_lea.vmem [#allocation8], 1
        %v4029 = vld [vmem:[%s4028] sm:$0x1]
        %v4031 = vlaneseq
        %v4032 = vshrl.u32 %v4031, 7
        %v4033 = vsub.s32 0, %v4032
        %v4034 = vrot.slane %v4029, %v4033
        %v4037 = vsel %vm719, %v4021, 0
        %v4040 = vsel %vm719, %v4022, 0
        %4042 = vmatprep.subr.mxu0 0.0
        %4043 = vmatpush1.msra.mxu0 %v4024
        %4044 = vmatprep.subr.mxu0 0.0
        %4045 = vmatpush1.msra.mxu0 %v4025
        %4046 = vmatprep.subr.mxu0 0.0
        %4047 = vmatpush1.msra.mxu0 %v4026
        %4048 = vmatprep.subr.mxu0 0.0
        %4049 = vmatpush1.msra.mxu0 %v4027
        %4050 = vmatprep.subr.mxu0 0.0
        %4051 = vmatpush1.msra.mxu0 0.0
        %4052 = vmatprep.subr.mxu0 0.0
        %4053 = vmatpush1.msra.mxu0 0.0
        %4054 = vmatprep.subr.mxu0 0.0
        %4055 = vmatpush1.msra.mxu0 0.0
        %4056 = vmatprep.subr.mxu0 0.0
        %4057 = vmatpush1.msra.mxu0 0.0
        %4058 = vmatprep.subr.mxu0 0.0
        %4059 = vmatpush1.msra.mxu0 0.0
        %4060 = vmatprep.subr.mxu0 0.0
        %4061 = vmatpush1.msra.mxu0 0.0
        %4062 = vmatprep.subr.mxu0 0.0
        %4063 = vmatpush1.msra.mxu0 0.0
        %4064 = vmatprep.subr.mxu0 0.0
        %4065 = vmatpush1.msra.mxu0 0.0
        %4066 = vmatprep.subr.mxu0 0.0
        %4067 = vmatpush1.msra.mxu0 0.0
        %4068 = vmatprep.subr.mxu0 0.0
        %4069 = vmatpush1.msra.mxu0 0.0
        %4070 = vmatprep.subr.mxu0 0.0
        %4071 = vmatpush1.msra.mxu0 0.0
        %4072 = vmatprep.subr.mxu0 0.0
        %4073 = vmatpush1.msra.mxu0 0.0
        %4074 = vmatprep.subr.mxu0 0.0
        %4075 = vmatpush1.msra.mxu0 0.0
        %4076 = vmatprep.subr.mxu0 0.0
        %4077 = vmatpush1.msra.mxu0 0.0
        %4078 = vmatprep.subr.mxu0 0.0
        %4079 = vmatpush1.msra.mxu0 0.0
        %4080 = vmatprep.subr.mxu0 0.0
        %4081 = vmatpush1.msra.mxu0 0.0
        %4082 = vmatprep.subr.mxu0 0.0
        %4083 = vmatpush1.msra.mxu0 0.0
        %4084 = vmatprep.subr.mxu0 0.0
        %4085 = vmatpush1.msra.mxu0 0.0
        %4086 = vmatprep.subr.mxu0 0.0
        %4087 = vmatpush1.msra.mxu0 0.0
        %4088 = vmatprep.subr.mxu0 0.0
        %4089 = vmatpush1.msra.mxu0 0.0
        %4090 = vmatprep.subr.mxu0 0.0
        %4091 = vmatpush1.msra.mxu0 0.0
        %4092 = vmatprep.subr.mxu0 0.0
        %4093 = vmatpush1.msra.mxu0 0.0
        %4094 = vmatprep.subr.mxu0 0.0
        %4095 = vmatpush1.msra.mxu0 0.0
        %4096 = vmatprep.subr.mxu0 0.0
        %4097 = vmatpush1.msra.mxu0 0.0
        %4098 = vmatprep.subr.mxu0 0.0
        %4099 = vmatpush1.msra.mxu0 0.0
        %4100 = vmatprep.subr.mxu0 0.0
        %4101 = vmatpush1.msra.mxu0 0.0
        %4102 = vmatprep.subr.mxu0 0.0
        %4103 = vmatpush1.msra.mxu0 0.0
        %4104 = vmatprep.subr.mxu0 0.0
        %4105 = vmatpush1.msra.mxu0 0.0
        %4106 = vmatprep.mubr.f32.mxu0 0.0
        %4107 = vmatmul.mubr.f32.gmra.mrb[0].mxu0 %v4037
        %v4108 = vpop.f32.mrb[0].mxu0
        %v4109 = vadd.f32 %v4034, %v4108
        %v4110 = vpop.f32.mrb[0].mxu0
        %4111 = vmatprep.mubr.f32.mxu0 0.0
        %4112 = vmatmul.mubr.f32.gmra.mrb[0].mxu0 %v4040
        %v4113 = vpop.f32.mrb[0].mxu0
        %v4114 = vadd.f32 %v4034, %v4113
        %v4115 = vpop.f32.mrb[0].mxu0
        %4116 = vdwg.mxu0
        %v4117 = vsel %vm719, %v4109, 0.0
        %4118 = vadd.xlane.f32.xlu0 %v4117
        %v4119 = vpop.xlane.xlu0 %4118
        %v4120 = vsel %vm719, %v4114, 0.0
        %4121 = vadd.xlane.f32.xlu0 %v4120
        %v4122 = vpop.xlane.xlu0 %4121
        %v4123 = vmul.f32 %v4119, %v726
        %v4124 = vmul.f32 %v4122, %v726
        %v4125 = vsub.f32 %v4109, %v4123
        %v4126 = vsub.f32 %v4114, %v4124
        %v4127 = vmul.f32 %v4125, %v4125
        %v4128 = vmul.f32 %v4126, %v4126
        %v4129 = vsel %vm719, %v4127, 0.0
        %4130 = vadd.xlane.f32.xlu0 %v4129
        %v4131 = vpop.xlane.xlu0 %4130
        %v4132 = vsel %vm719, %v4128, 0.0
        %4133 = vadd.xlane.f32.xlu0 %v4132
        %v4134 = vpop.xlane.xlu0 %4133
        %v4135 = vmul.f32 %v4131, %v726
        %v4136 = vmul.f32 %v4134, %v726
        %v4137 = vadd.f32 %v4135, 1e-05
        %v4138 = vadd.f32 %v4136, 1e-05
        %v4139 = vrsqrt.pop %v4137
        %v4140 = vrsqrt.pop %v4138
        %v4141 = vmul.f32 %v4125, %v4139
        %v4142 = vmul.f32 %v4126, %v4140
        %v4143 = vlaneseq
        %v4144 = vshrl.u32 %v4143, 7
        %v4145 = vsub.s32 1, %v4144
        %v4146 = vrot.slane %v2532, %v4145
        %v4147 = vmul.f32 %v4141, %v4146
        %v4148 = vmul.f32 %v4142, %v4146
        %v4149 = vlaneseq
        %v4150 = vshrl.u32 %v4149, 7
        %v4151 = vsub.s32 1, %v4150
        %v4152 = vrot.slane %v2534, %v4151
        %v4153 = vadd.f32 %v4147, %v4152
        %v4154 = vadd.f32 %v4148, %v4152
        %s4155 = scalar_lea.vmem [#allocation10], 32
        %v4156 = vld [vmem:[%s4155] sm:$0xff]
        %v4157 = vld [vmem:[%s4155 + $0x8] sm:$0xff]
        %v4158 = vld [vmem:[%s4155 + $0x10] sm:$0xff]
        %v4159 = vld [vmem:[%s4155 + $0x18] sm:$0xff]
        %s4160 = scalar_lea.vmem [#allocation11], 1
        %v4161 = vld [vmem:[%s4160] sm:$0x1]
        %v4163 = vlaneseq
        %v4164 = vshrl.u32 %v4163, 7
        %v4165 = vsub.s32 0, %v4164
        %v4166 = vrot.slane %v4161, %v4165
        %v4169 = vsel %vm719, %v4153, 0
        %v4172 = vsel %vm719, %v4154, 0
        %4174 = vmatprep.subr.mxu0 0.0
        %4175 = vmatpush1.msra.mxu0 %v4156
        %4176 = vmatprep.subr.mxu0 0.0
        %4177 = vmatpush1.msra.mxu0 %v4157
        %4178 = vmatprep.subr.mxu0 0.0
        %4179 = vmatpush1.msra.mxu0 %v4158
        %4180 = vmatprep.subr.mxu0 0.0
        %4181 = vmatpush1.msra.mxu0 %v4159
        %4182 = vmatprep.subr.mxu0 0.0
        %4183 = vmatpush1.msra.mxu0 0.0
        %4184 = vmatprep.subr.mxu0 0.0
        %4185 = vmatpush1.msra.mxu0 0.0
        %4186 = vmatprep.subr.mxu0 0.0
        %4187 = vmatpush1.msra.mxu0 0.0
        %4188 = vmatprep.subr.mxu0 0.0
        %4189 = vmatpush1.msra.mxu0 0.0
        %4190 = vmatprep.subr.mxu0 0.0
        %4191 = vmatpush1.msra.mxu0 0.0
        %4192 = vmatprep.subr.mxu0 0.0
        %4193 = vmatpush1.msra.mxu0 0.0
        %4194 = vmatprep.subr.mxu0 0.0
        %4195 = vmatpush1.msra.mxu0 0.0
        %4196 = vmatprep.subr.mxu0 0.0
        %4197 = vmatpush1.msra.mxu0 0.0
        %4198 = vmatprep.subr.mxu0 0.0
        %4199 = vmatpush1.msra.mxu0 0.0
        %4200 = vmatprep.subr.mxu0 0.0
        %4201 = vmatpush1.msra.mxu0 0.0
        %4202 = vmatprep.subr.mxu0 0.0
        %4203 = vmatpush1.msra.mxu0 0.0
        %4204 = vmatprep.subr.mxu0 0.0
        %4205 = vmatpush1.msra.mxu0 0.0
        %4206 = vmatprep.subr.mxu0 0.0
        %4207 = vmatpush1.msra.mxu0 0.0
        %4208 = vmatprep.subr.mxu0 0.0
        %4209 = vmatpush1.msra.mxu0 0.0
        %4210 = vmatprep.subr.mxu0 0.0
        %4211 = vmatpush1.msra.mxu0 0.0
        %4212 = vmatprep.subr.mxu0 0.0
        %4213 = vmatpush1.msra.mxu0 0.0
        %4214 = vmatprep.subr.mxu0 0.0
        %4215 = vmatpush1.msra.mxu0 0.0
        %4216 = vmatprep.subr.mxu0 0.0
        %4217 = vmatpush1.msra.mxu0 0.0
        %4218 = vmatprep.subr.mxu0 0.0
        %4219 = vmatpush1.msra.mxu0 0.0
        %4220 = vmatprep.subr.mxu0 0.0
        %4221 = vmatpush1.msra.mxu0 0.0
        %4222 = vmatprep.subr.mxu0 0.0
        %4223 = vmatpush1.msra.mxu0 0.0
        %4224 = vmatprep.subr.mxu0 0.0
        %4225 = vmatpush1.msra.mxu0 0.0
        %4226 = vmatprep.subr.mxu0 0.0
        %4227 = vmatpush1.msra.mxu0 0.0
        %4228 = vmatprep.subr.mxu0 0.0
        %4229 = vmatpush1.msra.mxu0 0.0
        %4230 = vmatprep.subr.mxu0 0.0
        %4231 = vmatpush1.msra.mxu0 0.0
        %4232 = vmatprep.subr.mxu0 0.0
        %4233 = vmatpush1.msra.mxu0 0.0
        %4234 = vmatprep.subr.mxu0 0.0
        %4235 = vmatpush1.msra.mxu0 0.0
        %4236 = vmatprep.subr.mxu0 0.0
        %4237 = vmatpush1.msra.mxu0 0.0
        %4238 = vmatprep.mubr.f32.mxu0 0.0
        %4239 = vmatmul.mubr.f32.gmra.mrb[0].mxu0 %v4169
        %v4240 = vpop.f32.mrb[0].mxu0
        %v4241 = vadd.f32 %v4166, %v4240
        %v4242 = vpop.f32.mrb[0].mxu0
        %4243 = vmatprep.mubr.f32.mxu0 0.0
        %4244 = vmatmul.mubr.f32.gmra.mrb[0].mxu0 %v4172
        %v4245 = vpop.f32.mrb[0].mxu0
        %v4246 = vadd.f32 %v4166, %v4245
        %v4247 = vpop.f32.mrb[0].mxu0
        %4248 = vdwg.mxu0
        %v4249 = vmax.f32 %v4241, 0.0
        %v4250 = vmax.f32 %v4246, 0.0
        %s4251 = scalar_lea.vmem %s9, 64
        %v4252 = vld [vmem:[%s4251] sm:$0xff]
        %v4253 = vld [vmem:[%s4251 + $0x8] sm:$0xff]
        %v4254 = vld [vmem:[%s4251 + $0x10] sm:$0xff]
        %v4255 = vld [vmem:[%s4251 + $0x18] sm:$0xff]
        %v4256 = vld [vmem:[%s4251 + $0x20] sm:$0xff]
        %v4257 = vld [vmem:[%s4251 + $0x28] sm:$0xff]
        %v4258 = vld [vmem:[%s4251 + $0x30] sm:$0xff]
        %v4259 = vld [vmem:[%s4251 + $0x38] sm:$0xff]
        %s4260 = scalar_lea.vmem [#allocation13], 1
        %v4261 = vld [vmem:[%s4260] sm:$0x1]
        %v4263 = vlaneseq
        %v4264 = vshrl.u32 %v4263, 7
        %v4265 = vsub.s32 0, %v4264
        %v4266 = vrot.slane %v4261, %v4265
        %v4269 = vsel %vm2449, %v4249, 0
        %v4272 = vsel %vm2449, %v4250, 0
        %4274 = vmatprep.subr.mxu0 0.0
        %4275 = vmatpush1.msra.mxu0 %v4252
        %4276 = vmatprep.subr.mxu0 0.0
        %4277 = vmatpush1.msra.mxu0 %v4253
        %4278 = vmatprep.subr.mxu0 0.0
        %4279 = vmatpush1.msra.mxu0 %v4254
        %4280 = vmatprep.subr.mxu0 0.0
        %4281 = vmatpush1.msra.mxu0 %v4255
        %4282 = vmatprep.subr.mxu0 0.0
        %4283 = vmatpush1.msra.mxu0 %v4256
        %4284 = vmatprep.subr.mxu0 0.0
        %4285 = vmatpush1.msra.mxu0 %v4257
        %4286 = vmatprep.subr.mxu0 0.0
        %4287 = vmatpush1.msra.mxu0 %v4258
        %4288 = vmatprep.subr.mxu0 0.0
        %4289 = vmatpush1.msra.mxu0 %v4259
        %4290 = vmatprep.subr.mxu0 0.0
        %4291 = vmatpush1.msra.mxu0 0.0
        %4292 = vmatprep.subr.mxu0 0.0
        %4293 = vmatpush1.msra.mxu0 0.0
        %4294 = vmatprep.subr.mxu0 0.0
        %4295 = vmatpush1.msra.mxu0 0.0
        %4296 = vmatprep.subr.mxu0 0.0
        %4297 = vmatpush1.msra.mxu0 0.0
        %4298 = vmatprep.subr.mxu0 0.0
        %4299 = vmatpush1.msra.mxu0 0.0
        %4300 = vmatprep.subr.mxu0 0.0
        %4301 = vmatpush1.msra.mxu0 0.0
        %4302 = vmatprep.subr.mxu0 0.0
        %4303 = vmatpush1.msra.mxu0 0.0
        %4304 = vmatprep.subr.mxu0 0.0
        %4305 = vmatpush1.msra.mxu0 0.0
        %4306 = vmatprep.subr.mxu0 0.0
        %4307 = vmatpush1.msra.mxu0 0.0
        %4308 = vmatprep.subr.mxu0 0.0
        %4309 = vmatpush1.msra.mxu0 0.0
        %4310 = vmatprep.subr.mxu0 0.0
        %4311 = vmatpush1.msra.mxu0 0.0
        %4312 = vmatprep.subr.mxu0 0.0
        %4313 = vmatpush1.msra.mxu0 0.0
        %4314 = vmatprep.subr.mxu0 0.0
        %4315 = vmatpush1.msra.mxu0 0.0
        %4316 = vmatprep.subr.mxu0 0.0
        %4317 = vmatpush1.msra.mxu0 0.0
        %4318 = vmatprep.subr.mxu0 0.0
        %4319 = vmatpush1.msra.mxu0 0.0
        %4320 = vmatprep.subr.mxu0 0.0
        %4321 = vmatpush1.msra.mxu0 0.0
        %4322 = vmatprep.subr.mxu0 0.0
        %4323 = vmatpush1.msra.mxu0 0.0
        %4324 = vmatprep.subr.mxu0 0.0
        %4325 = vmatpush1.msra.mxu0 0.0
        %4326 = vmatprep.subr.mxu0 0.0
        %4327 = vmatpush1.msra.mxu0 0.0
        %4328 = vmatprep.subr.mxu0 0.0
        %4329 = vmatpush1.msra.mxu0 0.0
        %4330 = vmatprep.subr.mxu0 0.0
        %4331 = vmatpush1.msra.mxu0 0.0
        %4332 = vmatprep.subr.mxu0 0.0
        %4333 = vmatpush1.msra.mxu0 0.0
        %4334 = vmatprep.subr.mxu0 0.0
        %4335 = vmatpush1.msra.mxu0 0.0
        %4336 = vmatprep.subr.mxu0 0.0
        %4337 = vmatpush1.msra.mxu0 0.0
        %4338 = vmatprep.mubr.f32.mxu0 0.0
        %4339 = vmatmul.mubr.f32.gmra.mrb[0].mxu0 %v4269
        %v4340 = vpop.f32.mrb[0].mxu0
        %v4341 = vadd.f32 %v4266, %v4340
        %v4342 = vpop.f32.mrb[0].mxu0
        %4343 = vmatprep.mubr.f32.mxu0 0.0
        %4344 = vmatmul.mubr.f32.gmra.mrb[0].mxu0 %v4272
        %v4345 = vpop.f32.mrb[0].mxu0
        %v4346 = vadd.f32 %v4266, %v4345
        %v4347 = vpop.f32.mrb[0].mxu0
        %4348 = vdwg.mxu0
        %v4349 = vld [vmem:[%s11] sm:$0xf]
        %v4350 = vld [vmem:[%s12] sm:$0xf]
        %v4351 = vld [vmem:[%s13] sm:$0xff]
        %v4352 = vld [vmem:[%s13 + $0x8] sm:$0xff]
        %v4353 = vld [vmem:[%s13 + $0x10] sm:$0xff]
        %v4354 = vld [vmem:[%s13 + $0x18] sm:$0xff]
        %v4355 = vld [vmem:[%s13 + $0x20] sm:$0xff]
        %v4356 = vld [vmem:[%s13 + $0x28] sm:$0xff]
        %v4357 = vld [vmem:[%s13 + $0x30] sm:$0xff]
        %v4358 = vld [vmem:[%s13 + $0x38] sm:$0xff]
        %v4359 = vld [vmem:[%s13 + $0x40] sm:$0xff]
        %v4360 = vld [vmem:[%s13 + $0x48] sm:$0xff]
        %v4361 = vld [vmem:[%s13 + $0x50] sm:$0xff]
        %v4362 = vld [vmem:[%s13 + $0x58] sm:$0xff]
        %v4363 = vld [vmem:[%s13 + $0x60] sm:$0xff]
        %v4364 = vld [vmem:[%s13 + $0x68] sm:$0xff]
        %v4365 = vld [vmem:[%s13 + $0x70] sm:$0xff]
        %v4366 = vld [vmem:[%s13 + $0x78] sm:$0xff]
        %v4367 = vld [vmem:[%s13 + $0x80] sm:$0xff]
        %v4368 = vld [vmem:[%s13 + $0x88] sm:$0xff]
        %v4369 = vld [vmem:[%s13 + $0x90] sm:$0xff]
        %v4370 = vld [vmem:[%s13 + $0x98] sm:$0xff]
        %v4371 = vld [vmem:[%s13 + $0xa0] sm:$0xff]
        %v4372 = vld [vmem:[%s13 + $0xa8] sm:$0xff]
        %v4373 = vld [vmem:[%s13 + $0xb0] sm:$0xff]
        %v4374 = vld [vmem:[%s13 + $0xb8] sm:$0xff]
        %v4375 = vld [vmem:[%s14] sm:$0x1]
        %v4376 = vld [vmem:[%s14 + $0x1] sm:$0x1]
        %v4377 = vld [vmem:[%s14 + $0x2] sm:$0x1]
        %v4378 = vld [vmem:[%s14 + $0x3] sm:$0x1]
        %v4379 = vld [vmem:[%s14 + $0x4] sm:$0x1]
        %v4380 = vld [vmem:[%s14 + $0x5] sm:$0x1]
        %v4381 = vsel %vm719, %v4341, 0.0
        %4382 = vadd.xlane.f32.xlu0 %v4381
        %v4383 = vpop.xlane.xlu0 %4382
        %v4384 = vmul.f32 %v4383, %v726
        %v4385 = vsub.f32 %v4341, %v4384
        %v4386 = vmul.f32 %v4385, %v4385
        %v4387 = vsel %vm719, %v4386, 0.0
        %4388 = vadd.xlane.f32.xlu0 %v4387
        %v4389 = vpop.xlane.xlu0 %4388
        %v4390 = vmul.f32 %v4389, %v726
        %v4391 = vadd.f32 %v4390, 1e-05
        %v4392 = vrsqrt.pop %v4391
        %v4393 = vmul.f32 %v4385, %v4392
        %v4394 = vlaneseq
        %v4395 = vshrl.u32 %v4394, 7
        %v4396 = vsub.s32 0, %v4395
        %v4397 = vrot.slane %v4349, %v4396
        %v4398 = vmul.f32 %v4393, %v4397
        %v4399 = vlaneseq
        %v4400 = vshrl.u32 %v4399, 7
        %v4401 = vsub.s32 0, %v4400
        %v4402 = vrot.slane %v4350, %v4401
        %v4403 = vadd.f32 %v4398, %v4402
        %v4404 = vsel %vm719, %v4346, 0.0
        %4405 = vadd.xlane.f32.xlu0 %v4404
        %v4406 = vpop.xlane.xlu0 %4405
        %v4407 = vmul.f32 %v4406, %v726
        %v4408 = vsub.f32 %v4346, %v4407
        %v4409 = vmul.f32 %v4408, %v4408
        %v4410 = vsel %vm719, %v4409, 0.0
        %4411 = vadd.xlane.f32.xlu0 %v4410
        %v4412 = vpop.xlane.xlu0 %4411
        %v4413 = vmul.f32 %v4412, %v726
        %v4414 = vadd.f32 %v4413, 1e-05
        %v4415 = vrsqrt.pop %v4414
        %v4416 = vmul.f32 %v4408, %v4415
        %v4417 = vlaneseq
        %v4418 = vshrl.u32 %v4417, 7
        %v4419 = vsub.s32 1, %v4418
        %v4420 = vrot.slane %v4349, %v4419
        %v4421 = vmul.f32 %v4416, %v4420
        %v4422 = vlaneseq
        %v4423 = vshrl.u32 %v4422, 7
        %v4424 = vsub.s32 1, %v4423
        %v4425 = vrot.slane %v4350, %v4424
        %v4426 = vadd.f32 %v4421, %v4425
        %v4428 = vlaneseq
        %v4429 = vshrl.u32 %v4428, 7
        %v4430 = vsub.s32 0, %v4429
        %v4431 = vrot.slane %v4375, %v4430
        %v4434 = vsel %vm719, %v4403, 0
        %4436 = vmatprep.subr.mxu0 0.0
        %4437 = vmatpush1.msra.mxu0 %v4351
        %4438 = vmatprep.subr.mxu0 0.0
        %4439 = vmatpush1.msra.mxu0 %v4352
        %4440 = vmatprep.subr.mxu0 0.0
        %4441 = vmatpush1.msra.mxu0 %v4353
        %4442 = vmatprep.subr.mxu0 0.0
        %4443 = vmatpush1.msra.mxu0 %v4354
        %4444 = vmatprep.subr.mxu0 0.0
        %4445 = vmatpush1.msra.mxu0 0.0
        %4446 = vmatprep.subr.mxu0 0.0
        %4447 = vmatpush1.msra.mxu0 0.0
        %4448 = vmatprep.subr.mxu0 0.0
        %4449 = vmatpush1.msra.mxu0 0.0
        %4450 = vmatprep.subr.mxu0 0.0
        %4451 = vmatpush1.msra.mxu0 0.0
        %4452 = vmatprep.subr.mxu0 0.0
        %4453 = vmatpush1.msra.mxu0 0.0
        %4454 = vmatprep.subr.mxu0 0.0
        %4455 = vmatpush1.msra.mxu0 0.0
        %4456 = vmatprep.subr.mxu0 0.0
        %4457 = vmatpush1.msra.mxu0 0.0
        %4458 = vmatprep.subr.mxu0 0.0
        %4459 = vmatpush1.msra.mxu0 0.0
        %4460 = vmatprep.subr.mxu0 0.0
        %4461 = vmatpush1.msra.mxu0 0.0
        %4462 = vmatprep.subr.mxu0 0.0
        %4463 = vmatpush1.msra.mxu0 0.0
        %4464 = vmatprep.subr.mxu0 0.0
        %4465 = vmatpush1.msra.mxu0 0.0
        %4466 = vmatprep.subr.mxu0 0.0
        %4467 = vmatpush1.msra.mxu0 0.0
        %4468 = vmatprep.subr.mxu0 0.0
        %4469 = vmatpush1.msra.mxu0 0.0
        %4470 = vmatprep.subr.mxu0 0.0
        %4471 = vmatpush1.msra.mxu0 0.0
        %4472 = vmatprep.subr.mxu0 0.0
        %4473 = vmatpush1.msra.mxu0 0.0
        %4474 = vmatprep.subr.mxu0 0.0
        %4475 = vmatpush1.msra.mxu0 0.0
        %4476 = vmatprep.subr.mxu0 0.0
        %4477 = vmatpush1.msra.mxu0 0.0
        %4478 = vmatprep.subr.mxu0 0.0
        %4479 = vmatpush1.msra.mxu0 0.0
        %4480 = vmatprep.subr.mxu0 0.0
        %4481 = vmatpush1.msra.mxu0 0.0
        %4482 = vmatprep.subr.mxu0 0.0
        %4483 = vmatpush1.msra.mxu0 0.0
        %4484 = vmatprep.subr.mxu0 0.0
        %4485 = vmatpush1.msra.mxu0 0.0
        %4486 = vmatprep.subr.mxu0 0.0
        %4487 = vmatpush1.msra.mxu0 0.0
        %4488 = vmatprep.subr.mxu0 0.0
        %4489 = vmatpush1.msra.mxu0 0.0
        %4490 = vmatprep.subr.mxu0 0.0
        %4491 = vmatpush1.msra.mxu0 0.0
        %4492 = vmatprep.subr.mxu0 0.0
        %4493 = vmatpush1.msra.mxu0 0.0
        %4494 = vmatprep.subr.mxu0 0.0
        %4495 = vmatpush1.msra.mxu0 0.0
        %4496 = vmatprep.subr.mxu0 0.0
        %4497 = vmatpush1.msra.mxu0 0.0
        %4498 = vmatprep.subr.mxu0 0.0
        %4499 = vmatpush1.msra.mxu0 0.0
        %4500 = vmatprep.mubr.f32.mxu0 0.0
        %4501 = vmatmul.mubr.f32.gmra.mrb[0].mxu0 %v4434
        %v4502 = vpop.f32.mrb[0].mxu0
        %v4503 = vadd.f32 %v4431, %v4502
        %v4504 = vpop.f32.mrb[0].mxu0
        %4505 = vdwg.mxu0
        %v4506 = vsel %vm719, %v4503, 0.0
        %4507 = vadd.xlane.f32.xlu0 %v4506
        %v4508 = vpop.xlane.xlu0 %4507
        %v4509 = vmul.f32 %v4508, %v726
        %v4510 = vsub.f32 %v4503, %v4509
        %v4511 = vmul.f32 %v4510, %v4510
        %v4512 = vsel %vm719, %v4511, 0.0
        %4513 = vadd.xlane.f32.xlu0 %v4512
        %v4514 = vpop.xlane.xlu0 %4513
        %v4515 = vmul.f32 %v4514, %v726
        %v4516 = vadd.f32 %v4515, 1e-05
        %v4517 = vrsqrt.pop %v4516
        %v4518 = vmul.f32 %v4510, %v4517
        %v4519 = vlaneseq
        %v4520 = vshrl.u32 %v4519, 7
        %v4521 = vsub.s32 2, %v4520
        %v4522 = vrot.slane %v4349, %v4521
        %v4523 = vmul.f32 %v4518, %v4522
        %v4524 = vlaneseq
        %v4525 = vshrl.u32 %v4524, 7
        %v4526 = vsub.s32 2, %v4525
        %v4527 = vrot.slane %v4350, %v4526
        %v4528 = vadd.f32 %v4523, %v4527
        %v4530 = vlaneseq
        %v4531 = vshrl.u32 %v4530, 7
        %v4532 = vsub.s32 0, %v4531
        %v4533 = vrot.slane %v4376, %v4532
        %v4536 = vsel %vm719, %v4426, 0
        %4538 = vmatprep.subr.mxu0 0.0
        %4539 = vmatpush1.msra.mxu0 %v4355
        %4540 = vmatprep.subr.mxu0 0.0
        %4541 = vmatpush1.msra.mxu0 %v4356
        %4542 = vmatprep.subr.mxu0 0.0
        %4543 = vmatpush1.msra.mxu0 %v4357
        %4544 = vmatprep.subr.mxu0 0.0
        %4545 = vmatpush1.msra.mxu0 %v4358
        %4546 = vmatprep.subr.mxu0 0.0
        %4547 = vmatpush1.msra.mxu0 0.0
        %4548 = vmatprep.subr.mxu0 0.0
        %4549 = vmatpush1.msra.mxu0 0.0
        %4550 = vmatprep.subr.mxu0 0.0
        %4551 = vmatpush1.msra.mxu0 0.0
        %4552 = vmatprep.subr.mxu0 0.0
        %4553 = vmatpush1.msra.mxu0 0.0
        %4554 = vmatprep.subr.mxu0 0.0
        %4555 = vmatpush1.msra.mxu0 0.0
        %4556 = vmatprep.subr.mxu0 0.0
        %4557 = vmatpush1.msra.mxu0 0.0
        %4558 = vmatprep.subr.mxu0 0.0
        %4559 = vmatpush1.msra.mxu0 0.0
        %4560 = vmatprep.subr.mxu0 0.0
        %4561 = vmatpush1.msra.mxu0 0.0
        %4562 = vmatprep.subr.mxu0 0.0
        %4563 = vmatpush1.msra.mxu0 0.0
        %4564 = vmatprep.subr.mxu0 0.0
        %4565 = vmatpush1.msra.mxu0 0.0
        %4566 = vmatprep.subr.mxu0 0.0
        %4567 = vmatpush1.msra.mxu0 0.0
        %4568 = vmatprep.subr.mxu0 0.0
        %4569 = vmatpush1.msra.mxu0 0.0
        %4570 = vmatprep.subr.mxu0 0.0
        %4571 = vmatpush1.msra.mxu0 0.0
        %4572 = vmatprep.subr.mxu0 0.0
        %4573 = vmatpush1.msra.mxu0 0.0
        %4574 = vmatprep.subr.mxu0 0.0
        %4575 = vmatpush1.msra.mxu0 0.0
        %4576 = vmatprep.subr.mxu0 0.0
        %4577 = vmatpush1.msra.mxu0 0.0
        %4578 = vmatprep.subr.mxu0 0.0
        %4579 = vmatpush1.msra.mxu0 0.0
        %4580 = vmatprep.subr.mxu0 0.0
        %4581 = vmatpush1.msra.mxu0 0.0
        %4582 = vmatprep.subr.mxu0 0.0
        %4583 = vmatpush1.msra.mxu0 0.0
        %4584 = vmatprep.subr.mxu0 0.0
        %4585 = vmatpush1.msra.mxu0 0.0
        %4586 = vmatprep.subr.mxu0 0.0
        %4587 = vmatpush1.msra.mxu0 0.0
        %4588 = vmatprep.subr.mxu0 0.0
        %4589 = vmatpush1.msra.mxu0 0.0
        %4590 = vmatprep.subr.mxu0 0.0
        %4591 = vmatpush1.msra.mxu0 0.0
        %4592 = vmatprep.subr.mxu0 0.0
        %4593 = vmatpush1.msra.mxu0 0.0
        %4594 = vmatprep.subr.mxu0 0.0
        %4595 = vmatpush1.msra.mxu0 0.0
        %4596 = vmatprep.subr.mxu0 0.0
        %4597 = vmatpush1.msra.mxu0 0.0
        %4598 = vmatprep.subr.mxu0 0.0
        %4599 = vmatpush1.msra.mxu0 0.0
        %4600 = vmatprep.subr.mxu0 0.0
        %4601 = vmatpush1.msra.mxu0 0.0
        %4602 = vmatprep.mubr.f32.mxu0 0.0
        %4603 = vmatmul.mubr.f32.gmra.mrb[0].mxu0 %v4536
        %v4604 = vpop.f32.mrb[0].mxu0
        %v4605 = vadd.f32 %v4533, %v4604
        %v4606 = vpop.f32.mrb[0].mxu0
        %4607 = vdwg.mxu0
        %v4608 = vsel %vm719, %v4605, 0.0
        %4609 = vadd.xlane.f32.xlu0 %v4608
        %v4610 = vpop.xlane.xlu0 %4609
        %v4611 = vmul.f32 %v4610, %v726
        %v4612 = vsub.f32 %v4605, %v4611
        %v4613 = vmul.f32 %v4612, %v4612
        %v4614 = vsel %vm719, %v4613, 0.0
        %4615 = vadd.xlane.f32.xlu0 %v4614
        %v4616 = vpop.xlane.xlu0 %4615
        %v4617 = vmul.f32 %v4616, %v726
        %v4618 = vadd.f32 %v4617, 1e-05
        %v4619 = vrsqrt.pop %v4618
        %v4620 = vmul.f32 %v4612, %v4619
        %v4621 = vlaneseq
        %v4622 = vshrl.u32 %v4621, 7
        %v4623 = vsub.s32 3, %v4622
        %v4624 = vrot.slane %v4349, %v4623
        %v4625 = vmul.f32 %v4620, %v4624
        %v4626 = vlaneseq
        %v4627 = vshrl.u32 %v4626, 7
        %v4628 = vsub.s32 3, %v4627
        %v4629 = vrot.slane %v4350, %v4628
        %v4630 = vadd.f32 %v4625, %v4629
        %v4632 = vlaneseq
        %v4633 = vshrl.u32 %v4632, 7
        %v4634 = vsub.s32 0, %v4633
        %v4635 = vrot.slane %v4377, %v4634
        %4637 = vmatprep.subr.mxu0 0.0
        %4638 = vmatpush1.msra.mxu0 %v4359
        %4639 = vmatprep.subr.mxu0 0.0
        %4640 = vmatpush1.msra.mxu0 %v4360
        %4641 = vmatprep.subr.mxu0 0.0
        %4642 = vmatpush1.msra.mxu0 %v4361
        %4643 = vmatprep.subr.mxu0 0.0
        %4644 = vmatpush1.msra.mxu0 %v4362
        %4645 = vmatprep.subr.mxu0 0.0
        %4646 = vmatpush1.msra.mxu0 0.0
        %4647 = vmatprep.subr.mxu0 0.0
        %4648 = vmatpush1.msra.mxu0 0.0
        %4649 = vmatprep.subr.mxu0 0.0
        %4650 = vmatpush1.msra.mxu0 0.0
        %4651 = vmatprep.subr.mxu0 0.0
        %4652 = vmatpush1.msra.mxu0 0.0
        %4653 = vmatprep.subr.mxu0 0.0
        %4654 = vmatpush1.msra.mxu0 0.0
        %4655 = vmatprep.subr.mxu0 0.0
        %4656 = vmatpush1.msra.mxu0 0.0
        %4657 = vmatprep.subr.mxu0 0.0
        %4658 = vmatpush1.msra.mxu0 0.0
        %4659 = vmatprep.subr.mxu0 0.0
        %4660 = vmatpush1.msra.mxu0 0.0
        %4661 = vmatprep.subr.mxu0 0.0
        %4662 = vmatpush1.msra.mxu0 0.0
        %4663 = vmatprep.subr.mxu0 0.0
        %4664 = vmatpush1.msra.mxu0 0.0
        %4665 = vmatprep.subr.mxu0 0.0
        %4666 = vmatpush1.msra.mxu0 0.0
        %4667 = vmatprep.subr.mxu0 0.0
        %4668 = vmatpush1.msra.mxu0 0.0
        %4669 = vmatprep.subr.mxu0 0.0
        %4670 = vmatpush1.msra.mxu0 0.0
        %4671 = vmatprep.subr.mxu0 0.0
        %4672 = vmatpush1.msra.mxu0 0.0
        %4673 = vmatprep.subr.mxu0 0.0
        %4674 = vmatpush1.msra.mxu0 0.0
        %4675 = vmatprep.subr.mxu0 0.0
        %4676 = vmatpush1.msra.mxu0 0.0
        %4677 = vmatprep.subr.mxu0 0.0
        %4678 = vmatpush1.msra.mxu0 0.0
        %4679 = vmatprep.subr.mxu0 0.0
        %4680 = vmatpush1.msra.mxu0 0.0
        %4681 = vmatprep.subr.mxu0 0.0
        %4682 = vmatpush1.msra.mxu0 0.0
        %4683 = vmatprep.subr.mxu0 0.0
        %4684 = vmatpush1.msra.mxu0 0.0
        %4685 = vmatprep.subr.mxu0 0.0
        %4686 = vmatpush1.msra.mxu0 0.0
        %4687 = vmatprep.subr.mxu0 0.0
        %4688 = vmatpush1.msra.mxu0 0.0
        %4689 = vmatprep.subr.mxu0 0.0
        %4690 = vmatpush1.msra.mxu0 0.0
        %4691 = vmatprep.subr.mxu0 0.0
        %4692 = vmatpush1.msra.mxu0 0.0
        %4693 = vmatprep.subr.mxu0 0.0
        %4694 = vmatpush1.msra.mxu0 0.0
        %4695 = vmatprep.subr.mxu0 0.0
        %4696 = vmatpush1.msra.mxu0 0.0
        %4697 = vmatprep.subr.mxu0 0.0
        %4698 = vmatpush1.msra.mxu0 0.0
        %4699 = vmatprep.subr.mxu0 0.0
        %4700 = vmatpush1.msra.mxu0 0.0
        %4701 = vmatprep.mubr.f32.mxu0 0.0
        %4702 = vmatmul.mubr.f32.gmra.mrb[0].mxu0 %v4536
        %v4703 = vpop.f32.mrb[0].mxu0
        %v4704 = vadd.f32 %v4635, %v4703
        %v4705 = vpop.f32.mrb[0].mxu0
        %4706 = vdwg.mxu0
        %v4708 = vsel %vm719, %v4528, 0
        %v4711 = vsel %vm719, %v4630, 0
        %4713 = vmatprep.subr.mxu0 0.0
        %4714 = vmatpush1.xpose.msra.mxu0 %v4711
        %4715 = vmatprep.subr.mxu0 0.0
        %4716 = vmatpush1.xpose.msra.mxu0 0.0
        %4717 = vmatprep.subr.mxu0 0.0
        %4718 = vmatpush1.xpose.msra.mxu0 0.0
        %4719 = vmatprep.subr.mxu0 0.0
        %4720 = vmatpush1.xpose.msra.mxu0 0.0
        %4721 = vmatprep.subr.mxu0 0.0
        %4722 = vmatpush1.xpose.msra.mxu0 0.0
        %4723 = vmatprep.subr.mxu0 0.0
        %4724 = vmatpush1.xpose.msra.mxu0 0.0
        %4725 = vmatprep.subr.mxu0 0.0
        %4726 = vmatpush1.xpose.msra.mxu0 0.0
        %4727 = vmatprep.subr.mxu0 0.0
        %4728 = vmatpush1.xpose.msra.mxu0 0.0
        %4729 = vmatprep.subr.mxu0 0.0
        %4730 = vmatpush1.xpose.msra.mxu0 0.0
        %4731 = vmatprep.subr.mxu0 0.0
        %4732 = vmatpush1.xpose.msra.mxu0 0.0
        %4733 = vmatprep.subr.mxu0 0.0
        %4734 = vmatpush1.xpose.msra.mxu0 0.0
        %4735 = vmatprep.subr.mxu0 0.0
        %4736 = vmatpush1.xpose.msra.mxu0 0.0
        %4737 = vmatprep.subr.mxu0 0.0
        %4738 = vmatpush1.xpose.msra.mxu0 0.0
        %4739 = vmatprep.subr.mxu0 0.0
        %4740 = vmatpush1.xpose.msra.mxu0 0.0
        %4741 = vmatprep.subr.mxu0 0.0
        %4742 = vmatpush1.xpose.msra.mxu0 0.0
        %4743 = vmatprep.subr.mxu0 0.0
        %4744 = vmatpush1.xpose.msra.mxu0 0.0
        %4745 = vmatprep.subr.mxu0 0.0
        %4746 = vmatpush1.xpose.msra.mxu0 0.0
        %4747 = vmatprep.subr.mxu0 0.0
        %4748 = vmatpush1.xpose.msra.mxu0 0.0
        %4749 = vmatprep.subr.mxu0 0.0
        %4750 = vmatpush1.xpose.msra.mxu0 0.0
        %4751 = vmatprep.subr.mxu0 0.0
        %4752 = vmatpush1.xpose.msra.mxu0 0.0
        %4753 = vmatprep.subr.mxu0 0.0
        %4754 = vmatpush1.xpose.msra.mxu0 0.0
        %4755 = vmatprep.subr.mxu0 0.0
        %4756 = vmatpush1.xpose.msra.mxu0 0.0
        %4757 = vmatprep.subr.mxu0 0.0
        %4758 = vmatpush1.xpose.msra.mxu0 0.0
        %4759 = vmatprep.subr.mxu0 0.0
        %4760 = vmatpush1.xpose.msra.mxu0 0.0
        %4761 = vmatprep.subr.mxu0 0.0
        %4762 = vmatpush1.xpose.msra.mxu0 0.0
        %4763 = vmatprep.subr.mxu0 0.0
        %4764 = vmatpush1.xpose.msra.mxu0 0.0
        %4765 = vmatprep.subr.mxu0 0.0
        %4766 = vmatpush1.xpose.msra.mxu0 0.0
        %4767 = vmatprep.subr.mxu0 0.0
        %4768 = vmatpush1.xpose.msra.mxu0 0.0
        %4769 = vmatprep.subr.mxu0 0.0
        %4770 = vmatpush1.xpose.msra.mxu0 0.0
        %4771 = vmatprep.subr.mxu0 0.0
        %4772 = vmatpush1.xpose.msra.mxu0 0.0
        %4773 = vmatprep.subr.mxu0 0.0
        %4774 = vmatpush1.xpose.msra.mxu0 0.0
        %4775 = vmatprep.subr.mxu0 0.0
        %4776 = vmatpush1.xpose.msra.mxu0 0.0
        %4777 = vmatprep.mubr.f32.mxu0 0.0
        %4778 = vmatmul.mubr.f32.gmra.mrb[0].mxu0 %v4708
        %v4779 = vpop.f32.mrb[0].mxu0
        %v4780 = vadd.f32 0.0, %v4779
        %v4781 = vpop.f32.mrb[0].mxu0
        %4782 = vdwg.mxu0
        %v4783 = vmul.f32 %v4780, 0.17677669
        %v4784 = vsel %vm854, %v4783, -inf
        %4785 = vmax.xlane.f32.xlu0 %v4784
        %v4786 = vpop.xlane.xlu0 %4785
        %v4787 = vsub.f32 %v4783, %v4786
        %v4788 = vmul.f32 %v4787, 1.442695
        %v4789 = vpow.pop %v4788
        %v4790 = vsel %vm854, %v4789, 0.0
        %4791 = vadd.xlane.f32.xlu0 %v4790
        %v4792 = vpop.xlane.xlu0 %4791
        %v4793 = vrcp.pop %v4792
        %v4794 = vmul.f32 %v4789, %v4793
        %v4796 = vsel %vm854, %v4794, 0
        %4798 = vmatprep.subr.mxu0 0.0
        %4799 = vmatpush1.msra.mxu0 %v4704
        %4800 = vmatprep.subr.mxu0 0.0
        %4801 = vmatpush1.msra.mxu0 0.0
        %4802 = vmatprep.subr.mxu0 0.0
        %4803 = vmatpush1.msra.mxu0 0.0
        %4804 = vmatprep.subr.mxu0 0.0
        %4805 = vmatpush1.msra.mxu0 0.0
        %4806 = vmatprep.subr.mxu0 0.0
        %4807 = vmatpush1.msra.mxu0 0.0
        %4808 = vmatprep.subr.mxu0 0.0
        %4809 = vmatpush1.msra.mxu0 0.0
        %4810 = vmatprep.subr.mxu0 0.0
        %4811 = vmatpush1.msra.mxu0 0.0
        %4812 = vmatprep.subr.mxu0 0.0
        %4813 = vmatpush1.msra.mxu0 0.0
        %4814 = vmatprep.subr.mxu0 0.0
        %4815 = vmatpush1.msra.mxu0 0.0
        %4816 = vmatprep.subr.mxu0 0.0
        %4817 = vmatpush1.msra.mxu0 0.0
        %4818 = vmatprep.subr.mxu0 0.0
        %4819 = vmatpush1.msra.mxu0 0.0
        %4820 = vmatprep.subr.mxu0 0.0
        %4821 = vmatpush1.msra.mxu0 0.0
        %4822 = vmatprep.subr.mxu0 0.0
        %4823 = vmatpush1.msra.mxu0 0.0
        %4824 = vmatprep.subr.mxu0 0.0
        %4825 = vmatpush1.msra.mxu0 0.0
        %4826 = vmatprep.subr.mxu0 0.0
        %4827 = vmatpush1.msra.mxu0 0.0
        %4828 = vmatprep.subr.mxu0 0.0
        %4829 = vmatpush1.msra.mxu0 0.0
        %4830 = vmatprep.subr.mxu0 0.0
        %4831 = vmatpush1.msra.mxu0 0.0
        %4832 = vmatprep.subr.mxu0 0.0
        %4833 = vmatpush1.msra.mxu0 0.0
        %4834 = vmatprep.subr.mxu0 0.0
        %4835 = vmatpush1.msra.mxu0 0.0
        %4836 = vmatprep.subr.mxu0 0.0
        %4837 = vmatpush1.msra.mxu0 0.0
        %4838 = vmatprep.subr.mxu0 0.0
        %4839 = vmatpush1.msra.mxu0 0.0
        %4840 = vmatprep.subr.mxu0 0.0
        %4841 = vmatpush1.msra.mxu0 0.0
        %4842 = vmatprep.subr.mxu0 0.0
        %4843 = vmatpush1.msra.mxu0 0.0
        %4844 = vmatprep.subr.mxu0 0.0
        %4845 = vmatpush1.msra.mxu0 0.0
        %4846 = vmatprep.subr.mxu0 0.0
        %4847 = vmatpush1.msra.mxu0 0.0
        %4848 = vmatprep.subr.mxu0 0.0
        %4849 = vmatpush1.msra.mxu0 0.0
        %4850 = vmatprep.subr.mxu0 0.0
        %4851 = vmatpush1.msra.mxu0 0.0
        %4852 = vmatprep.subr.mxu0 0.0
        %4853 = vmatpush1.msra.mxu0 0.0
        %4854 = vmatprep.subr.mxu0 0.0
        %4855 = vmatpush1.msra.mxu0 0.0
        %4856 = vmatprep.subr.mxu0 0.0
        %4857 = vmatpush1.msra.mxu0 0.0
        %4858 = vmatprep.subr.mxu0 0.0
        %4859 = vmatpush1.msra.mxu0 0.0
        %4860 = vmatprep.subr.mxu0 0.0
        %4861 = vmatpush1.msra.mxu0 0.0
        %4862 = vmatprep.mubr.f32.mxu0 0.0
        %4863 = vmatmul.mubr.f32.gmra.mrb[0].mxu0 %v4796
        %v4864 = vpop.f32.mrb[0].mxu0
        %v4865 = vadd.f32 0.0, %v4864
        %v4866 = vpop.f32.mrb[0].mxu0
        %4867 = vdwg.mxu0
        %v4869 = vlaneseq
        %v4870 = vshrl.u32 %v4869, 7
        %v4871 = vsub.s32 0, %v4870
        %v4872 = vrot.slane %v4378, %v4871
        %4874 = vmatprep.subr.mxu0 0.0
        %4875 = vmatpush1.msra.mxu0 %v4363
        %4876 = vmatprep.subr.mxu0 0.0
        %4877 = vmatpush1.msra.mxu0 %v4364
        %4878 = vmatprep.subr.mxu0 0.0
        %4879 = vmatpush1.msra.mxu0 %v4365
        %4880 = vmatprep.subr.mxu0 0.0
        %4881 = vmatpush1.msra.mxu0 %v4366
        %4882 = vmatprep.subr.mxu0 0.0
        %4883 = vmatpush1.msra.mxu0 0.0
        %4884 = vmatprep.subr.mxu0 0.0
        %4885 = vmatpush1.msra.mxu0 0.0
        %4886 = vmatprep.subr.mxu0 0.0
        %4887 = vmatpush1.msra.mxu0 0.0
        %4888 = vmatprep.subr.mxu0 0.0
        %4889 = vmatpush1.msra.mxu0 0.0
        %4890 = vmatprep.subr.mxu0 0.0
        %4891 = vmatpush1.msra.mxu0 0.0
        %4892 = vmatprep.subr.mxu0 0.0
        %4893 = vmatpush1.msra.mxu0 0.0
        %4894 = vmatprep.subr.mxu0 0.0
        %4895 = vmatpush1.msra.mxu0 0.0
        %4896 = vmatprep.subr.mxu0 0.0
        %4897 = vmatpush1.msra.mxu0 0.0
        %4898 = vmatprep.subr.mxu0 0.0
        %4899 = vmatpush1.msra.mxu0 0.0
        %4900 = vmatprep.subr.mxu0 0.0
        %4901 = vmatpush1.msra.mxu0 0.0
        %4902 = vmatprep.subr.mxu0 0.0
        %4903 = vmatpush1.msra.mxu0 0.0
        %4904 = vmatprep.subr.mxu0 0.0
        %4905 = vmatpush1.msra.mxu0 0.0
        %4906 = vmatprep.subr.mxu0 0.0
        %4907 = vmatpush1.msra.mxu0 0.0
        %4908 = vmatprep.subr.mxu0 0.0
        %4909 = vmatpush1.msra.mxu0 0.0
        %4910 = vmatprep.subr.mxu0 0.0
        %4911 = vmatpush1.msra.mxu0 0.0
        %4912 = vmatprep.subr.mxu0 0.0
        %4913 = vmatpush1.msra.mxu0 0.0
        %4914 = vmatprep.subr.mxu0 0.0
        %4915 = vmatpush1.msra.mxu0 0.0
        %4916 = vmatprep.subr.mxu0 0.0
        %4917 = vmatpush1.msra.mxu0 0.0
        %4918 = vmatprep.subr.mxu0 0.0
        %4919 = vmatpush1.msra.mxu0 0.0
        %4920 = vmatprep.subr.mxu0 0.0
        %4921 = vmatpush1.msra.mxu0 0.0
        %4922 = vmatprep.subr.mxu0 0.0
        %4923 = vmatpush1.msra.mxu0 0.0
        %4924 = vmatprep.subr.mxu0 0.0
        %4925 = vmatpush1.msra.mxu0 0.0
        %4926 = vmatprep.subr.mxu0 0.0
        %4927 = vmatpush1.msra.mxu0 0.0
        %4928 = vmatprep.subr.mxu0 0.0
        %4929 = vmatpush1.msra.mxu0 0.0
        %4930 = vmatprep.subr.mxu0 0.0
        %4931 = vmatpush1.msra.mxu0 0.0
        %4932 = vmatprep.subr.mxu0 0.0
        %4933 = vmatpush1.msra.mxu0 0.0
        %4934 = vmatprep.subr.mxu0 0.0
        %4935 = vmatpush1.msra.mxu0 0.0
        %4936 = vmatprep.subr.mxu0 0.0
        %4937 = vmatpush1.msra.mxu0 0.0
        %4938 = vmatprep.mubr.f32.mxu0 0.0
        %4939 = vmatmul.mubr.f32.gmra.mrb[0].mxu0 %v4536
        %v4940 = vpop.f32.mrb[0].mxu0
        %v4941 = vadd.f32 %v4872, %v4940
        %v4942 = vpop.f32.mrb[0].mxu0
        %4943 = vdwg.mxu0
        %v4944 = vsel %vm719, %v4941, 0.0
        %4945 = vadd.xlane.f32.xlu0 %v4944
        %v4946 = vpop.xlane.xlu0 %4945
        %v4947 = vmul.f32 %v4946, %v726
        %v4948 = vsub.f32 %v4941, %v4947
        %v4949 = vmul.f32 %v4948, %v4948
        %v4950 = vsel %vm719, %v4949, 0.0
        %4951 = vadd.xlane.f32.xlu0 %v4950
        %v4952 = vpop.xlane.xlu0 %4951
        %v4953 = vmul.f32 %v4952, %v726
        %v4954 = vadd.f32 %v4953, 1e-05
        %v4955 = vrsqrt.pop %v4954
        %v4956 = vmul.f32 %v4948, %v4955
        %v4957 = vmul.f32 %v4956, %v4624
        %v4958 = vadd.f32 %v4957, %v4629
        %v4960 = vlaneseq
        %v4961 = vshrl.u32 %v4960, 7
        %v4962 = vsub.s32 0, %v4961
        %v4963 = vrot.slane %v4379, %v4962
        %4965 = vmatprep.subr.mxu0 0.0
        %4966 = vmatpush1.msra.mxu0 %v4367
        %4967 = vmatprep.subr.mxu0 0.0
        %4968 = vmatpush1.msra.mxu0 %v4368
        %4969 = vmatprep.subr.mxu0 0.0
        %4970 = vmatpush1.msra.mxu0 %v4369
        %4971 = vmatprep.subr.mxu0 0.0
        %4972 = vmatpush1.msra.mxu0 %v4370
        %4973 = vmatprep.subr.mxu0 0.0
        %4974 = vmatpush1.msra.mxu0 0.0
        %4975 = vmatprep.subr.mxu0 0.0
        %4976 = vmatpush1.msra.mxu0 0.0
        %4977 = vmatprep.subr.mxu0 0.0
        %4978 = vmatpush1.msra.mxu0 0.0
        %4979 = vmatprep.subr.mxu0 0.0
        %4980 = vmatpush1.msra.mxu0 0.0
        %4981 = vmatprep.subr.mxu0 0.0
        %4982 = vmatpush1.msra.mxu0 0.0
        %4983 = vmatprep.subr.mxu0 0.0
        %4984 = vmatpush1.msra.mxu0 0.0
        %4985 = vmatprep.subr.mxu0 0.0
        %4986 = vmatpush1.msra.mxu0 0.0
        %4987 = vmatprep.subr.mxu0 0.0
        %4988 = vmatpush1.msra.mxu0 0.0
        %4989 = vmatprep.subr.mxu0 0.0
        %4990 = vmatpush1.msra.mxu0 0.0
        %4991 = vmatprep.subr.mxu0 0.0
        %4992 = vmatpush1.msra.mxu0 0.0
        %4993 = vmatprep.subr.mxu0 0.0
        %4994 = vmatpush1.msra.mxu0 0.0
        %4995 = vmatprep.subr.mxu0 0.0
        %4996 = vmatpush1.msra.mxu0 0.0
        %4997 = vmatprep.subr.mxu0 0.0
        %4998 = vmatpush1.msra.mxu0 0.0
        %4999 = vmatprep.subr.mxu0 0.0
        %5000 = vmatpush1.msra.mxu0 0.0
        %5001 = vmatprep.subr.mxu0 0.0
        %5002 = vmatpush1.msra.mxu0 0.0
        %5003 = vmatprep.subr.mxu0 0.0
        %5004 = vmatpush1.msra.mxu0 0.0
        %5005 = vmatprep.subr.mxu0 0.0
        %5006 = vmatpush1.msra.mxu0 0.0
        %5007 = vmatprep.subr.mxu0 0.0
        %5008 = vmatpush1.msra.mxu0 0.0
        %5009 = vmatprep.subr.mxu0 0.0
        %5010 = vmatpush1.msra.mxu0 0.0
        %5011 = vmatprep.subr.mxu0 0.0
        %5012 = vmatpush1.msra.mxu0 0.0
        %5013 = vmatprep.subr.mxu0 0.0
        %5014 = vmatpush1.msra.mxu0 0.0
        %5015 = vmatprep.subr.mxu0 0.0
        %5016 = vmatpush1.msra.mxu0 0.0
        %5017 = vmatprep.subr.mxu0 0.0
        %5018 = vmatpush1.msra.mxu0 0.0
        %5019 = vmatprep.subr.mxu0 0.0
        %5020 = vmatpush1.msra.mxu0 0.0
        %5021 = vmatprep.subr.mxu0 0.0
        %5022 = vmatpush1.msra.mxu0 0.0
        %5023 = vmatprep.subr.mxu0 0.0
        %5024 = vmatpush1.msra.mxu0 0.0
        %5025 = vmatprep.subr.mxu0 0.0
        %5026 = vmatpush1.msra.mxu0 0.0
        %5027 = vmatprep.subr.mxu0 0.0
        %5028 = vmatpush1.msra.mxu0 0.0
        %5029 = vmatprep.mubr.f32.mxu0 0.0
        %5030 = vmatmul.mubr.f32.gmra.mrb[0].mxu0 %v4434
        %v5031 = vpop.f32.mrb[0].mxu0
        %v5032 = vadd.f32 %v4963, %v5031
        %v5033 = vpop.f32.mrb[0].mxu0
        %5034 = vdwg.mxu0
        %v5035 = vsel %vm719, %v5032, 0.0
        %5036 = vadd.xlane.f32.xlu0 %v5035
        %v5037 = vpop.xlane.xlu0 %5036
        %v5038 = vmul.f32 %v5037, %v726
        %v5039 = vsub.f32 %v5032, %v5038
        %v5040 = vmul.f32 %v5039, %v5039
        %v5041 = vsel %vm719, %v5040, 0.0
        %5042 = vadd.xlane.f32.xlu0 %v5041
        %v5043 = vpop.xlane.xlu0 %5042
        %v5044 = vmul.f32 %v5043, %v726
        %v5045 = vadd.f32 %v5044, 1e-05
        %v5046 = vrsqrt.pop %v5045
        %v5047 = vmul.f32 %v5039, %v5046
        %v5048 = vmul.f32 %v5047, %v4522
        %v5049 = vadd.f32 %v5048, %v4527
        %v5051 = vlaneseq
        %v5052 = vshrl.u32 %v5051, 7
        %v5053 = vsub.s32 0, %v5052
        %v5054 = vrot.slane %v4380, %v5053
        %5056 = vmatprep.subr.mxu0 0.0
        %5057 = vmatpush1.msra.mxu0 %v4371
        %5058 = vmatprep.subr.mxu0 0.0
        %5059 = vmatpush1.msra.mxu0 %v4372
        %5060 = vmatprep.subr.mxu0 0.0
        %5061 = vmatpush1.msra.mxu0 %v4373
        %5062 = vmatprep.subr.mxu0 0.0
        %5063 = vmatpush1.msra.mxu0 %v4374
        %5064 = vmatprep.subr.mxu0 0.0
        %5065 = vmatpush1.msra.mxu0 0.0
        %5066 = vmatprep.subr.mxu0 0.0
        %5067 = vmatpush1.msra.mxu0 0.0
        %5068 = vmatprep.subr.mxu0 0.0
        %5069 = vmatpush1.msra.mxu0 0.0
        %5070 = vmatprep.subr.mxu0 0.0
        %5071 = vmatpush1.msra.mxu0 0.0
        %5072 = vmatprep.subr.mxu0 0.0
        %5073 = vmatpush1.msra.mxu0 0.0
        %5074 = vmatprep.subr.mxu0 0.0
        %5075 = vmatpush1.msra.mxu0 0.0
        %5076 = vmatprep.subr.mxu0 0.0
        %5077 = vmatpush1.msra.mxu0 0.0
        %5078 = vmatprep.subr.mxu0 0.0
        %5079 = vmatpush1.msra.mxu0 0.0
        %5080 = vmatprep.subr.mxu0 0.0
        %5081 = vmatpush1.msra.mxu0 0.0
        %5082 = vmatprep.subr.mxu0 0.0
        %5083 = vmatpush1.msra.mxu0 0.0
        %5084 = vmatprep.subr.mxu0 0.0
        %5085 = vmatpush1.msra.mxu0 0.0
        %5086 = vmatprep.subr.mxu0 0.0
        %5087 = vmatpush1.msra.mxu0 0.0
        %5088 = vmatprep.subr.mxu0 0.0
        %5089 = vmatpush1.msra.mxu0 0.0
        %5090 = vmatprep.subr.mxu0 0.0
        %5091 = vmatpush1.msra.mxu0 0.0
        %5092 = vmatprep.subr.mxu0 0.0
        %5093 = vmatpush1.msra.mxu0 0.0
        %5094 = vmatprep.subr.mxu0 0.0
        %5095 = vmatpush1.msra.mxu0 0.0
        %5096 = vmatprep.subr.mxu0 0.0
        %5097 = vmatpush1.msra.mxu0 0.0
        %5098 = vmatprep.subr.mxu0 0.0
        %5099 = vmatpush1.msra.mxu0 0.0
        %5100 = vmatprep.subr.mxu0 0.0
        %5101 = vmatpush1.msra.mxu0 0.0
        %5102 = vmatprep.subr.mxu0 0.0
        %5103 = vmatpush1.msra.mxu0 0.0
        %5104 = vmatprep.subr.mxu0 0.0
        %5105 = vmatpush1.msra.mxu0 0.0
        %5106 = vmatprep.subr.mxu0 0.0
        %5107 = vmatpush1.msra.mxu0 0.0
        %5108 = vmatprep.subr.mxu0 0.0
        %5109 = vmatpush1.msra.mxu0 0.0
        %5110 = vmatprep.subr.mxu0 0.0
        %5111 = vmatpush1.msra.mxu0 0.0
        %5112 = vmatprep.subr.mxu0 0.0
        %5113 = vmatpush1.msra.mxu0 0.0
        %5114 = vmatprep.subr.mxu0 0.0
        %5115 = vmatpush1.msra.mxu0 0.0
        %5116 = vmatprep.subr.mxu0 0.0
        %5117 = vmatpush1.msra.mxu0 0.0
        %5118 = vmatprep.subr.mxu0 0.0
        %5119 = vmatpush1.msra.mxu0 0.0
        %5120 = vmatprep.mubr.f32.mxu0 0.0
        %5121 = vmatmul.mubr.f32.gmra.mrb[0].mxu0 %v4434
        %v5122 = vpop.f32.mrb[0].mxu0
        %v5123 = vadd.f32 %v5054, %v5122
        %v5124 = vpop.f32.mrb[0].mxu0
        %5125 = vdwg.mxu0
        %v5127 = vsel %vm719, %v4958, 0
        %v5130 = vsel %vm719, %v5049, 0
        %5132 = vmatprep.subr.mxu0 0.0
        %5133 = vmatpush1.xpose.msra.mxu0 %v5130
        %5134 = vmatprep.subr.mxu0 0.0
        %5135 = vmatpush1.xpose.msra.mxu0 0.0
        %5136 = vmatprep.subr.mxu0 0.0
        %5137 = vmatpush1.xpose.msra.mxu0 0.0
        %5138 = vmatprep.subr.mxu0 0.0
        %5139 = vmatpush1.xpose.msra.mxu0 0.0
        %5140 = vmatprep.subr.mxu0 0.0
        %5141 = vmatpush1.xpose.msra.mxu0 0.0
        %5142 = vmatprep.subr.mxu0 0.0
        %5143 = vmatpush1.xpose.msra.mxu0 0.0
        %5144 = vmatprep.subr.mxu0 0.0
        %5145 = vmatpush1.xpose.msra.mxu0 0.0
        %5146 = vmatprep.subr.mxu0 0.0
        %5147 = vmatpush1.xpose.msra.mxu0 0.0
        %5148 = vmatprep.subr.mxu0 0.0
        %5149 = vmatpush1.xpose.msra.mxu0 0.0
        %5150 = vmatprep.subr.mxu0 0.0
        %5151 = vmatpush1.xpose.msra.mxu0 0.0
        %5152 = vmatprep.subr.mxu0 0.0
        %5153 = vmatpush1.xpose.msra.mxu0 0.0
        %5154 = vmatprep.subr.mxu0 0.0
        %5155 = vmatpush1.xpose.msra.mxu0 0.0
        %5156 = vmatprep.subr.mxu0 0.0
        %5157 = vmatpush1.xpose.msra.mxu0 0.0
        %5158 = vmatprep.subr.mxu0 0.0
        %5159 = vmatpush1.xpose.msra.mxu0 0.0
        %5160 = vmatprep.subr.mxu0 0.0
        %5161 = vmatpush1.xpose.msra.mxu0 0.0
        %5162 = vmatprep.subr.mxu0 0.0
        %5163 = vmatpush1.xpose.msra.mxu0 0.0
        %5164 = vmatprep.subr.mxu0 0.0
        %5165 = vmatpush1.xpose.msra.mxu0 0.0
        %5166 = vmatprep.subr.mxu0 0.0
        %5167 = vmatpush1.xpose.msra.mxu0 0.0
        %5168 = vmatprep.subr.mxu0 0.0
        %5169 = vmatpush1.xpose.msra.mxu0 0.0
        %5170 = vmatprep.subr.mxu0 0.0
        %5171 = vmatpush1.xpose.msra.mxu0 0.0
        %5172 = vmatprep.subr.mxu0 0.0
        %5173 = vmatpush1.xpose.msra.mxu0 0.0
        %5174 = vmatprep.subr.mxu0 0.0
        %5175 = vmatpush1.xpose.msra.mxu0 0.0
        %5176 = vmatprep.subr.mxu0 0.0
        %5177 = vmatpush1.xpose.msra.mxu0 0.0
        %5178 = vmatprep.subr.mxu0 0.0
        %5179 = vmatpush1.xpose.msra.mxu0 0.0
        %5180 = vmatprep.subr.mxu0 0.0
        %5181 = vmatpush1.xpose.msra.mxu0 0.0
        %5182 = vmatprep.subr.mxu0 0.0
        %5183 = vmatpush1.xpose.msra.mxu0 0.0
        %5184 = vmatprep.subr.mxu0 0.0
        %5185 = vmatpush1.xpose.msra.mxu0 0.0
        %5186 = vmatprep.subr.mxu0 0.0
        %5187 = vmatpush1.xpose.msra.mxu0 0.0
        %5188 = vmatprep.subr.mxu0 0.0
        %5189 = vmatpush1.xpose.msra.mxu0 0.0
        %5190 = vmatprep.subr.mxu0 0.0
        %5191 = vmatpush1.xpose.msra.mxu0 0.0
        %5192 = vmatprep.subr.mxu0 0.0
        %5193 = vmatpush1.xpose.msra.mxu0 0.0
        %5194 = vmatprep.subr.mxu0 0.0
        %5195 = vmatpush1.xpose.msra.mxu0 0.0
        %5196 = vmatprep.mubr.f32.mxu0 0.0
        %5197 = vmatmul.mubr.f32.gmra.mrb[0].mxu0 %v5127
        %v5198 = vpop.f32.mrb[0].mxu0
        %v5199 = vadd.f32 0.0, %v5198
        %v5200 = vpop.f32.mrb[0].mxu0
        %5201 = vdwg.mxu0
        %v5202 = vmul.f32 %v5199, 0.17677669
        %v5203 = vsel %vm854, %v5202, -inf
        %5204 = vmax.xlane.f32.xlu0 %v5203
        %v5205 = vpop.xlane.xlu0 %5204
        %v5206 = vsub.f32 %v5202, %v5205
        %v5207 = vmul.f32 %v5206, 1.442695
        %v5208 = vpow.pop %v5207
        %v5209 = vsel %vm854, %v5208, 0.0
        %5210 = vadd.xlane.f32.xlu0 %v5209
        %v5211 = vpop.xlane.xlu0 %5210
        %v5212 = vrcp.pop %v5211
        %v5213 = vmul.f32 %v5208, %v5212
        %v5215 = vsel %vm854, %v5213, 0
        %5217 = vmatprep.subr.mxu0 0.0
        %5218 = vmatpush1.msra.mxu0 %v5123
        %5219 = vmatprep.subr.mxu0 0.0
        %5220 = vmatpush1.msra.mxu0 0.0
        %5221 = vmatprep.subr.mxu0 0.0
        %5222 = vmatpush1.msra.mxu0 0.0
        %5223 = vmatprep.subr.mxu0 0.0
        %5224 = vmatpush1.msra.mxu0 0.0
        %5225 = vmatprep.subr.mxu0 0.0
        %5226 = vmatpush1.msra.mxu0 0.0
        %5227 = vmatprep.subr.mxu0 0.0
        %5228 = vmatpush1.msra.mxu0 0.0
        %5229 = vmatprep.subr.mxu0 0.0
        %5230 = vmatpush1.msra.mxu0 0.0
        %5231 = vmatprep.subr.mxu0 0.0
        %5232 = vmatpush1.msra.mxu0 0.0
        %5233 = vmatprep.subr.mxu0 0.0
        %5234 = vmatpush1.msra.mxu0 0.0
        %5235 = vmatprep.subr.mxu0 0.0
        %5236 = vmatpush1.msra.mxu0 0.0
        %5237 = vmatprep.subr.mxu0 0.0
        %5238 = vmatpush1.msra.mxu0 0.0
        %5239 = vmatprep.subr.mxu0 0.0
        %5240 = vmatpush1.msra.mxu0 0.0
        %5241 = vmatprep.subr.mxu0 0.0
        %5242 = vmatpush1.msra.mxu0 0.0
        %5243 = vmatprep.subr.mxu0 0.0
        %5244 = vmatpush1.msra.mxu0 0.0
        %5245 = vmatprep.subr.mxu0 0.0
        %5246 = vmatpush1.msra.mxu0 0.0
        %5247 = vmatprep.subr.mxu0 0.0
        %5248 = vmatpush1.msra.mxu0 0.0
        %5249 = vmatprep.subr.mxu0 0.0
        %5250 = vmatpush1.msra.mxu0 0.0
        %5251 = vmatprep.subr.mxu0 0.0
        %5252 = vmatpush1.msra.mxu0 0.0
        %5253 = vmatprep.subr.mxu0 0.0
        %5254 = vmatpush1.msra.mxu0 0.0
        %5255 = vmatprep.subr.mxu0 0.0
        %5256 = vmatpush1.msra.mxu0 0.0
        %5257 = vmatprep.subr.mxu0 0.0
        %5258 = vmatpush1.msra.mxu0 0.0
        %5259 = vmatprep.subr.mxu0 0.0
        %5260 = vmatpush1.msra.mxu0 0.0
        %5261 = vmatprep.subr.mxu0 0.0
        %5262 = vmatpush1.msra.mxu0 0.0
        %5263 = vmatprep.subr.mxu0 0.0
        %5264 = vmatpush1.msra.mxu0 0.0
        %5265 = vmatprep.subr.mxu0 0.0
        %5266 = vmatpush1.msra.mxu0 0.0
        %5267 = vmatprep.subr.mxu0 0.0
        %5268 = vmatpush1.msra.mxu0 0.0
        %5269 = vmatprep.subr.mxu0 0.0
        %5270 = vmatpush1.msra.mxu0 0.0
        %5271 = vmatprep.subr.mxu0 0.0
        %5272 = vmatpush1.msra.mxu0 0.0
        %5273 = vmatprep.subr.mxu0 0.0
        %5274 = vmatpush1.msra.mxu0 0.0
        %5275 = vmatprep.subr.mxu0 0.0
        %5276 = vmatpush1.msra.mxu0 0.0
        %5277 = vmatprep.subr.mxu0 0.0
        %5278 = vmatpush1.msra.mxu0 0.0
        %5279 = vmatprep.subr.mxu0 0.0
        %5280 = vmatpush1.msra.mxu0 0.0
        %5281 = vmatprep.mubr.f32.mxu0 0.0
        %5282 = vmatmul.mubr.f32.gmra.mrb[0].mxu0 %v5215
        %v5283 = vpop.f32.mrb[0].mxu0
        %v5284 = vadd.f32 0.0, %v5283
        %v5285 = vpop.f32.mrb[0].mxu0
        %5286 = vdwg.mxu0
        %5288 = vrot.lane.b32.xlu0 %v5284, 32
        %v5289 = vpop.permute.xlu0 %5288
        %v5291 = vsel %vm719, %v4865, %v5289
        %v5292 = vld [vmem:[%s15] sm:$0xff]
        %v5293 = vld [vmem:[%s15 + $0x8] sm:$0xff]
        %v5294 = vld [vmem:[%s15 + $0x10] sm:$0xff]
        %v5295 = vld [vmem:[%s15 + $0x18] sm:$0xff]
        %v5296 = vld [vmem:[%s15 + $0x20] sm:$0xff]
        %v5297 = vld [vmem:[%s15 + $0x28] sm:$0xff]
        %v5298 = vld [vmem:[%s15 + $0x30] sm:$0xff]
        %v5299 = vld [vmem:[%s15 + $0x38] sm:$0xff]
        %v5300 = vld [vmem:[%s16] sm:$0x1]
        %v5302 = vlaneseq
        %v5303 = vshrl.u32 %v5302, 7
        %v5304 = vsub.s32 0, %v5303
        %v5305 = vrot.slane %v5300, %v5304
        %v5308 = vsel %vm2449, %v5291, 0
        %5310 = vmatprep.subr.mxu0 0.0
        %5311 = vmatpush1.msra.mxu0 %v5292
        %5312 = vmatprep.subr.mxu0 0.0
        %5313 = vmatpush1.msra.mxu0 %v5293
        %5314 = vmatprep.subr.mxu0 0.0
        %5315 = vmatpush1.msra.mxu0 %v5294
        %5316 = vmatprep.subr.mxu0 0.0
        %5317 = vmatpush1.msra.mxu0 %v5295
        %5318 = vmatprep.subr.mxu0 0.0
        %5319 = vmatpush1.msra.mxu0 %v5296
        %5320 = vmatprep.subr.mxu0 0.0
        %5321 = vmatpush1.msra.mxu0 %v5297
        %5322 = vmatprep.subr.mxu0 0.0
        %5323 = vmatpush1.msra.mxu0 %v5298
        %5324 = vmatprep.subr.mxu0 0.0
        %5325 = vmatpush1.msra.mxu0 %v5299
        %5326 = vmatprep.subr.mxu0 0.0
        %5327 = vmatpush1.msra.mxu0 0.0
        %5328 = vmatprep.subr.mxu0 0.0
        %5329 = vmatpush1.msra.mxu0 0.0
        %5330 = vmatprep.subr.mxu0 0.0
        %5331 = vmatpush1.msra.mxu0 0.0
        %5332 = vmatprep.subr.mxu0 0.0
        %5333 = vmatpush1.msra.mxu0 0.0
        %5334 = vmatprep.subr.mxu0 0.0
        %5335 = vmatpush1.msra.mxu0 0.0
        %5336 = vmatprep.subr.mxu0 0.0
        %5337 = vmatpush1.msra.mxu0 0.0
        %5338 = vmatprep.subr.mxu0 0.0
        %5339 = vmatpush1.msra.mxu0 0.0
        %5340 = vmatprep.subr.mxu0 0.0
        %5341 = vmatpush1.msra.mxu0 0.0
        %5342 = vmatprep.subr.mxu0 0.0
        %5343 = vmatpush1.msra.mxu0 0.0
        %5344 = vmatprep.subr.mxu0 0.0
        %5345 = vmatpush1.msra.mxu0 0.0
        %5346 = vmatprep.subr.mxu0 0.0
        %5347 = vmatpush1.msra.mxu0 0.0
        %5348 = vmatprep.subr.mxu0 0.0
        %5349 = vmatpush1.msra.mxu0 0.0
        %5350 = vmatprep.subr.mxu0 0.0
        %5351 = vmatpush1.msra.mxu0 0.0
        %5352 = vmatprep.subr.mxu0 0.0
        %5353 = vmatpush1.msra.mxu0 0.0
        %5354 = vmatprep.subr.mxu0 0.0
        %5355 = vmatpush1.msra.mxu0 0.0
        %5356 = vmatprep.subr.mxu0 0.0
        %5357 = vmatpush1.msra.mxu0 0.0
        %5358 = vmatprep.subr.mxu0 0.0
        %5359 = vmatpush1.msra.mxu0 0.0
        %5360 = vmatprep.subr.mxu0 0.0
        %5361 = vmatpush1.msra.mxu0 0.0
        %5362 = vmatprep.subr.mxu0 0.0
        %5363 = vmatpush1.msra.mxu0 0.0
        %5364 = vmatprep.subr.mxu0 0.0
        %5365 = vmatpush1.msra.mxu0 0.0
        %5366 = vmatprep.subr.mxu0 0.0
        %5367 = vmatpush1.msra.mxu0 0.0
        %5368 = vmatprep.subr.mxu0 0.0
        %5369 = vmatpush1.msra.mxu0 0.0
        %5370 = vmatprep.subr.mxu0 0.0
        %5371 = vmatpush1.msra.mxu0 0.0
        %5372 = vmatprep.subr.mxu0 0.0
        %5373 = vmatpush1.msra.mxu0 0.0
        %5374 = vmatprep.mubr.f32.mxu0 0.0
        %5375 = vmatmul.mubr.f32.gmra.mrb[0].mxu0 %v5308
        %v5376 = vpop.f32.mrb[0].mxu0
        %v5377 = vadd.f32 %v5305, %v5376
        %v5378 = vpop.f32.mrb[0].mxu0
        %5379 = vdwg.mxu0
        %v5380 = vsel %vm719, %v5377, 0.0
        %v5381 = vrot.slane %v5380, 4
        %v5382 = vadd.f32 %v5380, %v5381
        %v5383 = vrot.slane %v5382, 2
        %v5384 = vadd.f32 %v5382, %v5383
        %v5385 = vrot.slane %v5384, 1
        %v5386 = vadd.f32 %v5384, %v5385
        %v5387 = vrcp.pop 8.0
        %v5388 = vmul.f32 %v5386, %v5387
        %v5389 = vld [vmem:[%s17] sm:$0xff]
        %v5390 = vld [vmem:[%s17 + $0x8] sm:$0xff]
        %v5391 = vld [vmem:[%s17 + $0x10] sm:$0xff]
        %v5392 = vld [vmem:[%s17 + $0x18] sm:$0xff]
        %v5393 = vld [vmem:[#allocation14] sm:$0x1]
        %v5395 = vsel %vm719, %v5388, 0
        %5397 = vmatprep.subr.mxu0 0.0
        %5398 = vmatpush1.msra.mxu0 %v5389
        %5399 = vmatprep.subr.mxu0 0.0
        %5400 = vmatpush1.msra.mxu0 %v5390
        %5401 = vmatprep.subr.mxu0 0.0
        %5402 = vmatpush1.msra.mxu0 %v5391
        %5403 = vmatprep.subr.mxu0 0.0
        %5404 = vmatpush1.msra.mxu0 %v5392
        %5405 = vmatprep.subr.mxu0 0.0
        %5406 = vmatpush1.msra.mxu0 0.0
        %5407 = vmatprep.subr.mxu0 0.0
        %5408 = vmatpush1.msra.mxu0 0.0
        %5409 = vmatprep.subr.mxu0 0.0
        %5410 = vmatpush1.msra.mxu0 0.0
        %5411 = vmatprep.subr.mxu0 0.0
        %5412 = vmatpush1.msra.mxu0 0.0
        %5413 = vmatprep.subr.mxu0 0.0
        %5414 = vmatpush1.msra.mxu0 0.0
        %5415 = vmatprep.subr.mxu0 0.0
        %5416 = vmatpush1.msra.mxu0 0.0
        %5417 = vmatprep.subr.mxu0 0.0
        %5418 = vmatpush1.msra.mxu0 0.0
        %5419 = vmatprep.subr.mxu0 0.0
        %5420 = vmatpush1.msra.mxu0 0.0
        %5421 = vmatprep.subr.mxu0 0.0
        %5422 = vmatpush1.msra.mxu0 0.0
        %5423 = vmatprep.subr.mxu0 0.0
        %5424 = vmatpush1.msra.mxu0 0.0
        %5425 = vmatprep.subr.mxu0 0.0
        %5426 = vmatpush1.msra.mxu0 0.0
        %5427 = vmatprep.subr.mxu0 0.0
        %5428 = vmatpush1.msra.mxu0 0.0
        %5429 = vmatprep.subr.mxu0 0.0
        %5430 = vmatpush1.msra.mxu0 0.0
        %5431 = vmatprep.subr.mxu0 0.0
        %5432 = vmatpush1.msra.mxu0 0.0
        %5433 = vmatprep.subr.mxu0 0.0
        %5434 = vmatpush1.msra.mxu0 0.0
        %5435 = vmatprep.subr.mxu0 0.0
        %5436 = vmatpush1.msra.mxu0 0.0
        %5437 = vmatprep.subr.mxu0 0.0
        %5438 = vmatpush1.msra.mxu0 0.0
        %5439 = vmatprep.subr.mxu0 0.0
        %5440 = vmatpush1.msra.mxu0 0.0
        %5441 = vmatprep.subr.mxu0 0.0
        %5442 = vmatpush1.msra.mxu0 0.0
        %5443 = vmatprep.subr.mxu0 0.0
        %5444 = vmatpush1.msra.mxu0 0.0
        %5445 = vmatprep.subr.mxu0 0.0
        %5446 = vmatpush1.msra.mxu0 0.0
        %5447 = vmatprep.subr.mxu0 0.0
        %5448 = vmatpush1.msra.mxu0 0.0
        %5449 = vmatprep.subr.mxu0 0.0
        %5450 = vmatpush1.msra.mxu0 0.0
        %5451 = vmatprep.subr.mxu0 0.0
        %5452 = vmatpush1.msra.mxu0 0.0
        %5453 = vmatprep.subr.mxu0 0.0
        %5454 = vmatpush1.msra.mxu0 0.0
        %5455 = vmatprep.subr.mxu0 0.0
        %5456 = vmatpush1.msra.mxu0 0.0
        %5457 = vmatprep.subr.mxu0 0.0
        %5458 = vmatpush1.msra.mxu0 0.0
        %5459 = vmatprep.subr.mxu0 0.0
        %5460 = vmatpush1.msra.mxu0 0.0
        %5461 = vmatprep.mubr.f32.mxu0 0.0
        %5462 = vmatmul.mubr.f32.gmra.mrb[0].mxu0 %v5395
        %v5463 = vpop.f32.mrb[0].mxu0
        %v5464 = vadd.f32 %v5393, %v5463
        %v5465 = vpop.f32.mrb[0].mxu0
        %5466 = vdwg.mxu0
        %vm5467 = vcmask 8192
        %5468 = vst.msk [vmem:[%s709] sm:$0x1] %vm5467, %v5464
        %s5469 = sand.u32 %s450, 1
        %s5470 = scalar_lea.sflag [#allocation4], %s5469
        %s5471 = sand.u32 %s450, 1
        %s5472 = scalar_lea.vmem [#allocation16], %s5471
        // Predicated region
        $region129: #{transformer_fake_detector.1} parent=95 // pred_check
          %p5473 = pneg %p460
        $region130: #{transformer_fake_detector.1} parent=95 // pred_check_branch
          %5475 = sbr.rel (%p5473) target = $region132
        $region131: #{transformer_fake_detector.1} parent=95 // pred_region
          %s5477 = ssub.s32 16, 16
          %5478 = vsyncadd %s5470, %s5477
          %s5479 = smul.addr %s38, 16
          %s5480 = scalar_lea.hbm %s19, %s5479
          %s5482 = sshll.u32 %s5472, 4
          %s5483 = int_to_ptr.vmem [resolvable:$true] %s5482
          %5485 = dma.vmem_to_hbm [thread:$0]  %s5483, 16, %s5480, %s5470
        $region132: #{transformer_fake_detector.1} parent=95 // pred_fallthru
          _
      $region96: #{transformer_fake_detector.1} parent=5 // pred_fallthru
        _
      %p5486 = scmp.le.s32.totalorder 2, %s33
      // Predicated region
      $region133: #{transformer_fake_detector.1} parent=5 // pred_check
        %p5487 = pneg %p5486
      $region134: #{transformer_fake_detector.1} parent=5 // pred_check_branch
        %5489 = sbr.rel (%p5487) target = $region136
      $region135: #{transformer_fake_detector.1} parent=5 // pred_region
        %s5490 = ssub.s32 %s33, 2
        // Predicated region
        $region137: #{transformer_fake_detector.1} parent=135 // pred_check
          %p5491 = pneg %p466
        $region138: #{transformer_fake_detector.1} parent=135 // pred_check_branch
          %5493 = sbr.rel (%p5491) target = $region140
        $region139: #{transformer_fake_detector.1} parent=135 // pred_region
          %s5494 = sand.u32 %s451, 1
          %s5495 = scalar_lea.sflag [#allocation4], %s5494
          %s5496 = sand.u32 %s451, 1
          %s5497 = scalar_lea.vmem [#allocation16], %s5496
          %5498 = dma.done %s5495, 16
        $region140: #{transformer_fake_detector.1} parent=135 // pred_fallthru
          _
      $region136: #{transformer_fake_detector.1} parent=5 // pred_fallthru
        _
    $region6: #{transformer_fake_detector.1} parent=1 // loop_footer
      %s37 = sadd.s32 1, %s33
    $region7: #{transformer_fake_detector.1} parent=1 // loop_footer_branch
      %32 = sbr.rel target = $region3
    $region8: #{transformer_fake_detector.1} parent=1 // loop_exit
      _
    %5499 = vsyncpa [#allocation3], 1
    %s5500 = scalar_lea.sflag [#allocation3], 1
    %5501 = vsyncpa %s5500, 1
    %5502 = vsyncpa [#allocation6], 1
    %5503 = vsyncpa [#allocation9], 1
    %5504 = vsyncpa [#allocation12], 1
    %5505 = vsyncpa [#allocation15], 1
    %5506 = vsyncpa [#allocation4], 1
    %s5507 = scalar_lea.sflag [#allocation4], 1
    %5508 = vsyncpa %s5507, 1

</llo_original>
